<compile_context>
chip_gen: v6e
topology: v6e:2x2x1
jax: 0.10.0
libtpu: 0.0.40
codegen_flags: <defaults>
</compile_context>

<pallas_src>
import jax
import jax.numpy as jnp
from jax.experimental import pallas as pl
from jax.experimental.pallas import tpu as pltpu

EPS = 1e-5
VMEM_LIMIT = 32 * 1024 * 1024  # safe scoped-VMEM ceiling on v5e/v6e/v7x


# ---------------------------------------------------------------------------
# pass 1: conv1 (3x3, pad 1, stride 1, bias folded away) + partial BN1 stats
# ---------------------------------------------------------------------------
def _conv1_stats_kernel(xpad_ref, w_ref, z_ref, stats_ref, patch_ref):
    # xpad_ref : (1, H+2, W+2, C) bf16   zero-padded input tile (one image)
    # w_ref    : (9*C, C)         bf16   conv1 weights, (ky, kx, ci) flattened
    # z_ref    : (1, H, W, C)     bf16   pre-BN conv1 output
    # stats_ref: (1, 2, C)        f32    per-tile [sum, sum_sq] over (H, W)
    # patch_ref: (H*W, 9*C)       f32    im2col scratch
    _, Hp, Wp, C = xpad_ref.shape
    H, W = Hp - 2, Wp - 2

    # im2col: 9 shifted taps -> one (H*W, 9C) patch matrix -> ONE MXU matmul (K = 9C).
    for ky in range(3):
        for kx in range(3):
            k = ky * 3 + kx
            tap = xpad_ref[0, ky:ky + H, kx:kx + W, :].astype(jnp.float32)
            patch_ref[:, k * C:(k + 1) * C] = tap.reshape(H * W, C)

    z = jnp.dot(patch_ref[...].astype(jnp.bfloat16), w_ref[...],
                preferred_element_type=jnp.float32)            # (H*W, C) f32

    z_ref[0] = z.reshape(H, W, C).astype(z_ref.dtype)
    stats_ref[0, 0:1, :] = jnp.sum(z, axis=0, keepdims=True)
    stats_ref[0, 1:2, :] = jnp.sum(z * z, axis=0, keepdims=True)


# ---------------------------------------------------------------------------
# pass 2: BN1 (folded scale/shift) + ReLU + conv2 + partial BN2 stats
# ---------------------------------------------------------------------------
def _bn1_relu_conv2_stats_kernel(z1_ref, scale_ref, shift_ref, w_ref,
                                 z2_ref, stats_ref, ypad_ref, patch_ref):
    # z1_ref   : (1, H, W, C) bf16   conv1 pre-BN output tile
    # scale_ref: (1, C) f32          gamma1 * rsqrt(var1 + eps)  (global stats)
    # shift_ref: (1, C) f32          beta1 - mean1 * scale1
    # w_ref    : (9*C, C) bf16       conv2 weights
    # z2_ref   : (1, H, W, C) bf16   conv2 pre-BN output tile
    # stats_ref: (1, 2, C) f32
    # ypad_ref : (H+2, W+2, C) f32   padded conv2-input scratch
    # patch_ref: (H*W, 9*C) f32      im2col scratch
    _, H, W, C = z1_ref.shape

    # BN1 + ReLU in f32 (single fused scale/shift; conv bias already folded away).
    y = jnp.maximum(z1_ref[0].astype(jnp.float32) * scale_ref[...] + shift_ref[...], 0.0)

    # Zero only the 1-element halo frame (cheap), write the interior once.
    ypad_ref[0:1, :, :] = jnp.zeros((1, W + 2, C), jnp.float32)
    ypad_ref[H + 1:H + 2, :, :] = jnp.zeros((1, W + 2, C), jnp.float32)
    ypad_ref[:, 0:1, :] = jnp.zeros((H + 2, 1, C), jnp.float32)
    ypad_ref[:, W + 1:W + 2, :] = jnp.zeros((H + 2, 1, C), jnp.float32)
    ypad_ref[1:H + 1, 1:W + 1, :] = y

    for ky in range(3):
        for kx in range(3):
            k = ky * 3 + kx
            patch_ref[:, k * C:(k + 1) * C] = (
                ypad_ref[ky:ky + H, kx:kx + W, :].reshape(H * W, C))

    z2 = jnp.dot(patch_ref[...].astype(jnp.bfloat16), w_ref[...],
                 preferred_element_type=jnp.float32)           # (H*W, C) f32

    z2_ref[0] = z2.reshape(H, W, C).astype(z2_ref.dtype)
    stats_ref[0, 0:1, :] = jnp.sum(z2, axis=0, keepdims=True)
    stats_ref[0, 1:2, :] = jnp.sum(z2 * z2, axis=0, keepdims=True)


# ---------------------------------------------------------------------------
# pass 3: BN2 (folded scale/shift) + residual add + ReLU, lane-dense layout
# ---------------------------------------------------------------------------
def _bn2_residual_relu_kernel(z2_ref, x_ref, scale_ref, shift_ref, o_ref):
    # z2_ref/x_ref: (TR, W*C) bf16 ; scale/shift: (1, W*C) f32 ; o_ref: (TR, W*C) f32
    z = z2_ref[...].astype(jnp.float32)
    idn = x_ref[...].astype(jnp.float32)
    o_ref[...] = jnp.maximum(z * scale_ref[...] + shift_ref[...] + idn, 0.0)


# ---------------------------------------------------------------------------
# wrapper
# ---------------------------------------------------------------------------
def _fold_bn(stats, gamma, beta, count):
    """Global training-mode BN stats -> per-channel (scale, shift), f32."""
    total = jnp.sum(stats[:, 0, :], axis=0)
    total_sq = jnp.sum(stats[:, 1, :], axis=0)
    mean = total / count
    var = total_sq / count - mean * mean          # biased variance (PyTorch train mode)
    scale = gamma.reshape(1, -1) * jax.lax.rsqrt(var + EPS).reshape(1, -1)
    shift = beta.reshape(1, -1) - mean.reshape(1, -1) * scale
    return scale.astype(jnp.float32), shift.astype(jnp.float32)


def basic_block(x_nchw, params):
    """ResNet basic block forward: (N, C, H, W) f32 -> (N, C, H, W) f32."""
    N, C, H, W = x_nchw.shape

    # NCHW -> NHWC, bf16 (MXU dtype + halved HBM traffic). Pad fuses with the transpose.
    x_nhwc = jnp.transpose(x_nchw, (0, 2, 3, 1)).astype(jnp.bfloat16)
    x_pad = jnp.pad(x_nhwc, ((0, 0), (1, 1), (1, 1), (0, 0)))

    w1 = params["w1"].reshape(9 * C, C).astype(jnp.bfloat16)
    w2 = params["w2"].reshape(9 * C, C).astype(jnp.bfloat16)

    conv_flops = 2 * N * H * W * (9 * C) * C
    act_bytes = N * H * W * C

    # --- pass 1: conv1 + per-image partial BN1 stats (grid over batch) ----------------
    z1, stats1 = pl.pallas_call(
        _conv1_stats_kernel,
        grid=(N,),
        in_specs=[
            pl.BlockSpec((1, H + 2, W + 2, C), lambda n: (n, 0, 0, 0)),
            pl.BlockSpec((9 * C, C), lambda n: (0, 0)),
        ],
        out_specs=(
            pl.BlockSpec((1, H, W, C), lambda n: (n, 0, 0, 0)),
            pl.BlockSpec((1, 2, C), lambda n: (n, 0, 0)),
        ),
        out_shape=(
            jax.ShapeDtypeStruct((N, H, W, C), jnp.bfloat16),
            jax.ShapeDtypeStruct((N, 2, C), jnp.float32),
        ),
        scratch_shapes=[pltpu.VMEM((H * W, 9 * C), jnp.float32)],
        compiler_params=pltpu.CompilerParams(
            dimension_semantics=("parallel",), vmem_limit_bytes=VMEM_LIMIT),
        cost_estimate=pl.CostEstimate(
            flops=conv_flops, transcendentals=0,
            bytes_accessed=2 * N * (H + 2) * (W + 2) * C + 2 * act_bytes),
    )(x_pad, w1)

    scale1, shift1 = _fold_bn(stats1, params["g1"], params["be1"], float(N * H * W))

    # --- pass 2: BN1 + ReLU + conv2 + per-image partial BN2 stats ---------------------
    z2, stats2 = pl.pallas_call(
        _bn1_relu_conv2_stats_kernel,
        grid=(N,),
        in_specs=[
            pl.BlockSpec((1, H, W, C), lambda n: (n, 0, 0, 0)),
            pl.BlockSpec((1, C), lambda n: (0, 0)),
            pl.BlockSpec((1, C), lambda n: (0, 0)),
            pl.BlockSpec((9 * C, C), lambda n: (0, 0)),
        ],
        out_specs=(
            pl.BlockSpec((1, H, W, C), lambda n: (n, 0, 0, 0)),
            pl.BlockSpec((1, 2, C), lambda n: (n, 0, 0)),
        ),
        out_shape=(
            jax.ShapeDtypeStruct((N, H, W, C), jnp.bfloat16),
            jax.ShapeDtypeStruct((N, 2, C), jnp.float32),
        ),
        scratch_shapes=[
            pltpu.VMEM((H + 2, W + 2, C), jnp.float32),
            pltpu.VMEM((H * W, 9 * C), jnp.float32),
        ],
        compiler_params=pltpu.CompilerParams(
            dimension_semantics=("parallel",), vmem_limit_bytes=VMEM_LIMIT),
        cost_estimate=pl.CostEstimate(
            flops=conv_flops, transcendentals=0, bytes_accessed=4 * act_bytes),
    )(z1, scale1, shift1, w2)

    scale2, shift2 = _fold_bn(stats2, params["g2"], params["be2"], float(N * H * W))

    # --- pass 3: BN2 + residual + ReLU in lane-dense (N*H, W*C) layout ----------------
    rows = N * H
    tr = 8 if rows % 8 == 0 else rows
    z2_2d = z2.reshape(rows, W * C)            # contiguous reshapes (free)
    x_2d = x_nhwc.reshape(rows, W * C)
    scale2_t = jnp.tile(scale2, (1, W))        # column w*C + c -> scale2[c]
    shift2_t = jnp.tile(shift2, (1, W))

    out_2d = pl.pallas_call(
        _bn2_residual_relu_kernel,
        grid=(rows // tr,),
        in_specs=[
            pl.BlockSpec((tr, W * C), lambda i: (i, 0)),
            pl.BlockSpec((tr, W * C), lambda i: (i, 0)),
            pl.BlockSpec((1, W * C), lambda i: (0, 0)),
            pl.BlockSpec((1, W * C), lambda i: (0, 0)),
        ],
        out_specs=pl.BlockSpec((tr, W * C), lambda i: (i, 0)),
        out_shape=jax.ShapeDtypeStruct((rows, W * C), jnp.float32),
        compiler_params=pltpu.CompilerParams(
            dimension_semantics=("parallel",), vmem_limit_bytes=VMEM_LIMIT),
        cost_estimate=pl.CostEstimate(
            flops=3 * rows * W * C, transcendentals=0,
            bytes_accessed=8 * rows * W * C),
    )(z2_2d, x_2d, scale2_t, shift2_t)

    out_nhwc = out_2d.reshape(N, H, W, C)
    return jnp.transpose(out_nhwc, (0, 3, 1, 2))


# ---------------------------------------------------------------------------
# params / reference / test
# ---------------------------------------------------------------------------
def init_params(key, channels):
    ks = jax.random.split(key, 6)
    scale = 1.0 / (channels * 9) ** 0.5
    return {
        # conv weights in HWIO (3, 3, Cin, Cout); biases kept in the reference to show
        # they cancel exactly under training-mode BN (the kernels drop them).
        "w1": scale * jax.random.normal(ks[0], (3, 3, channels, channels), jnp.float32),
        "b1": 0.01 * jax.random.normal(ks[1], (1, channels), jnp.float32),
        "g1": 1.0 + 0.1 * jax.random.normal(ks[2], (1, channels), jnp.float32),
        "be1": 0.1 * jax.random.normal(ks[3], (1, channels), jnp.float32),
        "w2": scale * jax.random.normal(ks[4], (3, 3, channels, channels), jnp.float32),
        "b2": 0.01 * jax.random.normal(ks[5], (1, channels), jnp.float32),
        "g2": jnp.ones((1, channels), jnp.float32),
        "be2": jnp.zeros((1, channels), jnp.float32),
    }


def basic_block_reference(x_nchw, p):
    """Pure-JAX f32 reference mirroring the PyTorch module in train() mode."""
    x = jnp.transpose(x_nchw, (0, 2, 3, 1)).astype(jnp.float32)

    def conv(h, w, b):
        y = jax.lax.conv_general_dilated(
            h, w, window_strides=(1, 1), padding="SAME",
            dimension_numbers=("NHWC", "HWIO", "NHWC"))
        return y + b.reshape(1, 1, 1, -1)

    def bn(y, g, be):
        mean = y.mean(axis=(0, 1, 2), keepdims=True)
        var = ((y - mean) ** 2).mean(axis=(0, 1, 2), keepdims=True)
        return (y - mean) / jnp.sqrt(var + EPS) * g.reshape(1, 1, 1, -1) + be.reshape(1, 1, 1, -1)

    h = jax.nn.relu(bn(conv(x, p["w1"], p["b1"]), p["g1"], p["be1"]))
    h = bn(conv(h, p["w2"], p["b2"]), p["g2"], p["be2"])
    out = jax.nn.relu(h + x)
    return jnp.transpose(out, (0, 3, 1, 2))


if __name__ == "__main__":
    key = jax.random.PRNGKey(0)
    k_x, k_p = jax.random.split(key)

    N, C, H, W = 2, 8, 16, 16  # input_channels == output_channels == 8, stride=1
    x = jax.random.normal(k_x, (N, C, H, W), jnp.float32)
    params = init_params(k_p, C)

    out = jax.block_until_ready(jax.jit(basic_block)(x, params))
    ref = jax.block_until_ready(basic_block_reference(x, params))

    assert out.shape == (N, C, H, W)
    assert out.dtype == jnp.float32
    # bf16 MXU operands / bf16 intermediate storage -> bf16-level tolerance vs f32 ref.
    assert jnp.allclose(out, ref, rtol=5e-2, atol=5e-2), float(jnp.max(jnp.abs(out - ref)))

    print("KERNEL_OK")
</pallas_src>

<mosaic_0001>
module attributes {stable_mosaic.version = 11 : i64} {
  func.func @_conv1_stats_kernel(%arg0: i32, %arg1: memref<1x18x18x8xbf16, #tpu.memory_space<vmem>>, %arg2: memref<72x8xbf16, #tpu.memory_space<vmem>>, %arg3: memref<1x16x16x8xbf16, #tpu.memory_space<vmem>>, %arg4: memref<1x2x8xf32, #tpu.memory_space<vmem>>, %arg5: memref<256x72xf32, #tpu.memory_space<vmem>>) attributes {dimension_semantics = [#tpu.dimension_semantics<parallel>], iteration_bounds = array<i64: 2>, scalar_prefetch = 0 : i64, scratch_operands = 1 : i64, tpu.core_type = #tpu.core_type<tc>, window_params = [{transform_indices = @transform_0, window_bounds = array<i64: 1, 18, 18, 8>}, {pipeline_mode = #tpu.pipeline_mode<synchronous>, transform_indices = @transform_1, window_bounds = array<i64: 72, 8>}, {transform_indices = @transform_2, window_bounds = array<i64: 1, 16, 16, 8>}, {transform_indices = @transform_3, window_bounds = array<i64: 1, 2, 8>}]} {
    %c0 = arith.constant 0 : index
    %c0_0 = arith.constant 0 : index
    %c0_1 = arith.constant 0 : index
    %c0_2 = arith.constant 0 : index
    %0 = vector.load %arg1[%c0, %c0_0, %c0_1, %c0_2] : memref<1x18x18x8xbf16, #tpu.memory_space<vmem>>, vector<1x16x16x8xbf16>
    %1 = vector.shape_cast %0 : vector<1x16x16x8xbf16> to vector<16x16x8xbf16>
    %2 = arith.extf %1 : vector<16x16x8xbf16> to vector<16x16x8xf32>
    %3 = vector.shape_cast %2 : vector<16x16x8xf32> to vector<256x8xf32>
    %c0_3 = arith.constant 0 : index
    %c0_4 = arith.constant 0 : index
    %4 = vector.load %arg5[%c0_3, %c0_4] : memref<256x72xf32, #tpu.memory_space<vmem>>, vector<256x8xf32>
    tpu.vector_store %arg5[%c0_3, %c0_4], %3 {strides = array<i32>} : memref<256x72xf32, #tpu.memory_space<vmem>>, vector<256x8xf32>,
    %c0_5 = arith.constant 0 : index
    %c0_6 = arith.constant 0 : index
    %c1 = arith.constant 1 : index
    %c0_7 = arith.constant 0 : index
    %5 = vector.load %arg1[%c0_5, %c0_6, %c1, %c0_7] : memref<1x18x18x8xbf16, #tpu.memory_space<vmem>>, vector<1x16x16x8xbf16>
    %6 = vector.shape_cast %5 : vector<1x16x16x8xbf16> to vector<16x16x8xbf16>
    %7 = arith.extf %6 : vector<16x16x8xbf16> to vector<16x16x8xf32>
    %8 = vector.shape_cast %7 : vector<16x16x8xf32> to vector<256x8xf32>
    %c0_8 = arith.constant 0 : index
    %c8 = arith.constant 8 : index
    %9 = vector.load %arg5[%c0_8, %c8] : memref<256x72xf32, #tpu.memory_space<vmem>>, vector<256x8xf32>
    tpu.vector_store %arg5[%c0_8, %c8], %8 {strides = array<i32>} : memref<256x72xf32, #tpu.memory_space<vmem>>, vector<256x8xf32>,
    %c0_9 = arith.constant 0 : index
    %c0_10 = arith.constant 0 : index
    %c2 = arith.constant 2 : index
    %c0_11 = arith.constant 0 : index
    %10 = vector.load %arg1[%c0_9, %c0_10, %c2, %c0_11] : memref<1x18x18x8xbf16, #tpu.memory_space<vmem>>, vector<1x16x16x8xbf16>
    %11 = vector.shape_cast %10 : vector<1x16x16x8xbf16> to vector<16x16x8xbf16>
    %12 = arith.extf %11 : vector<16x16x8xbf16> to vector<16x16x8xf32>
    %13 = vector.shape_cast %12 : vector<16x16x8xf32> to vector<256x8xf32>
    %c0_12 = arith.constant 0 : index
    %c16 = arith.constant 16 : index
    %14 = vector.load %arg5[%c0_12, %c16] : memref<256x72xf32, #tpu.memory_space<vmem>>, vector<256x8xf32>
    tpu.vector_store %arg5[%c0_12, %c16], %13 {strides = array<i32>} : memref<256x72xf32, #tpu.memory_space<vmem>>, vector<256x8xf32>,
    %c0_13 = arith.constant 0 : index
    %c1_14 = arith.constant 1 : index
    %c0_15 = arith.constant 0 : index
    %c0_16 = arith.constant 0 : index
    %15 = vector.load %arg1[%c0_13, %c1_14, %c0_15, %c0_16] : memref<1x18x18x8xbf16, #tpu.memory_space<vmem>>, vector<1x16x16x8xbf16>
    %16 = vector.shape_cast %15 : vector<1x16x16x8xbf16> to vector<16x16x8xbf16>
    %17 = arith.extf %16 : vector<16x16x8xbf16> to vector<16x16x8xf32>
    %18 = vector.shape_cast %17 : vector<16x16x8xf32> to vector<256x8xf32>
    %c0_17 = arith.constant 0 : index
    %c24 = arith.constant 24 : index
    %19 = vector.load %arg5[%c0_17, %c24] : memref<256x72xf32, #tpu.memory_space<vmem>>, vector<256x8xf32>
    tpu.vector_store %arg5[%c0_17, %c24], %18 {strides = array<i32>} : memref<256x72xf32, #tpu.memory_space<vmem>>, vector<256x8xf32>,
    %c0_18 = arith.constant 0 : index
    %c1_19 = arith.constant 1 : index
    %c1_20 = arith.constant 1 : index
    %c0_21 = arith.constant 0 : index
    %20 = vector.load %arg1[%c0_18, %c1_19, %c1_20, %c0_21] : memref<1x18x18x8xbf16, #tpu.memory_space<vmem>>, vector<1x16x16x8xbf16>
    %21 = vector.shape_cast %20 : vector<1x16x16x8xbf16> to vector<16x16x8xbf16>
    %22 = arith.extf %21 : vector<16x16x8xbf16> to vector<16x16x8xf32>
    %23 = vector.shape_cast %22 : vector<16x16x8xf32> to vector<256x8xf32>
    %c0_22 = arith.constant 0 : index
    %c32 = arith.constant 32 : index
    %24 = vector.load %arg5[%c0_22, %c32] : memref<256x72xf32, #tpu.memory_space<vmem>>, vector<256x8xf32>
    tpu.vector_store %arg5[%c0_22, %c32], %23 {strides = array<i32>} : memref<256x72xf32, #tpu.memory_space<vmem>>, vector<256x8xf32>,
    %c0_23 = arith.constant 0 : index
    %c1_24 = arith.constant 1 : index
    %c2_25 = arith.constant 2 : index
    %c0_26 = arith.constant 0 : index
    %25 = vector.load %arg1[%c0_23, %c1_24, %c2_25, %c0_26] : memref<1x18x18x8xbf16, #tpu.memory_space<vmem>>, vector<1x16x16x8xbf16>
    %26 = vector.shape_cast %25 : vector<1x16x16x8xbf16> to vector<16x16x8xbf16>
    %27 = arith.extf %26 : vector<16x16x8xbf16> to vector<16x16x8xf32>
    %28 = vector.shape_cast %27 : vector<16x16x8xf32> to vector<256x8xf32>
    %c0_27 = arith.constant 0 : index
    %c40 = arith.constant 40 : index
    %29 = vector.load %arg5[%c0_27, %c40] : memref<256x72xf32, #tpu.memory_space<vmem>>, vector<256x8xf32>
    tpu.vector_store %arg5[%c0_27, %c40], %28 {strides = array<i32>} : memref<256x72xf32, #tpu.memory_space<vmem>>, vector<256x8xf32>,
    %c0_28 = arith.constant 0 : index
    %c2_29 = arith.constant 2 : index
    %c0_30 = arith.constant 0 : index
    %c0_31 = arith.constant 0 : index
    %30 = vector.load %arg1[%c0_28, %c2_29, %c0_30, %c0_31] : memref<1x18x18x8xbf16, #tpu.memory_space<vmem>>, vector<1x16x16x8xbf16>
    %31 = vector.shape_cast %30 : vector<1x16x16x8xbf16> to vector<16x16x8xbf16>
    %32 = arith.extf %31 : vector<16x16x8xbf16> to vector<16x16x8xf32>
    %33 = vector.shape_cast %32 : vector<16x16x8xf32> to vector<256x8xf32>
    %c0_32 = arith.constant 0 : index
    %c48 = arith.constant 48 : index
    %34 = vector.load %arg5[%c0_32, %c48] : memref<256x72xf32, #tpu.memory_space<vmem>>, vector<256x8xf32>
    tpu.vector_store %arg5[%c0_32, %c48], %33 {strides = array<i32>} : memref<256x72xf32, #tpu.memory_space<vmem>>, vector<256x8xf32>,
    %c0_33 = arith.constant 0 : index
    %c2_34 = arith.constant 2 : index
    %c1_35 = arith.constant 1 : index
    %c0_36 = arith.constant 0 : index
    %35 = vector.load %arg1[%c0_33, %c2_34, %c1_35, %c0_36] : memref<1x18x18x8xbf16, #tpu.memory_space<vmem>>, vector<1x16x16x8xbf16>
    %36 = vector.shape_cast %35 : vector<1x16x16x8xbf16> to vector<16x16x8xbf16>
    %37 = arith.extf %36 : vector<16x16x8xbf16> to vector<16x16x8xf32>
    %38 = vector.shape_cast %37 : vector<16x16x8xf32> to vector<256x8xf32>
    %c0_37 = arith.constant 0 : index
    %c56 = arith.constant 56 : index
    %39 = vector.load %arg5[%c0_37, %c56] : memref<256x72xf32, #tpu.memory_space<vmem>>, vector<256x8xf32>
    tpu.vector_store %arg5[%c0_37, %c56], %38 {strides = array<i32>} : memref<256x72xf32, #tpu.memory_space<vmem>>, vector<256x8xf32>,
    %c0_38 = arith.constant 0 : index
    %c2_39 = arith.constant 2 : index
    %c2_40 = arith.constant 2 : index
    %c0_41 = arith.constant 0 : index
    %40 = vector.load %arg1[%c0_38, %c2_39, %c2_40, %c0_41] : memref<1x18x18x8xbf16, #tpu.memory_space<vmem>>, vector<1x16x16x8xbf16>
    %41 = vector.shape_cast %40 : vector<1x16x16x8xbf16> to vector<16x16x8xbf16>
    %42 = arith.extf %41 : vector<16x16x8xbf16> to vector<16x16x8xf32>
    %43 = vector.shape_cast %42 : vector<16x16x8xf32> to vector<256x8xf32>
    %c0_42 = arith.constant 0 : index
    %c64 = arith.constant 64 : index
    %44 = vector.load %arg5[%c0_42, %c64] : memref<256x72xf32, #tpu.memory_space<vmem>>, vector<256x8xf32>
    tpu.vector_store %arg5[%c0_42, %c64], %43 {strides = array<i32>} : memref<256x72xf32, #tpu.memory_space<vmem>>, vector<256x8xf32>,
    %c0_43 = arith.constant 0 : index
    %c0_44 = arith.constant 0 : index
    %45 = vector.load %arg5[%c0_43, %c0_44] : memref<256x72xf32, #tpu.memory_space<vmem>>, vector<256x72xf32>
    %46 = arith.truncf %45 : vector<256x72xf32> to vector<256x72xbf16>
    %c0_45 = arith.constant 0 : index
    %c0_46 = arith.constant 0 : index
    %47 = vector.load %arg2[%c0_45, %c0_46] : memref<72x8xbf16, #tpu.memory_space<vmem>>, vector<72x8xbf16>
    %cst = arith.constant dense<0.000000e+00> : vector<256x8xf32>
    %48 = tpu.matmul %46, %47, %cst {dimension_numbers = #tpu.dot_dimension_numbers<[1], [0], [0], [1], [0, 0, 1, 1], [], []>} : vector<256x72xbf16>, vector<72x8xbf16>, vector<256x8xf32> -> vector<256x8xf32>
    %49 = vector.shape_cast %48 : vector<256x8xf32> to vector<16x16x8xf32>
    %50 = arith.truncf %49 : vector<16x16x8xf32> to vector<16x16x8xbf16>
    %c0_47 = arith.constant 0 : index
    %c0_48 = arith.constant 0 : index
    %c0_49 = arith.constant 0 : index
    %c0_50 = arith.constant 0 : index
    %51 = vector.load %arg3[%c0_47, %c0_48, %c0_49, %c0_50] : memref<1x16x16x8xbf16, #tpu.memory_space<vmem>>, vector<1x16x16x8xbf16>
    %52 = vector.shape_cast %51 : vector<1x16x16x8xbf16> to vector<16x16x8xbf16>
    %53 = vector.shape_cast %50 : vector<16x16x8xbf16> to vector<1x16x16x8xbf16>
    tpu.vector_store %arg3[%c0_47, %c0_48, %c0_49, %c0_50], %53 {strides = array<i32>} : memref<1x16x16x8xbf16, #tpu.memory_space<vmem>>, vector<1x16x16x8xbf16>,
    %cst_51 = arith.constant dense<0.000000e+00> : vector<8xf32>
    %54 = vector.multi_reduction <add>, %48, %cst_51 [0] : vector<256x8xf32> to vector<8xf32>
    %55 = vector.shape_cast %54 : vector<8xf32> to vector<1x8xf32>
    %c0_52 = arith.constant 0 : index
    %c0_53 = arith.constant 0 : index
    %c0_54 = arith.constant 0 : index
    %56 = vector.load %arg4[%c0_52, %c0_53, %c0_54] : memref<1x2x8xf32, #tpu.memory_space<vmem>>, vector<1x1x8xf32>
    %57 = vector.shape_cast %56 : vector<1x1x8xf32> to vector<1x8xf32>
    %58 = vector.shape_cast %55 : vector<1x8xf32> to vector<1x1x8xf32>
    tpu.vector_store %arg4[%c0_52, %c0_53, %c0_54], %58 {strides = array<i32>} : memref<1x2x8xf32, #tpu.memory_space<vmem>>, vector<1x1x8xf32>,
    %59 = arith.mulf %48, %48 : vector<256x8xf32>
    %cst_55 = arith.constant dense<0.000000e+00> : vector<8xf32>
    %60 = vector.multi_reduction <add>, %59, %cst_55 [0] : vector<256x8xf32> to vector<8xf32>
    %61 = vector.shape_cast %60 : vector<8xf32> to vector<1x8xf32>
    %c0_56 = arith.constant 0 : index
    %c1_57 = arith.constant 1 : index
    %c0_58 = arith.constant 0 : index
    %62 = vector.load %arg4[%c0_56, %c1_57, %c0_58] : memref<1x2x8xf32, #tpu.memory_space<vmem>>, vector<1x1x8xf32>
    %63 = vector.shape_cast %62 : vector<1x1x8xf32> to vector<1x8xf32>
    %64 = vector.shape_cast %61 : vector<1x8xf32> to vector<1x1x8xf32>
    tpu.vector_store %arg4[%c0_56, %c1_57, %c0_58], %64 {strides = array<i32>} : memref<1x2x8xf32, #tpu.memory_space<vmem>>, vector<1x1x8xf32>,
    return
  }
  func.func @transform_0(%arg0: i32) -> (i32, i32, i32, i32) {
    %c0_i32 = arith.constant 0 : i32
    %c0_i32_0 = arith.constant 0 : i32
    %c0_i32_1 = arith.constant 0 : i32
    %c0_i32_2 = arith.constant 0 : i32
    return %arg0, %c0_i32, %c0_i32_0, %c0_i32_1 : i32, i32, i32, i32
  }
  func.func @transform_1(%arg0: i32) -> (i32, i32) {
    %c0_i32 = arith.constant 0 : i32
    %c0_i32_0 = arith.constant 0 : i32
    %c0_i32_1 = arith.constant 0 : i32
    return %c0_i32, %c0_i32_0 : i32, i32
  }
  func.func @transform_2(%arg0: i32) -> (i32, i32, i32, i32) {
    %c0_i32 = arith.constant 0 : i32
    %c0_i32_0 = arith.constant 0 : i32
    %c0_i32_1 = arith.constant 0 : i32
    %c0_i32_2 = arith.constant 0 : i32
    return %arg0, %c0_i32, %c0_i32_0, %c0_i32_1 : i32, i32, i32, i32
  }
  func.func @transform_3(%arg0: i32) -> (i32, i32, i32) {
    %c0_i32 = arith.constant 0 : i32
    %c0_i32_0 = arith.constant 0 : i32
    %c0_i32_1 = arith.constant 0 : i32
    return %arg0, %c0_i32, %c0_i32_0 : i32, i32, i32
  }
}

module attributes {stable_mosaic.version = 11 : i64} {
  func.func @_bn1_relu_conv2_stats_kernel(%arg0: i32, %arg1: memref<1x16x16x8xbf16, #tpu.memory_space<vmem>>, %arg2: memref<1x8xf32, #tpu.memory_space<vmem>>, %arg3: memref<1x8xf32, #tpu.memory_space<vmem>>, %arg4: memref<72x8xbf16, #tpu.memory_space<vmem>>, %arg5: memref<1x16x16x8xbf16, #tpu.memory_space<vmem>>, %arg6: memref<1x2x8xf32, #tpu.memory_space<vmem>>, %arg7: memref<18x18x8xf32, #tpu.memory_space<vmem>>, %arg8: memref<256x72xf32, #tpu.memory_space<vmem>>) attributes {dimension_semantics = [#tpu.dimension_semantics<parallel>], iteration_bounds = array<i64: 2>, scalar_prefetch = 0 : i64, scratch_operands = 2 : i64, tpu.core_type = #tpu.core_type<tc>, window_params = [{transform_indices = @transform_0, window_bounds = array<i64: 1, 16, 16, 8>}, {pipeline_mode = #tpu.pipeline_mode<synchronous>, transform_indices = @transform_1, window_bounds = array<i64: 1, 8>}, {pipeline_mode = #tpu.pipeline_mode<synchronous>, transform_indices = @transform_2, window_bounds = array<i64: 1, 8>}, {pipeline_mode = #tpu.pipeline_mode<synchronous>, transform_indices = @transform_3, window_bounds = array<i64: 72, 8>}, {transform_indices = @transform_4, window_bounds = array<i64: 1, 16, 16, 8>}, {transform_indices = @transform_5, window_bounds = array<i64: 1, 2, 8>}]} {
    %c0 = arith.constant 0 : index
    %c0_0 = arith.constant 0 : index
    %c0_1 = arith.constant 0 : index
    %c0_2 = arith.constant 0 : index
    %0 = vector.load %arg1[%c0, %c0_0, %c0_1, %c0_2] : memref<1x16x16x8xbf16, #tpu.memory_space<vmem>>, vector<1x16x16x8xbf16>
    %1 = vector.shape_cast %0 : vector<1x16x16x8xbf16> to vector<16x16x8xbf16>
    %2 = arith.extf %1 : vector<16x16x8xbf16> to vector<16x16x8xf32>
    %c0_3 = arith.constant 0 : index
    %c0_4 = arith.constant 0 : index
    %3 = vector.load %arg2[%c0_3, %c0_4] : memref<1x8xf32, #tpu.memory_space<vmem>>, vector<1x8xf32>
    %4 = vector.shape_cast %3 : vector<1x8xf32> to vector<1x1x8xf32>
    %5 = vector.broadcast %4 : vector<1x1x8xf32> to vector<16x16x8xf32>
    %6 = arith.mulf %2, %5 : vector<16x16x8xf32>
    %c0_5 = arith.constant 0 : index
    %c0_6 = arith.constant 0 : index
    %7 = vector.load %arg3[%c0_5, %c0_6] : memref<1x8xf32, #tpu.memory_space<vmem>>, vector<1x8xf32>
    %8 = vector.shape_cast %7 : vector<1x8xf32> to vector<1x1x8xf32>
    %9 = vector.broadcast %8 : vector<1x1x8xf32> to vector<16x16x8xf32>
    %10 = arith.addf %6, %9 : vector<16x16x8xf32>
    %cst = arith.constant 0.000000e+00 : f32
    %11 = vector.broadcast %cst : f32 to vector<16x16x8xf32>
    %12 = arith.maximumf %10, %11 : vector<16x16x8xf32>
    %cst_7 = arith.constant 0.000000e+00 : f32
    %13 = vector.broadcast %cst_7 : f32 to vector<1x18x8xf32>
    %c0_8 = arith.constant 0 : index
    %c0_9 = arith.constant 0 : index
    %c0_10 = arith.constant 0 : index
    %14 = vector.load %arg7[%c0_8, %c0_9, %c0_10] : memref<18x18x8xf32, #tpu.memory_space<vmem>>, vector<1x18x8xf32>
    tpu.vector_store %arg7[%c0_8, %c0_9, %c0_10], %13 {strides = array<i32>} : memref<18x18x8xf32, #tpu.memory_space<vmem>>, vector<1x18x8xf32>,
    %cst_11 = arith.constant 0.000000e+00 : f32
    %15 = vector.broadcast %cst_11 : f32 to vector<1x18x8xf32>
    %c17 = arith.constant 17 : index
    %c0_12 = arith.constant 0 : index
    %c0_13 = arith.constant 0 : index
    %16 = vector.load %arg7[%c17, %c0_12, %c0_13] : memref<18x18x8xf32, #tpu.memory_space<vmem>>, vector<1x18x8xf32>
    tpu.vector_store %arg7[%c17, %c0_12, %c0_13], %15 {strides = array<i32>} : memref<18x18x8xf32, #tpu.memory_space<vmem>>, vector<1x18x8xf32>,
    %cst_14 = arith.constant 0.000000e+00 : f32
    %17 = vector.broadcast %cst_14 : f32 to vector<18x1x8xf32>
    %c0_15 = arith.constant 0 : index
    %c0_16 = arith.constant 0 : index
    %c0_17 = arith.constant 0 : index
    %18 = vector.load %arg7[%c0_15, %c0_16, %c0_17] : memref<18x18x8xf32, #tpu.memory_space<vmem>>, vector<18x1x8xf32>
    tpu.vector_store %arg7[%c0_15, %c0_16, %c0_17], %17 {strides = array<i32>} : memref<18x18x8xf32, #tpu.memory_space<vmem>>, vector<18x1x8xf32>,
    %cst_18 = arith.constant 0.000000e+00 : f32
    %19 = vector.broadcast %cst_18 : f32 to vector<18x1x8xf32>
    %c0_19 = arith.constant 0 : index
    %c17_20 = arith.constant 17 : index
    %c0_21 = arith.constant 0 : index
    %20 = vector.load %arg7[%c0_19, %c17_20, %c0_21] : memref<18x18x8xf32, #tpu.memory_space<vmem>>, vector<18x1x8xf32>
    tpu.vector_store %arg7[%c0_19, %c17_20, %c0_21], %19 {strides = array<i32>} : memref<18x18x8xf32, #tpu.memory_space<vmem>>, vector<18x1x8xf32>,
    %c1 = arith.constant 1 : index
    %c1_22 = arith.constant 1 : index
    %c0_23 = arith.constant 0 : index
    %21 = vector.load %arg7[%c1, %c1_22, %c0_23] : memref<18x18x8xf32, #tpu.memory_space<vmem>>, vector<16x16x8xf32>
    tpu.vector_store %arg7[%c1, %c1_22, %c0_23], %12 {strides = array<i32>} : memref<18x18x8xf32, #tpu.memory_space<vmem>>, vector<16x16x8xf32>,
    %c0_24 = arith.constant 0 : index
    %c0_25 = arith.constant 0 : index
    %c0_26 = arith.constant 0 : index
    %22 = vector.load %arg7[%c0_24, %c0_25, %c0_26] : memref<18x18x8xf32, #tpu.memory_space<vmem>>, vector<16x16x8xf32>
    %23 = vector.shape_cast %22 : vector<16x16x8xf32> to vector<256x8xf32>
    %c0_27 = arith.constant 0 : index
    %c0_28 = arith.constant 0 : index
    %24 = vector.load %arg8[%c0_27, %c0_28] : memref<256x72xf32, #tpu.memory_space<vmem>>, vector<256x8xf32>
    tpu.vector_store %arg8[%c0_27, %c0_28], %23 {strides = array<i32>} : memref<256x72xf32, #tpu.memory_space<vmem>>, vector<256x8xf32>,
    %c0_29 = arith.constant 0 : index
    %c1_30 = arith.constant 1 : index
    %c0_31 = arith.constant 0 : index
    %25 = vector.load %arg7[%c0_29, %c1_30, %c0_31] : memref<18x18x8xf32, #tpu.memory_space<vmem>>, vector<16x16x8xf32>
    %26 = vector.shape_cast %25 : vector<16x16x8xf32> to vector<256x8xf32>
    %c0_32 = arith.constant 0 : index
    %c8 = arith.constant 8 : index
    %27 = vector.load %arg8[%c0_32, %c8] : memref<256x72xf32, #tpu.memory_space<vmem>>, vector<256x8xf32>
    tpu.vector_store %arg8[%c0_32, %c8], %26 {strides = array<i32>} : memref<256x72xf32, #tpu.memory_space<vmem>>, vector<256x8xf32>,
    %c0_33 = arith.constant 0 : index
    %c2 = arith.constant 2 : index
    %c0_34 = arith.constant 0 : index
    %28 = vector.load %arg7[%c0_33, %c2, %c0_34] : memref<18x18x8xf32, #tpu.memory_space<vmem>>, vector<16x16x8xf32>
    %29 = vector.shape_cast %28 : vector<16x16x8xf32> to vector<256x8xf32>
    %c0_35 = arith.constant 0 : index
    %c16 = arith.constant 16 : index
    %30 = vector.load %arg8[%c0_35, %c16] : memref<256x72xf32, #tpu.memory_space<vmem>>, vector<256x8xf32>
    tpu.vector_store %arg8[%c0_35, %c16], %29 {strides = array<i32>} : memref<256x72xf32, #tpu.memory_space<vmem>>, vector<256x8xf32>,
    %c1_36 = arith.constant 1 : index
    %c0_37 = arith.constant 0 : index
    %c0_38 = arith.constant 0 : index
    %31 = vector.load %arg7[%c1_36, %c0_37, %c0_38] : memref<18x18x8xf32, #tpu.memory_space<vmem>>, vector<16x16x8xf32>
    %32 = vector.shape_cast %31 : vector<16x16x8xf32> to vector<256x8xf32>
    %c0_39 = arith.constant 0 : index
    %c24 = arith.constant 24 : index
    %33 = vector.load %arg8[%c0_39, %c24] : memref<256x72xf32, #tpu.memory_space<vmem>>, vector<256x8xf32>
    tpu.vector_store %arg8[%c0_39, %c24], %32 {strides = array<i32>} : memref<256x72xf32, #tpu.memory_space<vmem>>, vector<256x8xf32>,
    %c1_40 = arith.constant 1 : index
    %c1_41 = arith.constant 1 : index
    %c0_42 = arith.constant 0 : index
    %34 = vector.load %arg7[%c1_40, %c1_41, %c0_42] : memref<18x18x8xf32, #tpu.memory_space<vmem>>, vector<16x16x8xf32>
    %35 = vector.shape_cast %34 : vector<16x16x8xf32> to vector<256x8xf32>
    %c0_43 = arith.constant 0 : index
    %c32 = arith.constant 32 : index
    %36 = vector.load %arg8[%c0_43, %c32] : memref<256x72xf32, #tpu.memory_space<vmem>>, vector<256x8xf32>
    tpu.vector_store %arg8[%c0_43, %c32], %35 {strides = array<i32>} : memref<256x72xf32, #tpu.memory_space<vmem>>, vector<256x8xf32>,
    %c1_44 = arith.constant 1 : index
    %c2_45 = arith.constant 2 : index
    %c0_46 = arith.constant 0 : index
    %37 = vector.load %arg7[%c1_44, %c2_45, %c0_46] : memref<18x18x8xf32, #tpu.memory_space<vmem>>, vector<16x16x8xf32>
    %38 = vector.shape_cast %37 : vector<16x16x8xf32> to vector<256x8xf32>
    %c0_47 = arith.constant 0 : index
    %c40 = arith.constant 40 : index
    %39 = vector.load %arg8[%c0_47, %c40] : memref<256x72xf32, #tpu.memory_space<vmem>>, vector<256x8xf32>
    tpu.vector_store %arg8[%c0_47, %c40], %38 {strides = array<i32>} : memref<256x72xf32, #tpu.memory_space<vmem>>, vector<256x8xf32>,
    %c2_48 = arith.constant 2 : index
    %c0_49 = arith.constant 0 : index
    %c0_50 = arith.constant 0 : index
    %40 = vector.load %arg7[%c2_48, %c0_49, %c0_50] : memref<18x18x8xf32, #tpu.memory_space<vmem>>, vector<16x16x8xf32>
    %41 = vector.shape_cast %40 : vector<16x16x8xf32> to vector<256x8xf32>
    %c0_51 = arith.constant 0 : index
    %c48 = arith.constant 48 : index
    %42 = vector.load %arg8[%c0_51, %c48] : memref<256x72xf32, #tpu.memory_space<vmem>>, vector<256x8xf32>
    tpu.vector_store %arg8[%c0_51, %c48], %41 {strides = array<i32>} : memref<256x72xf32, #tpu.memory_space<vmem>>, vector<256x8xf32>,
    %c2_52 = arith.constant 2 : index
    %c1_53 = arith.constant 1 : index
    %c0_54 = arith.constant 0 : index
    %43 = vector.load %arg7[%c2_52, %c1_53, %c0_54] : memref<18x18x8xf32, #tpu.memory_space<vmem>>, vector<16x16x8xf32>
    %44 = vector.shape_cast %43 : vector<16x16x8xf32> to vector<256x8xf32>
    %c0_55 = arith.constant 0 : index
    %c56 = arith.constant 56 : index
    %45 = vector.load %arg8[%c0_55, %c56] : memref<256x72xf32, #tpu.memory_space<vmem>>, vector<256x8xf32>
    tpu.vector_store %arg8[%c0_55, %c56], %44 {strides = array<i32>} : memref<256x72xf32, #tpu.memory_space<vmem>>, vector<256x8xf32>,
    %c2_56 = arith.constant 2 : index
    %c2_57 = arith.constant 2 : index
    %c0_58 = arith.constant 0 : index
    %46 = vector.load %arg7[%c2_56, %c2_57, %c0_58] : memref<18x18x8xf32, #tpu.memory_space<vmem>>, vector<16x16x8xf32>
    %47 = vector.shape_cast %46 : vector<16x16x8xf32> to vector<256x8xf32>
    %c0_59 = arith.constant 0 : index
    %c64 = arith.constant 64 : index
    %48 = vector.load %arg8[%c0_59, %c64] : memref<256x72xf32, #tpu.memory_space<vmem>>, vector<256x8xf32>
    tpu.vector_store %arg8[%c0_59, %c64], %47 {strides = array<i32>} : memref<256x72xf32, #tpu.memory_space<vmem>>, vector<256x8xf32>,
    %c0_60 = arith.constant 0 : index
    %c0_61 = arith.constant 0 : index
    %49 = vector.load %arg8[%c0_60, %c0_61] : memref<256x72xf32, #tpu.memory_space<vmem>>, vector<256x72xf32>
    %50 = arith.truncf %49 : vector<256x72xf32> to vector<256x72xbf16>
    %c0_62 = arith.constant 0 : index
    %c0_63 = arith.constant 0 : index
    %51 = vector.load %arg4[%c0_62, %c0_63] : memref<72x8xbf16, #tpu.memory_space<vmem>>, vector<72x8xbf16>
    %cst_64 = arith.constant dense<0.000000e+00> : vector<256x8xf32>
    %52 = tpu.matmul %50, %51, %cst_64 {dimension_numbers = #tpu.dot_dimension_numbers<[1], [0], [0], [1], [0, 0, 1, 1], [], []>} : vector<256x72xbf16>, vector<72x8xbf16>, vector<256x8xf32> -> vector<256x8xf32>
    %53 = vector.shape_cast %52 : vector<256x8xf32> to vector<16x16x8xf32>
    %54 = arith.truncf %53 : vector<16x16x8xf32> to vector<16x16x8xbf16>
    %c0_65 = arith.constant 0 : index
    %c0_66 = arith.constant 0 : index
    %c0_67 = arith.constant 0 : index
    %c0_68 = arith.constant 0 : index
    %55 = vector.load %arg5[%c0_65, %c0_66, %c0_67, %c0_68] : memref<1x16x16x8xbf16, #tpu.memory_space<vmem>>, vector<1x16x16x8xbf16>
    %56 = vector.shape_cast %55 : vector<1x16x16x8xbf16> to vector<16x16x8xbf16>
    %57 = vector.shape_cast %54 : vector<16x16x8xbf16> to vector<1x16x16x8xbf16>
    tpu.vector_store %arg5[%c0_65, %c0_66, %c0_67, %c0_68], %57 {strides = array<i32>} : memref<1x16x16x8xbf16, #tpu.memory_space<vmem>>, vector<1x16x16x8xbf16>,
    %cst_69 = arith.constant dense<0.000000e+00> : vector<8xf32>
    %58 = vector.multi_reduction <add>, %52, %cst_69 [0] : vector<256x8xf32> to vector<8xf32>
    %59 = vector.shape_cast %58 : vector<8xf32> to vector<1x8xf32>
    %c0_70 = arith.constant 0 : index
    %c0_71 = arith.constant 0 : index
    %c0_72 = arith.constant 0 : index
    %60 = vector.load %arg6[%c0_70, %c0_71, %c0_72] : memref<1x2x8xf32, #tpu.memory_space<vmem>>, vector<1x1x8xf32>
    %61 = vector.shape_cast %60 : vector<1x1x8xf32> to vector<1x8xf32>
    %62 = vector.shape_cast %59 : vector<1x8xf32> to vector<1x1x8xf32>
    tpu.vector_store %arg6[%c0_70, %c0_71, %c0_72], %62 {strides = array<i32>} : memref<1x2x8xf32, #tpu.memory_space<vmem>>, vector<1x1x8xf32>,
    %63 = arith.mulf %52, %52 : vector<256x8xf32>
    %cst_73 = arith.constant dense<0.000000e+00> : vector<8xf32>
    %64 = vector.multi_reduction <add>, %63, %cst_73 [0] : vector<256x8xf32> to vector<8xf32>
    %65 = vector.shape_cast %64 : vector<8xf32> to vector<1x8xf32>
    %c0_74 = arith.constant 0 : index
    %c1_75 = arith.constant 1 : index
    %c0_76 = arith.constant 0 : index
    %66 = vector.load %arg6[%c0_74, %c1_75, %c0_76] : memref<1x2x8xf32, #tpu.memory_space<vmem>>, vector<1x1x8xf32>
    %67 = vector.shape_cast %66 : vector<1x1x8xf32> to vector<1x8xf32>
    %68 = vector.shape_cast %65 : vector<1x8xf32> to vector<1x1x8xf32>
    tpu.vector_store %arg6[%c0_74, %c1_75, %c0_76], %68 {strides = array<i32>} : memref<1x2x8xf32, #tpu.memory_space<vmem>>, vector<1x1x8xf32>,
    return
  }
  func.func @transform_0(%arg0: i32) -> (i32, i32, i32, i32) {
    %c0_i32 = arith.constant 0 : i32
    %c0_i32_0 = arith.constant 0 : i32
    %c0_i32_1 = arith.constant 0 : i32
    %c0_i32_2 = arith.constant 0 : i32
    return %arg0, %c0_i32, %c0_i32_0, %c0_i32_1 : i32, i32, i32, i32
  }
  func.func @transform_1(%arg0: i32) -> (i32, i32) {
    %c0_i32 = arith.constant 0 : i32
    %c0_i32_0 = arith.constant 0 : i32
    %c0_i32_1 = arith.constant 0 : i32
    return %c0_i32, %c0_i32_0 : i32, i32
  }
  func.func @transform_2(%arg0: i32) -> (i32, i32) {
    %c0_i32 = arith.constant 0 : i32
    %c0_i32_0 = arith.constant 0 : i32
    %c0_i32_1 = arith.constant 0 : i32
    return %c0_i32, %c0_i32_0 : i32, i32
  }
  func.func @transform_3(%arg0: i32) -> (i32, i32) {
    %c0_i32 = arith.constant 0 : i32
    %c0_i32_0 = arith.constant 0 : i32
    %c0_i32_1 = arith.constant 0 : i32
    return %c0_i32, %c0_i32_0 : i32, i32
  }
  func.func @transform_4(%arg0: i32) -> (i32, i32, i32, i32) {
    %c0_i32 = arith.constant 0 : i32
    %c0_i32_0 = arith.constant 0 : i32
    %c0_i32_1 = arith.constant 0 : i32
    %c0_i32_2 = arith.constant 0 : i32
    return %arg0, %c0_i32, %c0_i32_0, %c0_i32_1 : i32, i32, i32, i32
  }
  func.func @transform_5(%arg0: i32) -> (i32, i32, i32) {
    %c0_i32 = arith.constant 0 : i32
    %c0_i32_0 = arith.constant 0 : i32
    %c0_i32_1 = arith.constant 0 : i32
    return %arg0, %c0_i32, %c0_i32_0 : i32, i32, i32
  }
}

module attributes {stable_mosaic.version = 11 : i64} {
  func.func @_bn2_residual_relu_kernel(%arg0: i32, %arg1: memref<8x128xbf16, #tpu.memory_space<vmem>>, %arg2: memref<8x128xbf16, #tpu.memory_space<vmem>>, %arg3: memref<1x128xf32, #tpu.memory_space<vmem>>, %arg4: memref<1x128xf32, #tpu.memory_space<vmem>>, %arg5: memref<8x128xf32, #tpu.memory_space<vmem>>) attributes {dimension_semantics = [#tpu.dimension_semantics<parallel>], iteration_bounds = array<i64: 4>, scalar_prefetch = 0 : i64, scratch_operands = 0 : i64, tpu.core_type = #tpu.core_type<tc>, window_params = [{transform_indices = @transform_0, window_bounds = array<i64: 8, 128>}, {transform_indices = @transform_1, window_bounds = array<i64: 8, 128>}, {pipeline_mode = #tpu.pipeline_mode<synchronous>, transform_indices = @transform_2, window_bounds = array<i64: 1, 128>}, {pipeline_mode = #tpu.pipeline_mode<synchronous>, transform_indices = @transform_3, window_bounds = array<i64: 1, 128>}, {transform_indices = @transform_4, window_bounds = array<i64: 8, 128>}]} {
    %c0 = arith.constant 0 : index
    %c0_0 = arith.constant 0 : index
    %0 = vector.load %arg1[%c0, %c0_0] : memref<8x128xbf16, #tpu.memory_space<vmem>>, vector<8x128xbf16>
    %1 = arith.extf %0 : vector<8x128xbf16> to vector<8x128xf32>
    %c0_1 = arith.constant 0 : index
    %c0_2 = arith.constant 0 : index
    %2 = vector.load %arg2[%c0_1, %c0_2] : memref<8x128xbf16, #tpu.memory_space<vmem>>, vector<8x128xbf16>
    %3 = arith.extf %2 : vector<8x128xbf16> to vector<8x128xf32>
    %c0_3 = arith.constant 0 : index
    %c0_4 = arith.constant 0 : index
    %4 = vector.load %arg3[%c0_3, %c0_4] : memref<1x128xf32, #tpu.memory_space<vmem>>, vector<1x128xf32>
    %5 = vector.broadcast %4 : vector<1x128xf32> to vector<8x128xf32>
    %6 = arith.mulf %1, %5 : vector<8x128xf32>
    %c0_5 = arith.constant 0 : index
    %c0_6 = arith.constant 0 : index
    %7 = vector.load %arg4[%c0_5, %c0_6] : memref<1x128xf32, #tpu.memory_space<vmem>>, vector<1x128xf32>
    %8 = vector.broadcast %7 : vector<1x128xf32> to vector<8x128xf32>
    %9 = arith.addf %6, %8 : vector<8x128xf32>
    %10 = arith.addf %9, %3 : vector<8x128xf32>
    %cst = arith.constant 0.000000e+00 : f32
    %11 = vector.broadcast %cst : f32 to vector<8x128xf32>
    %12 = arith.maximumf %10, %11 : vector<8x128xf32>
    %c0_7 = arith.constant 0 : index
    %c0_8 = arith.constant 0 : index
    %13 = vector.load %arg5[%c0_7, %c0_8] : memref<8x128xf32, #tpu.memory_space<vmem>>, vector<8x128xf32>
    tpu.vector_store %arg5[%c0_7, %c0_8], %12 {strides = array<i32>} : memref<8x128xf32, #tpu.memory_space<vmem>>, vector<8x128xf32>,
    return
  }
  func.func @transform_0(%arg0: i32) -> (i32, i32) {
    %c0_i32 = arith.constant 0 : i32
    %c0_i32_0 = arith.constant 0 : i32
    return %arg0, %c0_i32 : i32, i32
  }
  func.func @transform_1(%arg0: i32) -> (i32, i32) {
    %c0_i32 = arith.constant 0 : i32
    %c0_i32_0 = arith.constant 0 : i32
    return %arg0, %c0_i32 : i32, i32
  }
  func.func @transform_2(%arg0: i32) -> (i32, i32) {
    %c0_i32 = arith.constant 0 : i32
    %c0_i32_0 = arith.constant 0 : i32
    %c0_i32_1 = arith.constant 0 : i32
    return %c0_i32, %c0_i32_0 : i32, i32
  }
  func.func @transform_3(%arg0: i32) -> (i32, i32) {
    %c0_i32 = arith.constant 0 : i32
    %c0_i32_0 = arith.constant 0 : i32
    %c0_i32_1 = arith.constant 0 : i32
    return %c0_i32, %c0_i32_0 : i32, i32
  }
  func.func @transform_4(%arg0: i32) -> (i32, i32) {
    %c0_i32 = arith.constant 0 : i32
    %c0_i32_0 = arith.constant 0 : i32
    return %arg0, %c0_i32 : i32, i32
  }
}

</mosaic_0001>

<llo_original>
// kernel: basic_block.5
$region0: #{basic_block.5}
  #allocation0 [shape = 'u32[]', space=smem, size = 0x4, offset = 0x4, fixed_abs, tag = 'smem constant byte address 0x4 - core index']
  #allocation1 [shape = 'u32[144,128]{1,0:T(1,128)}', space=vmem, size = 0x12000, scoped, tag = 'internal scratch']
  %s0 = inlined_call_operand.vmem [shape: bf16[32,128], index: 0, kind: input, shape index: {}]
  %s1 = inlined_call_operand.vmem [shape: bf16[32,128], index: 1, kind: input, shape index: {}]
  %s2 = inlined_call_operand.vmem [shape: f32[1,128], index: 2, kind: input, shape index: {}]
  %s3 = inlined_call_operand.vmem [shape: f32[1,128], index: 3, kind: input, shape index: {}]
  %s4 = inlined_call_operand.vmem [shape: f32[32,128], index: 4, kind: output, shape index: {}]
  %s5 = sld [smem:[#allocation0]]
  $region49: #{basic_block.5} parent=0
    _
  %s7 = ssub.s32 1, %s5
  %s8 = scalar_select 0, %s7, %s5
  loop: start=0, step=1, limit=6
  $region2: #{basic_block.5} parent=0 // loop_pre_header
    _
  $region3: #{basic_block.5} parent=0 // loop_header
    %s10 = sphi 0, %s14
    %p11 = scmp.ge.s32.totalorder %s10, 6
    %s20 = sphi 0, %s22
    %s23 = sphi 0, %s20
    %s24 = sphi 0, %s23
    %s40 = sphi 0, %s24
    %s46 = sphi 0, %s48
    %s49 = sphi 0, %s46
    %s50 = sphi 0, %s49
    %s66 = sphi 0, %s50
    %s70 = sphi 0, %s70
    %s72 = sphi 0, %s70
    %s73 = sphi 0, %s72
    %s87 = sphi 0, %s73
    %s91 = sphi 0, %s91
    %s93 = sphi 0, %s91
    %s94 = sphi 0, %s93
    %s108 = sphi 0, %s94
    %s114 = sphi 0, %s116
    %s117 = sphi 0, %s114
    %s118 = sphi 0, %s117
    %s134 = sphi 0, %s118
  $region4: #{basic_block.5} parent=0 // loop_header_branch
    %13 = sbr.rel (%p11) target = $region8
  $region5: #{basic_block.5} parent=0 // loop_body
    %s15 = ssub.s32 %s10, 1
    %s16 = ssub.s32 %s10, 2
    %s17 = sadd.s32 %s10, 1
    %s18 = ssub.s32 %s10, %s17
    %p19 = scmp.eq.s32.totalorder %s18, 0
    %s21 = sadd.s32 %s20, 1
    %s22 = scalar_select %p19, %s20, %s21
    %p25 = pneg %p19
    %p26 = scmp.eq.s32.totalorder %s10, 3
    %p27 = por %p25, %p26
    %p28 = scmp.ne.s32.totalorder %s20, %s23
    %p29 = scmp.eq.s32.totalorder %s10, 0
    %p30 = por %p28, %p29
    %p31 = scmp.ne.s32.totalorder %s20, %s23
    %p32 = scmp.eq.s32.totalorder %s15, 3
    %p33 = por %p31, %p32
    %p34 = scmp.ne.s32.totalorder %s23, %s24
    %p35 = scmp.eq.s32.totalorder %s15, 0
    %p36 = por %p34, %p35
    %p37 = scmp.ne.s32.totalorder %s23, %s24
    %p38 = scmp.eq.s32.totalorder %s16, 3
    %p39 = por %p37, %p38
    %p41 = scmp.ne.s32.totalorder %s24, %s40
    %p42 = scmp.eq.s32.totalorder %s16, 0
    %p43 = por %p41, %p42
    %s44 = ssub.s32 %s10, %s17
    %p45 = scmp.eq.s32.totalorder %s44, 0
    %s47 = sadd.s32 %s46, 1
    %s48 = scalar_select %p45, %s46, %s47
    %p51 = pneg %p45
    %p52 = scmp.eq.s32.totalorder %s10, 3
    %p53 = por %p51, %p52
    %p54 = scmp.ne.s32.totalorder %s46, %s49
    %p55 = scmp.eq.s32.totalorder %s10, 0
    %p56 = por %p54, %p55
    %p57 = scmp.ne.s32.totalorder %s46, %s49
    %p58 = scmp.eq.s32.totalorder %s15, 3
    %p59 = por %p57, %p58
    %p60 = scmp.ne.s32.totalorder %s49, %s50
    %p61 = scmp.eq.s32.totalorder %s15, 0
    %p62 = por %p60, %p61
    %p63 = scmp.ne.s32.totalorder %s49, %s50
    %p64 = scmp.eq.s32.totalorder %s16, 3
    %p65 = por %p63, %p64
    %p67 = scmp.ne.s32.totalorder %s50, %s66
    %p68 = scmp.eq.s32.totalorder %s16, 0
    %p69 = por %p67, %p68
    %s71 = sadd.s32 %s70, 1
    %p74 = scmp.eq.s32.totalorder %s10, 3
    %p75 = scmp.ne.s32.totalorder %s70, %s72
    %p76 = scmp.eq.s32.totalorder %s10, 0
    %p77 = por %p75, %p76
    %p78 = scmp.ne.s32.totalorder %s70, %s72
    %p79 = scmp.eq.s32.totalorder %s15, 3
    %p80 = por %p78, %p79
    %p81 = scmp.ne.s32.totalorder %s72, %s73
    %p82 = scmp.eq.s32.totalorder %s15, 0
    %p83 = por %p81, %p82
    %p84 = scmp.ne.s32.totalorder %s72, %s73
    %p85 = scmp.eq.s32.totalorder %s16, 3
    %p86 = por %p84, %p85
    %p88 = scmp.ne.s32.totalorder %s73, %s87
    %p89 = scmp.eq.s32.totalorder %s16, 0
    %p90 = por %p88, %p89
    %s92 = sadd.s32 %s91, 1
    %p95 = scmp.eq.s32.totalorder %s10, 3
    %p96 = scmp.ne.s32.totalorder %s91, %s93
    %p97 = scmp.eq.s32.totalorder %s10, 0
    %p98 = por %p96, %p97
    %p99 = scmp.ne.s32.totalorder %s91, %s93
    %p100 = scmp.eq.s32.totalorder %s15, 3
    %p101 = por %p99, %p100
    %p102 = scmp.ne.s32.totalorder %s93, %s94
    %p103 = scmp.eq.s32.totalorder %s15, 0
    %p104 = por %p102, %p103
    %p105 = scmp.ne.s32.totalorder %s93, %s94
    %p106 = scmp.eq.s32.totalorder %s16, 3
    %p107 = por %p105, %p106
    %p109 = scmp.ne.s32.totalorder %s94, %s108
    %p110 = scmp.eq.s32.totalorder %s16, 0
    %p111 = por %p109, %p110
    %s112 = ssub.s32 %s10, %s17
    %p113 = scmp.eq.s32.totalorder %s112, 0
    %s115 = sadd.s32 %s114, 1
    %s116 = scalar_select %p113, %s114, %s115
    %p119 = pneg %p113
    %p120 = scmp.eq.s32.totalorder %s10, 3
    %p121 = por %p119, %p120
    %p122 = scmp.ne.s32.totalorder %s114, %s117
    %p123 = scmp.eq.s32.totalorder %s10, 0
    %p124 = por %p122, %p123
    %p125 = scmp.ne.s32.totalorder %s114, %s117
    %p126 = scmp.eq.s32.totalorder %s15, 3
    %p127 = por %p125, %p126
    %p128 = scmp.ne.s32.totalorder %s117, %s118
    %p129 = scmp.eq.s32.totalorder %s15, 0
    %p130 = por %p128, %p129
    %p131 = scmp.ne.s32.totalorder %s117, %s118
    %p132 = scmp.eq.s32.totalorder %s16, 3
    %p133 = por %p131, %p132
    %p135 = scmp.ne.s32.totalorder %s118, %s134
    %p136 = scmp.eq.s32.totalorder %s16, 0
    %p137 = por %p135, %p136
    %p138 = scmp.le.s32.totalorder 1, %s10
    %p139 = scmp.lt.s32.totalorder %s10, 5
    %p140 = pnand %p138, %p139
    %p141 = pneg %p140
    // Predicated region
    $region9: #{basic_block.5} parent=5 // pred_check
      _
    $region10: #{basic_block.5} parent=5 // pred_check_branch
      %143 = sbr.rel (%p140) target = $region12
    $region11: #{basic_block.5} parent=5 // pred_region
      %s144 = ssub.s32 %s10, 1
      // Predicated region
      $region13: #{basic_block.5} parent=11 // pred_check
        %p145 = pneg %p83
      $region14: #{basic_block.5} parent=11 // pred_check_branch
        %147 = sbr.rel (%p145) target = $region16
      $region15: #{basic_block.5} parent=11 // pred_region
        _
      $region16: #{basic_block.5} parent=11 // pred_fallthru
        _
      // Predicated region
      $region17: #{basic_block.5} parent=11 // pred_check
        %p148 = pneg %p104
      $region18: #{basic_block.5} parent=11 // pred_check_branch
        %150 = sbr.rel (%p148) target = $region20
      $region19: #{basic_block.5} parent=11 // pred_region
        _
      $region20: #{basic_block.5} parent=11 // pred_fallthru
        _
    $region12: #{basic_block.5} parent=5 // pred_fallthru
      _
    %p151 = scmp.lt.s32.totalorder %s10, 4
    // Predicated region
    $region21: #{basic_block.5} parent=5 // pred_check
      %p152 = pneg %p151
    $region22: #{basic_block.5} parent=5 // pred_check_branch
      %154 = sbr.rel (%p152) target = $region24
    $region23: #{basic_block.5} parent=5 // pred_region
      // Predicated region
      $region25: #{basic_block.5} parent=23 // pred_check
        %p155 = pneg %p30
      $region26: #{basic_block.5} parent=23 // pred_check_branch
        %157 = sbr.rel (%p155) target = $region28
      $region27: #{basic_block.5} parent=23 // pred_region
        %p158 = scmp.lt.s32.totalorder %s10, 3
        %s159 = scalar_select %p158, %s10, 3
        %s160 = smul.addr %s159, 4
        %s161 = scalar_lea.vmem %s0, %s160
      $region28: #{basic_block.5} parent=23 // pred_fallthru
        _
      // Predicated region
      $region29: #{basic_block.5} parent=23 // pred_check
        %p162 = pneg %p56
      $region30: #{basic_block.5} parent=23 // pred_check_branch
        %164 = sbr.rel (%p162) target = $region32
      $region31: #{basic_block.5} parent=23 // pred_region
        %p165 = scmp.lt.s32.totalorder %s10, 3
        %s166 = scalar_select %p165, %s10, 3
        %s167 = smul.addr %s166, 4
        %s168 = scalar_lea.vmem %s1, %s167
      $region32: #{basic_block.5} parent=23 // pred_fallthru
        _
    $region24: #{basic_block.5} parent=5 // pred_fallthru
      _
    %p169 = scmp.le.s32.totalorder 1, %s10
    %p170 = scmp.lt.s32.totalorder %s10, 5
    %p171 = pnand %p169, %p170
    %p172 = pneg %p171
    // Predicated region
    $region33: #{basic_block.5} parent=5 // pred_check
      _
    $region34: #{basic_block.5} parent=5 // pred_check_branch
      %174 = sbr.rel (%p171) target = $region36
    $region35: #{basic_block.5} parent=5 // pred_region
      %s175 = ssub.s32 %s10, 1
      %p176 = scmp.lt.s32.totalorder %s15, 3
      %s177 = scalar_select %p176, %s15, 3
      %s178 = smul.addr %s177, 4
      %s179 = scalar_lea.vmem %s0, %s178
      %p180 = pneg %p36
      %p181 = pneg %p33
      %p182 = scmp.lt.s32.totalorder %s15, 3
      %s183 = scalar_select %p182, %s15, 3
      %s184 = smul.addr %s183, 4
      %s185 = scalar_lea.vmem %s1, %s184
      %p186 = pneg %p62
      %p187 = pneg %p59
      %p188 = pneg %p83
      %p189 = pneg %p80
      %p190 = pneg %p104
      %p191 = pneg %p101
      %p192 = pneg %p130
      %p193 = pneg %p127
      %p194 = scmp.lt.s32.totalorder %s15, 3
      %s195 = scalar_select %p194, %s15, 3
      %s196 = smul.addr %s195, 8
      %s197 = scalar_lea.vmem %s4, %s196
      %p198 = scmp.lt.s32.totalorder %s15, 3
      %s199 = scalar_select %p198, %s15, 3
      %s200 = smul.addr %s199, 4
      %s201 = scalar_lea.vmem %s0, %s200
      %p202 = scmp.lt.s32.totalorder %s15, 3
      %s203 = scalar_select %p202, %s15, 3
      %s204 = smul.addr %s203, 4
      %s205 = scalar_lea.vmem %s1, %s204
      %p206 = scmp.lt.s32.totalorder %s15, 3
      %s207 = scalar_select %p206, %s15, 3
      %s208 = smul.addr %s207, 8
      %s209 = scalar_lea.vmem %s4, %s208
      %v210 = vld [vmem:[%s201] sm:$0xf]
      %v211 = vunpack.c.l.bf16 %v210
      %v212 = vld [vmem:[%s205] sm:$0xf]
      %v213 = vunpack.c.l.bf16 %v212
      %v214 = vld [vmem:[%s2] sm:$0x1]
      %v216 = vlaneseq
      %v217 = vshrl.u32 %v216, 7
      %v218 = vsub.s32 0, %v217
      %v219 = vrot.slane %v214, %v218
      %v221 = vmul.f32 %v211, %v219
      %v222 = vld [vmem:[%s3] sm:$0x1]
      %v224 = vlaneseq
      %v225 = vshrl.u32 %v224, 7
      %v226 = vsub.s32 0, %v225
      %v227 = vrot.slane %v222, %v226
      %v229 = vadd.f32 %v221, %v227
      %v230 = vadd.f32 %v229, %v213
      %v231 = vmax.f32 %v230, 0.0
      %232 = vst [vmem:[%s209] sm:$0xff] %v231
      %p233 = scmp.lt.s32.totalorder %s15, 3
      %s234 = scalar_select %p233, %s15, 3
      %s235 = smul.addr %s234, 8
      %s236 = scalar_lea.vmem %s4, %s235
      // Predicated region
      $region37: #{basic_block.5} parent=35 // pred_check
        %p237 = pneg %p127
      $region38: #{basic_block.5} parent=35 // pred_check_branch
        %239 = sbr.rel (%p237) target = $region40
      $region39: #{basic_block.5} parent=35 // pred_region
        _
      $region40: #{basic_block.5} parent=35 // pred_fallthru
        _
    $region36: #{basic_block.5} parent=5 // pred_fallthru
      _
    %p240 = scmp.le.s32.totalorder 2, %s10
    // Predicated region
    $region41: #{basic_block.5} parent=5 // pred_check
      %p241 = pneg %p240
    $region42: #{basic_block.5} parent=5 // pred_check_branch
      %243 = sbr.rel (%p241) target = $region44
    $region43: #{basic_block.5} parent=5 // pred_region
      %s244 = ssub.s32 %s10, 2
      // Predicated region
      $region45: #{basic_block.5} parent=43 // pred_check
        %p245 = pneg %p133
      $region46: #{basic_block.5} parent=43 // pred_check_branch
        %247 = sbr.rel (%p245) target = $region48
      $region47: #{basic_block.5} parent=43 // pred_region
        %p248 = scmp.lt.s32.totalorder %s16, 3
        %s249 = scalar_select %p248, %s16, 3
        %s250 = smul.addr %s249, 8
        %s251 = scalar_lea.vmem %s4, %s250
      $region48: #{basic_block.5} parent=43 // pred_fallthru
        _
    $region44: #{basic_block.5} parent=5 // pred_fallthru
      _
  $region6: #{basic_block.5} parent=0 // loop_footer
    %s14 = sadd.s32 1, %s10
  $region7: #{basic_block.5} parent=0 // loop_footer_branch
    %9 = sbr.rel target = $region3
  $region8: #{basic_block.5} parent=0 // loop_exit
    _

// kernel: basic_block.4
$region0: #{basic_block.4}
  #allocation0 [shape = 'u32[]', space=smem, size = 0x4, offset = 0x4, fixed_abs, tag = 'smem constant byte address 0x4 - core index']
  #allocation1 [shape = 'u32[144,128]{1,0:T(1,128)}', space=vmem, size = 0x12000, scoped, tag = 'internal scratch']
  #allocation2 [shape = 'f32[18,18,8]{2,1,0:T(8,128)}', space=vmem, size = 0x36000, scoped, tag = 'scratch operand']
  #allocation3 [shape = 'f32[256,72]{1,0:T(8,128)}', space=vmem, size = 0x20000, scoped, tag = 'scratch operand']
  %s0 = inlined_call_operand.vmem [shape: bf16[2,16,16,8], index: 0, kind: input, shape index: {}]
  %s1 = inlined_call_operand.vmem [shape: f32[1,8], index: 1, kind: input, shape index: {}]
  %s2 = inlined_call_operand.vmem [shape: f32[1,8], index: 2, kind: input, shape index: {}]
  %s3 = inlined_call_operand.vmem [shape: bf16[72,8], index: 3, kind: input, shape index: {}]
  %s4 = inlined_call_operand.vmem [shape: bf16[2,16,16,8], index: 4, kind: output, shape index: {0}]
  %s5 = inlined_call_operand.vmem [shape: f32[2,2,8], index: 5, kind: output, shape index: {1}]
  %6 = xla_tuple %s4, %s5
  %s7 = sld [smem:[#allocation0]]
  $region57: #{basic_block.4} parent=0
    _
  %s9 = ssub.s32 1, %s7
  %s10 = scalar_select 0, %s9, %s7
  loop: start=0, step=1, limit=4
  $region2: #{basic_block.4} parent=0 // loop_pre_header
    _
  $region3: #{basic_block.4} parent=0 // loop_header
    %s12 = sphi 0, %s16
    %p13 = scmp.ge.s32.totalorder %s12, 4
    %s22 = sphi 0, %s24
    %s25 = sphi 0, %s22
    %s26 = sphi 0, %s25
    %s42 = sphi 0, %s26
    %s46 = sphi 0, %s46
    %s48 = sphi 0, %s46
    %s49 = sphi 0, %s48
    %s63 = sphi 0, %s49
    %s67 = sphi 0, %s67
    %s69 = sphi 0, %s67
    %s70 = sphi 0, %s69
    %s84 = sphi 0, %s70
    %s88 = sphi 0, %s88
    %s90 = sphi 0, %s88
    %s91 = sphi 0, %s90
    %s105 = sphi 0, %s91
    %s111 = sphi 0, %s113
    %s114 = sphi 0, %s111
    %s115 = sphi 0, %s114
    %s131 = sphi 0, %s115
    %s137 = sphi 0, %s139
    %s140 = sphi 0, %s137
    %s141 = sphi 0, %s140
    %s157 = sphi 0, %s141
  $region4: #{basic_block.4} parent=0 // loop_header_branch
    %15 = sbr.rel (%p13) target = $region8
  $region5: #{basic_block.4} parent=0 // loop_body
    %s17 = ssub.s32 %s12, 1
    %s18 = ssub.s32 %s12, 2
    %s19 = sadd.s32 %s12, 1
    %s20 = ssub.s32 %s12, %s19
    %p21 = scmp.eq.s32.totalorder %s20, 0
    %s23 = sadd.s32 %s22, 1
    %s24 = scalar_select %p21, %s22, %s23
    %p27 = pneg %p21
    %p28 = scmp.eq.s32.totalorder %s12, 1
    %p29 = por %p27, %p28
    %p30 = scmp.ne.s32.totalorder %s22, %s25
    %p31 = scmp.eq.s32.totalorder %s12, 0
    %p32 = por %p30, %p31
    %p33 = scmp.ne.s32.totalorder %s22, %s25
    %p34 = scmp.eq.s32.totalorder %s17, 1
    %p35 = por %p33, %p34
    %p36 = scmp.ne.s32.totalorder %s25, %s26
    %p37 = scmp.eq.s32.totalorder %s17, 0
    %p38 = por %p36, %p37
    %p39 = scmp.ne.s32.totalorder %s25, %s26
    %p40 = scmp.eq.s32.totalorder %s18, 1
    %p41 = por %p39, %p40
    %p43 = scmp.ne.s32.totalorder %s26, %s42
    %p44 = scmp.eq.s32.totalorder %s18, 0
    %p45 = por %p43, %p44
    %s47 = sadd.s32 %s46, 1
    %p50 = scmp.eq.s32.totalorder %s12, 1
    %p51 = scmp.ne.s32.totalorder %s46, %s48
    %p52 = scmp.eq.s32.totalorder %s12, 0
    %p53 = por %p51, %p52
    %p54 = scmp.ne.s32.totalorder %s46, %s48
    %p55 = scmp.eq.s32.totalorder %s17, 1
    %p56 = por %p54, %p55
    %p57 = scmp.ne.s32.totalorder %s48, %s49
    %p58 = scmp.eq.s32.totalorder %s17, 0
    %p59 = por %p57, %p58
    %p60 = scmp.ne.s32.totalorder %s48, %s49
    %p61 = scmp.eq.s32.totalorder %s18, 1
    %p62 = por %p60, %p61
    %p64 = scmp.ne.s32.totalorder %s49, %s63
    %p65 = scmp.eq.s32.totalorder %s18, 0
    %p66 = por %p64, %p65
    %s68 = sadd.s32 %s67, 1
    %p71 = scmp.eq.s32.totalorder %s12, 1
    %p72 = scmp.ne.s32.totalorder %s67, %s69
    %p73 = scmp.eq.s32.totalorder %s12, 0
    %p74 = por %p72, %p73
    %p75 = scmp.ne.s32.totalorder %s67, %s69
    %p76 = scmp.eq.s32.totalorder %s17, 1
    %p77 = por %p75, %p76
    %p78 = scmp.ne.s32.totalorder %s69, %s70
    %p79 = scmp.eq.s32.totalorder %s17, 0
    %p80 = por %p78, %p79
    %p81 = scmp.ne.s32.totalorder %s69, %s70
    %p82 = scmp.eq.s32.totalorder %s18, 1
    %p83 = por %p81, %p82
    %p85 = scmp.ne.s32.totalorder %s70, %s84
    %p86 = scmp.eq.s32.totalorder %s18, 0
    %p87 = por %p85, %p86
    %s89 = sadd.s32 %s88, 1
    %p92 = scmp.eq.s32.totalorder %s12, 1
    %p93 = scmp.ne.s32.totalorder %s88, %s90
    %p94 = scmp.eq.s32.totalorder %s12, 0
    %p95 = por %p93, %p94
    %p96 = scmp.ne.s32.totalorder %s88, %s90
    %p97 = scmp.eq.s32.totalorder %s17, 1
    %p98 = por %p96, %p97
    %p99 = scmp.ne.s32.totalorder %s90, %s91
    %p100 = scmp.eq.s32.totalorder %s17, 0
    %p101 = por %p99, %p100
    %p102 = scmp.ne.s32.totalorder %s90, %s91
    %p103 = scmp.eq.s32.totalorder %s18, 1
    %p104 = por %p102, %p103
    %p106 = scmp.ne.s32.totalorder %s91, %s105
    %p107 = scmp.eq.s32.totalorder %s18, 0
    %p108 = por %p106, %p107
    %s109 = ssub.s32 %s12, %s19
    %p110 = scmp.eq.s32.totalorder %s109, 0
    %s112 = sadd.s32 %s111, 1
    %s113 = scalar_select %p110, %s111, %s112
    %p116 = pneg %p110
    %p117 = scmp.eq.s32.totalorder %s12, 1
    %p118 = por %p116, %p117
    %p119 = scmp.ne.s32.totalorder %s111, %s114
    %p120 = scmp.eq.s32.totalorder %s12, 0
    %p121 = por %p119, %p120
    %p122 = scmp.ne.s32.totalorder %s111, %s114
    %p123 = scmp.eq.s32.totalorder %s17, 1
    %p124 = por %p122, %p123
    %p125 = scmp.ne.s32.totalorder %s114, %s115
    %p126 = scmp.eq.s32.totalorder %s17, 0
    %p127 = por %p125, %p126
    %p128 = scmp.ne.s32.totalorder %s114, %s115
    %p129 = scmp.eq.s32.totalorder %s18, 1
    %p130 = por %p128, %p129
    %p132 = scmp.ne.s32.totalorder %s115, %s131
    %p133 = scmp.eq.s32.totalorder %s18, 0
    %p134 = por %p132, %p133
    %s135 = ssub.s32 %s12, %s19
    %p136 = scmp.eq.s32.totalorder %s135, 0
    %s138 = sadd.s32 %s137, 1
    %s139 = scalar_select %p136, %s137, %s138
    %p142 = pneg %p136
    %p143 = scmp.eq.s32.totalorder %s12, 1
    %p144 = por %p142, %p143
    %p145 = scmp.ne.s32.totalorder %s137, %s140
    %p146 = scmp.eq.s32.totalorder %s12, 0
    %p147 = por %p145, %p146
    %p148 = scmp.ne.s32.totalorder %s137, %s140
    %p149 = scmp.eq.s32.totalorder %s17, 1
    %p150 = por %p148, %p149
    %p151 = scmp.ne.s32.totalorder %s140, %s141
    %p152 = scmp.eq.s32.totalorder %s17, 0
    %p153 = por %p151, %p152
    %p154 = scmp.ne.s32.totalorder %s140, %s141
    %p155 = scmp.eq.s32.totalorder %s18, 1
    %p156 = por %p154, %p155
    %p158 = scmp.ne.s32.totalorder %s141, %s157
    %p159 = scmp.eq.s32.totalorder %s18, 0
    %p160 = por %p158, %p159
    %p161 = scmp.le.s32.totalorder 1, %s12
    %p162 = scmp.lt.s32.totalorder %s12, 3
    %p163 = pnand %p161, %p162
    %p164 = pneg %p163
    // Predicated region
    $region9: #{basic_block.4} parent=5 // pred_check
      _
    $region10: #{basic_block.4} parent=5 // pred_check_branch
      %166 = sbr.rel (%p163) target = $region12
    $region11: #{basic_block.4} parent=5 // pred_region
      %s167 = ssub.s32 %s12, 1
      // Predicated region
      $region13: #{basic_block.4} parent=11 // pred_check
        %p168 = pneg %p59
      $region14: #{basic_block.4} parent=11 // pred_check_branch
        %170 = sbr.rel (%p168) target = $region16
      $region15: #{basic_block.4} parent=11 // pred_region
        _
      $region16: #{basic_block.4} parent=11 // pred_fallthru
        _
      // Predicated region
      $region17: #{basic_block.4} parent=11 // pred_check
        %p171 = pneg %p80
      $region18: #{basic_block.4} parent=11 // pred_check_branch
        %173 = sbr.rel (%p171) target = $region20
      $region19: #{basic_block.4} parent=11 // pred_region
        _
      $region20: #{basic_block.4} parent=11 // pred_fallthru
        _
      // Predicated region
      $region21: #{basic_block.4} parent=11 // pred_check
        %p174 = pneg %p101
      $region22: #{basic_block.4} parent=11 // pred_check_branch
        %176 = sbr.rel (%p174) target = $region24
      $region23: #{basic_block.4} parent=11 // pred_region
        _
      $region24: #{basic_block.4} parent=11 // pred_fallthru
        _
    $region12: #{basic_block.4} parent=5 // pred_fallthru
      _
    %p177 = scmp.lt.s32.totalorder %s12, 2
    // Predicated region
    $region25: #{basic_block.4} parent=5 // pred_check
      %p178 = pneg %p177
    $region26: #{basic_block.4} parent=5 // pred_check_branch
      %180 = sbr.rel (%p178) target = $region28
    $region27: #{basic_block.4} parent=5 // pred_region
      // Predicated region
      $region29: #{basic_block.4} parent=27 // pred_check
        %p181 = pneg %p32
      $region30: #{basic_block.4} parent=27 // pred_check_branch
        %183 = sbr.rel (%p181) target = $region32
      $region31: #{basic_block.4} parent=27 // pred_region
        %p184 = scmp.lt.s32.totalorder %s12, 1
        %s185 = scalar_select %p184, %s12, 1
        %s186 = smul.addr %s185, 32
        %s187 = smul.addr %s186, 4
        %s188 = scalar_lea.vmem %s0, %s187
      $region32: #{basic_block.4} parent=27 // pred_fallthru
        _
    $region28: #{basic_block.4} parent=5 // pred_fallthru
      _
    %p189 = scmp.le.s32.totalorder 1, %s12
    %p190 = scmp.lt.s32.totalorder %s12, 3
    %p191 = pnand %p189, %p190
    %p192 = pneg %p191
    // Predicated region
    $region33: #{basic_block.4} parent=5 // pred_check
      _
    $region34: #{basic_block.4} parent=5 // pred_check_branch
      %194 = sbr.rel (%p191) target = $region36
    $region35: #{basic_block.4} parent=5 // pred_region
      %s195 = ssub.s32 %s12, 1
      %p196 = scmp.lt.s32.totalorder %s17, 1
      %s197 = scalar_select %p196, %s17, 1
      %s198 = smul.addr %s197, 32
      %s199 = smul.addr %s198, 4
      %s200 = scalar_lea.vmem %s0, %s199
      %p201 = pneg %p38
      %p202 = pneg %p35
      %p203 = pneg %p59
      %p204 = pneg %p56
      %p205 = pneg %p80
      %p206 = pneg %p77
      %p207 = pneg %p101
      %p208 = pneg %p98
      %p209 = pneg %p127
      %p210 = pneg %p124
      %p211 = scmp.lt.s32.totalorder %s17, 1
      %s212 = scalar_select %p211, %s17, 1
      %s213 = smul.addr %s212, 32
      %s214 = smul.addr %s213, 4
      %s215 = scalar_lea.vmem %s4, %s214
      %p216 = pneg %p153
      %p217 = pneg %p150
      %p218 = scmp.lt.s32.totalorder %s17, 1
      %s219 = scalar_select %p218, %s17, 1
      %s220 = smul.addr %s219, 2
      %s221 = scalar_lea.vmem %s5, %s220
      %p222 = scmp.lt.s32.totalorder %s17, 1
      %s223 = scalar_select %p222, %s17, 1
      %s224 = smul.addr %s223, 32
      %s225 = smul.addr %s224, 4
      %s226 = scalar_lea.vmem %s0, %s225
      %p227 = scmp.lt.s32.totalorder %s17, 1
      %s228 = scalar_select %p227, %s17, 1
      %s229 = smul.addr %s228, 32
      %s230 = smul.addr %s229, 4
      %s231 = scalar_lea.vmem %s4, %s230
      %p232 = scmp.lt.s32.totalorder %s17, 1
      %s233 = scalar_select %p232, %s17, 1
      %s234 = smul.addr %s233, 2
      %s235 = scalar_lea.vmem %s5, %s234
      %v237 = vld [vmem:[%s226] sm:$0xf]
      %v238 = vld [vmem:[%s226 + $0x4] sm:$0xf]
      %v239 = vld [vmem:[%s226 + $0x8] sm:$0xf]
      %v240 = vld [vmem:[%s226 + $0xc] sm:$0xf]
      %v241 = vld [vmem:[%s226 + $0x10] sm:$0xf]
      %v242 = vld [vmem:[%s226 + $0x14] sm:$0xf]
      %v243 = vld [vmem:[%s226 + $0x18] sm:$0xf]
      %v244 = vld [vmem:[%s226 + $0x1c] sm:$0xf]
      %v245 = vld [vmem:[%s226 + $0x20] sm:$0xf]
      %v246 = vld [vmem:[%s226 + $0x24] sm:$0xf]
      %v247 = vld [vmem:[%s226 + $0x28] sm:$0xf]
      %v248 = vld [vmem:[%s226 + $0x2c] sm:$0xf]
      %v249 = vld [vmem:[%s226 + $0x30] sm:$0xf]
      %v250 = vld [vmem:[%s226 + $0x34] sm:$0xf]
      %v251 = vld [vmem:[%s226 + $0x38] sm:$0xf]
      %v252 = vld [vmem:[%s226 + $0x3c] sm:$0xf]
      %v253 = vld [vmem:[%s226 + $0x40] sm:$0xf]
      %v254 = vld [vmem:[%s226 + $0x44] sm:$0xf]
      %v255 = vld [vmem:[%s226 + $0x48] sm:$0xf]
      %v256 = vld [vmem:[%s226 + $0x4c] sm:$0xf]
      %v257 = vld [vmem:[%s226 + $0x50] sm:$0xf]
      %v258 = vld [vmem:[%s226 + $0x54] sm:$0xf]
      %v259 = vld [vmem:[%s226 + $0x58] sm:$0xf]
      %v260 = vld [vmem:[%s226 + $0x5c] sm:$0xf]
      %v261 = vld [vmem:[%s226 + $0x60] sm:$0xf]
      %v262 = vld [vmem:[%s226 + $0x64] sm:$0xf]
      %v263 = vld [vmem:[%s226 + $0x68] sm:$0xf]
      %v264 = vld [vmem:[%s226 + $0x6c] sm:$0xf]
      %v265 = vld [vmem:[%s226 + $0x70] sm:$0xf]
      %v266 = vld [vmem:[%s226 + $0x74] sm:$0xf]
      %v267 = vld [vmem:[%s226 + $0x78] sm:$0xf]
      %v268 = vld [vmem:[%s226 + $0x7c] sm:$0xf]
      %v269 = vunpack.c.l.bf16 %v237
      %v270 = vunpack.c.l.bf16 %v238
      %v271 = vunpack.c.l.bf16 %v239
      %v272 = vunpack.c.l.bf16 %v240
      %v273 = vunpack.c.l.bf16 %v241
      %v274 = vunpack.c.l.bf16 %v242
      %v275 = vunpack.c.l.bf16 %v243
      %v276 = vunpack.c.l.bf16 %v244
      %v277 = vunpack.c.l.bf16 %v245
      %v278 = vunpack.c.l.bf16 %v246
      %v279 = vunpack.c.l.bf16 %v247
      %v280 = vunpack.c.l.bf16 %v248
      %v281 = vunpack.c.l.bf16 %v249
      %v282 = vunpack.c.l.bf16 %v250
      %v283 = vunpack.c.l.bf16 %v251
      %v284 = vunpack.c.l.bf16 %v252
      %v285 = vunpack.c.l.bf16 %v253
      %v286 = vunpack.c.l.bf16 %v254
      %v287 = vunpack.c.l.bf16 %v255
      %v288 = vunpack.c.l.bf16 %v256
      %v289 = vunpack.c.l.bf16 %v257
      %v290 = vunpack.c.l.bf16 %v258
      %v291 = vunpack.c.l.bf16 %v259
      %v292 = vunpack.c.l.bf16 %v260
      %v293 = vunpack.c.l.bf16 %v261
      %v294 = vunpack.c.l.bf16 %v262
      %v295 = vunpack.c.l.bf16 %v263
      %v296 = vunpack.c.l.bf16 %v264
      %v297 = vunpack.c.l.bf16 %v265
      %v298 = vunpack.c.l.bf16 %v266
      %v299 = vunpack.c.l.bf16 %v267
      %v300 = vunpack.c.l.bf16 %v268
      %v301 = vld [vmem:[%s1] sm:$0x1]
      %v303 = vlaneseq
      %v304 = vshrl.u32 %v303, 7
      %v305 = vsub.s32 0, %v304
      %v306 = vrot.slane %v301, %v305
      %v308 = vmul.f32 %v269, %v306
      %v309 = vmul.f32 %v270, %v306
      %v310 = vmul.f32 %v271, %v306
      %v311 = vmul.f32 %v272, %v306
      %v312 = vmul.f32 %v273, %v306
      %v313 = vmul.f32 %v274, %v306
      %v314 = vmul.f32 %v275, %v306
      %v315 = vmul.f32 %v276, %v306
      %v316 = vmul.f32 %v277, %v306
      %v317 = vmul.f32 %v278, %v306
      %v318 = vmul.f32 %v279, %v306
      %v319 = vmul.f32 %v280, %v306
      %v320 = vmul.f32 %v281, %v306
      %v321 = vmul.f32 %v282, %v306
      %v322 = vmul.f32 %v283, %v306
      %v323 = vmul.f32 %v284, %v306
      %v324 = vmul.f32 %v285, %v306
      %v325 = vmul.f32 %v286, %v306
      %v326 = vmul.f32 %v287, %v306
      %v327 = vmul.f32 %v288, %v306
      %v328 = vmul.f32 %v289, %v306
      %v329 = vmul.f32 %v290, %v306
      %v330 = vmul.f32 %v291, %v306
      %v331 = vmul.f32 %v292, %v306
      %v332 = vmul.f32 %v293, %v306
      %v333 = vmul.f32 %v294, %v306
      %v334 = vmul.f32 %v295, %v306
      %v335 = vmul.f32 %v296, %v306
      %v336 = vmul.f32 %v297, %v306
      %v337 = vmul.f32 %v298, %v306
      %v338 = vmul.f32 %v299, %v306
      %v339 = vmul.f32 %v300, %v306
      %v340 = vld [vmem:[%s2] sm:$0x1]
      %v342 = vlaneseq
      %v343 = vshrl.u32 %v342, 7
      %v344 = vsub.s32 0, %v343
      %v345 = vrot.slane %v340, %v344
      %v347 = vadd.f32 %v308, %v345
      %v348 = vadd.f32 %v309, %v345
      %v349 = vadd.f32 %v310, %v345
      %v350 = vadd.f32 %v311, %v345
      %v351 = vadd.f32 %v312, %v345
      %v352 = vadd.f32 %v313, %v345
      %v353 = vadd.f32 %v314, %v345
      %v354 = vadd.f32 %v315, %v345
      %v355 = vadd.f32 %v316, %v345
      %v356 = vadd.f32 %v317, %v345
      %v357 = vadd.f32 %v318, %v345
      %v358 = vadd.f32 %v319, %v345
      %v359 = vadd.f32 %v320, %v345
      %v360 = vadd.f32 %v321, %v345
      %v361 = vadd.f32 %v322, %v345
      %v362 = vadd.f32 %v323, %v345
      %v363 = vadd.f32 %v324, %v345
      %v364 = vadd.f32 %v325, %v345
      %v365 = vadd.f32 %v326, %v345
      %v366 = vadd.f32 %v327, %v345
      %v367 = vadd.f32 %v328, %v345
      %v368 = vadd.f32 %v329, %v345
      %v369 = vadd.f32 %v330, %v345
      %v370 = vadd.f32 %v331, %v345
      %v371 = vadd.f32 %v332, %v345
      %v372 = vadd.f32 %v333, %v345
      %v373 = vadd.f32 %v334, %v345
      %v374 = vadd.f32 %v335, %v345
      %v375 = vadd.f32 %v336, %v345
      %v376 = vadd.f32 %v337, %v345
      %v377 = vadd.f32 %v338, %v345
      %v378 = vadd.f32 %v339, %v345
      %v379 = vmax.f32 %v347, 0.0
      %v380 = vmax.f32 %v348, 0.0
      %v381 = vmax.f32 %v349, 0.0
      %v382 = vmax.f32 %v350, 0.0
      %v383 = vmax.f32 %v351, 0.0
      %v384 = vmax.f32 %v352, 0.0
      %v385 = vmax.f32 %v353, 0.0
      %v386 = vmax.f32 %v354, 0.0
      %v387 = vmax.f32 %v355, 0.0
      %v388 = vmax.f32 %v356, 0.0
      %v389 = vmax.f32 %v357, 0.0
      %v390 = vmax.f32 %v358, 0.0
      %v391 = vmax.f32 %v359, 0.0
      %v392 = vmax.f32 %v360, 0.0
      %v393 = vmax.f32 %v361, 0.0
      %v394 = vmax.f32 %v362, 0.0
      %v395 = vmax.f32 %v363, 0.0
      %v396 = vmax.f32 %v364, 0.0
      %v397 = vmax.f32 %v365, 0.0
      %v398 = vmax.f32 %v366, 0.0
      %v399 = vmax.f32 %v367, 0.0
      %v400 = vmax.f32 %v368, 0.0
      %v401 = vmax.f32 %v369, 0.0
      %v402 = vmax.f32 %v370, 0.0
      %v403 = vmax.f32 %v371, 0.0
      %v404 = vmax.f32 %v372, 0.0
      %v405 = vmax.f32 %v373, 0.0
      %v406 = vmax.f32 %v374, 0.0
      %v407 = vmax.f32 %v375, 0.0
      %v408 = vmax.f32 %v376, 0.0
      %v409 = vmax.f32 %v377, 0.0
      %v410 = vmax.f32 %v378, 0.0
      %vm411 = vcmask 64512
      %412 = vst.msk [vmem:[#allocation2] sm:$0xff] %vm411, 0.0
      %413 = vst.msk [vmem:[#allocation2 + $0x8] sm:$0xff] %vm411, 0.0
      %vm414 = vcmask 58368
      %415 = vst.msk [vmem:[#allocation2 + $0x10] sm:$0x3] %vm414, 0.0
      %s416 = scalar_lea.vmem [#allocation2], 408
      %417 = vst.msk [vmem:[%s416] sm:$0xff] %vm411, 0.0
      %418 = vst.msk [vmem:[%s416 + $0x8] sm:$0xff] %vm411, 0.0
      %419 = vst.msk [vmem:[%s416 + $0x10] sm:$0x3] %vm414, 0.0
      %vm420 = vcmask 57344
      %421 = vst.msk [vmem:[#allocation2] sm:$0x1] %vm420, 0.0
      %422 = vst.msk [vmem:[#allocation2 + $0x18] sm:$0x1] %vm420, 0.0
      %423 = vst.msk [vmem:[#allocation2 + $0x30] sm:$0x1] %vm420, 0.0
      %424 = vst.msk [vmem:[#allocation2 + $0x48] sm:$0x1] %vm420, 0.0
      %425 = vst.msk [vmem:[#allocation2 + $0x60] sm:$0x1] %vm420, 0.0
      %426 = vst.msk [vmem:[#allocation2 + $0x78] sm:$0x1] %vm420, 0.0
      %427 = vst.msk [vmem:[#allocation2 + $0x90] sm:$0x1] %vm420, 0.0
      %428 = vst.msk [vmem:[#allocation2 + $0xa8] sm:$0x1] %vm420, 0.0
      %429 = vst.msk [vmem:[#allocation2 + $0xc0] sm:$0x1] %vm420, 0.0
      %430 = vst.msk [vmem:[#allocation2 + $0xd8] sm:$0x1] %vm420, 0.0
      %431 = vst.msk [vmem:[#allocation2 + $0xf0] sm:$0x1] %vm420, 0.0
      %432 = vst.msk [vmem:[#allocation2 + $0x108] sm:$0x1] %vm420, 0.0
      %433 = vst.msk [vmem:[#allocation2 + $0x120] sm:$0x1] %vm420, 0.0
      %434 = vst.msk [vmem:[#allocation2 + $0x138] sm:$0x1] %vm420, 0.0
      %435 = vst.msk [vmem:[#allocation2 + $0x150] sm:$0x1] %vm420, 0.0
      %436 = vst.msk [vmem:[#allocation2 + $0x168] sm:$0x1] %vm420, 0.0
      %437 = vst.msk [vmem:[#allocation2 + $0x180] sm:$0x1] %vm420, 0.0
      %438 = vst.msk [vmem:[#allocation2 + $0x198] sm:$0x1] %vm420, 0.0
      %439 = vst.msk [vmem:[#allocation2 + $0x11] sm:$0x1] %vm420, 0.0
      %440 = vst.msk [vmem:[#allocation2 + $0x29] sm:$0x1] %vm420, 0.0
      %441 = vst.msk [vmem:[#allocation2 + $0x41] sm:$0x1] %vm420, 0.0
      %442 = vst.msk [vmem:[#allocation2 + $0x59] sm:$0x1] %vm420, 0.0
      %443 = vst.msk [vmem:[#allocation2 + $0x71] sm:$0x1] %vm420, 0.0
      %444 = vst.msk [vmem:[#allocation2 + $0x89] sm:$0x1] %vm420, 0.0
      %445 = vst.msk [vmem:[#allocation2 + $0xa1] sm:$0x1] %vm420, 0.0
      %446 = vst.msk [vmem:[#allocation2 + $0xb9] sm:$0x1] %vm420, 0.0
      %447 = vst.msk [vmem:[#allocation2 + $0xd1] sm:$0x1] %vm420, 0.0
      %448 = vst.msk [vmem:[#allocation2 + $0xe9] sm:$0x1] %vm420, 0.0
      %449 = vst.msk [vmem:[#allocation2 + $0x101] sm:$0x1] %vm420, 0.0
      %450 = vst.msk [vmem:[#allocation2 + $0x119] sm:$0x1] %vm420, 0.0
      %451 = vst.msk [vmem:[#allocation2 + $0x131] sm:$0x1] %vm420, 0.0
      %452 = vst.msk [vmem:[#allocation2 + $0x149] sm:$0x1] %vm420, 0.0
      %453 = vst.msk [vmem:[#allocation2 + $0x161] sm:$0x1] %vm420, 0.0
      %454 = vst.msk [vmem:[#allocation2 + $0x179] sm:$0x1] %vm420, 0.0
      %455 = vst.msk [vmem:[#allocation2 + $0x191] sm:$0x1] %vm420, 0.0
      %456 = vst.msk [vmem:[#allocation2 + $0x1a9] sm:$0x1] %vm420, 0.0
      %s457 = scalar_lea.vmem [#allocation2], 24
      %458 = vst.msk [vmem:[%s457 + $0x1] sm:$0xff] %vm411, %v379
      %459 = vst.msk [vmem:[%s457 + $0x9] sm:$0xff] %vm411, %v380
      %460 = vst.msk [vmem:[%s457 + $0x19] sm:$0xff] %vm411, %v381
      %461 = vst.msk [vmem:[%s457 + $0x21] sm:$0xff] %vm411, %v382
      %462 = vst.msk [vmem:[%s457 + $0x31] sm:$0xff] %vm411, %v383
      %463 = vst.msk [vmem:[%s457 + $0x39] sm:$0xff] %vm411, %v384
      %464 = vst.msk [vmem:[%s457 + $0x49] sm:$0xff] %vm411, %v385
      %465 = vst.msk [vmem:[%s457 + $0x51] sm:$0xff] %vm411, %v386
      %466 = vst.msk [vmem:[%s457 + $0x61] sm:$0xff] %vm411, %v387
      %467 = vst.msk [vmem:[%s457 + $0x69] sm:$0xff] %vm411, %v388
      %468 = vst.msk [vmem:[%s457 + $0x79] sm:$0xff] %vm411, %v389
      %469 = vst.msk [vmem:[%s457 + $0x81] sm:$0xff] %vm411, %v390
      %470 = vst.msk [vmem:[%s457 + $0x91] sm:$0xff] %vm411, %v391
      %471 = vst.msk [vmem:[%s457 + $0x99] sm:$0xff] %vm411, %v392
      %472 = vst.msk [vmem:[%s457 + $0xa9] sm:$0xff] %vm411, %v393
      %473 = vst.msk [vmem:[%s457 + $0xb1] sm:$0xff] %vm411, %v394
      %474 = vst.msk [vmem:[%s457 + $0xc1] sm:$0xff] %vm411, %v395
      %475 = vst.msk [vmem:[%s457 + $0xc9] sm:$0xff] %vm411, %v396
      %476 = vst.msk [vmem:[%s457 + $0xd9] sm:$0xff] %vm411, %v397
      %477 = vst.msk [vmem:[%s457 + $0xe1] sm:$0xff] %vm411, %v398
      %478 = vst.msk [vmem:[%s457 + $0xf1] sm:$0xff] %vm411, %v399
      %479 = vst.msk [vmem:[%s457 + $0xf9] sm:$0xff] %vm411, %v400
      %480 = vst.msk [vmem:[%s457 + $0x109] sm:$0xff] %vm411, %v401
      %481 = vst.msk [vmem:[%s457 + $0x111] sm:$0xff] %vm411, %v402
      %482 = vst.msk [vmem:[%s457 + $0x121] sm:$0xff] %vm411, %v403
      %483 = vst.msk [vmem:[%s457 + $0x129] sm:$0xff] %vm411, %v404
      %484 = vst.msk [vmem:[%s457 + $0x139] sm:$0xff] %vm411, %v405
      %485 = vst.msk [vmem:[%s457 + $0x141] sm:$0xff] %vm411, %v406
      %486 = vst.msk [vmem:[%s457 + $0x151] sm:$0xff] %vm411, %v407
      %487 = vst.msk [vmem:[%s457 + $0x159] sm:$0xff] %vm411, %v408
      %488 = vst.msk [vmem:[%s457 + $0x169] sm:$0xff] %vm411, %v409
      %489 = vst.msk [vmem:[%s457 + $0x171] sm:$0xff] %vm411, %v410
      %v490 = vld [vmem:[#allocation2] sm:$0xff]
      %v491 = vld [vmem:[#allocation2 + $0x8] sm:$0xff]
      %v492 = vld [vmem:[#allocation2 + $0x18] sm:$0xff]
      %v493 = vld [vmem:[#allocation2 + $0x20] sm:$0xff]
      %v494 = vld [vmem:[#allocation2 + $0x30] sm:$0xff]
      %v495 = vld [vmem:[#allocation2 + $0x38] sm:$0xff]
      %v496 = vld [vmem:[#allocation2 + $0x48] sm:$0xff]
      %v497 = vld [vmem:[#allocation2 + $0x50] sm:$0xff]
      %v498 = vld [vmem:[#allocation2 + $0x60] sm:$0xff]
      %v499 = vld [vmem:[#allocation2 + $0x68] sm:$0xff]
      %v500 = vld [vmem:[#allocation2 + $0x78] sm:$0xff]
      %v501 = vld [vmem:[#allocation2 + $0x80] sm:$0xff]
      %v502 = vld [vmem:[#allocation2 + $0x90] sm:$0xff]
      %v503 = vld [vmem:[#allocation2 + $0x98] sm:$0xff]
      %v504 = vld [vmem:[#allocation2 + $0xa8] sm:$0xff]
      %v505 = vld [vmem:[#allocation2 + $0xb0] sm:$0xff]
      %v506 = vld [vmem:[#allocation2 + $0xc0] sm:$0xff]
      %v507 = vld [vmem:[#allocation2 + $0xc8] sm:$0xff]
      %v508 = vld [vmem:[#allocation2 + $0xd8] sm:$0xff]
      %v509 = vld [vmem:[#allocation2 + $0xe0] sm:$0xff]
      %v510 = vld [vmem:[#allocation2 + $0xf0] sm:$0xff]
      %v511 = vld [vmem:[#allocation2 + $0xf8] sm:$0xff]
      %v512 = vld [vmem:[#allocation2 + $0x108] sm:$0xff]
      %v513 = vld [vmem:[#allocation2 + $0x110] sm:$0xff]
      %v514 = vld [vmem:[#allocation2 + $0x120] sm:$0xff]
      %v515 = vld [vmem:[#allocation2 + $0x128] sm:$0xff]
      %v516 = vld [vmem:[#allocation2 + $0x138] sm:$0xff]
      %v517 = vld [vmem:[#allocation2 + $0x140] sm:$0xff]
      %v518 = vld [vmem:[#allocation2 + $0x150] sm:$0xff]
      %v519 = vld [vmem:[#allocation2 + $0x158] sm:$0xff]
      %v520 = vld [vmem:[#allocation2 + $0x168] sm:$0xff]
      %v521 = vld [vmem:[#allocation2 + $0x170] sm:$0xff]
      %522 = vst.msk [vmem:[#allocation3] sm:$0xff] %vm411, %v490
      %523 = vst.msk [vmem:[#allocation3 + $0x8] sm:$0xff] %vm411, %v491
      %524 = vst.msk [vmem:[#allocation3 + $0x10] sm:$0xff] %vm411, %v492
      %525 = vst.msk [vmem:[#allocation3 + $0x18] sm:$0xff] %vm411, %v493
      %526 = vst.msk [vmem:[#allocation3 + $0x20] sm:$0xff] %vm411, %v494
      %527 = vst.msk [vmem:[#allocation3 + $0x28] sm:$0xff] %vm411, %v495
      %528 = vst.msk [vmem:[#allocation3 + $0x30] sm:$0xff] %vm411, %v496
      %529 = vst.msk [vmem:[#allocation3 + $0x38] sm:$0xff] %vm411, %v497
      %530 = vst.msk [vmem:[#allocation3 + $0x40] sm:$0xff] %vm411, %v498
      %531 = vst.msk [vmem:[#allocation3 + $0x48] sm:$0xff] %vm411, %v499
      %532 = vst.msk [vmem:[#allocation3 + $0x50] sm:$0xff] %vm411, %v500
      %533 = vst.msk [vmem:[#allocation3 + $0x58] sm:$0xff] %vm411, %v501
      %534 = vst.msk [vmem:[#allocation3 + $0x60] sm:$0xff] %vm411, %v502
      %535 = vst.msk [vmem:[#allocation3 + $0x68] sm:$0xff] %vm411, %v503
      %536 = vst.msk [vmem:[#allocation3 + $0x70] sm:$0xff] %vm411, %v504
      %537 = vst.msk [vmem:[#allocation3 + $0x78] sm:$0xff] %vm411, %v505
      %538 = vst.msk [vmem:[#allocation3 + $0x80] sm:$0xff] %vm411, %v506
      %539 = vst.msk [vmem:[#allocation3 + $0x88] sm:$0xff] %vm411, %v507
      %540 = vst.msk [vmem:[#allocation3 + $0x90] sm:$0xff] %vm411, %v508
      %541 = vst.msk [vmem:[#allocation3 + $0x98] sm:$0xff] %vm411, %v509
      %542 = vst.msk [vmem:[#allocation3 + $0xa0] sm:$0xff] %vm411, %v510
      %543 = vst.msk [vmem:[#allocation3 + $0xa8] sm:$0xff] %vm411, %v511
      %544 = vst.msk [vmem:[#allocation3 + $0xb0] sm:$0xff] %vm411, %v512
      %545 = vst.msk [vmem:[#allocation3 + $0xb8] sm:$0xff] %vm411, %v513
      %546 = vst.msk [vmem:[#allocation3 + $0xc0] sm:$0xff] %vm411, %v514
      %547 = vst.msk [vmem:[#allocation3 + $0xc8] sm:$0xff] %vm411, %v515
      %548 = vst.msk [vmem:[#allocation3 + $0xd0] sm:$0xff] %vm411, %v516
      %549 = vst.msk [vmem:[#allocation3 + $0xd8] sm:$0xff] %vm411, %v517
      %550 = vst.msk [vmem:[#allocation3 + $0xe0] sm:$0xff] %vm411, %v518
      %551 = vst.msk [vmem:[#allocation3 + $0xe8] sm:$0xff] %vm411, %v519
      %552 = vst.msk [vmem:[#allocation3 + $0xf0] sm:$0xff] %vm411, %v520
      %553 = vst.msk [vmem:[#allocation3 + $0xf8] sm:$0xff] %vm411, %v521
      %v554 = vld [vmem:[#allocation2 + $0x1] sm:$0xff]
      %v555 = vld [vmem:[#allocation2 + $0x9] sm:$0xff]
      %v556 = vld [vmem:[#allocation2 + $0x19] sm:$0xff]
      %v557 = vld [vmem:[#allocation2 + $0x21] sm:$0xff]
      %v558 = vld [vmem:[#allocation2 + $0x31] sm:$0xff]
      %v559 = vld [vmem:[#allocation2 + $0x39] sm:$0xff]
      %v560 = vld [vmem:[#allocation2 + $0x49] sm:$0xff]
      %v561 = vld [vmem:[#allocation2 + $0x51] sm:$0xff]
      %v562 = vld [vmem:[#allocation2 + $0x61] sm:$0xff]
      %v563 = vld [vmem:[#allocation2 + $0x69] sm:$0xff]
      %v564 = vld [vmem:[#allocation2 + $0x79] sm:$0xff]
      %v565 = vld [vmem:[#allocation2 + $0x81] sm:$0xff]
      %v566 = vld [vmem:[#allocation2 + $0x91] sm:$0xff]
      %v567 = vld [vmem:[#allocation2 + $0x99] sm:$0xff]
      %v568 = vld [vmem:[#allocation2 + $0xa9] sm:$0xff]
      %v569 = vld [vmem:[#allocation2 + $0xb1] sm:$0xff]
      %v570 = vld [vmem:[#allocation2 + $0xc1] sm:$0xff]
      %v571 = vld [vmem:[#allocation2 + $0xc9] sm:$0xff]
      %v572 = vld [vmem:[#allocation2 + $0xd9] sm:$0xff]
      %v573 = vld [vmem:[#allocation2 + $0xe1] sm:$0xff]
      %v574 = vld [vmem:[#allocation2 + $0xf1] sm:$0xff]
      %v575 = vld [vmem:[#allocation2 + $0xf9] sm:$0xff]
      %v576 = vld [vmem:[#allocation2 + $0x109] sm:$0xff]
      %v577 = vld [vmem:[#allocation2 + $0x111] sm:$0xff]
      %v578 = vld [vmem:[#allocation2 + $0x121] sm:$0xff]
      %v579 = vld [vmem:[#allocation2 + $0x129] sm:$0xff]
      %v580 = vld [vmem:[#allocation2 + $0x139] sm:$0xff]
      %v581 = vld [vmem:[#allocation2 + $0x141] sm:$0xff]
      %v582 = vld [vmem:[#allocation2 + $0x151] sm:$0xff]
      %v583 = vld [vmem:[#allocation2 + $0x159] sm:$0xff]
      %v584 = vld [vmem:[#allocation2 + $0x169] sm:$0xff]
      %v585 = vld [vmem:[#allocation2 + $0x171] sm:$0xff]
      %618 = vrot.lane.b32.xlu0 %v554, 8
      %v619 = vpop.permute.xlu0 %618
      %620 = vrot.lane.b32.xlu0 %v555, 8
      %v621 = vpop.permute.xlu0 %620
      %622 = vrot.lane.b32.xlu0 %v556, 8
      %v623 = vpop.permute.xlu0 %622
      %624 = vrot.lane.b32.xlu0 %v557, 8
      %v625 = vpop.permute.xlu0 %624
      %626 = vrot.lane.b32.xlu0 %v558, 8
      %v627 = vpop.permute.xlu0 %626
      %628 = vrot.lane.b32.xlu0 %v559, 8
      %v629 = vpop.permute.xlu0 %628
      %630 = vrot.lane.b32.xlu0 %v560, 8
      %v631 = vpop.permute.xlu0 %630
      %632 = vrot.lane.b32.xlu0 %v561, 8
      %v633 = vpop.permute.xlu0 %632
      %634 = vrot.lane.b32.xlu0 %v562, 8
      %v635 = vpop.permute.xlu0 %634
      %636 = vrot.lane.b32.xlu0 %v563, 8
      %v637 = vpop.permute.xlu0 %636
      %638 = vrot.lane.b32.xlu0 %v564, 8
      %v639 = vpop.permute.xlu0 %638
      %640 = vrot.lane.b32.xlu0 %v565, 8
      %v641 = vpop.permute.xlu0 %640
      %642 = vrot.lane.b32.xlu0 %v566, 8
      %v643 = vpop.permute.xlu0 %642
      %644 = vrot.lane.b32.xlu0 %v567, 8
      %v645 = vpop.permute.xlu0 %644
      %646 = vrot.lane.b32.xlu0 %v568, 8
      %v647 = vpop.permute.xlu0 %646
      %648 = vrot.lane.b32.xlu0 %v569, 8
      %v649 = vpop.permute.xlu0 %648
      %650 = vrot.lane.b32.xlu0 %v570, 8
      %v651 = vpop.permute.xlu0 %650
      %652 = vrot.lane.b32.xlu0 %v571, 8
      %v653 = vpop.permute.xlu0 %652
      %654 = vrot.lane.b32.xlu0 %v572, 8
      %v655 = vpop.permute.xlu0 %654
      %656 = vrot.lane.b32.xlu0 %v573, 8
      %v657 = vpop.permute.xlu0 %656
      %658 = vrot.lane.b32.xlu0 %v574, 8
      %v659 = vpop.permute.xlu0 %658
      %660 = vrot.lane.b32.xlu0 %v575, 8
      %v661 = vpop.permute.xlu0 %660
      %662 = vrot.lane.b32.xlu0 %v576, 8
      %v663 = vpop.permute.xlu0 %662
      %664 = vrot.lane.b32.xlu0 %v577, 8
      %v665 = vpop.permute.xlu0 %664
      %666 = vrot.lane.b32.xlu0 %v578, 8
      %v667 = vpop.permute.xlu0 %666
      %668 = vrot.lane.b32.xlu0 %v579, 8
      %v669 = vpop.permute.xlu0 %668
      %670 = vrot.lane.b32.xlu0 %v580, 8
      %v671 = vpop.permute.xlu0 %670
      %672 = vrot.lane.b32.xlu0 %v581, 8
      %v673 = vpop.permute.xlu0 %672
      %674 = vrot.lane.b32.xlu0 %v582, 8
      %v675 = vpop.permute.xlu0 %674
      %676 = vrot.lane.b32.xlu0 %v583, 8
      %v677 = vpop.permute.xlu0 %676
      %678 = vrot.lane.b32.xlu0 %v584, 8
      %v679 = vpop.permute.xlu0 %678
      %680 = vrot.lane.b32.xlu0 %v585, 8
      %v681 = vpop.permute.xlu0 %680
      %vm714 = vcmask 130112
      %715 = vst.msk [vmem:[#allocation3] sm:$0xff] %vm714, %v619
      %716 = vst.msk [vmem:[#allocation3 + $0x8] sm:$0xff] %vm714, %v621
      %717 = vst.msk [vmem:[#allocation3 + $0x10] sm:$0xff] %vm714, %v623
      %718 = vst.msk [vmem:[#allocation3 + $0x18] sm:$0xff] %vm714, %v625
      %719 = vst.msk [vmem:[#allocation3 + $0x20] sm:$0xff] %vm714, %v627
      %720 = vst.msk [vmem:[#allocation3 + $0x28] sm:$0xff] %vm714, %v629
      %721 = vst.msk [vmem:[#allocation3 + $0x30] sm:$0xff] %vm714, %v631
      %722 = vst.msk [vmem:[#allocation3 + $0x38] sm:$0xff] %vm714, %v633
      %723 = vst.msk [vmem:[#allocation3 + $0x40] sm:$0xff] %vm714, %v635
      %724 = vst.msk [vmem:[#allocation3 + $0x48] sm:$0xff] %vm714, %v637
      %725 = vst.msk [vmem:[#allocation3 + $0x50] sm:$0xff] %vm714, %v639
      %726 = vst.msk [vmem:[#allocation3 + $0x58] sm:$0xff] %vm714, %v641
      %727 = vst.msk [vmem:[#allocation3 + $0x60] sm:$0xff] %vm714, %v643
      %728 = vst.msk [vmem:[#allocation3 + $0x68] sm:$0xff] %vm714, %v645
      %729 = vst.msk [vmem:[#allocation3 + $0x70] sm:$0xff] %vm714, %v647
      %730 = vst.msk [vmem:[#allocation3 + $0x78] sm:$0xff] %vm714, %v649
      %731 = vst.msk [vmem:[#allocation3 + $0x80] sm:$0xff] %vm714, %v651
      %732 = vst.msk [vmem:[#allocation3 + $0x88] sm:$0xff] %vm714, %v653
      %733 = vst.msk [vmem:[#allocation3 + $0x90] sm:$0xff] %vm714, %v655
      %734 = vst.msk [vmem:[#allocation3 + $0x98] sm:$0xff] %vm714, %v657
      %735 = vst.msk [vmem:[#allocation3 + $0xa0] sm:$0xff] %vm714, %v659
      %736 = vst.msk [vmem:[#allocation3 + $0xa8] sm:$0xff] %vm714, %v661
      %737 = vst.msk [vmem:[#allocation3 + $0xb0] sm:$0xff] %vm714, %v663
      %738 = vst.msk [vmem:[#allocation3 + $0xb8] sm:$0xff] %vm714, %v665
      %739 = vst.msk [vmem:[#allocation3 + $0xc0] sm:$0xff] %vm714, %v667
      %740 = vst.msk [vmem:[#allocation3 + $0xc8] sm:$0xff] %vm714, %v669
      %741 = vst.msk [vmem:[#allocation3 + $0xd0] sm:$0xff] %vm714, %v671
      %742 = vst.msk [vmem:[#allocation3 + $0xd8] sm:$0xff] %vm714, %v673
      %743 = vst.msk [vmem:[#allocation3 + $0xe0] sm:$0xff] %vm714, %v675
      %744 = vst.msk [vmem:[#allocation3 + $0xe8] sm:$0xff] %vm714, %v677
      %745 = vst.msk [vmem:[#allocation3 + $0xf0] sm:$0xff] %vm714, %v679
      %746 = vst.msk [vmem:[#allocation3 + $0xf8] sm:$0xff] %vm714, %v681
      %v747 = vld [vmem:[#allocation2 + $0x2] sm:$0xff]
      %v748 = vld [vmem:[#allocation2 + $0xa] sm:$0xff]
      %v749 = vld [vmem:[#allocation2 + $0x1a] sm:$0xff]
      %v750 = vld [vmem:[#allocation2 + $0x22] sm:$0xff]
      %v751 = vld [vmem:[#allocation2 + $0x32] sm:$0xff]
      %v752 = vld [vmem:[#allocation2 + $0x3a] sm:$0xff]
      %v753 = vld [vmem:[#allocation2 + $0x4a] sm:$0xff]
      %v754 = vld [vmem:[#allocation2 + $0x52] sm:$0xff]
      %v755 = vld [vmem:[#allocation2 + $0x62] sm:$0xff]
      %v756 = vld [vmem:[#allocation2 + $0x6a] sm:$0xff]
      %v757 = vld [vmem:[#allocation2 + $0x7a] sm:$0xff]
      %v758 = vld [vmem:[#allocation2 + $0x82] sm:$0xff]
      %v759 = vld [vmem:[#allocation2 + $0x92] sm:$0xff]
      %v760 = vld [vmem:[#allocation2 + $0x9a] sm:$0xff]
      %v761 = vld [vmem:[#allocation2 + $0xaa] sm:$0xff]
      %v762 = vld [vmem:[#allocation2 + $0xb2] sm:$0xff]
      %v763 = vld [vmem:[#allocation2 + $0xc2] sm:$0xff]
      %v764 = vld [vmem:[#allocation2 + $0xca] sm:$0xff]
      %v765 = vld [vmem:[#allocation2 + $0xda] sm:$0xff]
      %v766 = vld [vmem:[#allocation2 + $0xe2] sm:$0xff]
      %v767 = vld [vmem:[#allocation2 + $0xf2] sm:$0xff]
      %v768 = vld [vmem:[#allocation2 + $0xfa] sm:$0xff]
      %v769 = vld [vmem:[#allocation2 + $0x10a] sm:$0xff]
      %v770 = vld [vmem:[#allocation2 + $0x112] sm:$0xff]
      %v771 = vld [vmem:[#allocation2 + $0x122] sm:$0xff]
      %v772 = vld [vmem:[#allocation2 + $0x12a] sm:$0xff]
      %v773 = vld [vmem:[#allocation2 + $0x13a] sm:$0xff]
      %v774 = vld [vmem:[#allocation2 + $0x142] sm:$0xff]
      %v775 = vld [vmem:[#allocation2 + $0x152] sm:$0xff]
      %v776 = vld [vmem:[#allocation2 + $0x15a] sm:$0xff]
      %v777 = vld [vmem:[#allocation2 + $0x16a] sm:$0xff]
      %v778 = vld [vmem:[#allocation2 + $0x172] sm:$0xff]
      %811 = vrot.lane.b32.xlu0 %v747, 16
      %v812 = vpop.permute.xlu0 %811
      %813 = vrot.lane.b32.xlu0 %v748, 16
      %v814 = vpop.permute.xlu0 %813
      %815 = vrot.lane.b32.xlu0 %v749, 16
      %v816 = vpop.permute.xlu0 %815
      %817 = vrot.lane.b32.xlu0 %v750, 16
      %v818 = vpop.permute.xlu0 %817
      %819 = vrot.lane.b32.xlu0 %v751, 16
      %v820 = vpop.permute.xlu0 %819
      %821 = vrot.lane.b32.xlu0 %v752, 16
      %v822 = vpop.permute.xlu0 %821
      %823 = vrot.lane.b32.xlu0 %v753, 16
      %v824 = vpop.permute.xlu0 %823
      %825 = vrot.lane.b32.xlu0 %v754, 16
      %v826 = vpop.permute.xlu0 %825
      %827 = vrot.lane.b32.xlu0 %v755, 16
      %v828 = vpop.permute.xlu0 %827
      %829 = vrot.lane.b32.xlu0 %v756, 16
      %v830 = vpop.permute.xlu0 %829
      %831 = vrot.lane.b32.xlu0 %v757, 16
      %v832 = vpop.permute.xlu0 %831
      %833 = vrot.lane.b32.xlu0 %v758, 16
      %v834 = vpop.permute.xlu0 %833
      %835 = vrot.lane.b32.xlu0 %v759, 16
      %v836 = vpop.permute.xlu0 %835
      %837 = vrot.lane.b32.xlu0 %v760, 16
      %v838 = vpop.permute.xlu0 %837
      %839 = vrot.lane.b32.xlu0 %v761, 16
      %v840 = vpop.permute.xlu0 %839
      %841 = vrot.lane.b32.xlu0 %v762, 16
      %v842 = vpop.permute.xlu0 %841
      %843 = vrot.lane.b32.xlu0 %v763, 16
      %v844 = vpop.permute.xlu0 %843
      %845 = vrot.lane.b32.xlu0 %v764, 16
      %v846 = vpop.permute.xlu0 %845
      %847 = vrot.lane.b32.xlu0 %v765, 16
      %v848 = vpop.permute.xlu0 %847
      %849 = vrot.lane.b32.xlu0 %v766, 16
      %v850 = vpop.permute.xlu0 %849
      %851 = vrot.lane.b32.xlu0 %v767, 16
      %v852 = vpop.permute.xlu0 %851
      %853 = vrot.lane.b32.xlu0 %v768, 16
      %v854 = vpop.permute.xlu0 %853
      %855 = vrot.lane.b32.xlu0 %v769, 16
      %v856 = vpop.permute.xlu0 %855
      %857 = vrot.lane.b32.xlu0 %v770, 16
      %v858 = vpop.permute.xlu0 %857
      %859 = vrot.lane.b32.xlu0 %v771, 16
      %v860 = vpop.permute.xlu0 %859
      %861 = vrot.lane.b32.xlu0 %v772, 16
      %v862 = vpop.permute.xlu0 %861
      %863 = vrot.lane.b32.xlu0 %v773, 16
      %v864 = vpop.permute.xlu0 %863
      %865 = vrot.lane.b32.xlu0 %v774, 16
      %v866 = vpop.permute.xlu0 %865
      %867 = vrot.lane.b32.xlu0 %v775, 16
      %v868 = vpop.permute.xlu0 %867
      %869 = vrot.lane.b32.xlu0 %v776, 16
      %v870 = vpop.permute.xlu0 %869
      %871 = vrot.lane.b32.xlu0 %v777, 16
      %v872 = vpop.permute.xlu0 %871
      %873 = vrot.lane.b32.xlu0 %v778, 16
      %v874 = vpop.permute.xlu0 %873
      %vm907 = vcmask 195712
      %908 = vst.msk [vmem:[#allocation3] sm:$0xff] %vm907, %v812
      %909 = vst.msk [vmem:[#allocation3 + $0x8] sm:$0xff] %vm907, %v814
      %910 = vst.msk [vmem:[#allocation3 + $0x10] sm:$0xff] %vm907, %v816
      %911 = vst.msk [vmem:[#allocation3 + $0x18] sm:$0xff] %vm907, %v818
      %912 = vst.msk [vmem:[#allocation3 + $0x20] sm:$0xff] %vm907, %v820
      %913 = vst.msk [vmem:[#allocation3 + $0x28] sm:$0xff] %vm907, %v822
      %914 = vst.msk [vmem:[#allocation3 + $0x30] sm:$0xff] %vm907, %v824
      %915 = vst.msk [vmem:[#allocation3 + $0x38] sm:$0xff] %vm907, %v826
      %916 = vst.msk [vmem:[#allocation3 + $0x40] sm:$0xff] %vm907, %v828
      %917 = vst.msk [vmem:[#allocation3 + $0x48] sm:$0xff] %vm907, %v830
      %918 = vst.msk [vmem:[#allocation3 + $0x50] sm:$0xff] %vm907, %v832
      %919 = vst.msk [vmem:[#allocation3 + $0x58] sm:$0xff] %vm907, %v834
      %920 = vst.msk [vmem:[#allocation3 + $0x60] sm:$0xff] %vm907, %v836
      %921 = vst.msk [vmem:[#allocation3 + $0x68] sm:$0xff] %vm907, %v838
      %922 = vst.msk [vmem:[#allocation3 + $0x70] sm:$0xff] %vm907, %v840
      %923 = vst.msk [vmem:[#allocation3 + $0x78] sm:$0xff] %vm907, %v842
      %924 = vst.msk [vmem:[#allocation3 + $0x80] sm:$0xff] %vm907, %v844
      %925 = vst.msk [vmem:[#allocation3 + $0x88] sm:$0xff] %vm907, %v846
      %926 = vst.msk [vmem:[#allocation3 + $0x90] sm:$0xff] %vm907, %v848
      %927 = vst.msk [vmem:[#allocation3 + $0x98] sm:$0xff] %vm907, %v850
      %928 = vst.msk [vmem:[#allocation3 + $0xa0] sm:$0xff] %vm907, %v852
      %929 = vst.msk [vmem:[#allocation3 + $0xa8] sm:$0xff] %vm907, %v854
      %930 = vst.msk [vmem:[#allocation3 + $0xb0] sm:$0xff] %vm907, %v856
      %931 = vst.msk [vmem:[#allocation3 + $0xb8] sm:$0xff] %vm907, %v858
      %932 = vst.msk [vmem:[#allocation3 + $0xc0] sm:$0xff] %vm907, %v860
      %933 = vst.msk [vmem:[#allocation3 + $0xc8] sm:$0xff] %vm907, %v862
      %934 = vst.msk [vmem:[#allocation3 + $0xd0] sm:$0xff] %vm907, %v864
      %935 = vst.msk [vmem:[#allocation3 + $0xd8] sm:$0xff] %vm907, %v866
      %936 = vst.msk [vmem:[#allocation3 + $0xe0] sm:$0xff] %vm907, %v868
      %937 = vst.msk [vmem:[#allocation3 + $0xe8] sm:$0xff] %vm907, %v870
      %938 = vst.msk [vmem:[#allocation3 + $0xf0] sm:$0xff] %vm907, %v872
      %939 = vst.msk [vmem:[#allocation3 + $0xf8] sm:$0xff] %vm907, %v874
      %v940 = vld [vmem:[%s457] sm:$0xff]
      %v941 = vld [vmem:[%s457 + $0x8] sm:$0xff]
      %v942 = vld [vmem:[%s457 + $0x18] sm:$0xff]
      %v943 = vld [vmem:[%s457 + $0x20] sm:$0xff]
      %v944 = vld [vmem:[%s457 + $0x30] sm:$0xff]
      %v945 = vld [vmem:[%s457 + $0x38] sm:$0xff]
      %v946 = vld [vmem:[%s457 + $0x48] sm:$0xff]
      %v947 = vld [vmem:[%s457 + $0x50] sm:$0xff]
      %v948 = vld [vmem:[%s457 + $0x60] sm:$0xff]
      %v949 = vld [vmem:[%s457 + $0x68] sm:$0xff]
      %v950 = vld [vmem:[%s457 + $0x78] sm:$0xff]
      %v951 = vld [vmem:[%s457 + $0x80] sm:$0xff]
      %v952 = vld [vmem:[%s457 + $0x90] sm:$0xff]
      %v953 = vld [vmem:[%s457 + $0x98] sm:$0xff]
      %v954 = vld [vmem:[%s457 + $0xa8] sm:$0xff]
      %v955 = vld [vmem:[%s457 + $0xb0] sm:$0xff]
      %v956 = vld [vmem:[%s457 + $0xc0] sm:$0xff]
      %v957 = vld [vmem:[%s457 + $0xc8] sm:$0xff]
      %v958 = vld [vmem:[%s457 + $0xd8] sm:$0xff]
      %v959 = vld [vmem:[%s457 + $0xe0] sm:$0xff]
      %v960 = vld [vmem:[%s457 + $0xf0] sm:$0xff]
      %v961 = vld [vmem:[%s457 + $0xf8] sm:$0xff]
      %v962 = vld [vmem:[%s457 + $0x108] sm:$0xff]
      %v963 = vld [vmem:[%s457 + $0x110] sm:$0xff]
      %v964 = vld [vmem:[%s457 + $0x120] sm:$0xff]
      %v965 = vld [vmem:[%s457 + $0x128] sm:$0xff]
      %v966 = vld [vmem:[%s457 + $0x138] sm:$0xff]
      %v967 = vld [vmem:[%s457 + $0x140] sm:$0xff]
      %v968 = vld [vmem:[%s457 + $0x150] sm:$0xff]
      %v969 = vld [vmem:[%s457 + $0x158] sm:$0xff]
      %v970 = vld [vmem:[%s457 + $0x168] sm:$0xff]
      %v971 = vld [vmem:[%s457 + $0x170] sm:$0xff]
      %1004 = vrot.lane.b32.xlu0 %v940, 24
      %v1005 = vpop.permute.xlu0 %1004
      %1006 = vrot.lane.b32.xlu0 %v941, 24
      %v1007 = vpop.permute.xlu0 %1006
      %1008 = vrot.lane.b32.xlu0 %v942, 24
      %v1009 = vpop.permute.xlu0 %1008
      %1010 = vrot.lane.b32.xlu0 %v943, 24
      %v1011 = vpop.permute.xlu0 %1010
      %1012 = vrot.lane.b32.xlu0 %v944, 24
      %v1013 = vpop.permute.xlu0 %1012
      %1014 = vrot.lane.b32.xlu0 %v945, 24
      %v1015 = vpop.permute.xlu0 %1014
      %1016 = vrot.lane.b32.xlu0 %v946, 24
      %v1017 = vpop.permute.xlu0 %1016
      %1018 = vrot.lane.b32.xlu0 %v947, 24
      %v1019 = vpop.permute.xlu0 %1018
      %1020 = vrot.lane.b32.xlu0 %v948, 24
      %v1021 = vpop.permute.xlu0 %1020
      %1022 = vrot.lane.b32.xlu0 %v949, 24
      %v1023 = vpop.permute.xlu0 %1022
      %1024 = vrot.lane.b32.xlu0 %v950, 24
      %v1025 = vpop.permute.xlu0 %1024
      %1026 = vrot.lane.b32.xlu0 %v951, 24
      %v1027 = vpop.permute.xlu0 %1026
      %1028 = vrot.lane.b32.xlu0 %v952, 24
      %v1029 = vpop.permute.xlu0 %1028
      %1030 = vrot.lane.b32.xlu0 %v953, 24
      %v1031 = vpop.permute.xlu0 %1030
      %1032 = vrot.lane.b32.xlu0 %v954, 24
      %v1033 = vpop.permute.xlu0 %1032
      %1034 = vrot.lane.b32.xlu0 %v955, 24
      %v1035 = vpop.permute.xlu0 %1034
      %1036 = vrot.lane.b32.xlu0 %v956, 24
      %v1037 = vpop.permute.xlu0 %1036
      %1038 = vrot.lane.b32.xlu0 %v957, 24
      %v1039 = vpop.permute.xlu0 %1038
      %1040 = vrot.lane.b32.xlu0 %v958, 24
      %v1041 = vpop.permute.xlu0 %1040
      %1042 = vrot.lane.b32.xlu0 %v959, 24
      %v1043 = vpop.permute.xlu0 %1042
      %1044 = vrot.lane.b32.xlu0 %v960, 24
      %v1045 = vpop.permute.xlu0 %1044
      %1046 = vrot.lane.b32.xlu0 %v961, 24
      %v1047 = vpop.permute.xlu0 %1046
      %1048 = vrot.lane.b32.xlu0 %v962, 24
      %v1049 = vpop.permute.xlu0 %1048
      %1050 = vrot.lane.b32.xlu0 %v963, 24
      %v1051 = vpop.permute.xlu0 %1050
      %1052 = vrot.lane.b32.xlu0 %v964, 24
      %v1053 = vpop.permute.xlu0 %1052
      %1054 = vrot.lane.b32.xlu0 %v965, 24
      %v1055 = vpop.permute.xlu0 %1054
      %1056 = vrot.lane.b32.xlu0 %v966, 24
      %v1057 = vpop.permute.xlu0 %1056
      %1058 = vrot.lane.b32.xlu0 %v967, 24
      %v1059 = vpop.permute.xlu0 %1058
      %1060 = vrot.lane.b32.xlu0 %v968, 24
      %v1061 = vpop.permute.xlu0 %1060
      %1062 = vrot.lane.b32.xlu0 %v969, 24
      %v1063 = vpop.permute.xlu0 %1062
      %1064 = vrot.lane.b32.xlu0 %v970, 24
      %v1065 = vpop.permute.xlu0 %1064
      %1066 = vrot.lane.b32.xlu0 %v971, 24
      %v1067 = vpop.permute.xlu0 %1066
      %vm1100 = vcmask 261312
      %1101 = vst.msk [vmem:[#allocation3] sm:$0xff] %vm1100, %v1005
      %1102 = vst.msk [vmem:[#allocation3 + $0x8] sm:$0xff] %vm1100, %v1007
      %1103 = vst.msk [vmem:[#allocation3 + $0x10] sm:$0xff] %vm1100, %v1009
      %1104 = vst.msk [vmem:[#allocation3 + $0x18] sm:$0xff] %vm1100, %v1011
      %1105 = vst.msk [vmem:[#allocation3 + $0x20] sm:$0xff] %vm1100, %v1013
      %1106 = vst.msk [vmem:[#allocation3 + $0x28] sm:$0xff] %vm1100, %v1015
      %1107 = vst.msk [vmem:[#allocation3 + $0x30] sm:$0xff] %vm1100, %v1017
      %1108 = vst.msk [vmem:[#allocation3 + $0x38] sm:$0xff] %vm1100, %v1019
      %1109 = vst.msk [vmem:[#allocation3 + $0x40] sm:$0xff] %vm1100, %v1021
      %1110 = vst.msk [vmem:[#allocation3 + $0x48] sm:$0xff] %vm1100, %v1023
      %1111 = vst.msk [vmem:[#allocation3 + $0x50] sm:$0xff] %vm1100, %v1025
      %1112 = vst.msk [vmem:[#allocation3 + $0x58] sm:$0xff] %vm1100, %v1027
      %1113 = vst.msk [vmem:[#allocation3 + $0x60] sm:$0xff] %vm1100, %v1029
      %1114 = vst.msk [vmem:[#allocation3 + $0x68] sm:$0xff] %vm1100, %v1031
      %1115 = vst.msk [vmem:[#allocation3 + $0x70] sm:$0xff] %vm1100, %v1033
      %1116 = vst.msk [vmem:[#allocation3 + $0x78] sm:$0xff] %vm1100, %v1035
      %1117 = vst.msk [vmem:[#allocation3 + $0x80] sm:$0xff] %vm1100, %v1037
      %1118 = vst.msk [vmem:[#allocation3 + $0x88] sm:$0xff] %vm1100, %v1039
      %1119 = vst.msk [vmem:[#allocation3 + $0x90] sm:$0xff] %vm1100, %v1041
      %1120 = vst.msk [vmem:[#allocation3 + $0x98] sm:$0xff] %vm1100, %v1043
      %1121 = vst.msk [vmem:[#allocation3 + $0xa0] sm:$0xff] %vm1100, %v1045
      %1122 = vst.msk [vmem:[#allocation3 + $0xa8] sm:$0xff] %vm1100, %v1047
      %1123 = vst.msk [vmem:[#allocation3 + $0xb0] sm:$0xff] %vm1100, %v1049
      %1124 = vst.msk [vmem:[#allocation3 + $0xb8] sm:$0xff] %vm1100, %v1051
      %1125 = vst.msk [vmem:[#allocation3 + $0xc0] sm:$0xff] %vm1100, %v1053
      %1126 = vst.msk [vmem:[#allocation3 + $0xc8] sm:$0xff] %vm1100, %v1055
      %1127 = vst.msk [vmem:[#allocation3 + $0xd0] sm:$0xff] %vm1100, %v1057
      %1128 = vst.msk [vmem:[#allocation3 + $0xd8] sm:$0xff] %vm1100, %v1059
      %1129 = vst.msk [vmem:[#allocation3 + $0xe0] sm:$0xff] %vm1100, %v1061
      %1130 = vst.msk [vmem:[#allocation3 + $0xe8] sm:$0xff] %vm1100, %v1063
      %1131 = vst.msk [vmem:[#allocation3 + $0xf0] sm:$0xff] %vm1100, %v1065
      %1132 = vst.msk [vmem:[#allocation3 + $0xf8] sm:$0xff] %vm1100, %v1067
      %v1133 = vld [vmem:[%s457 + $0x1] sm:$0xff]
      %v1134 = vld [vmem:[%s457 + $0x9] sm:$0xff]
      %v1135 = vld [vmem:[%s457 + $0x19] sm:$0xff]
      %v1136 = vld [vmem:[%s457 + $0x21] sm:$0xff]
      %v1137 = vld [vmem:[%s457 + $0x31] sm:$0xff]
      %v1138 = vld [vmem:[%s457 + $0x39] sm:$0xff]
      %v1139 = vld [vmem:[%s457 + $0x49] sm:$0xff]
      %v1140 = vld [vmem:[%s457 + $0x51] sm:$0xff]
      %v1141 = vld [vmem:[%s457 + $0x61] sm:$0xff]
      %v1142 = vld [vmem:[%s457 + $0x69] sm:$0xff]
      %v1143 = vld [vmem:[%s457 + $0x79] sm:$0xff]
      %v1144 = vld [vmem:[%s457 + $0x81] sm:$0xff]
      %v1145 = vld [vmem:[%s457 + $0x91] sm:$0xff]
      %v1146 = vld [vmem:[%s457 + $0x99] sm:$0xff]
      %v1147 = vld [vmem:[%s457 + $0xa9] sm:$0xff]
      %v1148 = vld [vmem:[%s457 + $0xb1] sm:$0xff]
      %v1149 = vld [vmem:[%s457 + $0xc1] sm:$0xff]
      %v1150 = vld [vmem:[%s457 + $0xc9] sm:$0xff]
      %v1151 = vld [vmem:[%s457 + $0xd9] sm:$0xff]
      %v1152 = vld [vmem:[%s457 + $0xe1] sm:$0xff]
      %v1153 = vld [vmem:[%s457 + $0xf1] sm:$0xff]
      %v1154 = vld [vmem:[%s457 + $0xf9] sm:$0xff]
      %v1155 = vld [vmem:[%s457 + $0x109] sm:$0xff]
      %v1156 = vld [vmem:[%s457 + $0x111] sm:$0xff]
      %v1157 = vld [vmem:[%s457 + $0x121] sm:$0xff]
      %v1158 = vld [vmem:[%s457 + $0x129] sm:$0xff]
      %v1159 = vld [vmem:[%s457 + $0x139] sm:$0xff]
      %v1160 = vld [vmem:[%s457 + $0x141] sm:$0xff]
      %v1161 = vld [vmem:[%s457 + $0x151] sm:$0xff]
      %v1162 = vld [vmem:[%s457 + $0x159] sm:$0xff]
      %v1163 = vld [vmem:[%s457 + $0x169] sm:$0xff]
      %v1164 = vld [vmem:[%s457 + $0x171] sm:$0xff]
      %1197 = vrot.lane.b32.xlu0 %v1133, 32
      %v1198 = vpop.permute.xlu0 %1197
      %1199 = vrot.lane.b32.xlu0 %v1134, 32
      %v1200 = vpop.permute.xlu0 %1199
      %1201 = vrot.lane.b32.xlu0 %v1135, 32
      %v1202 = vpop.permute.xlu0 %1201
      %1203 = vrot.lane.b32.xlu0 %v1136, 32
      %v1204 = vpop.permute.xlu0 %1203
      %1205 = vrot.lane.b32.xlu0 %v1137, 32
      %v1206 = vpop.permute.xlu0 %1205
      %1207 = vrot.lane.b32.xlu0 %v1138, 32
      %v1208 = vpop.permute.xlu0 %1207
      %1209 = vrot.lane.b32.xlu0 %v1139, 32
      %v1210 = vpop.permute.xlu0 %1209
      %1211 = vrot.lane.b32.xlu0 %v1140, 32
      %v1212 = vpop.permute.xlu0 %1211
      %1213 = vrot.lane.b32.xlu0 %v1141, 32
      %v1214 = vpop.permute.xlu0 %1213
      %1215 = vrot.lane.b32.xlu0 %v1142, 32
      %v1216 = vpop.permute.xlu0 %1215
      %1217 = vrot.lane.b32.xlu0 %v1143, 32
      %v1218 = vpop.permute.xlu0 %1217
      %1219 = vrot.lane.b32.xlu0 %v1144, 32
      %v1220 = vpop.permute.xlu0 %1219
      %1221 = vrot.lane.b32.xlu0 %v1145, 32
      %v1222 = vpop.permute.xlu0 %1221
      %1223 = vrot.lane.b32.xlu0 %v1146, 32
      %v1224 = vpop.permute.xlu0 %1223
      %1225 = vrot.lane.b32.xlu0 %v1147, 32
      %v1226 = vpop.permute.xlu0 %1225
      %1227 = vrot.lane.b32.xlu0 %v1148, 32
      %v1228 = vpop.permute.xlu0 %1227
      %1229 = vrot.lane.b32.xlu0 %v1149, 32
      %v1230 = vpop.permute.xlu0 %1229
      %1231 = vrot.lane.b32.xlu0 %v1150, 32
      %v1232 = vpop.permute.xlu0 %1231
      %1233 = vrot.lane.b32.xlu0 %v1151, 32
      %v1234 = vpop.permute.xlu0 %1233
      %1235 = vrot.lane.b32.xlu0 %v1152, 32
      %v1236 = vpop.permute.xlu0 %1235
      %1237 = vrot.lane.b32.xlu0 %v1153, 32
      %v1238 = vpop.permute.xlu0 %1237
      %1239 = vrot.lane.b32.xlu0 %v1154, 32
      %v1240 = vpop.permute.xlu0 %1239
      %1241 = vrot.lane.b32.xlu0 %v1155, 32
      %v1242 = vpop.permute.xlu0 %1241
      %1243 = vrot.lane.b32.xlu0 %v1156, 32
      %v1244 = vpop.permute.xlu0 %1243
      %1245 = vrot.lane.b32.xlu0 %v1157, 32
      %v1246 = vpop.permute.xlu0 %1245
      %1247 = vrot.lane.b32.xlu0 %v1158, 32
      %v1248 = vpop.permute.xlu0 %1247
      %1249 = vrot.lane.b32.xlu0 %v1159, 32
      %v1250 = vpop.permute.xlu0 %1249
      %1251 = vrot.lane.b32.xlu0 %v1160, 32
      %v1252 = vpop.permute.xlu0 %1251
      %1253 = vrot.lane.b32.xlu0 %v1161, 32
      %v1254 = vpop.permute.xlu0 %1253
      %1255 = vrot.lane.b32.xlu0 %v1162, 32
      %v1256 = vpop.permute.xlu0 %1255
      %1257 = vrot.lane.b32.xlu0 %v1163, 32
      %v1258 = vpop.permute.xlu0 %1257
      %1259 = vrot.lane.b32.xlu0 %v1164, 32
      %v1260 = vpop.permute.xlu0 %1259
      %vm1293 = vcmask 326912
      %1294 = vst.msk [vmem:[#allocation3] sm:$0xff] %vm1293, %v1198
      %1295 = vst.msk [vmem:[#allocation3 + $0x8] sm:$0xff] %vm1293, %v1200
      %1296 = vst.msk [vmem:[#allocation3 + $0x10] sm:$0xff] %vm1293, %v1202
      %1297 = vst.msk [vmem:[#allocation3 + $0x18] sm:$0xff] %vm1293, %v1204
      %1298 = vst.msk [vmem:[#allocation3 + $0x20] sm:$0xff] %vm1293, %v1206
      %1299 = vst.msk [vmem:[#allocation3 + $0x28] sm:$0xff] %vm1293, %v1208
      %1300 = vst.msk [vmem:[#allocation3 + $0x30] sm:$0xff] %vm1293, %v1210
      %1301 = vst.msk [vmem:[#allocation3 + $0x38] sm:$0xff] %vm1293, %v1212
      %1302 = vst.msk [vmem:[#allocation3 + $0x40] sm:$0xff] %vm1293, %v1214
      %1303 = vst.msk [vmem:[#allocation3 + $0x48] sm:$0xff] %vm1293, %v1216
      %1304 = vst.msk [vmem:[#allocation3 + $0x50] sm:$0xff] %vm1293, %v1218
      %1305 = vst.msk [vmem:[#allocation3 + $0x58] sm:$0xff] %vm1293, %v1220
      %1306 = vst.msk [vmem:[#allocation3 + $0x60] sm:$0xff] %vm1293, %v1222
      %1307 = vst.msk [vmem:[#allocation3 + $0x68] sm:$0xff] %vm1293, %v1224
      %1308 = vst.msk [vmem:[#allocation3 + $0x70] sm:$0xff] %vm1293, %v1226
      %1309 = vst.msk [vmem:[#allocation3 + $0x78] sm:$0xff] %vm1293, %v1228
      %1310 = vst.msk [vmem:[#allocation3 + $0x80] sm:$0xff] %vm1293, %v1230
      %1311 = vst.msk [vmem:[#allocation3 + $0x88] sm:$0xff] %vm1293, %v1232
      %1312 = vst.msk [vmem:[#allocation3 + $0x90] sm:$0xff] %vm1293, %v1234
      %1313 = vst.msk [vmem:[#allocation3 + $0x98] sm:$0xff] %vm1293, %v1236
      %1314 = vst.msk [vmem:[#allocation3 + $0xa0] sm:$0xff] %vm1293, %v1238
      %1315 = vst.msk [vmem:[#allocation3 + $0xa8] sm:$0xff] %vm1293, %v1240
      %1316 = vst.msk [vmem:[#allocation3 + $0xb0] sm:$0xff] %vm1293, %v1242
      %1317 = vst.msk [vmem:[#allocation3 + $0xb8] sm:$0xff] %vm1293, %v1244
      %1318 = vst.msk [vmem:[#allocation3 + $0xc0] sm:$0xff] %vm1293, %v1246
      %1319 = vst.msk [vmem:[#allocation3 + $0xc8] sm:$0xff] %vm1293, %v1248
      %1320 = vst.msk [vmem:[#allocation3 + $0xd0] sm:$0xff] %vm1293, %v1250
      %1321 = vst.msk [vmem:[#allocation3 + $0xd8] sm:$0xff] %vm1293, %v1252
      %1322 = vst.msk [vmem:[#allocation3 + $0xe0] sm:$0xff] %vm1293, %v1254
      %1323 = vst.msk [vmem:[#allocation3 + $0xe8] sm:$0xff] %vm1293, %v1256
      %1324 = vst.msk [vmem:[#allocation3 + $0xf0] sm:$0xff] %vm1293, %v1258
      %1325 = vst.msk [vmem:[#allocation3 + $0xf8] sm:$0xff] %vm1293, %v1260
      %v1326 = vld [vmem:[%s457 + $0x2] sm:$0xff]
      %v1327 = vld [vmem:[%s457 + $0xa] sm:$0xff]
      %v1328 = vld [vmem:[%s457 + $0x1a] sm:$0xff]
      %v1329 = vld [vmem:[%s457 + $0x22] sm:$0xff]
      %v1330 = vld [vmem:[%s457 + $0x32] sm:$0xff]
      %v1331 = vld [vmem:[%s457 + $0x3a] sm:$0xff]
      %v1332 = vld [vmem:[%s457 + $0x4a] sm:$0xff]
      %v1333 = vld [vmem:[%s457 + $0x52] sm:$0xff]
      %v1334 = vld [vmem:[%s457 + $0x62] sm:$0xff]
      %v1335 = vld [vmem:[%s457 + $0x6a] sm:$0xff]
      %v1336 = vld [vmem:[%s457 + $0x7a] sm:$0xff]
      %v1337 = vld [vmem:[%s457 + $0x82] sm:$0xff]
      %v1338 = vld [vmem:[%s457 + $0x92] sm:$0xff]
      %v1339 = vld [vmem:[%s457 + $0x9a] sm:$0xff]
      %v1340 = vld [vmem:[%s457 + $0xaa] sm:$0xff]
      %v1341 = vld [vmem:[%s457 + $0xb2] sm:$0xff]
      %v1342 = vld [vmem:[%s457 + $0xc2] sm:$0xff]
      %v1343 = vld [vmem:[%s457 + $0xca] sm:$0xff]
      %v1344 = vld [vmem:[%s457 + $0xda] sm:$0xff]
      %v1345 = vld [vmem:[%s457 + $0xe2] sm:$0xff]
      %v1346 = vld [vmem:[%s457 + $0xf2] sm:$0xff]
      %v1347 = vld [vmem:[%s457 + $0xfa] sm:$0xff]
      %v1348 = vld [vmem:[%s457 + $0x10a] sm:$0xff]
      %v1349 = vld [vmem:[%s457 + $0x112] sm:$0xff]
      %v1350 = vld [vmem:[%s457 + $0x122] sm:$0xff]
      %v1351 = vld [vmem:[%s457 + $0x12a] sm:$0xff]
      %v1352 = vld [vmem:[%s457 + $0x13a] sm:$0xff]
      %v1353 = vld [vmem:[%s457 + $0x142] sm:$0xff]
      %v1354 = vld [vmem:[%s457 + $0x152] sm:$0xff]
      %v1355 = vld [vmem:[%s457 + $0x15a] sm:$0xff]
      %v1356 = vld [vmem:[%s457 + $0x16a] sm:$0xff]
      %v1357 = vld [vmem:[%s457 + $0x172] sm:$0xff]
      %1390 = vrot.lane.b32.xlu0 %v1326, 40
      %v1391 = vpop.permute.xlu0 %1390
      %1392 = vrot.lane.b32.xlu0 %v1327, 40
      %v1393 = vpop.permute.xlu0 %1392
      %1394 = vrot.lane.b32.xlu0 %v1328, 40
      %v1395 = vpop.permute.xlu0 %1394
      %1396 = vrot.lane.b32.xlu0 %v1329, 40
      %v1397 = vpop.permute.xlu0 %1396
      %1398 = vrot.lane.b32.xlu0 %v1330, 40
      %v1399 = vpop.permute.xlu0 %1398
      %1400 = vrot.lane.b32.xlu0 %v1331, 40
      %v1401 = vpop.permute.xlu0 %1400
      %1402 = vrot.lane.b32.xlu0 %v1332, 40
      %v1403 = vpop.permute.xlu0 %1402
      %1404 = vrot.lane.b32.xlu0 %v1333, 40
      %v1405 = vpop.permute.xlu0 %1404
      %1406 = vrot.lane.b32.xlu0 %v1334, 40
      %v1407 = vpop.permute.xlu0 %1406
      %1408 = vrot.lane.b32.xlu0 %v1335, 40
      %v1409 = vpop.permute.xlu0 %1408
      %1410 = vrot.lane.b32.xlu0 %v1336, 40
      %v1411 = vpop.permute.xlu0 %1410
      %1412 = vrot.lane.b32.xlu0 %v1337, 40
      %v1413 = vpop.permute.xlu0 %1412
      %1414 = vrot.lane.b32.xlu0 %v1338, 40
      %v1415 = vpop.permute.xlu0 %1414
      %1416 = vrot.lane.b32.xlu0 %v1339, 40
      %v1417 = vpop.permute.xlu0 %1416
      %1418 = vrot.lane.b32.xlu0 %v1340, 40
      %v1419 = vpop.permute.xlu0 %1418
      %1420 = vrot.lane.b32.xlu0 %v1341, 40
      %v1421 = vpop.permute.xlu0 %1420
      %1422 = vrot.lane.b32.xlu0 %v1342, 40
      %v1423 = vpop.permute.xlu0 %1422
      %1424 = vrot.lane.b32.xlu0 %v1343, 40
      %v1425 = vpop.permute.xlu0 %1424
      %1426 = vrot.lane.b32.xlu0 %v1344, 40
      %v1427 = vpop.permute.xlu0 %1426
      %1428 = vrot.lane.b32.xlu0 %v1345, 40
      %v1429 = vpop.permute.xlu0 %1428
      %1430 = vrot.lane.b32.xlu0 %v1346, 40
      %v1431 = vpop.permute.xlu0 %1430
      %1432 = vrot.lane.b32.xlu0 %v1347, 40
      %v1433 = vpop.permute.xlu0 %1432
      %1434 = vrot.lane.b32.xlu0 %v1348, 40
      %v1435 = vpop.permute.xlu0 %1434
      %1436 = vrot.lane.b32.xlu0 %v1349, 40
      %v1437 = vpop.permute.xlu0 %1436
      %1438 = vrot.lane.b32.xlu0 %v1350, 40
      %v1439 = vpop.permute.xlu0 %1438
      %1440 = vrot.lane.b32.xlu0 %v1351, 40
      %v1441 = vpop.permute.xlu0 %1440
      %1442 = vrot.lane.b32.xlu0 %v1352, 40
      %v1443 = vpop.permute.xlu0 %1442
      %1444 = vrot.lane.b32.xlu0 %v1353, 40
      %v1445 = vpop.permute.xlu0 %1444
      %1446 = vrot.lane.b32.xlu0 %v1354, 40
      %v1447 = vpop.permute.xlu0 %1446
      %1448 = vrot.lane.b32.xlu0 %v1355, 40
      %v1449 = vpop.permute.xlu0 %1448
      %1450 = vrot.lane.b32.xlu0 %v1356, 40
      %v1451 = vpop.permute.xlu0 %1450
      %1452 = vrot.lane.b32.xlu0 %v1357, 40
      %v1453 = vpop.permute.xlu0 %1452
      %vm1486 = vcmask 392512
      %1487 = vst.msk [vmem:[#allocation3] sm:$0xff] %vm1486, %v1391
      %1488 = vst.msk [vmem:[#allocation3 + $0x8] sm:$0xff] %vm1486, %v1393
      %1489 = vst.msk [vmem:[#allocation3 + $0x10] sm:$0xff] %vm1486, %v1395
      %1490 = vst.msk [vmem:[#allocation3 + $0x18] sm:$0xff] %vm1486, %v1397
      %1491 = vst.msk [vmem:[#allocation3 + $0x20] sm:$0xff] %vm1486, %v1399
      %1492 = vst.msk [vmem:[#allocation3 + $0x28] sm:$0xff] %vm1486, %v1401
      %1493 = vst.msk [vmem:[#allocation3 + $0x30] sm:$0xff] %vm1486, %v1403
      %1494 = vst.msk [vmem:[#allocation3 + $0x38] sm:$0xff] %vm1486, %v1405
      %1495 = vst.msk [vmem:[#allocation3 + $0x40] sm:$0xff] %vm1486, %v1407
      %1496 = vst.msk [vmem:[#allocation3 + $0x48] sm:$0xff] %vm1486, %v1409
      %1497 = vst.msk [vmem:[#allocation3 + $0x50] sm:$0xff] %vm1486, %v1411
      %1498 = vst.msk [vmem:[#allocation3 + $0x58] sm:$0xff] %vm1486, %v1413
      %1499 = vst.msk [vmem:[#allocation3 + $0x60] sm:$0xff] %vm1486, %v1415
      %1500 = vst.msk [vmem:[#allocation3 + $0x68] sm:$0xff] %vm1486, %v1417
      %1501 = vst.msk [vmem:[#allocation3 + $0x70] sm:$0xff] %vm1486, %v1419
      %1502 = vst.msk [vmem:[#allocation3 + $0x78] sm:$0xff] %vm1486, %v1421
      %1503 = vst.msk [vmem:[#allocation3 + $0x80] sm:$0xff] %vm1486, %v1423
      %1504 = vst.msk [vmem:[#allocation3 + $0x88] sm:$0xff] %vm1486, %v1425
      %1505 = vst.msk [vmem:[#allocation3 + $0x90] sm:$0xff] %vm1486, %v1427
      %1506 = vst.msk [vmem:[#allocation3 + $0x98] sm:$0xff] %vm1486, %v1429
      %1507 = vst.msk [vmem:[#allocation3 + $0xa0] sm:$0xff] %vm1486, %v1431
      %1508 = vst.msk [vmem:[#allocation3 + $0xa8] sm:$0xff] %vm1486, %v1433
      %1509 = vst.msk [vmem:[#allocation3 + $0xb0] sm:$0xff] %vm1486, %v1435
      %1510 = vst.msk [vmem:[#allocation3 + $0xb8] sm:$0xff] %vm1486, %v1437
      %1511 = vst.msk [vmem:[#allocation3 + $0xc0] sm:$0xff] %vm1486, %v1439
      %1512 = vst.msk [vmem:[#allocation3 + $0xc8] sm:$0xff] %vm1486, %v1441
      %1513 = vst.msk [vmem:[#allocation3 + $0xd0] sm:$0xff] %vm1486, %v1443
      %1514 = vst.msk [vmem:[#allocation3 + $0xd8] sm:$0xff] %vm1486, %v1445
      %1515 = vst.msk [vmem:[#allocation3 + $0xe0] sm:$0xff] %vm1486, %v1447
      %1516 = vst.msk [vmem:[#allocation3 + $0xe8] sm:$0xff] %vm1486, %v1449
      %1517 = vst.msk [vmem:[#allocation3 + $0xf0] sm:$0xff] %vm1486, %v1451
      %1518 = vst.msk [vmem:[#allocation3 + $0xf8] sm:$0xff] %vm1486, %v1453
      %s1519 = scalar_lea.vmem [#allocation2], 48
      %v1520 = vld [vmem:[%s1519] sm:$0xff]
      %v1521 = vld [vmem:[%s1519 + $0x8] sm:$0xff]
      %v1522 = vld [vmem:[%s1519 + $0x18] sm:$0xff]
      %v1523 = vld [vmem:[%s1519 + $0x20] sm:$0xff]
      %v1524 = vld [vmem:[%s1519 + $0x30] sm:$0xff]
      %v1525 = vld [vmem:[%s1519 + $0x38] sm:$0xff]
      %v1526 = vld [vmem:[%s1519 + $0x48] sm:$0xff]
      %v1527 = vld [vmem:[%s1519 + $0x50] sm:$0xff]
      %v1528 = vld [vmem:[%s1519 + $0x60] sm:$0xff]
      %v1529 = vld [vmem:[%s1519 + $0x68] sm:$0xff]
      %v1530 = vld [vmem:[%s1519 + $0x78] sm:$0xff]
      %v1531 = vld [vmem:[%s1519 + $0x80] sm:$0xff]
      %v1532 = vld [vmem:[%s1519 + $0x90] sm:$0xff]
      %v1533 = vld [vmem:[%s1519 + $0x98] sm:$0xff]
      %v1534 = vld [vmem:[%s1519 + $0xa8] sm:$0xff]
      %v1535 = vld [vmem:[%s1519 + $0xb0] sm:$0xff]
      %v1536 = vld [vmem:[%s1519 + $0xc0] sm:$0xff]
      %v1537 = vld [vmem:[%s1519 + $0xc8] sm:$0xff]
      %v1538 = vld [vmem:[%s1519 + $0xd8] sm:$0xff]
      %v1539 = vld [vmem:[%s1519 + $0xe0] sm:$0xff]
      %v1540 = vld [vmem:[%s1519 + $0xf0] sm:$0xff]
      %v1541 = vld [vmem:[%s1519 + $0xf8] sm:$0xff]
      %v1542 = vld [vmem:[%s1519 + $0x108] sm:$0xff]
      %v1543 = vld [vmem:[%s1519 + $0x110] sm:$0xff]
      %v1544 = vld [vmem:[%s1519 + $0x120] sm:$0xff]
      %v1545 = vld [vmem:[%s1519 + $0x128] sm:$0xff]
      %v1546 = vld [vmem:[%s1519 + $0x138] sm:$0xff]
      %v1547 = vld [vmem:[%s1519 + $0x140] sm:$0xff]
      %v1548 = vld [vmem:[%s1519 + $0x150] sm:$0xff]
      %v1549 = vld [vmem:[%s1519 + $0x158] sm:$0xff]
      %v1550 = vld [vmem:[%s1519 + $0x168] sm:$0xff]
      %v1551 = vld [vmem:[%s1519 + $0x170] sm:$0xff]
      %1584 = vrot.lane.b32.xlu0 %v1520, 48
      %v1585 = vpop.permute.xlu0 %1584
      %1586 = vrot.lane.b32.xlu0 %v1521, 48
      %v1587 = vpop.permute.xlu0 %1586
      %1588 = vrot.lane.b32.xlu0 %v1522, 48
      %v1589 = vpop.permute.xlu0 %1588
      %1590 = vrot.lane.b32.xlu0 %v1523, 48
      %v1591 = vpop.permute.xlu0 %1590
      %1592 = vrot.lane.b32.xlu0 %v1524, 48
      %v1593 = vpop.permute.xlu0 %1592
      %1594 = vrot.lane.b32.xlu0 %v1525, 48
      %v1595 = vpop.permute.xlu0 %1594
      %1596 = vrot.lane.b32.xlu0 %v1526, 48
      %v1597 = vpop.permute.xlu0 %1596
      %1598 = vrot.lane.b32.xlu0 %v1527, 48
      %v1599 = vpop.permute.xlu0 %1598
      %1600 = vrot.lane.b32.xlu0 %v1528, 48
      %v1601 = vpop.permute.xlu0 %1600
      %1602 = vrot.lane.b32.xlu0 %v1529, 48
      %v1603 = vpop.permute.xlu0 %1602
      %1604 = vrot.lane.b32.xlu0 %v1530, 48
      %v1605 = vpop.permute.xlu0 %1604
      %1606 = vrot.lane.b32.xlu0 %v1531, 48
      %v1607 = vpop.permute.xlu0 %1606
      %1608 = vrot.lane.b32.xlu0 %v1532, 48
      %v1609 = vpop.permute.xlu0 %1608
      %1610 = vrot.lane.b32.xlu0 %v1533, 48
      %v1611 = vpop.permute.xlu0 %1610
      %1612 = vrot.lane.b32.xlu0 %v1534, 48
      %v1613 = vpop.permute.xlu0 %1612
      %1614 = vrot.lane.b32.xlu0 %v1535, 48
      %v1615 = vpop.permute.xlu0 %1614
      %1616 = vrot.lane.b32.xlu0 %v1536, 48
      %v1617 = vpop.permute.xlu0 %1616
      %1618 = vrot.lane.b32.xlu0 %v1537, 48
      %v1619 = vpop.permute.xlu0 %1618
      %1620 = vrot.lane.b32.xlu0 %v1538, 48
      %v1621 = vpop.permute.xlu0 %1620
      %1622 = vrot.lane.b32.xlu0 %v1539, 48
      %v1623 = vpop.permute.xlu0 %1622
      %1624 = vrot.lane.b32.xlu0 %v1540, 48
      %v1625 = vpop.permute.xlu0 %1624
      %1626 = vrot.lane.b32.xlu0 %v1541, 48
      %v1627 = vpop.permute.xlu0 %1626
      %1628 = vrot.lane.b32.xlu0 %v1542, 48
      %v1629 = vpop.permute.xlu0 %1628
      %1630 = vrot.lane.b32.xlu0 %v1543, 48
      %v1631 = vpop.permute.xlu0 %1630
      %1632 = vrot.lane.b32.xlu0 %v1544, 48
      %v1633 = vpop.permute.xlu0 %1632
      %1634 = vrot.lane.b32.xlu0 %v1545, 48
      %v1635 = vpop.permute.xlu0 %1634
      %1636 = vrot.lane.b32.xlu0 %v1546, 48
      %v1637 = vpop.permute.xlu0 %1636
      %1638 = vrot.lane.b32.xlu0 %v1547, 48
      %v1639 = vpop.permute.xlu0 %1638
      %1640 = vrot.lane.b32.xlu0 %v1548, 48
      %v1641 = vpop.permute.xlu0 %1640
      %1642 = vrot.lane.b32.xlu0 %v1549, 48
      %v1643 = vpop.permute.xlu0 %1642
      %1644 = vrot.lane.b32.xlu0 %v1550, 48
      %v1645 = vpop.permute.xlu0 %1644
      %1646 = vrot.lane.b32.xlu0 %v1551, 48
      %v1647 = vpop.permute.xlu0 %1646
      %vm1680 = vcmask 458112
      %1681 = vst.msk [vmem:[#allocation3] sm:$0xff] %vm1680, %v1585
      %1682 = vst.msk [vmem:[#allocation3 + $0x8] sm:$0xff] %vm1680, %v1587
      %1683 = vst.msk [vmem:[#allocation3 + $0x10] sm:$0xff] %vm1680, %v1589
      %1684 = vst.msk [vmem:[#allocation3 + $0x18] sm:$0xff] %vm1680, %v1591
      %1685 = vst.msk [vmem:[#allocation3 + $0x20] sm:$0xff] %vm1680, %v1593
      %1686 = vst.msk [vmem:[#allocation3 + $0x28] sm:$0xff] %vm1680, %v1595
      %1687 = vst.msk [vmem:[#allocation3 + $0x30] sm:$0xff] %vm1680, %v1597
      %1688 = vst.msk [vmem:[#allocation3 + $0x38] sm:$0xff] %vm1680, %v1599
      %1689 = vst.msk [vmem:[#allocation3 + $0x40] sm:$0xff] %vm1680, %v1601
      %1690 = vst.msk [vmem:[#allocation3 + $0x48] sm:$0xff] %vm1680, %v1603
      %1691 = vst.msk [vmem:[#allocation3 + $0x50] sm:$0xff] %vm1680, %v1605
      %1692 = vst.msk [vmem:[#allocation3 + $0x58] sm:$0xff] %vm1680, %v1607
      %1693 = vst.msk [vmem:[#allocation3 + $0x60] sm:$0xff] %vm1680, %v1609
      %1694 = vst.msk [vmem:[#allocation3 + $0x68] sm:$0xff] %vm1680, %v1611
      %1695 = vst.msk [vmem:[#allocation3 + $0x70] sm:$0xff] %vm1680, %v1613
      %1696 = vst.msk [vmem:[#allocation3 + $0x78] sm:$0xff] %vm1680, %v1615
      %1697 = vst.msk [vmem:[#allocation3 + $0x80] sm:$0xff] %vm1680, %v1617
      %1698 = vst.msk [vmem:[#allocation3 + $0x88] sm:$0xff] %vm1680, %v1619
      %1699 = vst.msk [vmem:[#allocation3 + $0x90] sm:$0xff] %vm1680, %v1621
      %1700 = vst.msk [vmem:[#allocation3 + $0x98] sm:$0xff] %vm1680, %v1623
      %1701 = vst.msk [vmem:[#allocation3 + $0xa0] sm:$0xff] %vm1680, %v1625
      %1702 = vst.msk [vmem:[#allocation3 + $0xa8] sm:$0xff] %vm1680, %v1627
      %1703 = vst.msk [vmem:[#allocation3 + $0xb0] sm:$0xff] %vm1680, %v1629
      %1704 = vst.msk [vmem:[#allocation3 + $0xb8] sm:$0xff] %vm1680, %v1631
      %1705 = vst.msk [vmem:[#allocation3 + $0xc0] sm:$0xff] %vm1680, %v1633
      %1706 = vst.msk [vmem:[#allocation3 + $0xc8] sm:$0xff] %vm1680, %v1635
      %1707 = vst.msk [vmem:[#allocation3 + $0xd0] sm:$0xff] %vm1680, %v1637
      %1708 = vst.msk [vmem:[#allocation3 + $0xd8] sm:$0xff] %vm1680, %v1639
      %1709 = vst.msk [vmem:[#allocation3 + $0xe0] sm:$0xff] %vm1680, %v1641
      %1710 = vst.msk [vmem:[#allocation3 + $0xe8] sm:$0xff] %vm1680, %v1643
      %1711 = vst.msk [vmem:[#allocation3 + $0xf0] sm:$0xff] %vm1680, %v1645
      %1712 = vst.msk [vmem:[#allocation3 + $0xf8] sm:$0xff] %vm1680, %v1647
      %v1713 = vld [vmem:[%s1519 + $0x1] sm:$0xff]
      %v1714 = vld [vmem:[%s1519 + $0x9] sm:$0xff]
      %v1715 = vld [vmem:[%s1519 + $0x19] sm:$0xff]
      %v1716 = vld [vmem:[%s1519 + $0x21] sm:$0xff]
      %v1717 = vld [vmem:[%s1519 + $0x31] sm:$0xff]
      %v1718 = vld [vmem:[%s1519 + $0x39] sm:$0xff]
      %v1719 = vld [vmem:[%s1519 + $0x49] sm:$0xff]
      %v1720 = vld [vmem:[%s1519 + $0x51] sm:$0xff]
      %v1721 = vld [vmem:[%s1519 + $0x61] sm:$0xff]
      %v1722 = vld [vmem:[%s1519 + $0x69] sm:$0xff]
      %v1723 = vld [vmem:[%s1519 + $0x79] sm:$0xff]
      %v1724 = vld [vmem:[%s1519 + $0x81] sm:$0xff]
      %v1725 = vld [vmem:[%s1519 + $0x91] sm:$0xff]
      %v1726 = vld [vmem:[%s1519 + $0x99] sm:$0xff]
      %v1727 = vld [vmem:[%s1519 + $0xa9] sm:$0xff]
      %v1728 = vld [vmem:[%s1519 + $0xb1] sm:$0xff]
      %v1729 = vld [vmem:[%s1519 + $0xc1] sm:$0xff]
      %v1730 = vld [vmem:[%s1519 + $0xc9] sm:$0xff]
      %v1731 = vld [vmem:[%s1519 + $0xd9] sm:$0xff]
      %v1732 = vld [vmem:[%s1519 + $0xe1] sm:$0xff]
      %v1733 = vld [vmem:[%s1519 + $0xf1] sm:$0xff]
      %v1734 = vld [vmem:[%s1519 + $0xf9] sm:$0xff]
      %v1735 = vld [vmem:[%s1519 + $0x109] sm:$0xff]
      %v1736 = vld [vmem:[%s1519 + $0x111] sm:$0xff]
      %v1737 = vld [vmem:[%s1519 + $0x121] sm:$0xff]
      %v1738 = vld [vmem:[%s1519 + $0x129] sm:$0xff]
      %v1739 = vld [vmem:[%s1519 + $0x139] sm:$0xff]
      %v1740 = vld [vmem:[%s1519 + $0x141] sm:$0xff]
      %v1741 = vld [vmem:[%s1519 + $0x151] sm:$0xff]
      %v1742 = vld [vmem:[%s1519 + $0x159] sm:$0xff]
      %v1743 = vld [vmem:[%s1519 + $0x169] sm:$0xff]
      %v1744 = vld [vmem:[%s1519 + $0x171] sm:$0xff]
      %1777 = vrot.lane.b32.xlu0 %v1713, 56
      %v1778 = vpop.permute.xlu0 %1777
      %1779 = vrot.lane.b32.xlu0 %v1714, 56
      %v1780 = vpop.permute.xlu0 %1779
      %1781 = vrot.lane.b32.xlu0 %v1715, 56
      %v1782 = vpop.permute.xlu0 %1781
      %1783 = vrot.lane.b32.xlu0 %v1716, 56
      %v1784 = vpop.permute.xlu0 %1783
      %1785 = vrot.lane.b32.xlu0 %v1717, 56
      %v1786 = vpop.permute.xlu0 %1785
      %1787 = vrot.lane.b32.xlu0 %v1718, 56
      %v1788 = vpop.permute.xlu0 %1787
      %1789 = vrot.lane.b32.xlu0 %v1719, 56
      %v1790 = vpop.permute.xlu0 %1789
      %1791 = vrot.lane.b32.xlu0 %v1720, 56
      %v1792 = vpop.permute.xlu0 %1791
      %1793 = vrot.lane.b32.xlu0 %v1721, 56
      %v1794 = vpop.permute.xlu0 %1793
      %1795 = vrot.lane.b32.xlu0 %v1722, 56
      %v1796 = vpop.permute.xlu0 %1795
      %1797 = vrot.lane.b32.xlu0 %v1723, 56
      %v1798 = vpop.permute.xlu0 %1797
      %1799 = vrot.lane.b32.xlu0 %v1724, 56
      %v1800 = vpop.permute.xlu0 %1799
      %1801 = vrot.lane.b32.xlu0 %v1725, 56
      %v1802 = vpop.permute.xlu0 %1801
      %1803 = vrot.lane.b32.xlu0 %v1726, 56
      %v1804 = vpop.permute.xlu0 %1803
      %1805 = vrot.lane.b32.xlu0 %v1727, 56
      %v1806 = vpop.permute.xlu0 %1805
      %1807 = vrot.lane.b32.xlu0 %v1728, 56
      %v1808 = vpop.permute.xlu0 %1807
      %1809 = vrot.lane.b32.xlu0 %v1729, 56
      %v1810 = vpop.permute.xlu0 %1809
      %1811 = vrot.lane.b32.xlu0 %v1730, 56
      %v1812 = vpop.permute.xlu0 %1811
      %1813 = vrot.lane.b32.xlu0 %v1731, 56
      %v1814 = vpop.permute.xlu0 %1813
      %1815 = vrot.lane.b32.xlu0 %v1732, 56
      %v1816 = vpop.permute.xlu0 %1815
      %1817 = vrot.lane.b32.xlu0 %v1733, 56
      %v1818 = vpop.permute.xlu0 %1817
      %1819 = vrot.lane.b32.xlu0 %v1734, 56
      %v1820 = vpop.permute.xlu0 %1819
      %1821 = vrot.lane.b32.xlu0 %v1735, 56
      %v1822 = vpop.permute.xlu0 %1821
      %1823 = vrot.lane.b32.xlu0 %v1736, 56
      %v1824 = vpop.permute.xlu0 %1823
      %1825 = vrot.lane.b32.xlu0 %v1737, 56
      %v1826 = vpop.permute.xlu0 %1825
      %1827 = vrot.lane.b32.xlu0 %v1738, 56
      %v1828 = vpop.permute.xlu0 %1827
      %1829 = vrot.lane.b32.xlu0 %v1739, 56
      %v1830 = vpop.permute.xlu0 %1829
      %1831 = vrot.lane.b32.xlu0 %v1740, 56
      %v1832 = vpop.permute.xlu0 %1831
      %1833 = vrot.lane.b32.xlu0 %v1741, 56
      %v1834 = vpop.permute.xlu0 %1833
      %1835 = vrot.lane.b32.xlu0 %v1742, 56
      %v1836 = vpop.permute.xlu0 %1835
      %1837 = vrot.lane.b32.xlu0 %v1743, 56
      %v1838 = vpop.permute.xlu0 %1837
      %1839 = vrot.lane.b32.xlu0 %v1744, 56
      %v1840 = vpop.permute.xlu0 %1839
      %vm1873 = vcmask 523712
      %1874 = vst.msk [vmem:[#allocation3] sm:$0xff] %vm1873, %v1778
      %1875 = vst.msk [vmem:[#allocation3 + $0x8] sm:$0xff] %vm1873, %v1780
      %1876 = vst.msk [vmem:[#allocation3 + $0x10] sm:$0xff] %vm1873, %v1782
      %1877 = vst.msk [vmem:[#allocation3 + $0x18] sm:$0xff] %vm1873, %v1784
      %1878 = vst.msk [vmem:[#allocation3 + $0x20] sm:$0xff] %vm1873, %v1786
      %1879 = vst.msk [vmem:[#allocation3 + $0x28] sm:$0xff] %vm1873, %v1788
      %1880 = vst.msk [vmem:[#allocation3 + $0x30] sm:$0xff] %vm1873, %v1790
      %1881 = vst.msk [vmem:[#allocation3 + $0x38] sm:$0xff] %vm1873, %v1792
      %1882 = vst.msk [vmem:[#allocation3 + $0x40] sm:$0xff] %vm1873, %v1794
      %1883 = vst.msk [vmem:[#allocation3 + $0x48] sm:$0xff] %vm1873, %v1796
      %1884 = vst.msk [vmem:[#allocation3 + $0x50] sm:$0xff] %vm1873, %v1798
      %1885 = vst.msk [vmem:[#allocation3 + $0x58] sm:$0xff] %vm1873, %v1800
      %1886 = vst.msk [vmem:[#allocation3 + $0x60] sm:$0xff] %vm1873, %v1802
      %1887 = vst.msk [vmem:[#allocation3 + $0x68] sm:$0xff] %vm1873, %v1804
      %1888 = vst.msk [vmem:[#allocation3 + $0x70] sm:$0xff] %vm1873, %v1806
      %1889 = vst.msk [vmem:[#allocation3 + $0x78] sm:$0xff] %vm1873, %v1808
      %1890 = vst.msk [vmem:[#allocation3 + $0x80] sm:$0xff] %vm1873, %v1810
      %1891 = vst.msk [vmem:[#allocation3 + $0x88] sm:$0xff] %vm1873, %v1812
      %1892 = vst.msk [vmem:[#allocation3 + $0x90] sm:$0xff] %vm1873, %v1814
      %1893 = vst.msk [vmem:[#allocation3 + $0x98] sm:$0xff] %vm1873, %v1816
      %1894 = vst.msk [vmem:[#allocation3 + $0xa0] sm:$0xff] %vm1873, %v1818
      %1895 = vst.msk [vmem:[#allocation3 + $0xa8] sm:$0xff] %vm1873, %v1820
      %1896 = vst.msk [vmem:[#allocation3 + $0xb0] sm:$0xff] %vm1873, %v1822
      %1897 = vst.msk [vmem:[#allocation3 + $0xb8] sm:$0xff] %vm1873, %v1824
      %1898 = vst.msk [vmem:[#allocation3 + $0xc0] sm:$0xff] %vm1873, %v1826
      %1899 = vst.msk [vmem:[#allocation3 + $0xc8] sm:$0xff] %vm1873, %v1828
      %1900 = vst.msk [vmem:[#allocation3 + $0xd0] sm:$0xff] %vm1873, %v1830
      %1901 = vst.msk [vmem:[#allocation3 + $0xd8] sm:$0xff] %vm1873, %v1832
      %1902 = vst.msk [vmem:[#allocation3 + $0xe0] sm:$0xff] %vm1873, %v1834
      %1903 = vst.msk [vmem:[#allocation3 + $0xe8] sm:$0xff] %vm1873, %v1836
      %1904 = vst.msk [vmem:[#allocation3 + $0xf0] sm:$0xff] %vm1873, %v1838
      %1905 = vst.msk [vmem:[#allocation3 + $0xf8] sm:$0xff] %vm1873, %v1840
      %v1906 = vld [vmem:[%s1519 + $0x2] sm:$0xff]
      %v1907 = vld [vmem:[%s1519 + $0xa] sm:$0xff]
      %v1908 = vld [vmem:[%s1519 + $0x1a] sm:$0xff]
      %v1909 = vld [vmem:[%s1519 + $0x22] sm:$0xff]
      %v1910 = vld [vmem:[%s1519 + $0x32] sm:$0xff]
      %v1911 = vld [vmem:[%s1519 + $0x3a] sm:$0xff]
      %v1912 = vld [vmem:[%s1519 + $0x4a] sm:$0xff]
      %v1913 = vld [vmem:[%s1519 + $0x52] sm:$0xff]
      %v1914 = vld [vmem:[%s1519 + $0x62] sm:$0xff]
      %v1915 = vld [vmem:[%s1519 + $0x6a] sm:$0xff]
      %v1916 = vld [vmem:[%s1519 + $0x7a] sm:$0xff]
      %v1917 = vld [vmem:[%s1519 + $0x82] sm:$0xff]
      %v1918 = vld [vmem:[%s1519 + $0x92] sm:$0xff]
      %v1919 = vld [vmem:[%s1519 + $0x9a] sm:$0xff]
      %v1920 = vld [vmem:[%s1519 + $0xaa] sm:$0xff]
      %v1921 = vld [vmem:[%s1519 + $0xb2] sm:$0xff]
      %v1922 = vld [vmem:[%s1519 + $0xc2] sm:$0xff]
      %v1923 = vld [vmem:[%s1519 + $0xca] sm:$0xff]
      %v1924 = vld [vmem:[%s1519 + $0xda] sm:$0xff]
      %v1925 = vld [vmem:[%s1519 + $0xe2] sm:$0xff]
      %v1926 = vld [vmem:[%s1519 + $0xf2] sm:$0xff]
      %v1927 = vld [vmem:[%s1519 + $0xfa] sm:$0xff]
      %v1928 = vld [vmem:[%s1519 + $0x10a] sm:$0xff]
      %v1929 = vld [vmem:[%s1519 + $0x112] sm:$0xff]
      %v1930 = vld [vmem:[%s1519 + $0x122] sm:$0xff]
      %v1931 = vld [vmem:[%s1519 + $0x12a] sm:$0xff]
      %v1932 = vld [vmem:[%s1519 + $0x13a] sm:$0xff]
      %v1933 = vld [vmem:[%s1519 + $0x142] sm:$0xff]
      %v1934 = vld [vmem:[%s1519 + $0x152] sm:$0xff]
      %v1935 = vld [vmem:[%s1519 + $0x15a] sm:$0xff]
      %v1936 = vld [vmem:[%s1519 + $0x16a] sm:$0xff]
      %v1937 = vld [vmem:[%s1519 + $0x172] sm:$0xff]
      %1970 = vrot.lane.b32.xlu0 %v1906, 64
      %v1971 = vpop.permute.xlu0 %1970
      %1972 = vrot.lane.b32.xlu0 %v1907, 64
      %v1973 = vpop.permute.xlu0 %1972
      %1974 = vrot.lane.b32.xlu0 %v1908, 64
      %v1975 = vpop.permute.xlu0 %1974
      %1976 = vrot.lane.b32.xlu0 %v1909, 64
      %v1977 = vpop.permute.xlu0 %1976
      %1978 = vrot.lane.b32.xlu0 %v1910, 64
      %v1979 = vpop.permute.xlu0 %1978
      %1980 = vrot.lane.b32.xlu0 %v1911, 64
      %v1981 = vpop.permute.xlu0 %1980
      %1982 = vrot.lane.b32.xlu0 %v1912, 64
      %v1983 = vpop.permute.xlu0 %1982
      %1984 = vrot.lane.b32.xlu0 %v1913, 64
      %v1985 = vpop.permute.xlu0 %1984
      %1986 = vrot.lane.b32.xlu0 %v1914, 64
      %v1987 = vpop.permute.xlu0 %1986
      %1988 = vrot.lane.b32.xlu0 %v1915, 64
      %v1989 = vpop.permute.xlu0 %1988
      %1990 = vrot.lane.b32.xlu0 %v1916, 64
      %v1991 = vpop.permute.xlu0 %1990
      %1992 = vrot.lane.b32.xlu0 %v1917, 64
      %v1993 = vpop.permute.xlu0 %1992
      %1994 = vrot.lane.b32.xlu0 %v1918, 64
      %v1995 = vpop.permute.xlu0 %1994
      %1996 = vrot.lane.b32.xlu0 %v1919, 64
      %v1997 = vpop.permute.xlu0 %1996
      %1998 = vrot.lane.b32.xlu0 %v1920, 64
      %v1999 = vpop.permute.xlu0 %1998
      %2000 = vrot.lane.b32.xlu0 %v1921, 64
      %v2001 = vpop.permute.xlu0 %2000
      %2002 = vrot.lane.b32.xlu0 %v1922, 64
      %v2003 = vpop.permute.xlu0 %2002
      %2004 = vrot.lane.b32.xlu0 %v1923, 64
      %v2005 = vpop.permute.xlu0 %2004
      %2006 = vrot.lane.b32.xlu0 %v1924, 64
      %v2007 = vpop.permute.xlu0 %2006
      %2008 = vrot.lane.b32.xlu0 %v1925, 64
      %v2009 = vpop.permute.xlu0 %2008
      %2010 = vrot.lane.b32.xlu0 %v1926, 64
      %v2011 = vpop.permute.xlu0 %2010
      %2012 = vrot.lane.b32.xlu0 %v1927, 64
      %v2013 = vpop.permute.xlu0 %2012
      %2014 = vrot.lane.b32.xlu0 %v1928, 64
      %v2015 = vpop.permute.xlu0 %2014
      %2016 = vrot.lane.b32.xlu0 %v1929, 64
      %v2017 = vpop.permute.xlu0 %2016
      %2018 = vrot.lane.b32.xlu0 %v1930, 64
      %v2019 = vpop.permute.xlu0 %2018
      %2020 = vrot.lane.b32.xlu0 %v1931, 64
      %v2021 = vpop.permute.xlu0 %2020
      %2022 = vrot.lane.b32.xlu0 %v1932, 64
      %v2023 = vpop.permute.xlu0 %2022
      %2024 = vrot.lane.b32.xlu0 %v1933, 64
      %v2025 = vpop.permute.xlu0 %2024
      %2026 = vrot.lane.b32.xlu0 %v1934, 64
      %v2027 = vpop.permute.xlu0 %2026
      %2028 = vrot.lane.b32.xlu0 %v1935, 64
      %v2029 = vpop.permute.xlu0 %2028
      %2030 = vrot.lane.b32.xlu0 %v1936, 64
      %v2031 = vpop.permute.xlu0 %2030
      %2032 = vrot.lane.b32.xlu0 %v1937, 64
      %v2033 = vpop.permute.xlu0 %2032
      %vm2066 = vcmask 589312
      %2067 = vst.msk [vmem:[#allocation3] sm:$0xff] %vm2066, %v1971
      %2068 = vst.msk [vmem:[#allocation3 + $0x8] sm:$0xff] %vm2066, %v1973
      %2069 = vst.msk [vmem:[#allocation3 + $0x10] sm:$0xff] %vm2066, %v1975
      %2070 = vst.msk [vmem:[#allocation3 + $0x18] sm:$0xff] %vm2066, %v1977
      %2071 = vst.msk [vmem:[#allocation3 + $0x20] sm:$0xff] %vm2066, %v1979
      %2072 = vst.msk [vmem:[#allocation3 + $0x28] sm:$0xff] %vm2066, %v1981
      %2073 = vst.msk [vmem:[#allocation3 + $0x30] sm:$0xff] %vm2066, %v1983
      %2074 = vst.msk [vmem:[#allocation3 + $0x38] sm:$0xff] %vm2066, %v1985
      %2075 = vst.msk [vmem:[#allocation3 + $0x40] sm:$0xff] %vm2066, %v1987
      %2076 = vst.msk [vmem:[#allocation3 + $0x48] sm:$0xff] %vm2066, %v1989
      %2077 = vst.msk [vmem:[#allocation3 + $0x50] sm:$0xff] %vm2066, %v1991
      %2078 = vst.msk [vmem:[#allocation3 + $0x58] sm:$0xff] %vm2066, %v1993
      %2079 = vst.msk [vmem:[#allocation3 + $0x60] sm:$0xff] %vm2066, %v1995
      %2080 = vst.msk [vmem:[#allocation3 + $0x68] sm:$0xff] %vm2066, %v1997
      %2081 = vst.msk [vmem:[#allocation3 + $0x70] sm:$0xff] %vm2066, %v1999
      %2082 = vst.msk [vmem:[#allocation3 + $0x78] sm:$0xff] %vm2066, %v2001
      %2083 = vst.msk [vmem:[#allocation3 + $0x80] sm:$0xff] %vm2066, %v2003
      %2084 = vst.msk [vmem:[#allocation3 + $0x88] sm:$0xff] %vm2066, %v2005
      %2085 = vst.msk [vmem:[#allocation3 + $0x90] sm:$0xff] %vm2066, %v2007
      %2086 = vst.msk [vmem:[#allocation3 + $0x98] sm:$0xff] %vm2066, %v2009
      %2087 = vst.msk [vmem:[#allocation3 + $0xa0] sm:$0xff] %vm2066, %v2011
      %2088 = vst.msk [vmem:[#allocation3 + $0xa8] sm:$0xff] %vm2066, %v2013
      %2089 = vst.msk [vmem:[#allocation3 + $0xb0] sm:$0xff] %vm2066, %v2015
      %2090 = vst.msk [vmem:[#allocation3 + $0xb8] sm:$0xff] %vm2066, %v2017
      %2091 = vst.msk [vmem:[#allocation3 + $0xc0] sm:$0xff] %vm2066, %v2019
      %2092 = vst.msk [vmem:[#allocation3 + $0xc8] sm:$0xff] %vm2066, %v2021
      %2093 = vst.msk [vmem:[#allocation3 + $0xd0] sm:$0xff] %vm2066, %v2023
      %2094 = vst.msk [vmem:[#allocation3 + $0xd8] sm:$0xff] %vm2066, %v2025
      %2095 = vst.msk [vmem:[#allocation3 + $0xe0] sm:$0xff] %vm2066, %v2027
      %2096 = vst.msk [vmem:[#allocation3 + $0xe8] sm:$0xff] %vm2066, %v2029
      %2097 = vst.msk [vmem:[#allocation3 + $0xf0] sm:$0xff] %vm2066, %v2031
      %2098 = vst.msk [vmem:[#allocation3 + $0xf8] sm:$0xff] %vm2066, %v2033
      %v2099 = vld [vmem:[#allocation3] sm:$0xff]
      %v2100 = vld [vmem:[#allocation3 + $0x8] sm:$0xff]
      %v2101 = vld [vmem:[#allocation3 + $0x10] sm:$0xff]
      %v2102 = vld [vmem:[#allocation3 + $0x18] sm:$0xff]
      %v2103 = vld [vmem:[#allocation3 + $0x20] sm:$0xff]
      %v2104 = vld [vmem:[#allocation3 + $0x28] sm:$0xff]
      %v2105 = vld [vmem:[#allocation3 + $0x30] sm:$0xff]
      %v2106 = vld [vmem:[#allocation3 + $0x38] sm:$0xff]
      %v2107 = vld [vmem:[#allocation3 + $0x40] sm:$0xff]
      %v2108 = vld [vmem:[#allocation3 + $0x48] sm:$0xff]
      %v2109 = vld [vmem:[#allocation3 + $0x50] sm:$0xff]
      %v2110 = vld [vmem:[#allocation3 + $0x58] sm:$0xff]
      %v2111 = vld [vmem:[#allocation3 + $0x60] sm:$0xff]
      %v2112 = vld [vmem:[#allocation3 + $0x68] sm:$0xff]
      %v2113 = vld [vmem:[#allocation3 + $0x70] sm:$0xff]
      %v2114 = vld [vmem:[#allocation3 + $0x78] sm:$0xff]
      %v2115 = vld [vmem:[#allocation3 + $0x80] sm:$0xff]
      %v2116 = vld [vmem:[#allocation3 + $0x88] sm:$0xff]
      %v2117 = vld [vmem:[#allocation3 + $0x90] sm:$0xff]
      %v2118 = vld [vmem:[#allocation3 + $0x98] sm:$0xff]
      %v2119 = vld [vmem:[#allocation3 + $0xa0] sm:$0xff]
      %v2120 = vld [vmem:[#allocation3 + $0xa8] sm:$0xff]
      %v2121 = vld [vmem:[#allocation3 + $0xb0] sm:$0xff]
      %v2122 = vld [vmem:[#allocation3 + $0xb8] sm:$0xff]
      %v2123 = vld [vmem:[#allocation3 + $0xc0] sm:$0xff]
      %v2124 = vld [vmem:[#allocation3 + $0xc8] sm:$0xff]
      %v2125 = vld [vmem:[#allocation3 + $0xd0] sm:$0xff]
      %v2126 = vld [vmem:[#allocation3 + $0xd8] sm:$0xff]
      %v2127 = vld [vmem:[#allocation3 + $0xe0] sm:$0xff]
      %v2128 = vld [vmem:[#allocation3 + $0xe8] sm:$0xff]
      %v2129 = vld [vmem:[#allocation3 + $0xf0] sm:$0xff]
      %v2130 = vld [vmem:[#allocation3 + $0xf8] sm:$0xff]
      %v2131 = vpack.c.bf16 %v2100, %v2099
      %v2132 = vpack.c.bf16 %v2102, %v2101
      %v2133 = vpack.c.bf16 %v2104, %v2103
      %v2134 = vpack.c.bf16 %v2106, %v2105
      %v2135 = vpack.c.bf16 %v2108, %v2107
      %v2136 = vpack.c.bf16 %v2110, %v2109
      %v2137 = vpack.c.bf16 %v2112, %v2111
      %v2138 = vpack.c.bf16 %v2114, %v2113
      %v2139 = vpack.c.bf16 %v2116, %v2115
      %v2140 = vpack.c.bf16 %v2118, %v2117
      %v2141 = vpack.c.bf16 %v2120, %v2119
      %v2142 = vpack.c.bf16 %v2122, %v2121
      %v2143 = vpack.c.bf16 %v2124, %v2123
      %v2144 = vpack.c.bf16 %v2126, %v2125
      %v2145 = vpack.c.bf16 %v2128, %v2127
      %v2146 = vpack.c.bf16 %v2130, %v2129
      %v2147 = vld [vmem:[%s3] sm:$0xf]
      %v2148 = vld [vmem:[%s3 + $0x4] sm:$0xf]
      %v2149 = vld [vmem:[%s3 + $0x8] sm:$0xf]
      %v2150 = vld [vmem:[%s3 + $0xc] sm:$0xf]
      %v2151 = vld [vmem:[%s3 + $0x10] sm:$0xf]
      %v2152 = vld [vmem:[%s3 + $0x14] sm:$0xf]
      %v2153 = vld [vmem:[%s3 + $0x18] sm:$0xf]
      %v2154 = vld [vmem:[%s3 + $0x1c] sm:$0xf]
      %v2155 = vld [vmem:[%s3 + $0x20] sm:$0xf]
      %v2165 = vunpack.c.l.b16 %v2147
      %v2166 = vunpack.c.l.b16 %v2148
      %v2167 = vunpack.c.l.b16 %v2149
      %v2168 = vunpack.c.l.b16 %v2150
      %v2169 = vunpack.c.l.b16 %v2151
      %v2170 = vunpack.c.l.b16 %v2152
      %v2171 = vunpack.c.l.b16 %v2153
      %v2172 = vunpack.c.l.b16 %v2154
      %v2173 = vunpack.c.l.b16 %v2155
      %v2174 = vpack.c.b16 %v2166, %v2165
      %v2175 = vpack.c.b16 %v2168, %v2167
      %v2176 = vpack.c.b16 %v2170, %v2169
      %v2177 = vpack.c.b16 %v2172, %v2171
      %v2178 = vpack.c.b16 %v2173, %v2173
      %vm2183 = vcmask 588800
      %v2185 = vsel %vm2183, %v2131, 0
      %v2188 = vsel %vm2183, %v2132, 0
      %v2191 = vsel %vm2183, %v2133, 0
      %v2194 = vsel %vm2183, %v2134, 0
      %v2197 = vsel %vm2183, %v2135, 0
      %v2200 = vsel %vm2183, %v2136, 0
      %v2203 = vsel %vm2183, %v2137, 0
      %v2206 = vsel %vm2183, %v2138, 0
      %v2209 = vsel %vm2183, %v2139, 0
      %v2212 = vsel %vm2183, %v2140, 0
      %v2215 = vsel %vm2183, %v2141, 0
      %v2218 = vsel %vm2183, %v2142, 0
      %v2221 = vsel %vm2183, %v2143, 0
      %v2224 = vsel %vm2183, %v2144, 0
      %v2227 = vsel %vm2183, %v2145, 0
      %v2230 = vsel %vm2183, %v2146, 0
      %vm2232 = vcmask 1043456
      %v2234 = vsel %vm2232, %v2178, 0
      %2236 = vmatprep.subr.bf16.mxu0 0
      %2237 = vmatpush1.bf16.msra.mxu0 0
      %2238 = vmatprep.subr.bf16.mxu0 0
      %2239 = vmatpush1.bf16.msra.mxu0 0
      %2240 = vmatprep.subr.bf16.mxu0 0
      %2241 = vmatpush1.bf16.msra.mxu0 0
      %2242 = vmatprep.subr.bf16.mxu0 0
      %2243 = vmatpush1.bf16.msra.mxu0 %v2234
      %2244 = vmatprep.subr.bf16.mxu0 0
      %2245 = vmatpush1.bf16.msra.mxu0 %v2177
      %2246 = vmatprep.subr.bf16.mxu0 0
      %2247 = vmatpush1.bf16.msra.mxu0 %v2176
      %2248 = vmatprep.subr.bf16.mxu0 0
      %2249 = vmatpush1.bf16.msra.mxu0 %v2175
      %2250 = vmatprep.subr.bf16.mxu0 0
      %2251 = vmatpush1.bf16.msra.mxu0 %v2174
      %2252 = vmatprep.subr.bf16.mxu0 0
      %2253 = vmatpush2.bf16.msra.mxu0 0
      %2254 = vmatprep.subr.bf16.mxu0 0
      %2255 = vmatpush2.bf16.msra.mxu0 0
      %2256 = vmatprep.subr.bf16.mxu0 0
      %2257 = vmatpush2.bf16.msra.mxu0 0
      %2258 = vmatprep.subr.bf16.mxu0 0
      %2259 = vmatpush2.bf16.msra.mxu0 0
      %2260 = vmatprep.subr.bf16.mxu0 0
      %2261 = vmatpush2.bf16.msra.mxu0 0
      %2262 = vmatprep.subr.bf16.mxu0 0
      %2263 = vmatpush2.bf16.msra.mxu0 0
      %2264 = vmatprep.subr.bf16.mxu0 0
      %2265 = vmatpush2.bf16.msra.mxu0 0
      %2266 = vmatprep.subr.bf16.mxu0 0
      %2267 = vmatpush2.bf16.msra.mxu0 0
      %2268 = vmatprep.mubr.bf16.mxu0 0
      %2269 = vmatmul.mubr.bf16.gmra.mxu0 %v2185
      %v2270 = vpop.f32.mrf.mxu0
      %v2271 = vadd.f32 0.0, %v2270
      %v2272 = vpop.f32.mrf.mxu0
      %v2273 = vpop.f32.mrf.mxu0
      %v2274 = vadd.f32 0.0, %v2273
      %v2275 = vpop.f32.mrf.mxu0
      %2276 = vmatprep.mubr.bf16.mxu0 0
      %2277 = vmatmul.mubr.bf16.gmra.mxu0 %v2188
      %v2278 = vpop.f32.mrf.mxu0
      %v2279 = vadd.f32 0.0, %v2278
      %v2280 = vpop.f32.mrf.mxu0
      %v2281 = vpop.f32.mrf.mxu0
      %v2282 = vadd.f32 0.0, %v2281
      %v2283 = vpop.f32.mrf.mxu0
      %2284 = vmatprep.mubr.bf16.mxu0 0
      %2285 = vmatmul.mubr.bf16.gmra.mxu0 %v2191
      %v2286 = vpop.f32.mrf.mxu0
      %v2287 = vadd.f32 0.0, %v2286
      %v2288 = vpop.f32.mrf.mxu0
      %v2289 = vpop.f32.mrf.mxu0
      %v2290 = vadd.f32 0.0, %v2289
      %v2291 = vpop.f32.mrf.mxu0
      %2292 = vmatprep.mubr.bf16.mxu0 0
      %2293 = vmatmul.mubr.bf16.gmra.mxu0 %v2194
      %v2294 = vpop.f32.mrf.mxu0
      %v2295 = vadd.f32 0.0, %v2294
      %v2296 = vpop.f32.mrf.mxu0
      %v2297 = vpop.f32.mrf.mxu0
      %v2298 = vadd.f32 0.0, %v2297
      %v2299 = vpop.f32.mrf.mxu0
      %2300 = vmatprep.mubr.bf16.mxu0 0
      %2301 = vmatmul.mubr.bf16.gmra.mxu0 %v2197
      %v2302 = vpop.f32.mrf.mxu0
      %v2303 = vadd.f32 0.0, %v2302
      %v2304 = vpop.f32.mrf.mxu0
      %v2305 = vpop.f32.mrf.mxu0
      %v2306 = vadd.f32 0.0, %v2305
      %v2307 = vpop.f32.mrf.mxu0
      %2308 = vmatprep.mubr.bf16.mxu0 0
      %2309 = vmatmul.mubr.bf16.gmra.mxu0 %v2200
      %v2310 = vpop.f32.mrf.mxu0
      %v2311 = vadd.f32 0.0, %v2310
      %v2312 = vpop.f32.mrf.mxu0
      %v2313 = vpop.f32.mrf.mxu0
      %v2314 = vadd.f32 0.0, %v2313
      %v2315 = vpop.f32.mrf.mxu0
      %2316 = vmatprep.mubr.bf16.mxu0 0
      %2317 = vmatmul.mubr.bf16.gmra.mxu0 %v2203
      %v2318 = vpop.f32.mrf.mxu0
      %v2319 = vadd.f32 0.0, %v2318
      %v2320 = vpop.f32.mrf.mxu0
      %v2321 = vpop.f32.mrf.mxu0
      %v2322 = vadd.f32 0.0, %v2321
      %v2323 = vpop.f32.mrf.mxu0
      %2324 = vmatprep.mubr.bf16.mxu0 0
      %2325 = vmatmul.mubr.bf16.gmra.mxu0 %v2206
      %v2326 = vpop.f32.mrf.mxu0
      %v2327 = vadd.f32 0.0, %v2326
      %v2328 = vpop.f32.mrf.mxu0
      %v2329 = vpop.f32.mrf.mxu0
      %v2330 = vadd.f32 0.0, %v2329
      %v2331 = vpop.f32.mrf.mxu0
      %2332 = vmatprep.mubr.bf16.mxu0 0
      %2333 = vmatmul.mubr.bf16.gmra.mxu0 %v2209
      %v2334 = vpop.f32.mrf.mxu0
      %v2335 = vadd.f32 0.0, %v2334
      %v2336 = vpop.f32.mrf.mxu0
      %v2337 = vpop.f32.mrf.mxu0
      %v2338 = vadd.f32 0.0, %v2337
      %v2339 = vpop.f32.mrf.mxu0
      %2340 = vmatprep.mubr.bf16.mxu0 0
      %2341 = vmatmul.mubr.bf16.gmra.mxu0 %v2212
      %v2342 = vpop.f32.mrf.mxu0
      %v2343 = vadd.f32 0.0, %v2342
      %v2344 = vpop.f32.mrf.mxu0
      %v2345 = vpop.f32.mrf.mxu0
      %v2346 = vadd.f32 0.0, %v2345
      %v2347 = vpop.f32.mrf.mxu0
      %2348 = vmatprep.mubr.bf16.mxu0 0
      %2349 = vmatmul.mubr.bf16.gmra.mxu0 %v2215
      %v2350 = vpop.f32.mrf.mxu0
      %v2351 = vadd.f32 0.0, %v2350
      %v2352 = vpop.f32.mrf.mxu0
      %v2353 = vpop.f32.mrf.mxu0
      %v2354 = vadd.f32 0.0, %v2353
      %v2355 = vpop.f32.mrf.mxu0
      %2356 = vmatprep.mubr.bf16.mxu0 0
      %2357 = vmatmul.mubr.bf16.gmra.mxu0 %v2218
      %v2358 = vpop.f32.mrf.mxu0
      %v2359 = vadd.f32 0.0, %v2358
      %v2360 = vpop.f32.mrf.mxu0
      %v2361 = vpop.f32.mrf.mxu0
      %v2362 = vadd.f32 0.0, %v2361
      %v2363 = vpop.f32.mrf.mxu0
      %2364 = vmatprep.mubr.bf16.mxu0 0
      %2365 = vmatmul.mubr.bf16.gmra.mxu0 %v2221
      %v2366 = vpop.f32.mrf.mxu0
      %v2367 = vadd.f32 0.0, %v2366
      %v2368 = vpop.f32.mrf.mxu0
      %v2369 = vpop.f32.mrf.mxu0
      %v2370 = vadd.f32 0.0, %v2369
      %v2371 = vpop.f32.mrf.mxu0
      %2372 = vmatprep.mubr.bf16.mxu0 0
      %2373 = vmatmul.mubr.bf16.gmra.mxu0 %v2224
      %v2374 = vpop.f32.mrf.mxu0
      %v2375 = vadd.f32 0.0, %v2374
      %v2376 = vpop.f32.mrf.mxu0
      %v2377 = vpop.f32.mrf.mxu0
      %v2378 = vadd.f32 0.0, %v2377
      %v2379 = vpop.f32.mrf.mxu0
      %2380 = vmatprep.mubr.bf16.mxu0 0
      %2381 = vmatmul.mubr.bf16.gmra.mxu0 %v2227
      %v2382 = vpop.f32.mrf.mxu0
      %v2383 = vadd.f32 0.0, %v2382
      %v2384 = vpop.f32.mrf.mxu0
      %v2385 = vpop.f32.mrf.mxu0
      %v2386 = vadd.f32 0.0, %v2385
      %v2387 = vpop.f32.mrf.mxu0
      %2388 = vmatprep.mubr.bf16.mxu0 0
      %2389 = vmatmul.mubr.bf16.gmra.mxu0 %v2230
      %v2390 = vpop.f32.mrf.mxu0
      %v2391 = vadd.f32 0.0, %v2390
      %v2392 = vpop.f32.mrf.mxu0
      %v2393 = vpop.f32.mrf.mxu0
      %v2394 = vadd.f32 0.0, %v2393
      %v2395 = vpop.f32.mrf.mxu0
      %2396 = vdwg.mxu0
      %v2397 = vpack.c.bf16 %v2274, %v2271
      %v2398 = vpack.c.bf16 %v2282, %v2279
      %v2399 = vpack.c.bf16 %v2290, %v2287
      %v2400 = vpack.c.bf16 %v2298, %v2295
      %v2401 = vpack.c.bf16 %v2306, %v2303
      %v2402 = vpack.c.bf16 %v2314, %v2311
      %v2403 = vpack.c.bf16 %v2322, %v2319
      %v2404 = vpack.c.bf16 %v2330, %v2327
      %v2405 = vpack.c.bf16 %v2338, %v2335
      %v2406 = vpack.c.bf16 %v2346, %v2343
      %v2407 = vpack.c.bf16 %v2354, %v2351
      %v2408 = vpack.c.bf16 %v2362, %v2359
      %v2409 = vpack.c.bf16 %v2370, %v2367
      %v2410 = vpack.c.bf16 %v2378, %v2375
      %v2411 = vpack.c.bf16 %v2386, %v2383
      %v2412 = vpack.c.bf16 %v2394, %v2391
      %v2429 = vunpack.c.l.b16 %v2397
      %v2430 = vunpack.c.h.b16 %v2397
      %v2431 = vunpack.c.l.b16 %v2398
      %v2432 = vunpack.c.h.b16 %v2398
      %v2433 = vunpack.c.l.b16 %v2399
      %v2434 = vunpack.c.h.b16 %v2399
      %v2435 = vunpack.c.l.b16 %v2400
      %v2436 = vunpack.c.h.b16 %v2400
      %v2437 = vunpack.c.l.b16 %v2401
      %v2438 = vunpack.c.h.b16 %v2401
      %v2439 = vunpack.c.l.b16 %v2402
      %v2440 = vunpack.c.h.b16 %v2402
      %v2441 = vunpack.c.l.b16 %v2403
      %v2442 = vunpack.c.h.b16 %v2403
      %v2443 = vunpack.c.l.b16 %v2404
      %v2444 = vunpack.c.h.b16 %v2404
      %v2445 = vunpack.c.l.b16 %v2405
      %v2446 = vunpack.c.h.b16 %v2405
      %v2447 = vunpack.c.l.b16 %v2406
      %v2448 = vunpack.c.h.b16 %v2406
      %v2449 = vunpack.c.l.b16 %v2407
      %v2450 = vunpack.c.h.b16 %v2407
      %v2451 = vunpack.c.l.b16 %v2408
      %v2452 = vunpack.c.h.b16 %v2408
      %v2453 = vunpack.c.l.b16 %v2409
      %v2454 = vunpack.c.h.b16 %v2409
      %v2455 = vunpack.c.l.b16 %v2410
      %v2456 = vunpack.c.h.b16 %v2410
      %v2457 = vunpack.c.l.b16 %v2411
      %v2458 = vunpack.c.h.b16 %v2411
      %v2459 = vunpack.c.l.b16 %v2412
      %v2460 = vunpack.c.h.b16 %v2412
      %v2461 = vpack.c.b16 %v2429, %v2429
      %v2462 = vpack.c.b16 %v2430, %v2430
      %v2463 = vpack.c.b16 %v2431, %v2431
      %v2464 = vpack.c.b16 %v2432, %v2432
      %v2465 = vpack.c.b16 %v2433, %v2433
      %v2466 = vpack.c.b16 %v2434, %v2434
      %v2467 = vpack.c.b16 %v2435, %v2435
      %v2468 = vpack.c.b16 %v2436, %v2436
      %v2469 = vpack.c.b16 %v2437, %v2437
      %v2470 = vpack.c.b16 %v2438, %v2438
      %v2471 = vpack.c.b16 %v2439, %v2439
      %v2472 = vpack.c.b16 %v2440, %v2440
      %v2473 = vpack.c.b16 %v2441, %v2441
      %v2474 = vpack.c.b16 %v2442, %v2442
      %v2475 = vpack.c.b16 %v2443, %v2443
      %v2476 = vpack.c.b16 %v2444, %v2444
      %v2477 = vpack.c.b16 %v2445, %v2445
      %v2478 = vpack.c.b16 %v2446, %v2446
      %v2479 = vpack.c.b16 %v2447, %v2447
      %v2480 = vpack.c.b16 %v2448, %v2448
      %v2481 = vpack.c.b16 %v2449, %v2449
      %v2482 = vpack.c.b16 %v2450, %v2450
      %v2483 = vpack.c.b16 %v2451, %v2451
      %v2484 = vpack.c.b16 %v2452, %v2452
      %v2485 = vpack.c.b16 %v2453, %v2453
      %v2486 = vpack.c.b16 %v2454, %v2454
      %v2487 = vpack.c.b16 %v2455, %v2455
      %v2488 = vpack.c.b16 %v2456, %v2456
      %v2489 = vpack.c.b16 %v2457, %v2457
      %v2490 = vpack.c.b16 %v2458, %v2458
      %v2491 = vpack.c.b16 %v2459, %v2459
      %v2492 = vpack.c.b16 %v2460, %v2460
      %vm2525 = vcmask 60416
      %2526 = vst.msk [vmem:[%s231] sm:$0xf] %vm2525, %v2461
      %2527 = vst.msk [vmem:[%s231 + $0x4] sm:$0xf] %vm2525, %v2462
      %2528 = vst.msk [vmem:[%s231 + $0x8] sm:$0xf] %vm2525, %v2463
      %2529 = vst.msk [vmem:[%s231 + $0xc] sm:$0xf] %vm2525, %v2464
      %2530 = vst.msk [vmem:[%s231 + $0x10] sm:$0xf] %vm2525, %v2465
      %2531 = vst.msk [vmem:[%s231 + $0x14] sm:$0xf] %vm2525, %v2466
      %2532 = vst.msk [vmem:[%s231 + $0x18] sm:$0xf] %vm2525, %v2467
      %2533 = vst.msk [vmem:[%s231 + $0x1c] sm:$0xf] %vm2525, %v2468
      %2534 = vst.msk [vmem:[%s231 + $0x20] sm:$0xf] %vm2525, %v2469
      %2535 = vst.msk [vmem:[%s231 + $0x24] sm:$0xf] %vm2525, %v2470
      %2536 = vst.msk [vmem:[%s231 + $0x28] sm:$0xf] %vm2525, %v2471
      %2537 = vst.msk [vmem:[%s231 + $0x2c] sm:$0xf] %vm2525, %v2472
      %2538 = vst.msk [vmem:[%s231 + $0x30] sm:$0xf] %vm2525, %v2473
      %2539 = vst.msk [vmem:[%s231 + $0x34] sm:$0xf] %vm2525, %v2474
      %2540 = vst.msk [vmem:[%s231 + $0x38] sm:$0xf] %vm2525, %v2475
      %2541 = vst.msk [vmem:[%s231 + $0x3c] sm:$0xf] %vm2525, %v2476
      %2542 = vst.msk [vmem:[%s231 + $0x40] sm:$0xf] %vm2525, %v2477
      %2543 = vst.msk [vmem:[%s231 + $0x44] sm:$0xf] %vm2525, %v2478
      %2544 = vst.msk [vmem:[%s231 + $0x48] sm:$0xf] %vm2525, %v2479
      %2545 = vst.msk [vmem:[%s231 + $0x4c] sm:$0xf] %vm2525, %v2480
      %2546 = vst.msk [vmem:[%s231 + $0x50] sm:$0xf] %vm2525, %v2481
      %2547 = vst.msk [vmem:[%s231 + $0x54] sm:$0xf] %vm2525, %v2482
      %2548 = vst.msk [vmem:[%s231 + $0x58] sm:$0xf] %vm2525, %v2483
      %2549 = vst.msk [vmem:[%s231 + $0x5c] sm:$0xf] %vm2525, %v2484
      %2550 = vst.msk [vmem:[%s231 + $0x60] sm:$0xf] %vm2525, %v2485
      %2551 = vst.msk [vmem:[%s231 + $0x64] sm:$0xf] %vm2525, %v2486
      %2552 = vst.msk [vmem:[%s231 + $0x68] sm:$0xf] %vm2525, %v2487
      %2553 = vst.msk [vmem:[%s231 + $0x6c] sm:$0xf] %vm2525, %v2488
      %2554 = vst.msk [vmem:[%s231 + $0x70] sm:$0xf] %vm2525, %v2489
      %2555 = vst.msk [vmem:[%s231 + $0x74] sm:$0xf] %vm2525, %v2490
      %2556 = vst.msk [vmem:[%s231 + $0x78] sm:$0xf] %vm2525, %v2491
      %2557 = vst.msk [vmem:[%s231 + $0x7c] sm:$0xf] %vm2525, %v2492
      %v2558 = vsel %vm411, %v2271, 0.0
      %v2559 = vsel %vm411, %v2274, 0.0
      %v2560 = vadd.f32 %v2558, %v2559
      %v2561 = vsel %vm411, %v2279, 0.0
      %v2562 = vadd.f32 %v2560, %v2561
      %v2563 = vsel %vm411, %v2282, 0.0
      %v2564 = vadd.f32 %v2562, %v2563
      %v2565 = vsel %vm411, %v2287, 0.0
      %v2566 = vadd.f32 %v2564, %v2565
      %v2567 = vsel %vm411, %v2290, 0.0
      %v2568 = vadd.f32 %v2566, %v2567
      %v2569 = vsel %vm411, %v2295, 0.0
      %v2570 = vadd.f32 %v2568, %v2569
      %v2571 = vsel %vm411, %v2298, 0.0
      %v2572 = vadd.f32 %v2570, %v2571
      %v2573 = vsel %vm411, %v2303, 0.0
      %v2574 = vadd.f32 %v2572, %v2573
      %v2575 = vsel %vm411, %v2306, 0.0
      %v2576 = vadd.f32 %v2574, %v2575
      %v2577 = vsel %vm411, %v2311, 0.0
      %v2578 = vadd.f32 %v2576, %v2577
      %v2579 = vsel %vm411, %v2314, 0.0
      %v2580 = vadd.f32 %v2578, %v2579
      %v2581 = vsel %vm411, %v2319, 0.0
      %v2582 = vadd.f32 %v2580, %v2581
      %v2583 = vsel %vm411, %v2322, 0.0
      %v2584 = vadd.f32 %v2582, %v2583
      %v2585 = vsel %vm411, %v2327, 0.0
      %v2586 = vadd.f32 %v2584, %v2585
      %v2587 = vsel %vm411, %v2330, 0.0
      %v2588 = vadd.f32 %v2586, %v2587
      %v2589 = vsel %vm411, %v2335, 0.0
      %v2590 = vadd.f32 %v2588, %v2589
      %v2591 = vsel %vm411, %v2338, 0.0
      %v2592 = vadd.f32 %v2590, %v2591
      %v2593 = vsel %vm411, %v2343, 0.0
      %v2594 = vadd.f32 %v2592, %v2593
      %v2595 = vsel %vm411, %v2346, 0.0
      %v2596 = vadd.f32 %v2594, %v2595
      %v2597 = vsel %vm411, %v2351, 0.0
      %v2598 = vadd.f32 %v2596, %v2597
      %v2599 = vsel %vm411, %v2354, 0.0
      %v2600 = vadd.f32 %v2598, %v2599
      %v2601 = vsel %vm411, %v2359, 0.0
      %v2602 = vadd.f32 %v2600, %v2601
      %v2603 = vsel %vm411, %v2362, 0.0
      %v2604 = vadd.f32 %v2602, %v2603
      %v2605 = vsel %vm411, %v2367, 0.0
      %v2606 = vadd.f32 %v2604, %v2605
      %v2607 = vsel %vm411, %v2370, 0.0
      %v2608 = vadd.f32 %v2606, %v2607
      %v2609 = vsel %vm411, %v2375, 0.0
      %v2610 = vadd.f32 %v2608, %v2609
      %v2611 = vsel %vm411, %v2378, 0.0
      %v2612 = vadd.f32 %v2610, %v2611
      %v2613 = vsel %vm411, %v2383, 0.0
      %v2614 = vadd.f32 %v2612, %v2613
      %v2615 = vsel %vm411, %v2386, 0.0
      %v2616 = vadd.f32 %v2614, %v2615
      %v2617 = vsel %vm411, %v2391, 0.0
      %v2618 = vadd.f32 %v2616, %v2617
      %v2619 = vsel %vm411, %v2394, 0.0
      %v2620 = vadd.f32 %v2618, %v2619
      %v2621 = vrot.slane %v2620, 4
      %v2622 = vadd.f32 %v2620, %v2621
      %v2623 = vrot.slane %v2622, 2
      %v2624 = vadd.f32 %v2622, %v2623
      %v2625 = vrot.slane %v2624, 1
      %v2626 = vadd.f32 %v2624, %v2625
      %2627 = vst.msk [vmem:[%s235] sm:$0x1] %vm420, %v2626
      %v2628 = vmul.f32 %v2271, %v2271
      %v2629 = vmul.f32 %v2274, %v2274
      %v2630 = vmul.f32 %v2279, %v2279
      %v2631 = vmul.f32 %v2282, %v2282
      %v2632 = vmul.f32 %v2287, %v2287
      %v2633 = vmul.f32 %v2290, %v2290
      %v2634 = vmul.f32 %v2295, %v2295
      %v2635 = vmul.f32 %v2298, %v2298
      %v2636 = vmul.f32 %v2303, %v2303
      %v2637 = vmul.f32 %v2306, %v2306
      %v2638 = vmul.f32 %v2311, %v2311
      %v2639 = vmul.f32 %v2314, %v2314
      %v2640 = vmul.f32 %v2319, %v2319
      %v2641 = vmul.f32 %v2322, %v2322
      %v2642 = vmul.f32 %v2327, %v2327
      %v2643 = vmul.f32 %v2330, %v2330
      %v2644 = vmul.f32 %v2335, %v2335
      %v2645 = vmul.f32 %v2338, %v2338
      %v2646 = vmul.f32 %v2343, %v2343
      %v2647 = vmul.f32 %v2346, %v2346
      %v2648 = vmul.f32 %v2351, %v2351
      %v2649 = vmul.f32 %v2354, %v2354
      %v2650 = vmul.f32 %v2359, %v2359
      %v2651 = vmul.f32 %v2362, %v2362
      %v2652 = vmul.f32 %v2367, %v2367
      %v2653 = vmul.f32 %v2370, %v2370
      %v2654 = vmul.f32 %v2375, %v2375
      %v2655 = vmul.f32 %v2378, %v2378
      %v2656 = vmul.f32 %v2383, %v2383
      %v2657 = vmul.f32 %v2386, %v2386
      %v2658 = vmul.f32 %v2391, %v2391
      %v2659 = vmul.f32 %v2394, %v2394
      %v2660 = vsel %vm411, %v2628, 0.0
      %v2661 = vsel %vm411, %v2629, 0.0
      %v2662 = vadd.f32 %v2660, %v2661
      %v2663 = vsel %vm411, %v2630, 0.0
      %v2664 = vadd.f32 %v2662, %v2663
      %v2665 = vsel %vm411, %v2631, 0.0
      %v2666 = vadd.f32 %v2664, %v2665
      %v2667 = vsel %vm411, %v2632, 0.0
      %v2668 = vadd.f32 %v2666, %v2667
      %v2669 = vsel %vm411, %v2633, 0.0
      %v2670 = vadd.f32 %v2668, %v2669
      %v2671 = vsel %vm411, %v2634, 0.0
      %v2672 = vadd.f32 %v2670, %v2671
      %v2673 = vsel %vm411, %v2635, 0.0
      %v2674 = vadd.f32 %v2672, %v2673
      %v2675 = vsel %vm411, %v2636, 0.0
      %v2676 = vadd.f32 %v2674, %v2675
      %v2677 = vsel %vm411, %v2637, 0.0
      %v2678 = vadd.f32 %v2676, %v2677
      %v2679 = vsel %vm411, %v2638, 0.0
      %v2680 = vadd.f32 %v2678, %v2679
      %v2681 = vsel %vm411, %v2639, 0.0
      %v2682 = vadd.f32 %v2680, %v2681
      %v2683 = vsel %vm411, %v2640, 0.0
      %v2684 = vadd.f32 %v2682, %v2683
      %v2685 = vsel %vm411, %v2641, 0.0
      %v2686 = vadd.f32 %v2684, %v2685
      %v2687 = vsel %vm411, %v2642, 0.0
      %v2688 = vadd.f32 %v2686, %v2687
      %v2689 = vsel %vm411, %v2643, 0.0
      %v2690 = vadd.f32 %v2688, %v2689
      %v2691 = vsel %vm411, %v2644, 0.0
      %v2692 = vadd.f32 %v2690, %v2691
      %v2693 = vsel %vm411, %v2645, 0.0
      %v2694 = vadd.f32 %v2692, %v2693
      %v2695 = vsel %vm411, %v2646, 0.0
      %v2696 = vadd.f32 %v2694, %v2695
      %v2697 = vsel %vm411, %v2647, 0.0
      %v2698 = vadd.f32 %v2696, %v2697
      %v2699 = vsel %vm411, %v2648, 0.0
      %v2700 = vadd.f32 %v2698, %v2699
      %v2701 = vsel %vm411, %v2649, 0.0
      %v2702 = vadd.f32 %v2700, %v2701
      %v2703 = vsel %vm411, %v2650, 0.0
      %v2704 = vadd.f32 %v2702, %v2703
      %v2705 = vsel %vm411, %v2651, 0.0
      %v2706 = vadd.f32 %v2704, %v2705
      %v2707 = vsel %vm411, %v2652, 0.0
      %v2708 = vadd.f32 %v2706, %v2707
      %v2709 = vsel %vm411, %v2653, 0.0
      %v2710 = vadd.f32 %v2708, %v2709
      %v2711 = vsel %vm411, %v2654, 0.0
      %v2712 = vadd.f32 %v2710, %v2711
      %v2713 = vsel %vm411, %v2655, 0.0
      %v2714 = vadd.f32 %v2712, %v2713
      %v2715 = vsel %vm411, %v2656, 0.0
      %v2716 = vadd.f32 %v2714, %v2715
      %v2717 = vsel %vm411, %v2657, 0.0
      %v2718 = vadd.f32 %v2716, %v2717
      %v2719 = vsel %vm411, %v2658, 0.0
      %v2720 = vadd.f32 %v2718, %v2719
      %v2721 = vsel %vm411, %v2659, 0.0
      %v2722 = vadd.f32 %v2720, %v2721
      %v2723 = vrot.slane %v2722, 4
      %v2724 = vadd.f32 %v2722, %v2723
      %v2725 = vrot.slane %v2724, 2
      %v2726 = vadd.f32 %v2724, %v2725
      %v2727 = vrot.slane %v2726, 1
      %v2728 = vadd.f32 %v2726, %v2727
      %2729 = vst.msk [vmem:[%s235 + $0x1] sm:$0x1] %vm420, %v2728
      %p2730 = scmp.lt.s32.totalorder %s17, 1
      %s2731 = scalar_select %p2730, %s17, 1
      %s2732 = smul.addr %s2731, 32
      %s2733 = smul.addr %s2732, 4
      %s2734 = scalar_lea.vmem %s4, %s2733
      %p2735 = scmp.lt.s32.totalorder %s17, 1
      %s2736 = scalar_select %p2735, %s17, 1
      %s2737 = smul.addr %s2736, 2
      %s2738 = scalar_lea.vmem %s5, %s2737
      // Predicated region
      $region37: #{basic_block.4} parent=35 // pred_check
        %p2739 = pneg %p124
      $region38: #{basic_block.4} parent=35 // pred_check_branch
        %2741 = sbr.rel (%p2739) target = $region40
      $region39: #{basic_block.4} parent=35 // pred_region
        _
      $region40: #{basic_block.4} parent=35 // pred_fallthru
        _
      // Predicated region
      $region41: #{basic_block.4} parent=35 // pred_check
        %p2742 = pneg %p150
      $region42: #{basic_block.4} parent=35 // pred_check_branch
        %2744 = sbr.rel (%p2742) target = $region44
      $region43: #{basic_block.4} parent=35 // pred_region
        _
      $region44: #{basic_block.4} parent=35 // pred_fallthru
        _
    $region36: #{basic_block.4} parent=5 // pred_fallthru
      _
    %p2745 = scmp.le.s32.totalorder 2, %s12
    // Predicated region
    $region45: #{basic_block.4} parent=5 // pred_check
      %p2746 = pneg %p2745
    $region46: #{basic_block.4} parent=5 // pred_check_branch
      %2748 = sbr.rel (%p2746) target = $region48
    $region47: #{basic_block.4} parent=5 // pred_region
      %s2749 = ssub.s32 %s12, 2
      // Predicated region
      $region49: #{basic_block.4} parent=47 // pred_check
        %p2750 = pneg %p130
      $region50: #{basic_block.4} parent=47 // pred_check_branch
        %2752 = sbr.rel (%p2750) target = $region52
      $region51: #{basic_block.4} parent=47 // pred_region
        %p2753 = scmp.lt.s32.totalorder %s18, 1
        %s2754 = scalar_select %p2753, %s18, 1
        %s2755 = smul.addr %s2754, 32
        %s2756 = smul.addr %s2755, 4
        %s2757 = scalar_lea.vmem %s4, %s2756
      $region52: #{basic_block.4} parent=47 // pred_fallthru
        _
      // Predicated region
      $region53: #{basic_block.4} parent=47 // pred_check
        %p2758 = pneg %p156
      $region54: #{basic_block.4} parent=47 // pred_check_branch
        %2760 = sbr.rel (%p2758) target = $region56
      $region55: #{basic_block.4} parent=47 // pred_region
        %p2761 = scmp.lt.s32.totalorder %s18, 1
        %s2762 = scalar_select %p2761, %s18, 1
        %s2763 = smul.addr %s2762, 2
        %s2764 = scalar_lea.vmem %s5, %s2763
      $region56: #{basic_block.4} parent=47 // pred_fallthru
        _
    $region48: #{basic_block.4} parent=5 // pred_fallthru
      _
  $region6: #{basic_block.4} parent=0 // loop_footer
    %s16 = sadd.s32 1, %s12
  $region7: #{basic_block.4} parent=0 // loop_footer_branch
    %11 = sbr.rel target = $region3
  $region8: #{basic_block.4} parent=0 // loop_exit
    _

// kernel: basic_block.3
$region0: #{basic_block.3}
  #allocation0 [shape = 'u32[]', space=smem, size = 0x4, offset = 0x4, fixed_abs, tag = 'smem constant byte address 0x4 - core index']
  #allocation1 [shape = 'u32[144,128]{1,0:T(1,128)}', space=vmem, size = 0x12000, scoped, tag = 'internal scratch']
  #allocation2 [shape = 'f32[256,72]{1,0:T(8,128)}', space=vmem, size = 0x20000, scoped, tag = 'scratch operand']
  %s0 = inlined_call_operand.vmem [shape: bf16[2,18,18,8], index: 0, kind: input, shape index: {}]
  %s1 = inlined_call_operand.vmem [shape: bf16[72,8], index: 1, kind: input, shape index: {}]
  %s2 = inlined_call_operand.vmem [shape: bf16[2,16,16,8], index: 2, kind: output, shape index: {0}]
  %s3 = inlined_call_operand.vmem [shape: f32[2,2,8], index: 3, kind: output, shape index: {1}]
  %4 = xla_tuple %s2, %s3
  %s5 = sld [smem:[#allocation0]]
  $region49: #{basic_block.3} parent=0
    _
  %s7 = ssub.s32 1, %s5
  %s8 = scalar_select 0, %s7, %s5
  loop: start=0, step=1, limit=4
  $region2: #{basic_block.3} parent=0 // loop_pre_header
    _
  $region3: #{basic_block.3} parent=0 // loop_header
    %s10 = sphi 0, %s14
    %p11 = scmp.ge.s32.totalorder %s10, 4
    %s20 = sphi 0, %s22
    %s23 = sphi 0, %s20
    %s24 = sphi 0, %s23
    %s40 = sphi 0, %s24
    %s44 = sphi 0, %s44
    %s46 = sphi 0, %s44
    %s47 = sphi 0, %s46
    %s61 = sphi 0, %s47
    %s67 = sphi 0, %s69
    %s70 = sphi 0, %s67
    %s71 = sphi 0, %s70
    %s87 = sphi 0, %s71
    %s93 = sphi 0, %s95
    %s96 = sphi 0, %s93
    %s97 = sphi 0, %s96
    %s113 = sphi 0, %s97
  $region4: #{basic_block.3} parent=0 // loop_header_branch
    %13 = sbr.rel (%p11) target = $region8
  $region5: #{basic_block.3} parent=0 // loop_body
    %s15 = ssub.s32 %s10, 1
    %s16 = ssub.s32 %s10, 2
    %s17 = sadd.s32 %s10, 1
    %s18 = ssub.s32 %s10, %s17
    %p19 = scmp.eq.s32.totalorder %s18, 0
    %s21 = sadd.s32 %s20, 1
    %s22 = scalar_select %p19, %s20, %s21
    %p25 = pneg %p19
    %p26 = scmp.eq.s32.totalorder %s10, 1
    %p27 = por %p25, %p26
    %p28 = scmp.ne.s32.totalorder %s20, %s23
    %p29 = scmp.eq.s32.totalorder %s10, 0
    %p30 = por %p28, %p29
    %p31 = scmp.ne.s32.totalorder %s20, %s23
    %p32 = scmp.eq.s32.totalorder %s15, 1
    %p33 = por %p31, %p32
    %p34 = scmp.ne.s32.totalorder %s23, %s24
    %p35 = scmp.eq.s32.totalorder %s15, 0
    %p36 = por %p34, %p35
    %p37 = scmp.ne.s32.totalorder %s23, %s24
    %p38 = scmp.eq.s32.totalorder %s16, 1
    %p39 = por %p37, %p38
    %p41 = scmp.ne.s32.totalorder %s24, %s40
    %p42 = scmp.eq.s32.totalorder %s16, 0
    %p43 = por %p41, %p42
    %s45 = sadd.s32 %s44, 1
    %p48 = scmp.eq.s32.totalorder %s10, 1
    %p49 = scmp.ne.s32.totalorder %s44, %s46
    %p50 = scmp.eq.s32.totalorder %s10, 0
    %p51 = por %p49, %p50
    %p52 = scmp.ne.s32.totalorder %s44, %s46
    %p53 = scmp.eq.s32.totalorder %s15, 1
    %p54 = por %p52, %p53
    %p55 = scmp.ne.s32.totalorder %s46, %s47
    %p56 = scmp.eq.s32.totalorder %s15, 0
    %p57 = por %p55, %p56
    %p58 = scmp.ne.s32.totalorder %s46, %s47
    %p59 = scmp.eq.s32.totalorder %s16, 1
    %p60 = por %p58, %p59
    %p62 = scmp.ne.s32.totalorder %s47, %s61
    %p63 = scmp.eq.s32.totalorder %s16, 0
    %p64 = por %p62, %p63
    %s65 = ssub.s32 %s10, %s17
    %p66 = scmp.eq.s32.totalorder %s65, 0
    %s68 = sadd.s32 %s67, 1
    %s69 = scalar_select %p66, %s67, %s68
    %p72 = pneg %p66
    %p73 = scmp.eq.s32.totalorder %s10, 1
    %p74 = por %p72, %p73
    %p75 = scmp.ne.s32.totalorder %s67, %s70
    %p76 = scmp.eq.s32.totalorder %s10, 0
    %p77 = por %p75, %p76
    %p78 = scmp.ne.s32.totalorder %s67, %s70
    %p79 = scmp.eq.s32.totalorder %s15, 1
    %p80 = por %p78, %p79
    %p81 = scmp.ne.s32.totalorder %s70, %s71
    %p82 = scmp.eq.s32.totalorder %s15, 0
    %p83 = por %p81, %p82
    %p84 = scmp.ne.s32.totalorder %s70, %s71
    %p85 = scmp.eq.s32.totalorder %s16, 1
    %p86 = por %p84, %p85
    %p88 = scmp.ne.s32.totalorder %s71, %s87
    %p89 = scmp.eq.s32.totalorder %s16, 0
    %p90 = por %p88, %p89
    %s91 = ssub.s32 %s10, %s17
    %p92 = scmp.eq.s32.totalorder %s91, 0
    %s94 = sadd.s32 %s93, 1
    %s95 = scalar_select %p92, %s93, %s94
    %p98 = pneg %p92
    %p99 = scmp.eq.s32.totalorder %s10, 1
    %p100 = por %p98, %p99
    %p101 = scmp.ne.s32.totalorder %s93, %s96
    %p102 = scmp.eq.s32.totalorder %s10, 0
    %p103 = por %p101, %p102
    %p104 = scmp.ne.s32.totalorder %s93, %s96
    %p105 = scmp.eq.s32.totalorder %s15, 1
    %p106 = por %p104, %p105
    %p107 = scmp.ne.s32.totalorder %s96, %s97
    %p108 = scmp.eq.s32.totalorder %s15, 0
    %p109 = por %p107, %p108
    %p110 = scmp.ne.s32.totalorder %s96, %s97
    %p111 = scmp.eq.s32.totalorder %s16, 1
    %p112 = por %p110, %p111
    %p114 = scmp.ne.s32.totalorder %s97, %s113
    %p115 = scmp.eq.s32.totalorder %s16, 0
    %p116 = por %p114, %p115
    %p117 = scmp.le.s32.totalorder 1, %s10
    %p118 = scmp.lt.s32.totalorder %s10, 3
    %p119 = pnand %p117, %p118
    %p120 = pneg %p119
    // Predicated region
    $region9: #{basic_block.3} parent=5 // pred_check
      _
    $region10: #{basic_block.3} parent=5 // pred_check_branch
      %122 = sbr.rel (%p119) target = $region12
    $region11: #{basic_block.3} parent=5 // pred_region
      %s123 = ssub.s32 %s10, 1
      // Predicated region
      $region13: #{basic_block.3} parent=11 // pred_check
        %p124 = pneg %p57
      $region14: #{basic_block.3} parent=11 // pred_check_branch
        %126 = sbr.rel (%p124) target = $region16
      $region15: #{basic_block.3} parent=11 // pred_region
        _
      $region16: #{basic_block.3} parent=11 // pred_fallthru
        _
    $region12: #{basic_block.3} parent=5 // pred_fallthru
      _
    %p127 = scmp.lt.s32.totalorder %s10, 2
    // Predicated region
    $region17: #{basic_block.3} parent=5 // pred_check
      %p128 = pneg %p127
    $region18: #{basic_block.3} parent=5 // pred_check_branch
      %130 = sbr.rel (%p128) target = $region20
    $region19: #{basic_block.3} parent=5 // pred_region
      // Predicated region
      $region21: #{basic_block.3} parent=19 // pred_check
        %p131 = pneg %p30
      $region22: #{basic_block.3} parent=19 // pred_check_branch
        %133 = sbr.rel (%p131) target = $region24
      $region23: #{basic_block.3} parent=19 // pred_region
        %p134 = scmp.lt.s32.totalorder %s10, 1
        %s135 = scalar_select %p134, %s10, 1
        %s136 = smul.addr %s135, 54
        %s137 = smul.addr %s136, 4
        %s138 = scalar_lea.vmem %s0, %s137
      $region24: #{basic_block.3} parent=19 // pred_fallthru
        _
    $region20: #{basic_block.3} parent=5 // pred_fallthru
      _
    %p139 = scmp.le.s32.totalorder 1, %s10
    %p140 = scmp.lt.s32.totalorder %s10, 3
    %p141 = pnand %p139, %p140
    %p142 = pneg %p141
    // Predicated region
    $region25: #{basic_block.3} parent=5 // pred_check
      _
    $region26: #{basic_block.3} parent=5 // pred_check_branch
      %144 = sbr.rel (%p141) target = $region28
    $region27: #{basic_block.3} parent=5 // pred_region
      %s145 = ssub.s32 %s10, 1
      %p146 = scmp.lt.s32.totalorder %s15, 1
      %s147 = scalar_select %p146, %s15, 1
      %s148 = smul.addr %s147, 54
      %s149 = smul.addr %s148, 4
      %s150 = scalar_lea.vmem %s0, %s149
      %p151 = pneg %p36
      %p152 = pneg %p33
      %p153 = pneg %p57
      %p154 = pneg %p54
      %p155 = pneg %p83
      %p156 = pneg %p80
      %p157 = scmp.lt.s32.totalorder %s15, 1
      %s158 = scalar_select %p157, %s15, 1
      %s159 = smul.addr %s158, 32
      %s160 = smul.addr %s159, 4
      %s161 = scalar_lea.vmem %s2, %s160
      %p162 = pneg %p109
      %p163 = pneg %p106
      %p164 = scmp.lt.s32.totalorder %s15, 1
      %s165 = scalar_select %p164, %s15, 1
      %s166 = smul.addr %s165, 2
      %s167 = scalar_lea.vmem %s3, %s166
      %p168 = scmp.lt.s32.totalorder %s15, 1
      %s169 = scalar_select %p168, %s15, 1
      %s170 = smul.addr %s169, 54
      %s171 = smul.addr %s170, 4
      %s172 = scalar_lea.vmem %s0, %s171
      %p173 = scmp.lt.s32.totalorder %s15, 1
      %s174 = scalar_select %p173, %s15, 1
      %s175 = smul.addr %s174, 32
      %s176 = smul.addr %s175, 4
      %s177 = scalar_lea.vmem %s2, %s176
      %p178 = scmp.lt.s32.totalorder %s15, 1
      %s179 = scalar_select %p178, %s15, 1
      %s180 = smul.addr %s179, 2
      %s181 = scalar_lea.vmem %s3, %s180
      %v183 = vld [vmem:[%s172] sm:$0xf]
      %v184 = vld [vmem:[%s172 + $0x4] sm:$0xf]
      %v185 = vld [vmem:[%s172 + $0xc] sm:$0xf]
      %v186 = vld [vmem:[%s172 + $0x10] sm:$0xf]
      %v187 = vld [vmem:[%s172 + $0x18] sm:$0xf]
      %v188 = vld [vmem:[%s172 + $0x1c] sm:$0xf]
      %v189 = vld [vmem:[%s172 + $0x24] sm:$0xf]
      %v190 = vld [vmem:[%s172 + $0x28] sm:$0xf]
      %v191 = vld [vmem:[%s172 + $0x30] sm:$0xf]
      %v192 = vld [vmem:[%s172 + $0x34] sm:$0xf]
      %v193 = vld [vmem:[%s172 + $0x3c] sm:$0xf]
      %v194 = vld [vmem:[%s172 + $0x40] sm:$0xf]
      %v195 = vld [vmem:[%s172 + $0x48] sm:$0xf]
      %v196 = vld [vmem:[%s172 + $0x4c] sm:$0xf]
      %v197 = vld [vmem:[%s172 + $0x54] sm:$0xf]
      %v198 = vld [vmem:[%s172 + $0x58] sm:$0xf]
      %v199 = vld [vmem:[%s172 + $0x60] sm:$0xf]
      %v200 = vld [vmem:[%s172 + $0x64] sm:$0xf]
      %v201 = vld [vmem:[%s172 + $0x6c] sm:$0xf]
      %v202 = vld [vmem:[%s172 + $0x70] sm:$0xf]
      %v203 = vld [vmem:[%s172 + $0x78] sm:$0xf]
      %v204 = vld [vmem:[%s172 + $0x7c] sm:$0xf]
      %v205 = vld [vmem:[%s172 + $0x84] sm:$0xf]
      %v206 = vld [vmem:[%s172 + $0x88] sm:$0xf]
      %v207 = vld [vmem:[%s172 + $0x90] sm:$0xf]
      %v208 = vld [vmem:[%s172 + $0x94] sm:$0xf]
      %v209 = vld [vmem:[%s172 + $0x9c] sm:$0xf]
      %v210 = vld [vmem:[%s172 + $0xa0] sm:$0xf]
      %v211 = vld [vmem:[%s172 + $0xa8] sm:$0xf]
      %v212 = vld [vmem:[%s172 + $0xac] sm:$0xf]
      %v213 = vld [vmem:[%s172 + $0xb4] sm:$0xf]
      %v214 = vld [vmem:[%s172 + $0xb8] sm:$0xf]
      %v215 = vunpack.c.l.bf16 %v183
      %v216 = vunpack.c.l.bf16 %v184
      %v217 = vunpack.c.l.bf16 %v185
      %v218 = vunpack.c.l.bf16 %v186
      %v219 = vunpack.c.l.bf16 %v187
      %v220 = vunpack.c.l.bf16 %v188
      %v221 = vunpack.c.l.bf16 %v189
      %v222 = vunpack.c.l.bf16 %v190
      %v223 = vunpack.c.l.bf16 %v191
      %v224 = vunpack.c.l.bf16 %v192
      %v225 = vunpack.c.l.bf16 %v193
      %v226 = vunpack.c.l.bf16 %v194
      %v227 = vunpack.c.l.bf16 %v195
      %v228 = vunpack.c.l.bf16 %v196
      %v229 = vunpack.c.l.bf16 %v197
      %v230 = vunpack.c.l.bf16 %v198
      %v231 = vunpack.c.l.bf16 %v199
      %v232 = vunpack.c.l.bf16 %v200
      %v233 = vunpack.c.l.bf16 %v201
      %v234 = vunpack.c.l.bf16 %v202
      %v235 = vunpack.c.l.bf16 %v203
      %v236 = vunpack.c.l.bf16 %v204
      %v237 = vunpack.c.l.bf16 %v205
      %v238 = vunpack.c.l.bf16 %v206
      %v239 = vunpack.c.l.bf16 %v207
      %v240 = vunpack.c.l.bf16 %v208
      %v241 = vunpack.c.l.bf16 %v209
      %v242 = vunpack.c.l.bf16 %v210
      %v243 = vunpack.c.l.bf16 %v211
      %v244 = vunpack.c.l.bf16 %v212
      %v245 = vunpack.c.l.bf16 %v213
      %v246 = vunpack.c.l.bf16 %v214
      %vm247 = vcmask 64512
      %248 = vst.msk [vmem:[#allocation2] sm:$0xff] %vm247, %v215
      %249 = vst.msk [vmem:[#allocation2 + $0x8] sm:$0xff] %vm247, %v216
      %250 = vst.msk [vmem:[#allocation2 + $0x10] sm:$0xff] %vm247, %v217
      %251 = vst.msk [vmem:[#allocation2 + $0x18] sm:$0xff] %vm247, %v218
      %252 = vst.msk [vmem:[#allocation2 + $0x20] sm:$0xff] %vm247, %v219
      %253 = vst.msk [vmem:[#allocation2 + $0x28] sm:$0xff] %vm247, %v220
      %254 = vst.msk [vmem:[#allocation2 + $0x30] sm:$0xff] %vm247, %v221
      %255 = vst.msk [vmem:[#allocation2 + $0x38] sm:$0xff] %vm247, %v222
      %256 = vst.msk [vmem:[#allocation2 + $0x40] sm:$0xff] %vm247, %v223
      %257 = vst.msk [vmem:[#allocation2 + $0x48] sm:$0xff] %vm247, %v224
      %258 = vst.msk [vmem:[#allocation2 + $0x50] sm:$0xff] %vm247, %v225
      %259 = vst.msk [vmem:[#allocation2 + $0x58] sm:$0xff] %vm247, %v226
      %260 = vst.msk [vmem:[#allocation2 + $0x60] sm:$0xff] %vm247, %v227
      %261 = vst.msk [vmem:[#allocation2 + $0x68] sm:$0xff] %vm247, %v228
      %262 = vst.msk [vmem:[#allocation2 + $0x70] sm:$0xff] %vm247, %v229
      %263 = vst.msk [vmem:[#allocation2 + $0x78] sm:$0xff] %vm247, %v230
      %264 = vst.msk [vmem:[#allocation2 + $0x80] sm:$0xff] %vm247, %v231
      %265 = vst.msk [vmem:[#allocation2 + $0x88] sm:$0xff] %vm247, %v232
      %266 = vst.msk [vmem:[#allocation2 + $0x90] sm:$0xff] %vm247, %v233
      %267 = vst.msk [vmem:[#allocation2 + $0x98] sm:$0xff] %vm247, %v234
      %268 = vst.msk [vmem:[#allocation2 + $0xa0] sm:$0xff] %vm247, %v235
      %269 = vst.msk [vmem:[#allocation2 + $0xa8] sm:$0xff] %vm247, %v236
      %270 = vst.msk [vmem:[#allocation2 + $0xb0] sm:$0xff] %vm247, %v237
      %271 = vst.msk [vmem:[#allocation2 + $0xb8] sm:$0xff] %vm247, %v238
      %272 = vst.msk [vmem:[#allocation2 + $0xc0] sm:$0xff] %vm247, %v239
      %273 = vst.msk [vmem:[#allocation2 + $0xc8] sm:$0xff] %vm247, %v240
      %274 = vst.msk [vmem:[#allocation2 + $0xd0] sm:$0xff] %vm247, %v241
      %275 = vst.msk [vmem:[#allocation2 + $0xd8] sm:$0xff] %vm247, %v242
      %276 = vst.msk [vmem:[#allocation2 + $0xe0] sm:$0xff] %vm247, %v243
      %277 = vst.msk [vmem:[#allocation2 + $0xe8] sm:$0xff] %vm247, %v244
      %278 = vst.msk [vmem:[#allocation2 + $0xf0] sm:$0xff] %vm247, %v245
      %279 = vst.msk [vmem:[#allocation2 + $0xf8] sm:$0xff] %vm247, %v246
      %v280 = vld [vmem:[%s172] sm:$0xf]
      %v281 = vld [vmem:[%s172 + $0x4] sm:$0xf]
      %v282 = vld [vmem:[%s172 + $0x8] sm:$0x1]
      %v283 = vld [vmem:[%s172 + $0xc] sm:$0xf]
      %v284 = vld [vmem:[%s172 + $0x10] sm:$0xf]
      %v285 = vld [vmem:[%s172 + $0x14] sm:$0x1]
      %v286 = vld [vmem:[%s172 + $0x18] sm:$0xf]
      %v287 = vld [vmem:[%s172 + $0x1c] sm:$0xf]
      %v288 = vld [vmem:[%s172 + $0x20] sm:$0x1]
      %v289 = vld [vmem:[%s172 + $0x24] sm:$0xf]
      %v290 = vld [vmem:[%s172 + $0x28] sm:$0xf]
      %v291 = vld [vmem:[%s172 + $0x2c] sm:$0x1]
      %v292 = vld [vmem:[%s172 + $0x30] sm:$0xf]
      %v293 = vld [vmem:[%s172 + $0x34] sm:$0xf]
      %v294 = vld [vmem:[%s172 + $0x38] sm:$0x1]
      %v295 = vld [vmem:[%s172 + $0x3c] sm:$0xf]
      %v296 = vld [vmem:[%s172 + $0x40] sm:$0xf]
      %v297 = vld [vmem:[%s172 + $0x44] sm:$0x1]
      %v298 = vld [vmem:[%s172 + $0x48] sm:$0xf]
      %v299 = vld [vmem:[%s172 + $0x4c] sm:$0xf]
      %v300 = vld [vmem:[%s172 + $0x50] sm:$0x1]
      %v301 = vld [vmem:[%s172 + $0x54] sm:$0xf]
      %v302 = vld [vmem:[%s172 + $0x58] sm:$0xf]
      %v303 = vld [vmem:[%s172 + $0x5c] sm:$0x1]
      %v304 = vld [vmem:[%s172 + $0x60] sm:$0xf]
      %v305 = vld [vmem:[%s172 + $0x64] sm:$0xf]
      %v306 = vld [vmem:[%s172 + $0x68] sm:$0x1]
      %v307 = vld [vmem:[%s172 + $0x6c] sm:$0xf]
      %v308 = vld [vmem:[%s172 + $0x70] sm:$0xf]
      %v309 = vld [vmem:[%s172 + $0x74] sm:$0x1]
      %v310 = vld [vmem:[%s172 + $0x78] sm:$0xf]
      %v311 = vld [vmem:[%s172 + $0x7c] sm:$0xf]
      %v312 = vld [vmem:[%s172 + $0x80] sm:$0x1]
      %v313 = vld [vmem:[%s172 + $0x84] sm:$0xf]
      %v314 = vld [vmem:[%s172 + $0x88] sm:$0xf]
      %v315 = vld [vmem:[%s172 + $0x8c] sm:$0x1]
      %v316 = vld [vmem:[%s172 + $0x90] sm:$0xf]
      %v317 = vld [vmem:[%s172 + $0x94] sm:$0xf]
      %v318 = vld [vmem:[%s172 + $0x98] sm:$0x1]
      %v319 = vld [vmem:[%s172 + $0x9c] sm:$0xf]
      %v320 = vld [vmem:[%s172 + $0xa0] sm:$0xf]
      %v321 = vld [vmem:[%s172 + $0xa4] sm:$0x1]
      %v322 = vld [vmem:[%s172 + $0xa8] sm:$0xf]
      %v323 = vld [vmem:[%s172 + $0xac] sm:$0xf]
      %v324 = vld [vmem:[%s172 + $0xb0] sm:$0x1]
      %v325 = vld [vmem:[%s172 + $0xb4] sm:$0xf]
      %v326 = vld [vmem:[%s172 + $0xb8] sm:$0xf]
      %v327 = vld [vmem:[%s172 + $0xbc] sm:$0x1]
      %v328 = vunpack.c.l.bf16 %v280
      %v329 = vunpack.c.l.bf16 %v281
      %v330 = vunpack.c.l.bf16 %v282
      %v331 = vunpack.c.l.bf16 %v283
      %v332 = vunpack.c.l.bf16 %v284
      %v333 = vunpack.c.l.bf16 %v285
      %v334 = vunpack.c.l.bf16 %v286
      %v335 = vunpack.c.l.bf16 %v287
      %v336 = vunpack.c.l.bf16 %v288
      %v337 = vunpack.c.l.bf16 %v289
      %v338 = vunpack.c.l.bf16 %v290
      %v339 = vunpack.c.l.bf16 %v291
      %v340 = vunpack.c.l.bf16 %v292
      %v341 = vunpack.c.l.bf16 %v293
      %v342 = vunpack.c.l.bf16 %v294
      %v343 = vunpack.c.l.bf16 %v295
      %v344 = vunpack.c.l.bf16 %v296
      %v345 = vunpack.c.l.bf16 %v297
      %v346 = vunpack.c.l.bf16 %v298
      %v347 = vunpack.c.l.bf16 %v299
      %v348 = vunpack.c.l.bf16 %v300
      %v349 = vunpack.c.l.bf16 %v301
      %v350 = vunpack.c.l.bf16 %v302
      %v351 = vunpack.c.l.bf16 %v303
      %v352 = vunpack.c.l.bf16 %v304
      %v353 = vunpack.c.l.bf16 %v305
      %v354 = vunpack.c.l.bf16 %v306
      %v355 = vunpack.c.l.bf16 %v307
      %v356 = vunpack.c.l.bf16 %v308
      %v357 = vunpack.c.l.bf16 %v309
      %v358 = vunpack.c.l.bf16 %v310
      %v359 = vunpack.c.l.bf16 %v311
      %v360 = vunpack.c.l.bf16 %v312
      %v361 = vunpack.c.l.bf16 %v313
      %v362 = vunpack.c.l.bf16 %v314
      %v363 = vunpack.c.l.bf16 %v315
      %v364 = vunpack.c.l.bf16 %v316
      %v365 = vunpack.c.l.bf16 %v317
      %v366 = vunpack.c.l.bf16 %v318
      %v367 = vunpack.c.l.bf16 %v319
      %v368 = vunpack.c.l.bf16 %v320
      %v369 = vunpack.c.l.bf16 %v321
      %v370 = vunpack.c.l.bf16 %v322
      %v371 = vunpack.c.l.bf16 %v323
      %v372 = vunpack.c.l.bf16 %v324
      %v373 = vunpack.c.l.bf16 %v325
      %v374 = vunpack.c.l.bf16 %v326
      %v375 = vunpack.c.l.bf16 %v327
      %vm424 = vcmask 1046528
      %v425 = vrot.slane %v328, 1
      %v426 = vrot.slane %v329, 1
      %v427 = vsel %vm424, %v425, %v426
      %v428 = vrot.slane %v330, 1
      %v429 = vsel %vm424, %v426, %v428
      %v430 = vrot.slane %v331, 1
      %v431 = vrot.slane %v332, 1
      %v432 = vsel %vm424, %v430, %v431
      %v433 = vrot.slane %v333, 1
      %v434 = vsel %vm424, %v431, %v433
      %v435 = vrot.slane %v334, 1
      %v436 = vrot.slane %v335, 1
      %v437 = vsel %vm424, %v435, %v436
      %v438 = vrot.slane %v336, 1
      %v439 = vsel %vm424, %v436, %v438
      %v440 = vrot.slane %v337, 1
      %v441 = vrot.slane %v338, 1
      %v442 = vsel %vm424, %v440, %v441
      %v443 = vrot.slane %v339, 1
      %v444 = vsel %vm424, %v441, %v443
      %v445 = vrot.slane %v340, 1
      %v446 = vrot.slane %v341, 1
      %v447 = vsel %vm424, %v445, %v446
      %v448 = vrot.slane %v342, 1
      %v449 = vsel %vm424, %v446, %v448
      %v450 = vrot.slane %v343, 1
      %v451 = vrot.slane %v344, 1
      %v452 = vsel %vm424, %v450, %v451
      %v453 = vrot.slane %v345, 1
      %v454 = vsel %vm424, %v451, %v453
      %v455 = vrot.slane %v346, 1
      %v456 = vrot.slane %v347, 1
      %v457 = vsel %vm424, %v455, %v456
      %v458 = vrot.slane %v348, 1
      %v459 = vsel %vm424, %v456, %v458
      %v460 = vrot.slane %v349, 1
      %v461 = vrot.slane %v350, 1
      %v462 = vsel %vm424, %v460, %v461
      %v463 = vrot.slane %v351, 1
      %v464 = vsel %vm424, %v461, %v463
      %v465 = vrot.slane %v352, 1
      %v466 = vrot.slane %v353, 1
      %v467 = vsel %vm424, %v465, %v466
      %v468 = vrot.slane %v354, 1
      %v469 = vsel %vm424, %v466, %v468
      %v470 = vrot.slane %v355, 1
      %v471 = vrot.slane %v356, 1
      %v472 = vsel %vm424, %v470, %v471
      %v473 = vrot.slane %v357, 1
      %v474 = vsel %vm424, %v471, %v473
      %v475 = vrot.slane %v358, 1
      %v476 = vrot.slane %v359, 1
      %v477 = vsel %vm424, %v475, %v476
      %v478 = vrot.slane %v360, 1
      %v479 = vsel %vm424, %v476, %v478
      %v480 = vrot.slane %v361, 1
      %v481 = vrot.slane %v362, 1
      %v482 = vsel %vm424, %v480, %v481
      %v483 = vrot.slane %v363, 1
      %v484 = vsel %vm424, %v481, %v483
      %v485 = vrot.slane %v364, 1
      %v486 = vrot.slane %v365, 1
      %v487 = vsel %vm424, %v485, %v486
      %v488 = vrot.slane %v366, 1
      %v489 = vsel %vm424, %v486, %v488
      %v490 = vrot.slane %v367, 1
      %v491 = vrot.slane %v368, 1
      %v492 = vsel %vm424, %v490, %v491
      %v493 = vrot.slane %v369, 1
      %v494 = vsel %vm424, %v491, %v493
      %v495 = vrot.slane %v370, 1
      %v496 = vrot.slane %v371, 1
      %v497 = vsel %vm424, %v495, %v496
      %v498 = vrot.slane %v372, 1
      %v499 = vsel %vm424, %v496, %v498
      %v500 = vrot.slane %v373, 1
      %v501 = vrot.slane %v374, 1
      %v502 = vsel %vm424, %v500, %v501
      %v503 = vrot.slane %v375, 1
      %v504 = vsel %vm424, %v501, %v503
      %505 = vrot.lane.b32.xlu0 %v427, 8
      %v506 = vpop.permute.xlu0 %505
      %507 = vrot.lane.b32.xlu0 %v429, 8
      %v508 = vpop.permute.xlu0 %507
      %509 = vrot.lane.b32.xlu0 %v432, 8
      %v510 = vpop.permute.xlu0 %509
      %511 = vrot.lane.b32.xlu0 %v434, 8
      %v512 = vpop.permute.xlu0 %511
      %513 = vrot.lane.b32.xlu0 %v437, 8
      %v514 = vpop.permute.xlu0 %513
      %515 = vrot.lane.b32.xlu0 %v439, 8
      %v516 = vpop.permute.xlu0 %515
      %517 = vrot.lane.b32.xlu0 %v442, 8
      %v518 = vpop.permute.xlu0 %517
      %519 = vrot.lane.b32.xlu0 %v444, 8
      %v520 = vpop.permute.xlu0 %519
      %521 = vrot.lane.b32.xlu0 %v447, 8
      %v522 = vpop.permute.xlu0 %521
      %523 = vrot.lane.b32.xlu0 %v449, 8
      %v524 = vpop.permute.xlu0 %523
      %525 = vrot.lane.b32.xlu0 %v452, 8
      %v526 = vpop.permute.xlu0 %525
      %527 = vrot.lane.b32.xlu0 %v454, 8
      %v528 = vpop.permute.xlu0 %527
      %529 = vrot.lane.b32.xlu0 %v457, 8
      %v530 = vpop.permute.xlu0 %529
      %531 = vrot.lane.b32.xlu0 %v459, 8
      %v532 = vpop.permute.xlu0 %531
      %533 = vrot.lane.b32.xlu0 %v462, 8
      %v534 = vpop.permute.xlu0 %533
      %535 = vrot.lane.b32.xlu0 %v464, 8
      %v536 = vpop.permute.xlu0 %535
      %537 = vrot.lane.b32.xlu0 %v467, 8
      %v538 = vpop.permute.xlu0 %537
      %539 = vrot.lane.b32.xlu0 %v469, 8
      %v540 = vpop.permute.xlu0 %539
      %541 = vrot.lane.b32.xlu0 %v472, 8
      %v542 = vpop.permute.xlu0 %541
      %543 = vrot.lane.b32.xlu0 %v474, 8
      %v544 = vpop.permute.xlu0 %543
      %545 = vrot.lane.b32.xlu0 %v477, 8
      %v546 = vpop.permute.xlu0 %545
      %547 = vrot.lane.b32.xlu0 %v479, 8
      %v548 = vpop.permute.xlu0 %547
      %549 = vrot.lane.b32.xlu0 %v482, 8
      %v550 = vpop.permute.xlu0 %549
      %551 = vrot.lane.b32.xlu0 %v484, 8
      %v552 = vpop.permute.xlu0 %551
      %553 = vrot.lane.b32.xlu0 %v487, 8
      %v554 = vpop.permute.xlu0 %553
      %555 = vrot.lane.b32.xlu0 %v489, 8
      %v556 = vpop.permute.xlu0 %555
      %557 = vrot.lane.b32.xlu0 %v492, 8
      %v558 = vpop.permute.xlu0 %557
      %559 = vrot.lane.b32.xlu0 %v494, 8
      %v560 = vpop.permute.xlu0 %559
      %561 = vrot.lane.b32.xlu0 %v497, 8
      %v562 = vpop.permute.xlu0 %561
      %563 = vrot.lane.b32.xlu0 %v499, 8
      %v564 = vpop.permute.xlu0 %563
      %565 = vrot.lane.b32.xlu0 %v502, 8
      %v566 = vpop.permute.xlu0 %565
      %567 = vrot.lane.b32.xlu0 %v504, 8
      %v568 = vpop.permute.xlu0 %567
      %vm601 = vcmask 130112
      %602 = vst.msk [vmem:[#allocation2] sm:$0xff] %vm601, %v506
      %603 = vst.msk [vmem:[#allocation2 + $0x8] sm:$0xff] %vm601, %v508
      %604 = vst.msk [vmem:[#allocation2 + $0x10] sm:$0xff] %vm601, %v510
      %605 = vst.msk [vmem:[#allocation2 + $0x18] sm:$0xff] %vm601, %v512
      %606 = vst.msk [vmem:[#allocation2 + $0x20] sm:$0xff] %vm601, %v514
      %607 = vst.msk [vmem:[#allocation2 + $0x28] sm:$0xff] %vm601, %v516
      %608 = vst.msk [vmem:[#allocation2 + $0x30] sm:$0xff] %vm601, %v518
      %609 = vst.msk [vmem:[#allocation2 + $0x38] sm:$0xff] %vm601, %v520
      %610 = vst.msk [vmem:[#allocation2 + $0x40] sm:$0xff] %vm601, %v522
      %611 = vst.msk [vmem:[#allocation2 + $0x48] sm:$0xff] %vm601, %v524
      %612 = vst.msk [vmem:[#allocation2 + $0x50] sm:$0xff] %vm601, %v526
      %613 = vst.msk [vmem:[#allocation2 + $0x58] sm:$0xff] %vm601, %v528
      %614 = vst.msk [vmem:[#allocation2 + $0x60] sm:$0xff] %vm601, %v530
      %615 = vst.msk [vmem:[#allocation2 + $0x68] sm:$0xff] %vm601, %v532
      %616 = vst.msk [vmem:[#allocation2 + $0x70] sm:$0xff] %vm601, %v534
      %617 = vst.msk [vmem:[#allocation2 + $0x78] sm:$0xff] %vm601, %v536
      %618 = vst.msk [vmem:[#allocation2 + $0x80] sm:$0xff] %vm601, %v538
      %619 = vst.msk [vmem:[#allocation2 + $0x88] sm:$0xff] %vm601, %v540
      %620 = vst.msk [vmem:[#allocation2 + $0x90] sm:$0xff] %vm601, %v542
      %621 = vst.msk [vmem:[#allocation2 + $0x98] sm:$0xff] %vm601, %v544
      %622 = vst.msk [vmem:[#allocation2 + $0xa0] sm:$0xff] %vm601, %v546
      %623 = vst.msk [vmem:[#allocation2 + $0xa8] sm:$0xff] %vm601, %v548
      %624 = vst.msk [vmem:[#allocation2 + $0xb0] sm:$0xff] %vm601, %v550
      %625 = vst.msk [vmem:[#allocation2 + $0xb8] sm:$0xff] %vm601, %v552
      %626 = vst.msk [vmem:[#allocation2 + $0xc0] sm:$0xff] %vm601, %v554
      %627 = vst.msk [vmem:[#allocation2 + $0xc8] sm:$0xff] %vm601, %v556
      %628 = vst.msk [vmem:[#allocation2 + $0xd0] sm:$0xff] %vm601, %v558
      %629 = vst.msk [vmem:[#allocation2 + $0xd8] sm:$0xff] %vm601, %v560
      %630 = vst.msk [vmem:[#allocation2 + $0xe0] sm:$0xff] %vm601, %v562
      %631 = vst.msk [vmem:[#allocation2 + $0xe8] sm:$0xff] %vm601, %v564
      %632 = vst.msk [vmem:[#allocation2 + $0xf0] sm:$0xff] %vm601, %v566
      %633 = vst.msk [vmem:[#allocation2 + $0xf8] sm:$0xff] %vm601, %v568
      %v634 = vld [vmem:[%s172] sm:$0xe]
      %v635 = vld [vmem:[%s172 + $0x4] sm:$0xf]
      %v636 = vld [vmem:[%s172 + $0x8] sm:$0x1]
      %v637 = vld [vmem:[%s172 + $0xc] sm:$0xe]
      %v638 = vld [vmem:[%s172 + $0x10] sm:$0xf]
      %v639 = vld [vmem:[%s172 + $0x14] sm:$0x1]
      %v640 = vld [vmem:[%s172 + $0x18] sm:$0xe]
      %v641 = vld [vmem:[%s172 + $0x1c] sm:$0xf]
      %v642 = vld [vmem:[%s172 + $0x20] sm:$0x1]
      %v643 = vld [vmem:[%s172 + $0x24] sm:$0xe]
      %v644 = vld [vmem:[%s172 + $0x28] sm:$0xf]
      %v645 = vld [vmem:[%s172 + $0x2c] sm:$0x1]
      %v646 = vld [vmem:[%s172 + $0x30] sm:$0xe]
      %v647 = vld [vmem:[%s172 + $0x34] sm:$0xf]
      %v648 = vld [vmem:[%s172 + $0x38] sm:$0x1]
      %v649 = vld [vmem:[%s172 + $0x3c] sm:$0xe]
      %v650 = vld [vmem:[%s172 + $0x40] sm:$0xf]
      %v651 = vld [vmem:[%s172 + $0x44] sm:$0x1]
      %v652 = vld [vmem:[%s172 + $0x48] sm:$0xe]
      %v653 = vld [vmem:[%s172 + $0x4c] sm:$0xf]
      %v654 = vld [vmem:[%s172 + $0x50] sm:$0x1]
      %v655 = vld [vmem:[%s172 + $0x54] sm:$0xe]
      %v656 = vld [vmem:[%s172 + $0x58] sm:$0xf]
      %v657 = vld [vmem:[%s172 + $0x5c] sm:$0x1]
      %v658 = vld [vmem:[%s172 + $0x60] sm:$0xe]
      %v659 = vld [vmem:[%s172 + $0x64] sm:$0xf]
      %v660 = vld [vmem:[%s172 + $0x68] sm:$0x1]
      %v661 = vld [vmem:[%s172 + $0x6c] sm:$0xe]
      %v662 = vld [vmem:[%s172 + $0x70] sm:$0xf]
      %v663 = vld [vmem:[%s172 + $0x74] sm:$0x1]
      %v664 = vld [vmem:[%s172 + $0x78] sm:$0xe]
      %v665 = vld [vmem:[%s172 + $0x7c] sm:$0xf]
      %v666 = vld [vmem:[%s172 + $0x80] sm:$0x1]
      %v667 = vld [vmem:[%s172 + $0x84] sm:$0xe]
      %v668 = vld [vmem:[%s172 + $0x88] sm:$0xf]
      %v669 = vld [vmem:[%s172 + $0x8c] sm:$0x1]
      %v670 = vld [vmem:[%s172 + $0x90] sm:$0xe]
      %v671 = vld [vmem:[%s172 + $0x94] sm:$0xf]
      %v672 = vld [vmem:[%s172 + $0x98] sm:$0x1]
      %v673 = vld [vmem:[%s172 + $0x9c] sm:$0xe]
      %v674 = vld [vmem:[%s172 + $0xa0] sm:$0xf]
      %v675 = vld [vmem:[%s172 + $0xa4] sm:$0x1]
      %v676 = vld [vmem:[%s172 + $0xa8] sm:$0xe]
      %v677 = vld [vmem:[%s172 + $0xac] sm:$0xf]
      %v678 = vld [vmem:[%s172 + $0xb0] sm:$0x1]
      %v679 = vld [vmem:[%s172 + $0xb4] sm:$0xe]
      %v680 = vld [vmem:[%s172 + $0xb8] sm:$0xf]
      %v681 = vld [vmem:[%s172 + $0xbc] sm:$0x1]
      %v682 = vunpack.c.l.bf16 %v634
      %v683 = vunpack.c.l.bf16 %v635
      %v684 = vunpack.c.l.bf16 %v636
      %v685 = vunpack.c.l.bf16 %v637
      %v686 = vunpack.c.l.bf16 %v638
      %v687 = vunpack.c.l.bf16 %v639
      %v688 = vunpack.c.l.bf16 %v640
      %v689 = vunpack.c.l.bf16 %v641
      %v690 = vunpack.c.l.bf16 %v642
      %v691 = vunpack.c.l.bf16 %v643
      %v692 = vunpack.c.l.bf16 %v644
      %v693 = vunpack.c.l.bf16 %v645
      %v694 = vunpack.c.l.bf16 %v646
      %v695 = vunpack.c.l.bf16 %v647
      %v696 = vunpack.c.l.bf16 %v648
      %v697 = vunpack.c.l.bf16 %v649
      %v698 = vunpack.c.l.bf16 %v650
      %v699 = vunpack.c.l.bf16 %v651
      %v700 = vunpack.c.l.bf16 %v652
      %v701 = vunpack.c.l.bf16 %v653
      %v702 = vunpack.c.l.bf16 %v654
      %v703 = vunpack.c.l.bf16 %v655
      %v704 = vunpack.c.l.bf16 %v656
      %v705 = vunpack.c.l.bf16 %v657
      %v706 = vunpack.c.l.bf16 %v658
      %v707 = vunpack.c.l.bf16 %v659
      %v708 = vunpack.c.l.bf16 %v660
      %v709 = vunpack.c.l.bf16 %v661
      %v710 = vunpack.c.l.bf16 %v662
      %v711 = vunpack.c.l.bf16 %v663
      %v712 = vunpack.c.l.bf16 %v664
      %v713 = vunpack.c.l.bf16 %v665
      %v714 = vunpack.c.l.bf16 %v666
      %v715 = vunpack.c.l.bf16 %v667
      %v716 = vunpack.c.l.bf16 %v668
      %v717 = vunpack.c.l.bf16 %v669
      %v718 = vunpack.c.l.bf16 %v670
      %v719 = vunpack.c.l.bf16 %v671
      %v720 = vunpack.c.l.bf16 %v672
      %v721 = vunpack.c.l.bf16 %v673
      %v722 = vunpack.c.l.bf16 %v674
      %v723 = vunpack.c.l.bf16 %v675
      %v724 = vunpack.c.l.bf16 %v676
      %v725 = vunpack.c.l.bf16 %v677
      %v726 = vunpack.c.l.bf16 %v678
      %v727 = vunpack.c.l.bf16 %v679
      %v728 = vunpack.c.l.bf16 %v680
      %v729 = vunpack.c.l.bf16 %v681
      %vm778 = vcmask 1045504
      %v779 = vrot.slane %v682, 2
      %v780 = vrot.slane %v683, 2
      %v781 = vsel %vm778, %v779, %v780
      %v782 = vrot.slane %v684, 2
      %v783 = vsel %vm778, %v780, %v782
      %v784 = vrot.slane %v685, 2
      %v785 = vrot.slane %v686, 2
      %v786 = vsel %vm778, %v784, %v785
      %v787 = vrot.slane %v687, 2
      %v788 = vsel %vm778, %v785, %v787
      %v789 = vrot.slane %v688, 2
      %v790 = vrot.slane %v689, 2
      %v791 = vsel %vm778, %v789, %v790
      %v792 = vrot.slane %v690, 2
      %v793 = vsel %vm778, %v790, %v792
      %v794 = vrot.slane %v691, 2
      %v795 = vrot.slane %v692, 2
      %v796 = vsel %vm778, %v794, %v795
      %v797 = vrot.slane %v693, 2
      %v798 = vsel %vm778, %v795, %v797
      %v799 = vrot.slane %v694, 2
      %v800 = vrot.slane %v695, 2
      %v801 = vsel %vm778, %v799, %v800
      %v802 = vrot.slane %v696, 2
      %v803 = vsel %vm778, %v800, %v802
      %v804 = vrot.slane %v697, 2
      %v805 = vrot.slane %v698, 2
      %v806 = vsel %vm778, %v804, %v805
      %v807 = vrot.slane %v699, 2
      %v808 = vsel %vm778, %v805, %v807
      %v809 = vrot.slane %v700, 2
      %v810 = vrot.slane %v701, 2
      %v811 = vsel %vm778, %v809, %v810
      %v812 = vrot.slane %v702, 2
      %v813 = vsel %vm778, %v810, %v812
      %v814 = vrot.slane %v703, 2
      %v815 = vrot.slane %v704, 2
      %v816 = vsel %vm778, %v814, %v815
      %v817 = vrot.slane %v705, 2
      %v818 = vsel %vm778, %v815, %v817
      %v819 = vrot.slane %v706, 2
      %v820 = vrot.slane %v707, 2
      %v821 = vsel %vm778, %v819, %v820
      %v822 = vrot.slane %v708, 2
      %v823 = vsel %vm778, %v820, %v822
      %v824 = vrot.slane %v709, 2
      %v825 = vrot.slane %v710, 2
      %v826 = vsel %vm778, %v824, %v825
      %v827 = vrot.slane %v711, 2
      %v828 = vsel %vm778, %v825, %v827
      %v829 = vrot.slane %v712, 2
      %v830 = vrot.slane %v713, 2
      %v831 = vsel %vm778, %v829, %v830
      %v832 = vrot.slane %v714, 2
      %v833 = vsel %vm778, %v830, %v832
      %v834 = vrot.slane %v715, 2
      %v835 = vrot.slane %v716, 2
      %v836 = vsel %vm778, %v834, %v835
      %v837 = vrot.slane %v717, 2
      %v838 = vsel %vm778, %v835, %v837
      %v839 = vrot.slane %v718, 2
      %v840 = vrot.slane %v719, 2
      %v841 = vsel %vm778, %v839, %v840
      %v842 = vrot.slane %v720, 2
      %v843 = vsel %vm778, %v840, %v842
      %v844 = vrot.slane %v721, 2
      %v845 = vrot.slane %v722, 2
      %v846 = vsel %vm778, %v844, %v845
      %v847 = vrot.slane %v723, 2
      %v848 = vsel %vm778, %v845, %v847
      %v849 = vrot.slane %v724, 2
      %v850 = vrot.slane %v725, 2
      %v851 = vsel %vm778, %v849, %v850
      %v852 = vrot.slane %v726, 2
      %v853 = vsel %vm778, %v850, %v852
      %v854 = vrot.slane %v727, 2
      %v855 = vrot.slane %v728, 2
      %v856 = vsel %vm778, %v854, %v855
      %v857 = vrot.slane %v729, 2
      %v858 = vsel %vm778, %v855, %v857
      %859 = vrot.lane.b32.xlu0 %v781, 16
      %v860 = vpop.permute.xlu0 %859
      %861 = vrot.lane.b32.xlu0 %v783, 16
      %v862 = vpop.permute.xlu0 %861
      %863 = vrot.lane.b32.xlu0 %v786, 16
      %v864 = vpop.permute.xlu0 %863
      %865 = vrot.lane.b32.xlu0 %v788, 16
      %v866 = vpop.permute.xlu0 %865
      %867 = vrot.lane.b32.xlu0 %v791, 16
      %v868 = vpop.permute.xlu0 %867
      %869 = vrot.lane.b32.xlu0 %v793, 16
      %v870 = vpop.permute.xlu0 %869
      %871 = vrot.lane.b32.xlu0 %v796, 16
      %v872 = vpop.permute.xlu0 %871
      %873 = vrot.lane.b32.xlu0 %v798, 16
      %v874 = vpop.permute.xlu0 %873
      %875 = vrot.lane.b32.xlu0 %v801, 16
      %v876 = vpop.permute.xlu0 %875
      %877 = vrot.lane.b32.xlu0 %v803, 16
      %v878 = vpop.permute.xlu0 %877
      %879 = vrot.lane.b32.xlu0 %v806, 16
      %v880 = vpop.permute.xlu0 %879
      %881 = vrot.lane.b32.xlu0 %v808, 16
      %v882 = vpop.permute.xlu0 %881
      %883 = vrot.lane.b32.xlu0 %v811, 16
      %v884 = vpop.permute.xlu0 %883
      %885 = vrot.lane.b32.xlu0 %v813, 16
      %v886 = vpop.permute.xlu0 %885
      %887 = vrot.lane.b32.xlu0 %v816, 16
      %v888 = vpop.permute.xlu0 %887
      %889 = vrot.lane.b32.xlu0 %v818, 16
      %v890 = vpop.permute.xlu0 %889
      %891 = vrot.lane.b32.xlu0 %v821, 16
      %v892 = vpop.permute.xlu0 %891
      %893 = vrot.lane.b32.xlu0 %v823, 16
      %v894 = vpop.permute.xlu0 %893
      %895 = vrot.lane.b32.xlu0 %v826, 16
      %v896 = vpop.permute.xlu0 %895
      %897 = vrot.lane.b32.xlu0 %v828, 16
      %v898 = vpop.permute.xlu0 %897
      %899 = vrot.lane.b32.xlu0 %v831, 16
      %v900 = vpop.permute.xlu0 %899
      %901 = vrot.lane.b32.xlu0 %v833, 16
      %v902 = vpop.permute.xlu0 %901
      %903 = vrot.lane.b32.xlu0 %v836, 16
      %v904 = vpop.permute.xlu0 %903
      %905 = vrot.lane.b32.xlu0 %v838, 16
      %v906 = vpop.permute.xlu0 %905
      %907 = vrot.lane.b32.xlu0 %v841, 16
      %v908 = vpop.permute.xlu0 %907
      %909 = vrot.lane.b32.xlu0 %v843, 16
      %v910 = vpop.permute.xlu0 %909
      %911 = vrot.lane.b32.xlu0 %v846, 16
      %v912 = vpop.permute.xlu0 %911
      %913 = vrot.lane.b32.xlu0 %v848, 16
      %v914 = vpop.permute.xlu0 %913
      %915 = vrot.lane.b32.xlu0 %v851, 16
      %v916 = vpop.permute.xlu0 %915
      %917 = vrot.lane.b32.xlu0 %v853, 16
      %v918 = vpop.permute.xlu0 %917
      %919 = vrot.lane.b32.xlu0 %v856, 16
      %v920 = vpop.permute.xlu0 %919
      %921 = vrot.lane.b32.xlu0 %v858, 16
      %v922 = vpop.permute.xlu0 %921
      %vm955 = vcmask 195712
      %956 = vst.msk [vmem:[#allocation2] sm:$0xff] %vm955, %v860
      %957 = vst.msk [vmem:[#allocation2 + $0x8] sm:$0xff] %vm955, %v862
      %958 = vst.msk [vmem:[#allocation2 + $0x10] sm:$0xff] %vm955, %v864
      %959 = vst.msk [vmem:[#allocation2 + $0x18] sm:$0xff] %vm955, %v866
      %960 = vst.msk [vmem:[#allocation2 + $0x20] sm:$0xff] %vm955, %v868
      %961 = vst.msk [vmem:[#allocation2 + $0x28] sm:$0xff] %vm955, %v870
      %962 = vst.msk [vmem:[#allocation2 + $0x30] sm:$0xff] %vm955, %v872
      %963 = vst.msk [vmem:[#allocation2 + $0x38] sm:$0xff] %vm955, %v874
      %964 = vst.msk [vmem:[#allocation2 + $0x40] sm:$0xff] %vm955, %v876
      %965 = vst.msk [vmem:[#allocation2 + $0x48] sm:$0xff] %vm955, %v878
      %966 = vst.msk [vmem:[#allocation2 + $0x50] sm:$0xff] %vm955, %v880
      %967 = vst.msk [vmem:[#allocation2 + $0x58] sm:$0xff] %vm955, %v882
      %968 = vst.msk [vmem:[#allocation2 + $0x60] sm:$0xff] %vm955, %v884
      %969 = vst.msk [vmem:[#allocation2 + $0x68] sm:$0xff] %vm955, %v886
      %970 = vst.msk [vmem:[#allocation2 + $0x70] sm:$0xff] %vm955, %v888
      %971 = vst.msk [vmem:[#allocation2 + $0x78] sm:$0xff] %vm955, %v890
      %972 = vst.msk [vmem:[#allocation2 + $0x80] sm:$0xff] %vm955, %v892
      %973 = vst.msk [vmem:[#allocation2 + $0x88] sm:$0xff] %vm955, %v894
      %974 = vst.msk [vmem:[#allocation2 + $0x90] sm:$0xff] %vm955, %v896
      %975 = vst.msk [vmem:[#allocation2 + $0x98] sm:$0xff] %vm955, %v898
      %976 = vst.msk [vmem:[#allocation2 + $0xa0] sm:$0xff] %vm955, %v900
      %977 = vst.msk [vmem:[#allocation2 + $0xa8] sm:$0xff] %vm955, %v902
      %978 = vst.msk [vmem:[#allocation2 + $0xb0] sm:$0xff] %vm955, %v904
      %979 = vst.msk [vmem:[#allocation2 + $0xb8] sm:$0xff] %vm955, %v906
      %980 = vst.msk [vmem:[#allocation2 + $0xc0] sm:$0xff] %vm955, %v908
      %981 = vst.msk [vmem:[#allocation2 + $0xc8] sm:$0xff] %vm955, %v910
      %982 = vst.msk [vmem:[#allocation2 + $0xd0] sm:$0xff] %vm955, %v912
      %983 = vst.msk [vmem:[#allocation2 + $0xd8] sm:$0xff] %vm955, %v914
      %984 = vst.msk [vmem:[#allocation2 + $0xe0] sm:$0xff] %vm955, %v916
      %985 = vst.msk [vmem:[#allocation2 + $0xe8] sm:$0xff] %vm955, %v918
      %986 = vst.msk [vmem:[#allocation2 + $0xf0] sm:$0xff] %vm955, %v920
      %987 = vst.msk [vmem:[#allocation2 + $0xf8] sm:$0xff] %vm955, %v922
      %s988 = scalar_lea.vmem %s172, 12
      %v989 = vld [vmem:[%s988] sm:$0xf]
      %v990 = vld [vmem:[%s988 + $0x4] sm:$0xf]
      %v991 = vld [vmem:[%s988 + $0xc] sm:$0xf]
      %v992 = vld [vmem:[%s988 + $0x10] sm:$0xf]
      %v993 = vld [vmem:[%s988 + $0x18] sm:$0xf]
      %v994 = vld [vmem:[%s988 + $0x1c] sm:$0xf]
      %v995 = vld [vmem:[%s988 + $0x24] sm:$0xf]
      %v996 = vld [vmem:[%s988 + $0x28] sm:$0xf]
      %v997 = vld [vmem:[%s988 + $0x30] sm:$0xf]
      %v998 = vld [vmem:[%s988 + $0x34] sm:$0xf]
      %v999 = vld [vmem:[%s988 + $0x3c] sm:$0xf]
      %v1000 = vld [vmem:[%s988 + $0x40] sm:$0xf]
      %v1001 = vld [vmem:[%s988 + $0x48] sm:$0xf]
      %v1002 = vld [vmem:[%s988 + $0x4c] sm:$0xf]
      %v1003 = vld [vmem:[%s988 + $0x54] sm:$0xf]
      %v1004 = vld [vmem:[%s988 + $0x58] sm:$0xf]
      %v1005 = vld [vmem:[%s988 + $0x60] sm:$0xf]
      %v1006 = vld [vmem:[%s988 + $0x64] sm:$0xf]
      %v1007 = vld [vmem:[%s988 + $0x6c] sm:$0xf]
      %v1008 = vld [vmem:[%s988 + $0x70] sm:$0xf]
      %v1009 = vld [vmem:[%s988 + $0x78] sm:$0xf]
      %v1010 = vld [vmem:[%s988 + $0x7c] sm:$0xf]
      %v1011 = vld [vmem:[%s988 + $0x84] sm:$0xf]
      %v1012 = vld [vmem:[%s988 + $0x88] sm:$0xf]
      %v1013 = vld [vmem:[%s988 + $0x90] sm:$0xf]
      %v1014 = vld [vmem:[%s988 + $0x94] sm:$0xf]
      %v1015 = vld [vmem:[%s988 + $0x9c] sm:$0xf]
      %v1016 = vld [vmem:[%s988 + $0xa0] sm:$0xf]
      %v1017 = vld [vmem:[%s988 + $0xa8] sm:$0xf]
      %v1018 = vld [vmem:[%s988 + $0xac] sm:$0xf]
      %v1019 = vld [vmem:[%s988 + $0xb4] sm:$0xf]
      %v1020 = vld [vmem:[%s988 + $0xb8] sm:$0xf]
      %v1021 = vunpack.c.l.bf16 %v989
      %v1022 = vunpack.c.l.bf16 %v990
      %v1023 = vunpack.c.l.bf16 %v991
      %v1024 = vunpack.c.l.bf16 %v992
      %v1025 = vunpack.c.l.bf16 %v993
      %v1026 = vunpack.c.l.bf16 %v994
      %v1027 = vunpack.c.l.bf16 %v995
      %v1028 = vunpack.c.l.bf16 %v996
      %v1029 = vunpack.c.l.bf16 %v997
      %v1030 = vunpack.c.l.bf16 %v998
      %v1031 = vunpack.c.l.bf16 %v999
      %v1032 = vunpack.c.l.bf16 %v1000
      %v1033 = vunpack.c.l.bf16 %v1001
      %v1034 = vunpack.c.l.bf16 %v1002
      %v1035 = vunpack.c.l.bf16 %v1003
      %v1036 = vunpack.c.l.bf16 %v1004
      %v1037 = vunpack.c.l.bf16 %v1005
      %v1038 = vunpack.c.l.bf16 %v1006
      %v1039 = vunpack.c.l.bf16 %v1007
      %v1040 = vunpack.c.l.bf16 %v1008
      %v1041 = vunpack.c.l.bf16 %v1009
      %v1042 = vunpack.c.l.bf16 %v1010
      %v1043 = vunpack.c.l.bf16 %v1011
      %v1044 = vunpack.c.l.bf16 %v1012
      %v1045 = vunpack.c.l.bf16 %v1013
      %v1046 = vunpack.c.l.bf16 %v1014
      %v1047 = vunpack.c.l.bf16 %v1015
      %v1048 = vunpack.c.l.bf16 %v1016
      %v1049 = vunpack.c.l.bf16 %v1017
      %v1050 = vunpack.c.l.bf16 %v1018
      %v1051 = vunpack.c.l.bf16 %v1019
      %v1052 = vunpack.c.l.bf16 %v1020
      %1085 = vrot.lane.b32.xlu0 %v1021, 24
      %v1086 = vpop.permute.xlu0 %1085
      %1087 = vrot.lane.b32.xlu0 %v1022, 24
      %v1088 = vpop.permute.xlu0 %1087
      %1089 = vrot.lane.b32.xlu0 %v1023, 24
      %v1090 = vpop.permute.xlu0 %1089
      %1091 = vrot.lane.b32.xlu0 %v1024, 24
      %v1092 = vpop.permute.xlu0 %1091
      %1093 = vrot.lane.b32.xlu0 %v1025, 24
      %v1094 = vpop.permute.xlu0 %1093
      %1095 = vrot.lane.b32.xlu0 %v1026, 24
      %v1096 = vpop.permute.xlu0 %1095
      %1097 = vrot.lane.b32.xlu0 %v1027, 24
      %v1098 = vpop.permute.xlu0 %1097
      %1099 = vrot.lane.b32.xlu0 %v1028, 24
      %v1100 = vpop.permute.xlu0 %1099
      %1101 = vrot.lane.b32.xlu0 %v1029, 24
      %v1102 = vpop.permute.xlu0 %1101
      %1103 = vrot.lane.b32.xlu0 %v1030, 24
      %v1104 = vpop.permute.xlu0 %1103
      %1105 = vrot.lane.b32.xlu0 %v1031, 24
      %v1106 = vpop.permute.xlu0 %1105
      %1107 = vrot.lane.b32.xlu0 %v1032, 24
      %v1108 = vpop.permute.xlu0 %1107
      %1109 = vrot.lane.b32.xlu0 %v1033, 24
      %v1110 = vpop.permute.xlu0 %1109
      %1111 = vrot.lane.b32.xlu0 %v1034, 24
      %v1112 = vpop.permute.xlu0 %1111
      %1113 = vrot.lane.b32.xlu0 %v1035, 24
      %v1114 = vpop.permute.xlu0 %1113
      %1115 = vrot.lane.b32.xlu0 %v1036, 24
      %v1116 = vpop.permute.xlu0 %1115
      %1117 = vrot.lane.b32.xlu0 %v1037, 24
      %v1118 = vpop.permute.xlu0 %1117
      %1119 = vrot.lane.b32.xlu0 %v1038, 24
      %v1120 = vpop.permute.xlu0 %1119
      %1121 = vrot.lane.b32.xlu0 %v1039, 24
      %v1122 = vpop.permute.xlu0 %1121
      %1123 = vrot.lane.b32.xlu0 %v1040, 24
      %v1124 = vpop.permute.xlu0 %1123
      %1125 = vrot.lane.b32.xlu0 %v1041, 24
      %v1126 = vpop.permute.xlu0 %1125
      %1127 = vrot.lane.b32.xlu0 %v1042, 24
      %v1128 = vpop.permute.xlu0 %1127
      %1129 = vrot.lane.b32.xlu0 %v1043, 24
      %v1130 = vpop.permute.xlu0 %1129
      %1131 = vrot.lane.b32.xlu0 %v1044, 24
      %v1132 = vpop.permute.xlu0 %1131
      %1133 = vrot.lane.b32.xlu0 %v1045, 24
      %v1134 = vpop.permute.xlu0 %1133
      %1135 = vrot.lane.b32.xlu0 %v1046, 24
      %v1136 = vpop.permute.xlu0 %1135
      %1137 = vrot.lane.b32.xlu0 %v1047, 24
      %v1138 = vpop.permute.xlu0 %1137
      %1139 = vrot.lane.b32.xlu0 %v1048, 24
      %v1140 = vpop.permute.xlu0 %1139
      %1141 = vrot.lane.b32.xlu0 %v1049, 24
      %v1142 = vpop.permute.xlu0 %1141
      %1143 = vrot.lane.b32.xlu0 %v1050, 24
      %v1144 = vpop.permute.xlu0 %1143
      %1145 = vrot.lane.b32.xlu0 %v1051, 24
      %v1146 = vpop.permute.xlu0 %1145
      %1147 = vrot.lane.b32.xlu0 %v1052, 24
      %v1148 = vpop.permute.xlu0 %1147
      %vm1181 = vcmask 261312
      %1182 = vst.msk [vmem:[#allocation2] sm:$0xff] %vm1181, %v1086
      %1183 = vst.msk [vmem:[#allocation2 + $0x8] sm:$0xff] %vm1181, %v1088
      %1184 = vst.msk [vmem:[#allocation2 + $0x10] sm:$0xff] %vm1181, %v1090
      %1185 = vst.msk [vmem:[#allocation2 + $0x18] sm:$0xff] %vm1181, %v1092
      %1186 = vst.msk [vmem:[#allocation2 + $0x20] sm:$0xff] %vm1181, %v1094
      %1187 = vst.msk [vmem:[#allocation2 + $0x28] sm:$0xff] %vm1181, %v1096
      %1188 = vst.msk [vmem:[#allocation2 + $0x30] sm:$0xff] %vm1181, %v1098
      %1189 = vst.msk [vmem:[#allocation2 + $0x38] sm:$0xff] %vm1181, %v1100
      %1190 = vst.msk [vmem:[#allocation2 + $0x40] sm:$0xff] %vm1181, %v1102
      %1191 = vst.msk [vmem:[#allocation2 + $0x48] sm:$0xff] %vm1181, %v1104
      %1192 = vst.msk [vmem:[#allocation2 + $0x50] sm:$0xff] %vm1181, %v1106
      %1193 = vst.msk [vmem:[#allocation2 + $0x58] sm:$0xff] %vm1181, %v1108
      %1194 = vst.msk [vmem:[#allocation2 + $0x60] sm:$0xff] %vm1181, %v1110
      %1195 = vst.msk [vmem:[#allocation2 + $0x68] sm:$0xff] %vm1181, %v1112
      %1196 = vst.msk [vmem:[#allocation2 + $0x70] sm:$0xff] %vm1181, %v1114
      %1197 = vst.msk [vmem:[#allocation2 + $0x78] sm:$0xff] %vm1181, %v1116
      %1198 = vst.msk [vmem:[#allocation2 + $0x80] sm:$0xff] %vm1181, %v1118
      %1199 = vst.msk [vmem:[#allocation2 + $0x88] sm:$0xff] %vm1181, %v1120
      %1200 = vst.msk [vmem:[#allocation2 + $0x90] sm:$0xff] %vm1181, %v1122
      %1201 = vst.msk [vmem:[#allocation2 + $0x98] sm:$0xff] %vm1181, %v1124
      %1202 = vst.msk [vmem:[#allocation2 + $0xa0] sm:$0xff] %vm1181, %v1126
      %1203 = vst.msk [vmem:[#allocation2 + $0xa8] sm:$0xff] %vm1181, %v1128
      %1204 = vst.msk [vmem:[#allocation2 + $0xb0] sm:$0xff] %vm1181, %v1130
      %1205 = vst.msk [vmem:[#allocation2 + $0xb8] sm:$0xff] %vm1181, %v1132
      %1206 = vst.msk [vmem:[#allocation2 + $0xc0] sm:$0xff] %vm1181, %v1134
      %1207 = vst.msk [vmem:[#allocation2 + $0xc8] sm:$0xff] %vm1181, %v1136
      %1208 = vst.msk [vmem:[#allocation2 + $0xd0] sm:$0xff] %vm1181, %v1138
      %1209 = vst.msk [vmem:[#allocation2 + $0xd8] sm:$0xff] %vm1181, %v1140
      %1210 = vst.msk [vmem:[#allocation2 + $0xe0] sm:$0xff] %vm1181, %v1142
      %1211 = vst.msk [vmem:[#allocation2 + $0xe8] sm:$0xff] %vm1181, %v1144
      %1212 = vst.msk [vmem:[#allocation2 + $0xf0] sm:$0xff] %vm1181, %v1146
      %1213 = vst.msk [vmem:[#allocation2 + $0xf8] sm:$0xff] %vm1181, %v1148
      %v1214 = vld [vmem:[%s988] sm:$0xf]
      %v1215 = vld [vmem:[%s988 + $0x4] sm:$0xf]
      %v1216 = vld [vmem:[%s988 + $0x8] sm:$0x1]
      %v1217 = vld [vmem:[%s988 + $0xc] sm:$0xf]
      %v1218 = vld [vmem:[%s988 + $0x10] sm:$0xf]
      %v1219 = vld [vmem:[%s988 + $0x14] sm:$0x1]
      %v1220 = vld [vmem:[%s988 + $0x18] sm:$0xf]
      %v1221 = vld [vmem:[%s988 + $0x1c] sm:$0xf]
      %v1222 = vld [vmem:[%s988 + $0x20] sm:$0x1]
      %v1223 = vld [vmem:[%s988 + $0x24] sm:$0xf]
      %v1224 = vld [vmem:[%s988 + $0x28] sm:$0xf]
      %v1225 = vld [vmem:[%s988 + $0x2c] sm:$0x1]
      %v1226 = vld [vmem:[%s988 + $0x30] sm:$0xf]
      %v1227 = vld [vmem:[%s988 + $0x34] sm:$0xf]
      %v1228 = vld [vmem:[%s988 + $0x38] sm:$0x1]
      %v1229 = vld [vmem:[%s988 + $0x3c] sm:$0xf]
      %v1230 = vld [vmem:[%s988 + $0x40] sm:$0xf]
      %v1231 = vld [vmem:[%s988 + $0x44] sm:$0x1]
      %v1232 = vld [vmem:[%s988 + $0x48] sm:$0xf]
      %v1233 = vld [vmem:[%s988 + $0x4c] sm:$0xf]
      %v1234 = vld [vmem:[%s988 + $0x50] sm:$0x1]
      %v1235 = vld [vmem:[%s988 + $0x54] sm:$0xf]
      %v1236 = vld [vmem:[%s988 + $0x58] sm:$0xf]
      %v1237 = vld [vmem:[%s988 + $0x5c] sm:$0x1]
      %v1238 = vld [vmem:[%s988 + $0x60] sm:$0xf]
      %v1239 = vld [vmem:[%s988 + $0x64] sm:$0xf]
      %v1240 = vld [vmem:[%s988 + $0x68] sm:$0x1]
      %v1241 = vld [vmem:[%s988 + $0x6c] sm:$0xf]
      %v1242 = vld [vmem:[%s988 + $0x70] sm:$0xf]
      %v1243 = vld [vmem:[%s988 + $0x74] sm:$0x1]
      %v1244 = vld [vmem:[%s988 + $0x78] sm:$0xf]
      %v1245 = vld [vmem:[%s988 + $0x7c] sm:$0xf]
      %v1246 = vld [vmem:[%s988 + $0x80] sm:$0x1]
      %v1247 = vld [vmem:[%s988 + $0x84] sm:$0xf]
      %v1248 = vld [vmem:[%s988 + $0x88] sm:$0xf]
      %v1249 = vld [vmem:[%s988 + $0x8c] sm:$0x1]
      %v1250 = vld [vmem:[%s988 + $0x90] sm:$0xf]
      %v1251 = vld [vmem:[%s988 + $0x94] sm:$0xf]
      %v1252 = vld [vmem:[%s988 + $0x98] sm:$0x1]
      %v1253 = vld [vmem:[%s988 + $0x9c] sm:$0xf]
      %v1254 = vld [vmem:[%s988 + $0xa0] sm:$0xf]
      %v1255 = vld [vmem:[%s988 + $0xa4] sm:$0x1]
      %v1256 = vld [vmem:[%s988 + $0xa8] sm:$0xf]
      %v1257 = vld [vmem:[%s988 + $0xac] sm:$0xf]
      %v1258 = vld [vmem:[%s988 + $0xb0] sm:$0x1]
      %v1259 = vld [vmem:[%s988 + $0xb4] sm:$0xf]
      %v1260 = vld [vmem:[%s988 + $0xb8] sm:$0xf]
      %v1261 = vld [vmem:[%s988 + $0xbc] sm:$0x1]
      %v1262 = vunpack.c.l.bf16 %v1214
      %v1263 = vunpack.c.l.bf16 %v1215
      %v1264 = vunpack.c.l.bf16 %v1216
      %v1265 = vunpack.c.l.bf16 %v1217
      %v1266 = vunpack.c.l.bf16 %v1218
      %v1267 = vunpack.c.l.bf16 %v1219
      %v1268 = vunpack.c.l.bf16 %v1220
      %v1269 = vunpack.c.l.bf16 %v1221
      %v1270 = vunpack.c.l.bf16 %v1222
      %v1271 = vunpack.c.l.bf16 %v1223
      %v1272 = vunpack.c.l.bf16 %v1224
      %v1273 = vunpack.c.l.bf16 %v1225
      %v1274 = vunpack.c.l.bf16 %v1226
      %v1275 = vunpack.c.l.bf16 %v1227
      %v1276 = vunpack.c.l.bf16 %v1228
      %v1277 = vunpack.c.l.bf16 %v1229
      %v1278 = vunpack.c.l.bf16 %v1230
      %v1279 = vunpack.c.l.bf16 %v1231
      %v1280 = vunpack.c.l.bf16 %v1232
      %v1281 = vunpack.c.l.bf16 %v1233
      %v1282 = vunpack.c.l.bf16 %v1234
      %v1283 = vunpack.c.l.bf16 %v1235
      %v1284 = vunpack.c.l.bf16 %v1236
      %v1285 = vunpack.c.l.bf16 %v1237
      %v1286 = vunpack.c.l.bf16 %v1238
      %v1287 = vunpack.c.l.bf16 %v1239
      %v1288 = vunpack.c.l.bf16 %v1240
      %v1289 = vunpack.c.l.bf16 %v1241
      %v1290 = vunpack.c.l.bf16 %v1242
      %v1291 = vunpack.c.l.bf16 %v1243
      %v1292 = vunpack.c.l.bf16 %v1244
      %v1293 = vunpack.c.l.bf16 %v1245
      %v1294 = vunpack.c.l.bf16 %v1246
      %v1295 = vunpack.c.l.bf16 %v1247
      %v1296 = vunpack.c.l.bf16 %v1248
      %v1297 = vunpack.c.l.bf16 %v1249
      %v1298 = vunpack.c.l.bf16 %v1250
      %v1299 = vunpack.c.l.bf16 %v1251
      %v1300 = vunpack.c.l.bf16 %v1252
      %v1301 = vunpack.c.l.bf16 %v1253
      %v1302 = vunpack.c.l.bf16 %v1254
      %v1303 = vunpack.c.l.bf16 %v1255
      %v1304 = vunpack.c.l.bf16 %v1256
      %v1305 = vunpack.c.l.bf16 %v1257
      %v1306 = vunpack.c.l.bf16 %v1258
      %v1307 = vunpack.c.l.bf16 %v1259
      %v1308 = vunpack.c.l.bf16 %v1260
      %v1309 = vunpack.c.l.bf16 %v1261
      %v1358 = vrot.slane %v1262, 1
      %v1359 = vrot.slane %v1263, 1
      %v1360 = vsel %vm424, %v1358, %v1359
      %v1361 = vrot.slane %v1264, 1
      %v1362 = vsel %vm424, %v1359, %v1361
      %v1363 = vrot.slane %v1265, 1
      %v1364 = vrot.slane %v1266, 1
      %v1365 = vsel %vm424, %v1363, %v1364
      %v1366 = vrot.slane %v1267, 1
      %v1367 = vsel %vm424, %v1364, %v1366
      %v1368 = vrot.slane %v1268, 1
      %v1369 = vrot.slane %v1269, 1
      %v1370 = vsel %vm424, %v1368, %v1369
      %v1371 = vrot.slane %v1270, 1
      %v1372 = vsel %vm424, %v1369, %v1371
      %v1373 = vrot.slane %v1271, 1
      %v1374 = vrot.slane %v1272, 1
      %v1375 = vsel %vm424, %v1373, %v1374
      %v1376 = vrot.slane %v1273, 1
      %v1377 = vsel %vm424, %v1374, %v1376
      %v1378 = vrot.slane %v1274, 1
      %v1379 = vrot.slane %v1275, 1
      %v1380 = vsel %vm424, %v1378, %v1379
      %v1381 = vrot.slane %v1276, 1
      %v1382 = vsel %vm424, %v1379, %v1381
      %v1383 = vrot.slane %v1277, 1
      %v1384 = vrot.slane %v1278, 1
      %v1385 = vsel %vm424, %v1383, %v1384
      %v1386 = vrot.slane %v1279, 1
      %v1387 = vsel %vm424, %v1384, %v1386
      %v1388 = vrot.slane %v1280, 1
      %v1389 = vrot.slane %v1281, 1
      %v1390 = vsel %vm424, %v1388, %v1389
      %v1391 = vrot.slane %v1282, 1
      %v1392 = vsel %vm424, %v1389, %v1391
      %v1393 = vrot.slane %v1283, 1
      %v1394 = vrot.slane %v1284, 1
      %v1395 = vsel %vm424, %v1393, %v1394
      %v1396 = vrot.slane %v1285, 1
      %v1397 = vsel %vm424, %v1394, %v1396
      %v1398 = vrot.slane %v1286, 1
      %v1399 = vrot.slane %v1287, 1
      %v1400 = vsel %vm424, %v1398, %v1399
      %v1401 = vrot.slane %v1288, 1
      %v1402 = vsel %vm424, %v1399, %v1401
      %v1403 = vrot.slane %v1289, 1
      %v1404 = vrot.slane %v1290, 1
      %v1405 = vsel %vm424, %v1403, %v1404
      %v1406 = vrot.slane %v1291, 1
      %v1407 = vsel %vm424, %v1404, %v1406
      %v1408 = vrot.slane %v1292, 1
      %v1409 = vrot.slane %v1293, 1
      %v1410 = vsel %vm424, %v1408, %v1409
      %v1411 = vrot.slane %v1294, 1
      %v1412 = vsel %vm424, %v1409, %v1411
      %v1413 = vrot.slane %v1295, 1
      %v1414 = vrot.slane %v1296, 1
      %v1415 = vsel %vm424, %v1413, %v1414
      %v1416 = vrot.slane %v1297, 1
      %v1417 = vsel %vm424, %v1414, %v1416
      %v1418 = vrot.slane %v1298, 1
      %v1419 = vrot.slane %v1299, 1
      %v1420 = vsel %vm424, %v1418, %v1419
      %v1421 = vrot.slane %v1300, 1
      %v1422 = vsel %vm424, %v1419, %v1421
      %v1423 = vrot.slane %v1301, 1
      %v1424 = vrot.slane %v1302, 1
      %v1425 = vsel %vm424, %v1423, %v1424
      %v1426 = vrot.slane %v1303, 1
      %v1427 = vsel %vm424, %v1424, %v1426
      %v1428 = vrot.slane %v1304, 1
      %v1429 = vrot.slane %v1305, 1
      %v1430 = vsel %vm424, %v1428, %v1429
      %v1431 = vrot.slane %v1306, 1
      %v1432 = vsel %vm424, %v1429, %v1431
      %v1433 = vrot.slane %v1307, 1
      %v1434 = vrot.slane %v1308, 1
      %v1435 = vsel %vm424, %v1433, %v1434
      %v1436 = vrot.slane %v1309, 1
      %v1437 = vsel %vm424, %v1434, %v1436
      %1438 = vrot.lane.b32.xlu0 %v1360, 32
      %v1439 = vpop.permute.xlu0 %1438
      %1440 = vrot.lane.b32.xlu0 %v1362, 32
      %v1441 = vpop.permute.xlu0 %1440
      %1442 = vrot.lane.b32.xlu0 %v1365, 32
      %v1443 = vpop.permute.xlu0 %1442
      %1444 = vrot.lane.b32.xlu0 %v1367, 32
      %v1445 = vpop.permute.xlu0 %1444
      %1446 = vrot.lane.b32.xlu0 %v1370, 32
      %v1447 = vpop.permute.xlu0 %1446
      %1448 = vrot.lane.b32.xlu0 %v1372, 32
      %v1449 = vpop.permute.xlu0 %1448
      %1450 = vrot.lane.b32.xlu0 %v1375, 32
      %v1451 = vpop.permute.xlu0 %1450
      %1452 = vrot.lane.b32.xlu0 %v1377, 32
      %v1453 = vpop.permute.xlu0 %1452
      %1454 = vrot.lane.b32.xlu0 %v1380, 32
      %v1455 = vpop.permute.xlu0 %1454
      %1456 = vrot.lane.b32.xlu0 %v1382, 32
      %v1457 = vpop.permute.xlu0 %1456
      %1458 = vrot.lane.b32.xlu0 %v1385, 32
      %v1459 = vpop.permute.xlu0 %1458
      %1460 = vrot.lane.b32.xlu0 %v1387, 32
      %v1461 = vpop.permute.xlu0 %1460
      %1462 = vrot.lane.b32.xlu0 %v1390, 32
      %v1463 = vpop.permute.xlu0 %1462
      %1464 = vrot.lane.b32.xlu0 %v1392, 32
      %v1465 = vpop.permute.xlu0 %1464
      %1466 = vrot.lane.b32.xlu0 %v1395, 32
      %v1467 = vpop.permute.xlu0 %1466
      %1468 = vrot.lane.b32.xlu0 %v1397, 32
      %v1469 = vpop.permute.xlu0 %1468
      %1470 = vrot.lane.b32.xlu0 %v1400, 32
      %v1471 = vpop.permute.xlu0 %1470
      %1472 = vrot.lane.b32.xlu0 %v1402, 32
      %v1473 = vpop.permute.xlu0 %1472
      %1474 = vrot.lane.b32.xlu0 %v1405, 32
      %v1475 = vpop.permute.xlu0 %1474
      %1476 = vrot.lane.b32.xlu0 %v1407, 32
      %v1477 = vpop.permute.xlu0 %1476
      %1478 = vrot.lane.b32.xlu0 %v1410, 32
      %v1479 = vpop.permute.xlu0 %1478
      %1480 = vrot.lane.b32.xlu0 %v1412, 32
      %v1481 = vpop.permute.xlu0 %1480
      %1482 = vrot.lane.b32.xlu0 %v1415, 32
      %v1483 = vpop.permute.xlu0 %1482
      %1484 = vrot.lane.b32.xlu0 %v1417, 32
      %v1485 = vpop.permute.xlu0 %1484
      %1486 = vrot.lane.b32.xlu0 %v1420, 32
      %v1487 = vpop.permute.xlu0 %1486
      %1488 = vrot.lane.b32.xlu0 %v1422, 32
      %v1489 = vpop.permute.xlu0 %1488
      %1490 = vrot.lane.b32.xlu0 %v1425, 32
      %v1491 = vpop.permute.xlu0 %1490
      %1492 = vrot.lane.b32.xlu0 %v1427, 32
      %v1493 = vpop.permute.xlu0 %1492
      %1494 = vrot.lane.b32.xlu0 %v1430, 32
      %v1495 = vpop.permute.xlu0 %1494
      %1496 = vrot.lane.b32.xlu0 %v1432, 32
      %v1497 = vpop.permute.xlu0 %1496
      %1498 = vrot.lane.b32.xlu0 %v1435, 32
      %v1499 = vpop.permute.xlu0 %1498
      %1500 = vrot.lane.b32.xlu0 %v1437, 32
      %v1501 = vpop.permute.xlu0 %1500
      %vm1534 = vcmask 326912
      %1535 = vst.msk [vmem:[#allocation2] sm:$0xff] %vm1534, %v1439
      %1536 = vst.msk [vmem:[#allocation2 + $0x8] sm:$0xff] %vm1534, %v1441
      %1537 = vst.msk [vmem:[#allocation2 + $0x10] sm:$0xff] %vm1534, %v1443
      %1538 = vst.msk [vmem:[#allocation2 + $0x18] sm:$0xff] %vm1534, %v1445
      %1539 = vst.msk [vmem:[#allocation2 + $0x20] sm:$0xff] %vm1534, %v1447
      %1540 = vst.msk [vmem:[#allocation2 + $0x28] sm:$0xff] %vm1534, %v1449
      %1541 = vst.msk [vmem:[#allocation2 + $0x30] sm:$0xff] %vm1534, %v1451
      %1542 = vst.msk [vmem:[#allocation2 + $0x38] sm:$0xff] %vm1534, %v1453
      %1543 = vst.msk [vmem:[#allocation2 + $0x40] sm:$0xff] %vm1534, %v1455
      %1544 = vst.msk [vmem:[#allocation2 + $0x48] sm:$0xff] %vm1534, %v1457
      %1545 = vst.msk [vmem:[#allocation2 + $0x50] sm:$0xff] %vm1534, %v1459
      %1546 = vst.msk [vmem:[#allocation2 + $0x58] sm:$0xff] %vm1534, %v1461
      %1547 = vst.msk [vmem:[#allocation2 + $0x60] sm:$0xff] %vm1534, %v1463
      %1548 = vst.msk [vmem:[#allocation2 + $0x68] sm:$0xff] %vm1534, %v1465
      %1549 = vst.msk [vmem:[#allocation2 + $0x70] sm:$0xff] %vm1534, %v1467
      %1550 = vst.msk [vmem:[#allocation2 + $0x78] sm:$0xff] %vm1534, %v1469
      %1551 = vst.msk [vmem:[#allocation2 + $0x80] sm:$0xff] %vm1534, %v1471
      %1552 = vst.msk [vmem:[#allocation2 + $0x88] sm:$0xff] %vm1534, %v1473
      %1553 = vst.msk [vmem:[#allocation2 + $0x90] sm:$0xff] %vm1534, %v1475
      %1554 = vst.msk [vmem:[#allocation2 + $0x98] sm:$0xff] %vm1534, %v1477
      %1555 = vst.msk [vmem:[#allocation2 + $0xa0] sm:$0xff] %vm1534, %v1479
      %1556 = vst.msk [vmem:[#allocation2 + $0xa8] sm:$0xff] %vm1534, %v1481
      %1557 = vst.msk [vmem:[#allocation2 + $0xb0] sm:$0xff] %vm1534, %v1483
      %1558 = vst.msk [vmem:[#allocation2 + $0xb8] sm:$0xff] %vm1534, %v1485
      %1559 = vst.msk [vmem:[#allocation2 + $0xc0] sm:$0xff] %vm1534, %v1487
      %1560 = vst.msk [vmem:[#allocation2 + $0xc8] sm:$0xff] %vm1534, %v1489
      %1561 = vst.msk [vmem:[#allocation2 + $0xd0] sm:$0xff] %vm1534, %v1491
      %1562 = vst.msk [vmem:[#allocation2 + $0xd8] sm:$0xff] %vm1534, %v1493
      %1563 = vst.msk [vmem:[#allocation2 + $0xe0] sm:$0xff] %vm1534, %v1495
      %1564 = vst.msk [vmem:[#allocation2 + $0xe8] sm:$0xff] %vm1534, %v1497
      %1565 = vst.msk [vmem:[#allocation2 + $0xf0] sm:$0xff] %vm1534, %v1499
      %1566 = vst.msk [vmem:[#allocation2 + $0xf8] sm:$0xff] %vm1534, %v1501
      %v1567 = vld [vmem:[%s988] sm:$0xe]
      %v1568 = vld [vmem:[%s988 + $0x4] sm:$0xf]
      %v1569 = vld [vmem:[%s988 + $0x8] sm:$0x1]
      %v1570 = vld [vmem:[%s988 + $0xc] sm:$0xe]
      %v1571 = vld [vmem:[%s988 + $0x10] sm:$0xf]
      %v1572 = vld [vmem:[%s988 + $0x14] sm:$0x1]
      %v1573 = vld [vmem:[%s988 + $0x18] sm:$0xe]
      %v1574 = vld [vmem:[%s988 + $0x1c] sm:$0xf]
      %v1575 = vld [vmem:[%s988 + $0x20] sm:$0x1]
      %v1576 = vld [vmem:[%s988 + $0x24] sm:$0xe]
      %v1577 = vld [vmem:[%s988 + $0x28] sm:$0xf]
      %v1578 = vld [vmem:[%s988 + $0x2c] sm:$0x1]
      %v1579 = vld [vmem:[%s988 + $0x30] sm:$0xe]
      %v1580 = vld [vmem:[%s988 + $0x34] sm:$0xf]
      %v1581 = vld [vmem:[%s988 + $0x38] sm:$0x1]
      %v1582 = vld [vmem:[%s988 + $0x3c] sm:$0xe]
      %v1583 = vld [vmem:[%s988 + $0x40] sm:$0xf]
      %v1584 = vld [vmem:[%s988 + $0x44] sm:$0x1]
      %v1585 = vld [vmem:[%s988 + $0x48] sm:$0xe]
      %v1586 = vld [vmem:[%s988 + $0x4c] sm:$0xf]
      %v1587 = vld [vmem:[%s988 + $0x50] sm:$0x1]
      %v1588 = vld [vmem:[%s988 + $0x54] sm:$0xe]
      %v1589 = vld [vmem:[%s988 + $0x58] sm:$0xf]
      %v1590 = vld [vmem:[%s988 + $0x5c] sm:$0x1]
      %v1591 = vld [vmem:[%s988 + $0x60] sm:$0xe]
      %v1592 = vld [vmem:[%s988 + $0x64] sm:$0xf]
      %v1593 = vld [vmem:[%s988 + $0x68] sm:$0x1]
      %v1594 = vld [vmem:[%s988 + $0x6c] sm:$0xe]
      %v1595 = vld [vmem:[%s988 + $0x70] sm:$0xf]
      %v1596 = vld [vmem:[%s988 + $0x74] sm:$0x1]
      %v1597 = vld [vmem:[%s988 + $0x78] sm:$0xe]
      %v1598 = vld [vmem:[%s988 + $0x7c] sm:$0xf]
      %v1599 = vld [vmem:[%s988 + $0x80] sm:$0x1]
      %v1600 = vld [vmem:[%s988 + $0x84] sm:$0xe]
      %v1601 = vld [vmem:[%s988 + $0x88] sm:$0xf]
      %v1602 = vld [vmem:[%s988 + $0x8c] sm:$0x1]
      %v1603 = vld [vmem:[%s988 + $0x90] sm:$0xe]
      %v1604 = vld [vmem:[%s988 + $0x94] sm:$0xf]
      %v1605 = vld [vmem:[%s988 + $0x98] sm:$0x1]
      %v1606 = vld [vmem:[%s988 + $0x9c] sm:$0xe]
      %v1607 = vld [vmem:[%s988 + $0xa0] sm:$0xf]
      %v1608 = vld [vmem:[%s988 + $0xa4] sm:$0x1]
      %v1609 = vld [vmem:[%s988 + $0xa8] sm:$0xe]
      %v1610 = vld [vmem:[%s988 + $0xac] sm:$0xf]
      %v1611 = vld [vmem:[%s988 + $0xb0] sm:$0x1]
      %v1612 = vld [vmem:[%s988 + $0xb4] sm:$0xe]
      %v1613 = vld [vmem:[%s988 + $0xb8] sm:$0xf]
      %v1614 = vld [vmem:[%s988 + $0xbc] sm:$0x1]
      %v1615 = vunpack.c.l.bf16 %v1567
      %v1616 = vunpack.c.l.bf16 %v1568
      %v1617 = vunpack.c.l.bf16 %v1569
      %v1618 = vunpack.c.l.bf16 %v1570
      %v1619 = vunpack.c.l.bf16 %v1571
      %v1620 = vunpack.c.l.bf16 %v1572
      %v1621 = vunpack.c.l.bf16 %v1573
      %v1622 = vunpack.c.l.bf16 %v1574
      %v1623 = vunpack.c.l.bf16 %v1575
      %v1624 = vunpack.c.l.bf16 %v1576
      %v1625 = vunpack.c.l.bf16 %v1577
      %v1626 = vunpack.c.l.bf16 %v1578
      %v1627 = vunpack.c.l.bf16 %v1579
      %v1628 = vunpack.c.l.bf16 %v1580
      %v1629 = vunpack.c.l.bf16 %v1581
      %v1630 = vunpack.c.l.bf16 %v1582
      %v1631 = vunpack.c.l.bf16 %v1583
      %v1632 = vunpack.c.l.bf16 %v1584
      %v1633 = vunpack.c.l.bf16 %v1585
      %v1634 = vunpack.c.l.bf16 %v1586
      %v1635 = vunpack.c.l.bf16 %v1587
      %v1636 = vunpack.c.l.bf16 %v1588
      %v1637 = vunpack.c.l.bf16 %v1589
      %v1638 = vunpack.c.l.bf16 %v1590
      %v1639 = vunpack.c.l.bf16 %v1591
      %v1640 = vunpack.c.l.bf16 %v1592
      %v1641 = vunpack.c.l.bf16 %v1593
      %v1642 = vunpack.c.l.bf16 %v1594
      %v1643 = vunpack.c.l.bf16 %v1595
      %v1644 = vunpack.c.l.bf16 %v1596
      %v1645 = vunpack.c.l.bf16 %v1597
      %v1646 = vunpack.c.l.bf16 %v1598
      %v1647 = vunpack.c.l.bf16 %v1599
      %v1648 = vunpack.c.l.bf16 %v1600
      %v1649 = vunpack.c.l.bf16 %v1601
      %v1650 = vunpack.c.l.bf16 %v1602
      %v1651 = vunpack.c.l.bf16 %v1603
      %v1652 = vunpack.c.l.bf16 %v1604
      %v1653 = vunpack.c.l.bf16 %v1605
      %v1654 = vunpack.c.l.bf16 %v1606
      %v1655 = vunpack.c.l.bf16 %v1607
      %v1656 = vunpack.c.l.bf16 %v1608
      %v1657 = vunpack.c.l.bf16 %v1609
      %v1658 = vunpack.c.l.bf16 %v1610
      %v1659 = vunpack.c.l.bf16 %v1611
      %v1660 = vunpack.c.l.bf16 %v1612
      %v1661 = vunpack.c.l.bf16 %v1613
      %v1662 = vunpack.c.l.bf16 %v1614
      %v1711 = vrot.slane %v1615, 2
      %v1712 = vrot.slane %v1616, 2
      %v1713 = vsel %vm778, %v1711, %v1712
      %v1714 = vrot.slane %v1617, 2
      %v1715 = vsel %vm778, %v1712, %v1714
      %v1716 = vrot.slane %v1618, 2
      %v1717 = vrot.slane %v1619, 2
      %v1718 = vsel %vm778, %v1716, %v1717
      %v1719 = vrot.slane %v1620, 2
      %v1720 = vsel %vm778, %v1717, %v1719
      %v1721 = vrot.slane %v1621, 2
      %v1722 = vrot.slane %v1622, 2
      %v1723 = vsel %vm778, %v1721, %v1722
      %v1724 = vrot.slane %v1623, 2
      %v1725 = vsel %vm778, %v1722, %v1724
      %v1726 = vrot.slane %v1624, 2
      %v1727 = vrot.slane %v1625, 2
      %v1728 = vsel %vm778, %v1726, %v1727
      %v1729 = vrot.slane %v1626, 2
      %v1730 = vsel %vm778, %v1727, %v1729
      %v1731 = vrot.slane %v1627, 2
      %v1732 = vrot.slane %v1628, 2
      %v1733 = vsel %vm778, %v1731, %v1732
      %v1734 = vrot.slane %v1629, 2
      %v1735 = vsel %vm778, %v1732, %v1734
      %v1736 = vrot.slane %v1630, 2
      %v1737 = vrot.slane %v1631, 2
      %v1738 = vsel %vm778, %v1736, %v1737
      %v1739 = vrot.slane %v1632, 2
      %v1740 = vsel %vm778, %v1737, %v1739
      %v1741 = vrot.slane %v1633, 2
      %v1742 = vrot.slane %v1634, 2
      %v1743 = vsel %vm778, %v1741, %v1742
      %v1744 = vrot.slane %v1635, 2
      %v1745 = vsel %vm778, %v1742, %v1744
      %v1746 = vrot.slane %v1636, 2
      %v1747 = vrot.slane %v1637, 2
      %v1748 = vsel %vm778, %v1746, %v1747
      %v1749 = vrot.slane %v1638, 2
      %v1750 = vsel %vm778, %v1747, %v1749
      %v1751 = vrot.slane %v1639, 2
      %v1752 = vrot.slane %v1640, 2
      %v1753 = vsel %vm778, %v1751, %v1752
      %v1754 = vrot.slane %v1641, 2
      %v1755 = vsel %vm778, %v1752, %v1754
      %v1756 = vrot.slane %v1642, 2
      %v1757 = vrot.slane %v1643, 2
      %v1758 = vsel %vm778, %v1756, %v1757
      %v1759 = vrot.slane %v1644, 2
      %v1760 = vsel %vm778, %v1757, %v1759
      %v1761 = vrot.slane %v1645, 2
      %v1762 = vrot.slane %v1646, 2
      %v1763 = vsel %vm778, %v1761, %v1762
      %v1764 = vrot.slane %v1647, 2
      %v1765 = vsel %vm778, %v1762, %v1764
      %v1766 = vrot.slane %v1648, 2
      %v1767 = vrot.slane %v1649, 2
      %v1768 = vsel %vm778, %v1766, %v1767
      %v1769 = vrot.slane %v1650, 2
      %v1770 = vsel %vm778, %v1767, %v1769
      %v1771 = vrot.slane %v1651, 2
      %v1772 = vrot.slane %v1652, 2
      %v1773 = vsel %vm778, %v1771, %v1772
      %v1774 = vrot.slane %v1653, 2
      %v1775 = vsel %vm778, %v1772, %v1774
      %v1776 = vrot.slane %v1654, 2
      %v1777 = vrot.slane %v1655, 2
      %v1778 = vsel %vm778, %v1776, %v1777
      %v1779 = vrot.slane %v1656, 2
      %v1780 = vsel %vm778, %v1777, %v1779
      %v1781 = vrot.slane %v1657, 2
      %v1782 = vrot.slane %v1658, 2
      %v1783 = vsel %vm778, %v1781, %v1782
      %v1784 = vrot.slane %v1659, 2
      %v1785 = vsel %vm778, %v1782, %v1784
      %v1786 = vrot.slane %v1660, 2
      %v1787 = vrot.slane %v1661, 2
      %v1788 = vsel %vm778, %v1786, %v1787
      %v1789 = vrot.slane %v1662, 2
      %v1790 = vsel %vm778, %v1787, %v1789
      %1791 = vrot.lane.b32.xlu0 %v1713, 40
      %v1792 = vpop.permute.xlu0 %1791
      %1793 = vrot.lane.b32.xlu0 %v1715, 40
      %v1794 = vpop.permute.xlu0 %1793
      %1795 = vrot.lane.b32.xlu0 %v1718, 40
      %v1796 = vpop.permute.xlu0 %1795
      %1797 = vrot.lane.b32.xlu0 %v1720, 40
      %v1798 = vpop.permute.xlu0 %1797
      %1799 = vrot.lane.b32.xlu0 %v1723, 40
      %v1800 = vpop.permute.xlu0 %1799
      %1801 = vrot.lane.b32.xlu0 %v1725, 40
      %v1802 = vpop.permute.xlu0 %1801
      %1803 = vrot.lane.b32.xlu0 %v1728, 40
      %v1804 = vpop.permute.xlu0 %1803
      %1805 = vrot.lane.b32.xlu0 %v1730, 40
      %v1806 = vpop.permute.xlu0 %1805
      %1807 = vrot.lane.b32.xlu0 %v1733, 40
      %v1808 = vpop.permute.xlu0 %1807
      %1809 = vrot.lane.b32.xlu0 %v1735, 40
      %v1810 = vpop.permute.xlu0 %1809
      %1811 = vrot.lane.b32.xlu0 %v1738, 40
      %v1812 = vpop.permute.xlu0 %1811
      %1813 = vrot.lane.b32.xlu0 %v1740, 40
      %v1814 = vpop.permute.xlu0 %1813
      %1815 = vrot.lane.b32.xlu0 %v1743, 40
      %v1816 = vpop.permute.xlu0 %1815
      %1817 = vrot.lane.b32.xlu0 %v1745, 40
      %v1818 = vpop.permute.xlu0 %1817
      %1819 = vrot.lane.b32.xlu0 %v1748, 40
      %v1820 = vpop.permute.xlu0 %1819
      %1821 = vrot.lane.b32.xlu0 %v1750, 40
      %v1822 = vpop.permute.xlu0 %1821
      %1823 = vrot.lane.b32.xlu0 %v1753, 40
      %v1824 = vpop.permute.xlu0 %1823
      %1825 = vrot.lane.b32.xlu0 %v1755, 40
      %v1826 = vpop.permute.xlu0 %1825
      %1827 = vrot.lane.b32.xlu0 %v1758, 40
      %v1828 = vpop.permute.xlu0 %1827
      %1829 = vrot.lane.b32.xlu0 %v1760, 40
      %v1830 = vpop.permute.xlu0 %1829
      %1831 = vrot.lane.b32.xlu0 %v1763, 40
      %v1832 = vpop.permute.xlu0 %1831
      %1833 = vrot.lane.b32.xlu0 %v1765, 40
      %v1834 = vpop.permute.xlu0 %1833
      %1835 = vrot.lane.b32.xlu0 %v1768, 40
      %v1836 = vpop.permute.xlu0 %1835
      %1837 = vrot.lane.b32.xlu0 %v1770, 40
      %v1838 = vpop.permute.xlu0 %1837
      %1839 = vrot.lane.b32.xlu0 %v1773, 40
      %v1840 = vpop.permute.xlu0 %1839
      %1841 = vrot.lane.b32.xlu0 %v1775, 40
      %v1842 = vpop.permute.xlu0 %1841
      %1843 = vrot.lane.b32.xlu0 %v1778, 40
      %v1844 = vpop.permute.xlu0 %1843
      %1845 = vrot.lane.b32.xlu0 %v1780, 40
      %v1846 = vpop.permute.xlu0 %1845
      %1847 = vrot.lane.b32.xlu0 %v1783, 40
      %v1848 = vpop.permute.xlu0 %1847
      %1849 = vrot.lane.b32.xlu0 %v1785, 40
      %v1850 = vpop.permute.xlu0 %1849
      %1851 = vrot.lane.b32.xlu0 %v1788, 40
      %v1852 = vpop.permute.xlu0 %1851
      %1853 = vrot.lane.b32.xlu0 %v1790, 40
      %v1854 = vpop.permute.xlu0 %1853
      %vm1887 = vcmask 392512
      %1888 = vst.msk [vmem:[#allocation2] sm:$0xff] %vm1887, %v1792
      %1889 = vst.msk [vmem:[#allocation2 + $0x8] sm:$0xff] %vm1887, %v1794
      %1890 = vst.msk [vmem:[#allocation2 + $0x10] sm:$0xff] %vm1887, %v1796
      %1891 = vst.msk [vmem:[#allocation2 + $0x18] sm:$0xff] %vm1887, %v1798
      %1892 = vst.msk [vmem:[#allocation2 + $0x20] sm:$0xff] %vm1887, %v1800
      %1893 = vst.msk [vmem:[#allocation2 + $0x28] sm:$0xff] %vm1887, %v1802
      %1894 = vst.msk [vmem:[#allocation2 + $0x30] sm:$0xff] %vm1887, %v1804
      %1895 = vst.msk [vmem:[#allocation2 + $0x38] sm:$0xff] %vm1887, %v1806
      %1896 = vst.msk [vmem:[#allocation2 + $0x40] sm:$0xff] %vm1887, %v1808
      %1897 = vst.msk [vmem:[#allocation2 + $0x48] sm:$0xff] %vm1887, %v1810
      %1898 = vst.msk [vmem:[#allocation2 + $0x50] sm:$0xff] %vm1887, %v1812
      %1899 = vst.msk [vmem:[#allocation2 + $0x58] sm:$0xff] %vm1887, %v1814
      %1900 = vst.msk [vmem:[#allocation2 + $0x60] sm:$0xff] %vm1887, %v1816
      %1901 = vst.msk [vmem:[#allocation2 + $0x68] sm:$0xff] %vm1887, %v1818
      %1902 = vst.msk [vmem:[#allocation2 + $0x70] sm:$0xff] %vm1887, %v1820
      %1903 = vst.msk [vmem:[#allocation2 + $0x78] sm:$0xff] %vm1887, %v1822
      %1904 = vst.msk [vmem:[#allocation2 + $0x80] sm:$0xff] %vm1887, %v1824
      %1905 = vst.msk [vmem:[#allocation2 + $0x88] sm:$0xff] %vm1887, %v1826
      %1906 = vst.msk [vmem:[#allocation2 + $0x90] sm:$0xff] %vm1887, %v1828
      %1907 = vst.msk [vmem:[#allocation2 + $0x98] sm:$0xff] %vm1887, %v1830
      %1908 = vst.msk [vmem:[#allocation2 + $0xa0] sm:$0xff] %vm1887, %v1832
      %1909 = vst.msk [vmem:[#allocation2 + $0xa8] sm:$0xff] %vm1887, %v1834
      %1910 = vst.msk [vmem:[#allocation2 + $0xb0] sm:$0xff] %vm1887, %v1836
      %1911 = vst.msk [vmem:[#allocation2 + $0xb8] sm:$0xff] %vm1887, %v1838
      %1912 = vst.msk [vmem:[#allocation2 + $0xc0] sm:$0xff] %vm1887, %v1840
      %1913 = vst.msk [vmem:[#allocation2 + $0xc8] sm:$0xff] %vm1887, %v1842
      %1914 = vst.msk [vmem:[#allocation2 + $0xd0] sm:$0xff] %vm1887, %v1844
      %1915 = vst.msk [vmem:[#allocation2 + $0xd8] sm:$0xff] %vm1887, %v1846
      %1916 = vst.msk [vmem:[#allocation2 + $0xe0] sm:$0xff] %vm1887, %v1848
      %1917 = vst.msk [vmem:[#allocation2 + $0xe8] sm:$0xff] %vm1887, %v1850
      %1918 = vst.msk [vmem:[#allocation2 + $0xf0] sm:$0xff] %vm1887, %v1852
      %1919 = vst.msk [vmem:[#allocation2 + $0xf8] sm:$0xff] %vm1887, %v1854
      %s1920 = scalar_lea.vmem %s172, 24
      %v1921 = vld [vmem:[%s1920] sm:$0xf]
      %v1922 = vld [vmem:[%s1920 + $0x4] sm:$0xf]
      %v1923 = vld [vmem:[%s1920 + $0xc] sm:$0xf]
      %v1924 = vld [vmem:[%s1920 + $0x10] sm:$0xf]
      %v1925 = vld [vmem:[%s1920 + $0x18] sm:$0xf]
      %v1926 = vld [vmem:[%s1920 + $0x1c] sm:$0xf]
      %v1927 = vld [vmem:[%s1920 + $0x24] sm:$0xf]
      %v1928 = vld [vmem:[%s1920 + $0x28] sm:$0xf]
      %v1929 = vld [vmem:[%s1920 + $0x30] sm:$0xf]
      %v1930 = vld [vmem:[%s1920 + $0x34] sm:$0xf]
      %v1931 = vld [vmem:[%s1920 + $0x3c] sm:$0xf]
      %v1932 = vld [vmem:[%s1920 + $0x40] sm:$0xf]
      %v1933 = vld [vmem:[%s1920 + $0x48] sm:$0xf]
      %v1934 = vld [vmem:[%s1920 + $0x4c] sm:$0xf]
      %v1935 = vld [vmem:[%s1920 + $0x54] sm:$0xf]
      %v1936 = vld [vmem:[%s1920 + $0x58] sm:$0xf]
      %v1937 = vld [vmem:[%s1920 + $0x60] sm:$0xf]
      %v1938 = vld [vmem:[%s1920 + $0x64] sm:$0xf]
      %v1939 = vld [vmem:[%s1920 + $0x6c] sm:$0xf]
      %v1940 = vld [vmem:[%s1920 + $0x70] sm:$0xf]
      %v1941 = vld [vmem:[%s1920 + $0x78] sm:$0xf]
      %v1942 = vld [vmem:[%s1920 + $0x7c] sm:$0xf]
      %v1943 = vld [vmem:[%s1920 + $0x84] sm:$0xf]
      %v1944 = vld [vmem:[%s1920 + $0x88] sm:$0xf]
      %v1945 = vld [vmem:[%s1920 + $0x90] sm:$0xf]
      %v1946 = vld [vmem:[%s1920 + $0x94] sm:$0xf]
      %v1947 = vld [vmem:[%s1920 + $0x9c] sm:$0xf]
      %v1948 = vld [vmem:[%s1920 + $0xa0] sm:$0xf]
      %v1949 = vld [vmem:[%s1920 + $0xa8] sm:$0xf]
      %v1950 = vld [vmem:[%s1920 + $0xac] sm:$0xf]
      %v1951 = vld [vmem:[%s1920 + $0xb4] sm:$0xf]
      %v1952 = vld [vmem:[%s1920 + $0xb8] sm:$0xf]
      %v1953 = vunpack.c.l.bf16 %v1921
      %v1954 = vunpack.c.l.bf16 %v1922
      %v1955 = vunpack.c.l.bf16 %v1923
      %v1956 = vunpack.c.l.bf16 %v1924
      %v1957 = vunpack.c.l.bf16 %v1925
      %v1958 = vunpack.c.l.bf16 %v1926
      %v1959 = vunpack.c.l.bf16 %v1927
      %v1960 = vunpack.c.l.bf16 %v1928
      %v1961 = vunpack.c.l.bf16 %v1929
      %v1962 = vunpack.c.l.bf16 %v1930
      %v1963 = vunpack.c.l.bf16 %v1931
      %v1964 = vunpack.c.l.bf16 %v1932
      %v1965 = vunpack.c.l.bf16 %v1933
      %v1966 = vunpack.c.l.bf16 %v1934
      %v1967 = vunpack.c.l.bf16 %v1935
      %v1968 = vunpack.c.l.bf16 %v1936
      %v1969 = vunpack.c.l.bf16 %v1937
      %v1970 = vunpack.c.l.bf16 %v1938
      %v1971 = vunpack.c.l.bf16 %v1939
      %v1972 = vunpack.c.l.bf16 %v1940
      %v1973 = vunpack.c.l.bf16 %v1941
      %v1974 = vunpack.c.l.bf16 %v1942
      %v1975 = vunpack.c.l.bf16 %v1943
      %v1976 = vunpack.c.l.bf16 %v1944
      %v1977 = vunpack.c.l.bf16 %v1945
      %v1978 = vunpack.c.l.bf16 %v1946
      %v1979 = vunpack.c.l.bf16 %v1947
      %v1980 = vunpack.c.l.bf16 %v1948
      %v1981 = vunpack.c.l.bf16 %v1949
      %v1982 = vunpack.c.l.bf16 %v1950
      %v1983 = vunpack.c.l.bf16 %v1951
      %v1984 = vunpack.c.l.bf16 %v1952
      %2017 = vrot.lane.b32.xlu0 %v1953, 48
      %v2018 = vpop.permute.xlu0 %2017
      %2019 = vrot.lane.b32.xlu0 %v1954, 48
      %v2020 = vpop.permute.xlu0 %2019
      %2021 = vrot.lane.b32.xlu0 %v1955, 48
      %v2022 = vpop.permute.xlu0 %2021
      %2023 = vrot.lane.b32.xlu0 %v1956, 48
      %v2024 = vpop.permute.xlu0 %2023
      %2025 = vrot.lane.b32.xlu0 %v1957, 48
      %v2026 = vpop.permute.xlu0 %2025
      %2027 = vrot.lane.b32.xlu0 %v1958, 48
      %v2028 = vpop.permute.xlu0 %2027
      %2029 = vrot.lane.b32.xlu0 %v1959, 48
      %v2030 = vpop.permute.xlu0 %2029
      %2031 = vrot.lane.b32.xlu0 %v1960, 48
      %v2032 = vpop.permute.xlu0 %2031
      %2033 = vrot.lane.b32.xlu0 %v1961, 48
      %v2034 = vpop.permute.xlu0 %2033
      %2035 = vrot.lane.b32.xlu0 %v1962, 48
      %v2036 = vpop.permute.xlu0 %2035
      %2037 = vrot.lane.b32.xlu0 %v1963, 48
      %v2038 = vpop.permute.xlu0 %2037
      %2039 = vrot.lane.b32.xlu0 %v1964, 48
      %v2040 = vpop.permute.xlu0 %2039
      %2041 = vrot.lane.b32.xlu0 %v1965, 48
      %v2042 = vpop.permute.xlu0 %2041
      %2043 = vrot.lane.b32.xlu0 %v1966, 48
      %v2044 = vpop.permute.xlu0 %2043
      %2045 = vrot.lane.b32.xlu0 %v1967, 48
      %v2046 = vpop.permute.xlu0 %2045
      %2047 = vrot.lane.b32.xlu0 %v1968, 48
      %v2048 = vpop.permute.xlu0 %2047
      %2049 = vrot.lane.b32.xlu0 %v1969, 48
      %v2050 = vpop.permute.xlu0 %2049
      %2051 = vrot.lane.b32.xlu0 %v1970, 48
      %v2052 = vpop.permute.xlu0 %2051
      %2053 = vrot.lane.b32.xlu0 %v1971, 48
      %v2054 = vpop.permute.xlu0 %2053
      %2055 = vrot.lane.b32.xlu0 %v1972, 48
      %v2056 = vpop.permute.xlu0 %2055
      %2057 = vrot.lane.b32.xlu0 %v1973, 48
      %v2058 = vpop.permute.xlu0 %2057
      %2059 = vrot.lane.b32.xlu0 %v1974, 48
      %v2060 = vpop.permute.xlu0 %2059
      %2061 = vrot.lane.b32.xlu0 %v1975, 48
      %v2062 = vpop.permute.xlu0 %2061
      %2063 = vrot.lane.b32.xlu0 %v1976, 48
      %v2064 = vpop.permute.xlu0 %2063
      %2065 = vrot.lane.b32.xlu0 %v1977, 48
      %v2066 = vpop.permute.xlu0 %2065
      %2067 = vrot.lane.b32.xlu0 %v1978, 48
      %v2068 = vpop.permute.xlu0 %2067
      %2069 = vrot.lane.b32.xlu0 %v1979, 48
      %v2070 = vpop.permute.xlu0 %2069
      %2071 = vrot.lane.b32.xlu0 %v1980, 48
      %v2072 = vpop.permute.xlu0 %2071
      %2073 = vrot.lane.b32.xlu0 %v1981, 48
      %v2074 = vpop.permute.xlu0 %2073
      %2075 = vrot.lane.b32.xlu0 %v1982, 48
      %v2076 = vpop.permute.xlu0 %2075
      %2077 = vrot.lane.b32.xlu0 %v1983, 48
      %v2078 = vpop.permute.xlu0 %2077
      %2079 = vrot.lane.b32.xlu0 %v1984, 48
      %v2080 = vpop.permute.xlu0 %2079
      %vm2113 = vcmask 458112
      %2114 = vst.msk [vmem:[#allocation2] sm:$0xff] %vm2113, %v2018
      %2115 = vst.msk [vmem:[#allocation2 + $0x8] sm:$0xff] %vm2113, %v2020
      %2116 = vst.msk [vmem:[#allocation2 + $0x10] sm:$0xff] %vm2113, %v2022
      %2117 = vst.msk [vmem:[#allocation2 + $0x18] sm:$0xff] %vm2113, %v2024
      %2118 = vst.msk [vmem:[#allocation2 + $0x20] sm:$0xff] %vm2113, %v2026
      %2119 = vst.msk [vmem:[#allocation2 + $0x28] sm:$0xff] %vm2113, %v2028
      %2120 = vst.msk [vmem:[#allocation2 + $0x30] sm:$0xff] %vm2113, %v2030
      %2121 = vst.msk [vmem:[#allocation2 + $0x38] sm:$0xff] %vm2113, %v2032
      %2122 = vst.msk [vmem:[#allocation2 + $0x40] sm:$0xff] %vm2113, %v2034
      %2123 = vst.msk [vmem:[#allocation2 + $0x48] sm:$0xff] %vm2113, %v2036
      %2124 = vst.msk [vmem:[#allocation2 + $0x50] sm:$0xff] %vm2113, %v2038
      %2125 = vst.msk [vmem:[#allocation2 + $0x58] sm:$0xff] %vm2113, %v2040
      %2126 = vst.msk [vmem:[#allocation2 + $0x60] sm:$0xff] %vm2113, %v2042
      %2127 = vst.msk [vmem:[#allocation2 + $0x68] sm:$0xff] %vm2113, %v2044
      %2128 = vst.msk [vmem:[#allocation2 + $0x70] sm:$0xff] %vm2113, %v2046
      %2129 = vst.msk [vmem:[#allocation2 + $0x78] sm:$0xff] %vm2113, %v2048
      %2130 = vst.msk [vmem:[#allocation2 + $0x80] sm:$0xff] %vm2113, %v2050
      %2131 = vst.msk [vmem:[#allocation2 + $0x88] sm:$0xff] %vm2113, %v2052
      %2132 = vst.msk [vmem:[#allocation2 + $0x90] sm:$0xff] %vm2113, %v2054
      %2133 = vst.msk [vmem:[#allocation2 + $0x98] sm:$0xff] %vm2113, %v2056
      %2134 = vst.msk [vmem:[#allocation2 + $0xa0] sm:$0xff] %vm2113, %v2058
      %2135 = vst.msk [vmem:[#allocation2 + $0xa8] sm:$0xff] %vm2113, %v2060
      %2136 = vst.msk [vmem:[#allocation2 + $0xb0] sm:$0xff] %vm2113, %v2062
      %2137 = vst.msk [vmem:[#allocation2 + $0xb8] sm:$0xff] %vm2113, %v2064
      %2138 = vst.msk [vmem:[#allocation2 + $0xc0] sm:$0xff] %vm2113, %v2066
      %2139 = vst.msk [vmem:[#allocation2 + $0xc8] sm:$0xff] %vm2113, %v2068
      %2140 = vst.msk [vmem:[#allocation2 + $0xd0] sm:$0xff] %vm2113, %v2070
      %2141 = vst.msk [vmem:[#allocation2 + $0xd8] sm:$0xff] %vm2113, %v2072
      %2142 = vst.msk [vmem:[#allocation2 + $0xe0] sm:$0xff] %vm2113, %v2074
      %2143 = vst.msk [vmem:[#allocation2 + $0xe8] sm:$0xff] %vm2113, %v2076
      %2144 = vst.msk [vmem:[#allocation2 + $0xf0] sm:$0xff] %vm2113, %v2078
      %2145 = vst.msk [vmem:[#allocation2 + $0xf8] sm:$0xff] %vm2113, %v2080
      %v2146 = vld [vmem:[%s1920] sm:$0xf]
      %v2147 = vld [vmem:[%s1920 + $0x4] sm:$0xf]
      %v2148 = vld [vmem:[%s1920 + $0x8] sm:$0x1]
      %v2149 = vld [vmem:[%s1920 + $0xc] sm:$0xf]
      %v2150 = vld [vmem:[%s1920 + $0x10] sm:$0xf]
      %v2151 = vld [vmem:[%s1920 + $0x14] sm:$0x1]
      %v2152 = vld [vmem:[%s1920 + $0x18] sm:$0xf]
      %v2153 = vld [vmem:[%s1920 + $0x1c] sm:$0xf]
      %v2154 = vld [vmem:[%s1920 + $0x20] sm:$0x1]
      %v2155 = vld [vmem:[%s1920 + $0x24] sm:$0xf]
      %v2156 = vld [vmem:[%s1920 + $0x28] sm:$0xf]
      %v2157 = vld [vmem:[%s1920 + $0x2c] sm:$0x1]
      %v2158 = vld [vmem:[%s1920 + $0x30] sm:$0xf]
      %v2159 = vld [vmem:[%s1920 + $0x34] sm:$0xf]
      %v2160 = vld [vmem:[%s1920 + $0x38] sm:$0x1]
      %v2161 = vld [vmem:[%s1920 + $0x3c] sm:$0xf]
      %v2162 = vld [vmem:[%s1920 + $0x40] sm:$0xf]
      %v2163 = vld [vmem:[%s1920 + $0x44] sm:$0x1]
      %v2164 = vld [vmem:[%s1920 + $0x48] sm:$0xf]
      %v2165 = vld [vmem:[%s1920 + $0x4c] sm:$0xf]
      %v2166 = vld [vmem:[%s1920 + $0x50] sm:$0x1]
      %v2167 = vld [vmem:[%s1920 + $0x54] sm:$0xf]
      %v2168 = vld [vmem:[%s1920 + $0x58] sm:$0xf]
      %v2169 = vld [vmem:[%s1920 + $0x5c] sm:$0x1]
      %v2170 = vld [vmem:[%s1920 + $0x60] sm:$0xf]
      %v2171 = vld [vmem:[%s1920 + $0x64] sm:$0xf]
      %v2172 = vld [vmem:[%s1920 + $0x68] sm:$0x1]
      %v2173 = vld [vmem:[%s1920 + $0x6c] sm:$0xf]
      %v2174 = vld [vmem:[%s1920 + $0x70] sm:$0xf]
      %v2175 = vld [vmem:[%s1920 + $0x74] sm:$0x1]
      %v2176 = vld [vmem:[%s1920 + $0x78] sm:$0xf]
      %v2177 = vld [vmem:[%s1920 + $0x7c] sm:$0xf]
      %v2178 = vld [vmem:[%s1920 + $0x80] sm:$0x1]
      %v2179 = vld [vmem:[%s1920 + $0x84] sm:$0xf]
      %v2180 = vld [vmem:[%s1920 + $0x88] sm:$0xf]
      %v2181 = vld [vmem:[%s1920 + $0x8c] sm:$0x1]
      %v2182 = vld [vmem:[%s1920 + $0x90] sm:$0xf]
      %v2183 = vld [vmem:[%s1920 + $0x94] sm:$0xf]
      %v2184 = vld [vmem:[%s1920 + $0x98] sm:$0x1]
      %v2185 = vld [vmem:[%s1920 + $0x9c] sm:$0xf]
      %v2186 = vld [vmem:[%s1920 + $0xa0] sm:$0xf]
      %v2187 = vld [vmem:[%s1920 + $0xa4] sm:$0x1]
      %v2188 = vld [vmem:[%s1920 + $0xa8] sm:$0xf]
      %v2189 = vld [vmem:[%s1920 + $0xac] sm:$0xf]
      %v2190 = vld [vmem:[%s1920 + $0xb0] sm:$0x1]
      %v2191 = vld [vmem:[%s1920 + $0xb4] sm:$0xf]
      %v2192 = vld [vmem:[%s1920 + $0xb8] sm:$0xf]
      %v2193 = vld [vmem:[%s1920 + $0xbc] sm:$0x1]
      %v2194 = vunpack.c.l.bf16 %v2146
      %v2195 = vunpack.c.l.bf16 %v2147
      %v2196 = vunpack.c.l.bf16 %v2148
      %v2197 = vunpack.c.l.bf16 %v2149
      %v2198 = vunpack.c.l.bf16 %v2150
      %v2199 = vunpack.c.l.bf16 %v2151
      %v2200 = vunpack.c.l.bf16 %v2152
      %v2201 = vunpack.c.l.bf16 %v2153
      %v2202 = vunpack.c.l.bf16 %v2154
      %v2203 = vunpack.c.l.bf16 %v2155
      %v2204 = vunpack.c.l.bf16 %v2156
      %v2205 = vunpack.c.l.bf16 %v2157
      %v2206 = vunpack.c.l.bf16 %v2158
      %v2207 = vunpack.c.l.bf16 %v2159
      %v2208 = vunpack.c.l.bf16 %v2160
      %v2209 = vunpack.c.l.bf16 %v2161
      %v2210 = vunpack.c.l.bf16 %v2162
      %v2211 = vunpack.c.l.bf16 %v2163
      %v2212 = vunpack.c.l.bf16 %v2164
      %v2213 = vunpack.c.l.bf16 %v2165
      %v2214 = vunpack.c.l.bf16 %v2166
      %v2215 = vunpack.c.l.bf16 %v2167
      %v2216 = vunpack.c.l.bf16 %v2168
      %v2217 = vunpack.c.l.bf16 %v2169
      %v2218 = vunpack.c.l.bf16 %v2170
      %v2219 = vunpack.c.l.bf16 %v2171
      %v2220 = vunpack.c.l.bf16 %v2172
      %v2221 = vunpack.c.l.bf16 %v2173
      %v2222 = vunpack.c.l.bf16 %v2174
      %v2223 = vunpack.c.l.bf16 %v2175
      %v2224 = vunpack.c.l.bf16 %v2176
      %v2225 = vunpack.c.l.bf16 %v2177
      %v2226 = vunpack.c.l.bf16 %v2178
      %v2227 = vunpack.c.l.bf16 %v2179
      %v2228 = vunpack.c.l.bf16 %v2180
      %v2229 = vunpack.c.l.bf16 %v2181
      %v2230 = vunpack.c.l.bf16 %v2182
      %v2231 = vunpack.c.l.bf16 %v2183
      %v2232 = vunpack.c.l.bf16 %v2184
      %v2233 = vunpack.c.l.bf16 %v2185
      %v2234 = vunpack.c.l.bf16 %v2186
      %v2235 = vunpack.c.l.bf16 %v2187
      %v2236 = vunpack.c.l.bf16 %v2188
      %v2237 = vunpack.c.l.bf16 %v2189
      %v2238 = vunpack.c.l.bf16 %v2190
      %v2239 = vunpack.c.l.bf16 %v2191
      %v2240 = vunpack.c.l.bf16 %v2192
      %v2241 = vunpack.c.l.bf16 %v2193
      %v2290 = vrot.slane %v2194, 1
      %v2291 = vrot.slane %v2195, 1
      %v2292 = vsel %vm424, %v2290, %v2291
      %v2293 = vrot.slane %v2196, 1
      %v2294 = vsel %vm424, %v2291, %v2293
      %v2295 = vrot.slane %v2197, 1
      %v2296 = vrot.slane %v2198, 1
      %v2297 = vsel %vm424, %v2295, %v2296
      %v2298 = vrot.slane %v2199, 1
      %v2299 = vsel %vm424, %v2296, %v2298
      %v2300 = vrot.slane %v2200, 1
      %v2301 = vrot.slane %v2201, 1
      %v2302 = vsel %vm424, %v2300, %v2301
      %v2303 = vrot.slane %v2202, 1
      %v2304 = vsel %vm424, %v2301, %v2303
      %v2305 = vrot.slane %v2203, 1
      %v2306 = vrot.slane %v2204, 1
      %v2307 = vsel %vm424, %v2305, %v2306
      %v2308 = vrot.slane %v2205, 1
      %v2309 = vsel %vm424, %v2306, %v2308
      %v2310 = vrot.slane %v2206, 1
      %v2311 = vrot.slane %v2207, 1
      %v2312 = vsel %vm424, %v2310, %v2311
      %v2313 = vrot.slane %v2208, 1
      %v2314 = vsel %vm424, %v2311, %v2313
      %v2315 = vrot.slane %v2209, 1
      %v2316 = vrot.slane %v2210, 1
      %v2317 = vsel %vm424, %v2315, %v2316
      %v2318 = vrot.slane %v2211, 1
      %v2319 = vsel %vm424, %v2316, %v2318
      %v2320 = vrot.slane %v2212, 1
      %v2321 = vrot.slane %v2213, 1
      %v2322 = vsel %vm424, %v2320, %v2321
      %v2323 = vrot.slane %v2214, 1
      %v2324 = vsel %vm424, %v2321, %v2323
      %v2325 = vrot.slane %v2215, 1
      %v2326 = vrot.slane %v2216, 1
      %v2327 = vsel %vm424, %v2325, %v2326
      %v2328 = vrot.slane %v2217, 1
      %v2329 = vsel %vm424, %v2326, %v2328
      %v2330 = vrot.slane %v2218, 1
      %v2331 = vrot.slane %v2219, 1
      %v2332 = vsel %vm424, %v2330, %v2331
      %v2333 = vrot.slane %v2220, 1
      %v2334 = vsel %vm424, %v2331, %v2333
      %v2335 = vrot.slane %v2221, 1
      %v2336 = vrot.slane %v2222, 1
      %v2337 = vsel %vm424, %v2335, %v2336
      %v2338 = vrot.slane %v2223, 1
      %v2339 = vsel %vm424, %v2336, %v2338
      %v2340 = vrot.slane %v2224, 1
      %v2341 = vrot.slane %v2225, 1
      %v2342 = vsel %vm424, %v2340, %v2341
      %v2343 = vrot.slane %v2226, 1
      %v2344 = vsel %vm424, %v2341, %v2343
      %v2345 = vrot.slane %v2227, 1
      %v2346 = vrot.slane %v2228, 1
      %v2347 = vsel %vm424, %v2345, %v2346
      %v2348 = vrot.slane %v2229, 1
      %v2349 = vsel %vm424, %v2346, %v2348
      %v2350 = vrot.slane %v2230, 1
      %v2351 = vrot.slane %v2231, 1
      %v2352 = vsel %vm424, %v2350, %v2351
      %v2353 = vrot.slane %v2232, 1
      %v2354 = vsel %vm424, %v2351, %v2353
      %v2355 = vrot.slane %v2233, 1
      %v2356 = vrot.slane %v2234, 1
      %v2357 = vsel %vm424, %v2355, %v2356
      %v2358 = vrot.slane %v2235, 1
      %v2359 = vsel %vm424, %v2356, %v2358
      %v2360 = vrot.slane %v2236, 1
      %v2361 = vrot.slane %v2237, 1
      %v2362 = vsel %vm424, %v2360, %v2361
      %v2363 = vrot.slane %v2238, 1
      %v2364 = vsel %vm424, %v2361, %v2363
      %v2365 = vrot.slane %v2239, 1
      %v2366 = vrot.slane %v2240, 1
      %v2367 = vsel %vm424, %v2365, %v2366
      %v2368 = vrot.slane %v2241, 1
      %v2369 = vsel %vm424, %v2366, %v2368
      %2370 = vrot.lane.b32.xlu0 %v2292, 56
      %v2371 = vpop.permute.xlu0 %2370
      %2372 = vrot.lane.b32.xlu0 %v2294, 56
      %v2373 = vpop.permute.xlu0 %2372
      %2374 = vrot.lane.b32.xlu0 %v2297, 56
      %v2375 = vpop.permute.xlu0 %2374
      %2376 = vrot.lane.b32.xlu0 %v2299, 56
      %v2377 = vpop.permute.xlu0 %2376
      %2378 = vrot.lane.b32.xlu0 %v2302, 56
      %v2379 = vpop.permute.xlu0 %2378
      %2380 = vrot.lane.b32.xlu0 %v2304, 56
      %v2381 = vpop.permute.xlu0 %2380
      %2382 = vrot.lane.b32.xlu0 %v2307, 56
      %v2383 = vpop.permute.xlu0 %2382
      %2384 = vrot.lane.b32.xlu0 %v2309, 56
      %v2385 = vpop.permute.xlu0 %2384
      %2386 = vrot.lane.b32.xlu0 %v2312, 56
      %v2387 = vpop.permute.xlu0 %2386
      %2388 = vrot.lane.b32.xlu0 %v2314, 56
      %v2389 = vpop.permute.xlu0 %2388
      %2390 = vrot.lane.b32.xlu0 %v2317, 56
      %v2391 = vpop.permute.xlu0 %2390
      %2392 = vrot.lane.b32.xlu0 %v2319, 56
      %v2393 = vpop.permute.xlu0 %2392
      %2394 = vrot.lane.b32.xlu0 %v2322, 56
      %v2395 = vpop.permute.xlu0 %2394
      %2396 = vrot.lane.b32.xlu0 %v2324, 56
      %v2397 = vpop.permute.xlu0 %2396
      %2398 = vrot.lane.b32.xlu0 %v2327, 56
      %v2399 = vpop.permute.xlu0 %2398
      %2400 = vrot.lane.b32.xlu0 %v2329, 56
      %v2401 = vpop.permute.xlu0 %2400
      %2402 = vrot.lane.b32.xlu0 %v2332, 56
      %v2403 = vpop.permute.xlu0 %2402
      %2404 = vrot.lane.b32.xlu0 %v2334, 56
      %v2405 = vpop.permute.xlu0 %2404
      %2406 = vrot.lane.b32.xlu0 %v2337, 56
      %v2407 = vpop.permute.xlu0 %2406
      %2408 = vrot.lane.b32.xlu0 %v2339, 56
      %v2409 = vpop.permute.xlu0 %2408
      %2410 = vrot.lane.b32.xlu0 %v2342, 56
      %v2411 = vpop.permute.xlu0 %2410
      %2412 = vrot.lane.b32.xlu0 %v2344, 56
      %v2413 = vpop.permute.xlu0 %2412
      %2414 = vrot.lane.b32.xlu0 %v2347, 56
      %v2415 = vpop.permute.xlu0 %2414
      %2416 = vrot.lane.b32.xlu0 %v2349, 56
      %v2417 = vpop.permute.xlu0 %2416
      %2418 = vrot.lane.b32.xlu0 %v2352, 56
      %v2419 = vpop.permute.xlu0 %2418
      %2420 = vrot.lane.b32.xlu0 %v2354, 56
      %v2421 = vpop.permute.xlu0 %2420
      %2422 = vrot.lane.b32.xlu0 %v2357, 56
      %v2423 = vpop.permute.xlu0 %2422
      %2424 = vrot.lane.b32.xlu0 %v2359, 56
      %v2425 = vpop.permute.xlu0 %2424
      %2426 = vrot.lane.b32.xlu0 %v2362, 56
      %v2427 = vpop.permute.xlu0 %2426
      %2428 = vrot.lane.b32.xlu0 %v2364, 56
      %v2429 = vpop.permute.xlu0 %2428
      %2430 = vrot.lane.b32.xlu0 %v2367, 56
      %v2431 = vpop.permute.xlu0 %2430
      %2432 = vrot.lane.b32.xlu0 %v2369, 56
      %v2433 = vpop.permute.xlu0 %2432
      %vm2466 = vcmask 523712
      %2467 = vst.msk [vmem:[#allocation2] sm:$0xff] %vm2466, %v2371
      %2468 = vst.msk [vmem:[#allocation2 + $0x8] sm:$0xff] %vm2466, %v2373
      %2469 = vst.msk [vmem:[#allocation2 + $0x10] sm:$0xff] %vm2466, %v2375
      %2470 = vst.msk [vmem:[#allocation2 + $0x18] sm:$0xff] %vm2466, %v2377
      %2471 = vst.msk [vmem:[#allocation2 + $0x20] sm:$0xff] %vm2466, %v2379
      %2472 = vst.msk [vmem:[#allocation2 + $0x28] sm:$0xff] %vm2466, %v2381
      %2473 = vst.msk [vmem:[#allocation2 + $0x30] sm:$0xff] %vm2466, %v2383
      %2474 = vst.msk [vmem:[#allocation2 + $0x38] sm:$0xff] %vm2466, %v2385
      %2475 = vst.msk [vmem:[#allocation2 + $0x40] sm:$0xff] %vm2466, %v2387
      %2476 = vst.msk [vmem:[#allocation2 + $0x48] sm:$0xff] %vm2466, %v2389
      %2477 = vst.msk [vmem:[#allocation2 + $0x50] sm:$0xff] %vm2466, %v2391
      %2478 = vst.msk [vmem:[#allocation2 + $0x58] sm:$0xff] %vm2466, %v2393
      %2479 = vst.msk [vmem:[#allocation2 + $0x60] sm:$0xff] %vm2466, %v2395
      %2480 = vst.msk [vmem:[#allocation2 + $0x68] sm:$0xff] %vm2466, %v2397
      %2481 = vst.msk [vmem:[#allocation2 + $0x70] sm:$0xff] %vm2466, %v2399
      %2482 = vst.msk [vmem:[#allocation2 + $0x78] sm:$0xff] %vm2466, %v2401
      %2483 = vst.msk [vmem:[#allocation2 + $0x80] sm:$0xff] %vm2466, %v2403
      %2484 = vst.msk [vmem:[#allocation2 + $0x88] sm:$0xff] %vm2466, %v2405
      %2485 = vst.msk [vmem:[#allocation2 + $0x90] sm:$0xff] %vm2466, %v2407
      %2486 = vst.msk [vmem:[#allocation2 + $0x98] sm:$0xff] %vm2466, %v2409
      %2487 = vst.msk [vmem:[#allocation2 + $0xa0] sm:$0xff] %vm2466, %v2411
      %2488 = vst.msk [vmem:[#allocation2 + $0xa8] sm:$0xff] %vm2466, %v2413
      %2489 = vst.msk [vmem:[#allocation2 + $0xb0] sm:$0xff] %vm2466, %v2415
      %2490 = vst.msk [vmem:[#allocation2 + $0xb8] sm:$0xff] %vm2466, %v2417
      %2491 = vst.msk [vmem:[#allocation2 + $0xc0] sm:$0xff] %vm2466, %v2419
      %2492 = vst.msk [vmem:[#allocation2 + $0xc8] sm:$0xff] %vm2466, %v2421
      %2493 = vst.msk [vmem:[#allocation2 + $0xd0] sm:$0xff] %vm2466, %v2423
      %2494 = vst.msk [vmem:[#allocation2 + $0xd8] sm:$0xff] %vm2466, %v2425
      %2495 = vst.msk [vmem:[#allocation2 + $0xe0] sm:$0xff] %vm2466, %v2427
      %2496 = vst.msk [vmem:[#allocation2 + $0xe8] sm:$0xff] %vm2466, %v2429
      %2497 = vst.msk [vmem:[#allocation2 + $0xf0] sm:$0xff] %vm2466, %v2431
      %2498 = vst.msk [vmem:[#allocation2 + $0xf8] sm:$0xff] %vm2466, %v2433
      %v2499 = vld [vmem:[%s1920] sm:$0xe]
      %v2500 = vld [vmem:[%s1920 + $0x4] sm:$0xf]
      %v2501 = vld [vmem:[%s1920 + $0x8] sm:$0x1]
      %v2502 = vld [vmem:[%s1920 + $0xc] sm:$0xe]
      %v2503 = vld [vmem:[%s1920 + $0x10] sm:$0xf]
      %v2504 = vld [vmem:[%s1920 + $0x14] sm:$0x1]
      %v2505 = vld [vmem:[%s1920 + $0x18] sm:$0xe]
      %v2506 = vld [vmem:[%s1920 + $0x1c] sm:$0xf]
      %v2507 = vld [vmem:[%s1920 + $0x20] sm:$0x1]
      %v2508 = vld [vmem:[%s1920 + $0x24] sm:$0xe]
      %v2509 = vld [vmem:[%s1920 + $0x28] sm:$0xf]
      %v2510 = vld [vmem:[%s1920 + $0x2c] sm:$0x1]
      %v2511 = vld [vmem:[%s1920 + $0x30] sm:$0xe]
      %v2512 = vld [vmem:[%s1920 + $0x34] sm:$0xf]
      %v2513 = vld [vmem:[%s1920 + $0x38] sm:$0x1]
      %v2514 = vld [vmem:[%s1920 + $0x3c] sm:$0xe]
      %v2515 = vld [vmem:[%s1920 + $0x40] sm:$0xf]
      %v2516 = vld [vmem:[%s1920 + $0x44] sm:$0x1]
      %v2517 = vld [vmem:[%s1920 + $0x48] sm:$0xe]
      %v2518 = vld [vmem:[%s1920 + $0x4c] sm:$0xf]
      %v2519 = vld [vmem:[%s1920 + $0x50] sm:$0x1]
      %v2520 = vld [vmem:[%s1920 + $0x54] sm:$0xe]
      %v2521 = vld [vmem:[%s1920 + $0x58] sm:$0xf]
      %v2522 = vld [vmem:[%s1920 + $0x5c] sm:$0x1]
      %v2523 = vld [vmem:[%s1920 + $0x60] sm:$0xe]
      %v2524 = vld [vmem:[%s1920 + $0x64] sm:$0xf]
      %v2525 = vld [vmem:[%s1920 + $0x68] sm:$0x1]
      %v2526 = vld [vmem:[%s1920 + $0x6c] sm:$0xe]
      %v2527 = vld [vmem:[%s1920 + $0x70] sm:$0xf]
      %v2528 = vld [vmem:[%s1920 + $0x74] sm:$0x1]
      %v2529 = vld [vmem:[%s1920 + $0x78] sm:$0xe]
      %v2530 = vld [vmem:[%s1920 + $0x7c] sm:$0xf]
      %v2531 = vld [vmem:[%s1920 + $0x80] sm:$0x1]
      %v2532 = vld [vmem:[%s1920 + $0x84] sm:$0xe]
      %v2533 = vld [vmem:[%s1920 + $0x88] sm:$0xf]
      %v2534 = vld [vmem:[%s1920 + $0x8c] sm:$0x1]
      %v2535 = vld [vmem:[%s1920 + $0x90] sm:$0xe]
      %v2536 = vld [vmem:[%s1920 + $0x94] sm:$0xf]
      %v2537 = vld [vmem:[%s1920 + $0x98] sm:$0x1]
      %v2538 = vld [vmem:[%s1920 + $0x9c] sm:$0xe]
      %v2539 = vld [vmem:[%s1920 + $0xa0] sm:$0xf]
      %v2540 = vld [vmem:[%s1920 + $0xa4] sm:$0x1]
      %v2541 = vld [vmem:[%s1920 + $0xa8] sm:$0xe]
      %v2542 = vld [vmem:[%s1920 + $0xac] sm:$0xf]
      %v2543 = vld [vmem:[%s1920 + $0xb0] sm:$0x1]
      %v2544 = vld [vmem:[%s1920 + $0xb4] sm:$0xe]
      %v2545 = vld [vmem:[%s1920 + $0xb8] sm:$0xf]
      %v2546 = vld [vmem:[%s1920 + $0xbc] sm:$0x1]
      %v2547 = vunpack.c.l.bf16 %v2499
      %v2548 = vunpack.c.l.bf16 %v2500
      %v2549 = vunpack.c.l.bf16 %v2501
      %v2550 = vunpack.c.l.bf16 %v2502
      %v2551 = vunpack.c.l.bf16 %v2503
      %v2552 = vunpack.c.l.bf16 %v2504
      %v2553 = vunpack.c.l.bf16 %v2505
      %v2554 = vunpack.c.l.bf16 %v2506
      %v2555 = vunpack.c.l.bf16 %v2507
      %v2556 = vunpack.c.l.bf16 %v2508
      %v2557 = vunpack.c.l.bf16 %v2509
      %v2558 = vunpack.c.l.bf16 %v2510
      %v2559 = vunpack.c.l.bf16 %v2511
      %v2560 = vunpack.c.l.bf16 %v2512
      %v2561 = vunpack.c.l.bf16 %v2513
      %v2562 = vunpack.c.l.bf16 %v2514
      %v2563 = vunpack.c.l.bf16 %v2515
      %v2564 = vunpack.c.l.bf16 %v2516
      %v2565 = vunpack.c.l.bf16 %v2517
      %v2566 = vunpack.c.l.bf16 %v2518
      %v2567 = vunpack.c.l.bf16 %v2519
      %v2568 = vunpack.c.l.bf16 %v2520
      %v2569 = vunpack.c.l.bf16 %v2521
      %v2570 = vunpack.c.l.bf16 %v2522
      %v2571 = vunpack.c.l.bf16 %v2523
      %v2572 = vunpack.c.l.bf16 %v2524
      %v2573 = vunpack.c.l.bf16 %v2525
      %v2574 = vunpack.c.l.bf16 %v2526
      %v2575 = vunpack.c.l.bf16 %v2527
      %v2576 = vunpack.c.l.bf16 %v2528
      %v2577 = vunpack.c.l.bf16 %v2529
      %v2578 = vunpack.c.l.bf16 %v2530
      %v2579 = vunpack.c.l.bf16 %v2531
      %v2580 = vunpack.c.l.bf16 %v2532
      %v2581 = vunpack.c.l.bf16 %v2533
      %v2582 = vunpack.c.l.bf16 %v2534
      %v2583 = vunpack.c.l.bf16 %v2535
      %v2584 = vunpack.c.l.bf16 %v2536
      %v2585 = vunpack.c.l.bf16 %v2537
      %v2586 = vunpack.c.l.bf16 %v2538
      %v2587 = vunpack.c.l.bf16 %v2539
      %v2588 = vunpack.c.l.bf16 %v2540
      %v2589 = vunpack.c.l.bf16 %v2541
      %v2590 = vunpack.c.l.bf16 %v2542
      %v2591 = vunpack.c.l.bf16 %v2543
      %v2592 = vunpack.c.l.bf16 %v2544
      %v2593 = vunpack.c.l.bf16 %v2545
      %v2594 = vunpack.c.l.bf16 %v2546
      %v2643 = vrot.slane %v2547, 2
      %v2644 = vrot.slane %v2548, 2
      %v2645 = vsel %vm778, %v2643, %v2644
      %v2646 = vrot.slane %v2549, 2
      %v2647 = vsel %vm778, %v2644, %v2646
      %v2648 = vrot.slane %v2550, 2
      %v2649 = vrot.slane %v2551, 2
      %v2650 = vsel %vm778, %v2648, %v2649
      %v2651 = vrot.slane %v2552, 2
      %v2652 = vsel %vm778, %v2649, %v2651
      %v2653 = vrot.slane %v2553, 2
      %v2654 = vrot.slane %v2554, 2
      %v2655 = vsel %vm778, %v2653, %v2654
      %v2656 = vrot.slane %v2555, 2
      %v2657 = vsel %vm778, %v2654, %v2656
      %v2658 = vrot.slane %v2556, 2
      %v2659 = vrot.slane %v2557, 2
      %v2660 = vsel %vm778, %v2658, %v2659
      %v2661 = vrot.slane %v2558, 2
      %v2662 = vsel %vm778, %v2659, %v2661
      %v2663 = vrot.slane %v2559, 2
      %v2664 = vrot.slane %v2560, 2
      %v2665 = vsel %vm778, %v2663, %v2664
      %v2666 = vrot.slane %v2561, 2
      %v2667 = vsel %vm778, %v2664, %v2666
      %v2668 = vrot.slane %v2562, 2
      %v2669 = vrot.slane %v2563, 2
      %v2670 = vsel %vm778, %v2668, %v2669
      %v2671 = vrot.slane %v2564, 2
      %v2672 = vsel %vm778, %v2669, %v2671
      %v2673 = vrot.slane %v2565, 2
      %v2674 = vrot.slane %v2566, 2
      %v2675 = vsel %vm778, %v2673, %v2674
      %v2676 = vrot.slane %v2567, 2
      %v2677 = vsel %vm778, %v2674, %v2676
      %v2678 = vrot.slane %v2568, 2
      %v2679 = vrot.slane %v2569, 2
      %v2680 = vsel %vm778, %v2678, %v2679
      %v2681 = vrot.slane %v2570, 2
      %v2682 = vsel %vm778, %v2679, %v2681
      %v2683 = vrot.slane %v2571, 2
      %v2684 = vrot.slane %v2572, 2
      %v2685 = vsel %vm778, %v2683, %v2684
      %v2686 = vrot.slane %v2573, 2
      %v2687 = vsel %vm778, %v2684, %v2686
      %v2688 = vrot.slane %v2574, 2
      %v2689 = vrot.slane %v2575, 2
      %v2690 = vsel %vm778, %v2688, %v2689
      %v2691 = vrot.slane %v2576, 2
      %v2692 = vsel %vm778, %v2689, %v2691
      %v2693 = vrot.slane %v2577, 2
      %v2694 = vrot.slane %v2578, 2
      %v2695 = vsel %vm778, %v2693, %v2694
      %v2696 = vrot.slane %v2579, 2
      %v2697 = vsel %vm778, %v2694, %v2696
      %v2698 = vrot.slane %v2580, 2
      %v2699 = vrot.slane %v2581, 2
      %v2700 = vsel %vm778, %v2698, %v2699
      %v2701 = vrot.slane %v2582, 2
      %v2702 = vsel %vm778, %v2699, %v2701
      %v2703 = vrot.slane %v2583, 2
      %v2704 = vrot.slane %v2584, 2
      %v2705 = vsel %vm778, %v2703, %v2704
      %v2706 = vrot.slane %v2585, 2
      %v2707 = vsel %vm778, %v2704, %v2706
      %v2708 = vrot.slane %v2586, 2
      %v2709 = vrot.slane %v2587, 2
      %v2710 = vsel %vm778, %v2708, %v2709
      %v2711 = vrot.slane %v2588, 2
      %v2712 = vsel %vm778, %v2709, %v2711
      %v2713 = vrot.slane %v2589, 2
      %v2714 = vrot.slane %v2590, 2
      %v2715 = vsel %vm778, %v2713, %v2714
      %v2716 = vrot.slane %v2591, 2
      %v2717 = vsel %vm778, %v2714, %v2716
      %v2718 = vrot.slane %v2592, 2
      %v2719 = vrot.slane %v2593, 2
      %v2720 = vsel %vm778, %v2718, %v2719
      %v2721 = vrot.slane %v2594, 2
      %v2722 = vsel %vm778, %v2719, %v2721
      %2723 = vrot.lane.b32.xlu0 %v2645, 64
      %v2724 = vpop.permute.xlu0 %2723
      %2725 = vrot.lane.b32.xlu0 %v2647, 64
      %v2726 = vpop.permute.xlu0 %2725
      %2727 = vrot.lane.b32.xlu0 %v2650, 64
      %v2728 = vpop.permute.xlu0 %2727
      %2729 = vrot.lane.b32.xlu0 %v2652, 64
      %v2730 = vpop.permute.xlu0 %2729
      %2731 = vrot.lane.b32.xlu0 %v2655, 64
      %v2732 = vpop.permute.xlu0 %2731
      %2733 = vrot.lane.b32.xlu0 %v2657, 64
      %v2734 = vpop.permute.xlu0 %2733
      %2735 = vrot.lane.b32.xlu0 %v2660, 64
      %v2736 = vpop.permute.xlu0 %2735
      %2737 = vrot.lane.b32.xlu0 %v2662, 64
      %v2738 = vpop.permute.xlu0 %2737
      %2739 = vrot.lane.b32.xlu0 %v2665, 64
      %v2740 = vpop.permute.xlu0 %2739
      %2741 = vrot.lane.b32.xlu0 %v2667, 64
      %v2742 = vpop.permute.xlu0 %2741
      %2743 = vrot.lane.b32.xlu0 %v2670, 64
      %v2744 = vpop.permute.xlu0 %2743
      %2745 = vrot.lane.b32.xlu0 %v2672, 64
      %v2746 = vpop.permute.xlu0 %2745
      %2747 = vrot.lane.b32.xlu0 %v2675, 64
      %v2748 = vpop.permute.xlu0 %2747
      %2749 = vrot.lane.b32.xlu0 %v2677, 64
      %v2750 = vpop.permute.xlu0 %2749
      %2751 = vrot.lane.b32.xlu0 %v2680, 64
      %v2752 = vpop.permute.xlu0 %2751
      %2753 = vrot.lane.b32.xlu0 %v2682, 64
      %v2754 = vpop.permute.xlu0 %2753
      %2755 = vrot.lane.b32.xlu0 %v2685, 64
      %v2756 = vpop.permute.xlu0 %2755
      %2757 = vrot.lane.b32.xlu0 %v2687, 64
      %v2758 = vpop.permute.xlu0 %2757
      %2759 = vrot.lane.b32.xlu0 %v2690, 64
      %v2760 = vpop.permute.xlu0 %2759
      %2761 = vrot.lane.b32.xlu0 %v2692, 64
      %v2762 = vpop.permute.xlu0 %2761
      %2763 = vrot.lane.b32.xlu0 %v2695, 64
      %v2764 = vpop.permute.xlu0 %2763
      %2765 = vrot.lane.b32.xlu0 %v2697, 64
      %v2766 = vpop.permute.xlu0 %2765
      %2767 = vrot.lane.b32.xlu0 %v2700, 64
      %v2768 = vpop.permute.xlu0 %2767
      %2769 = vrot.lane.b32.xlu0 %v2702, 64
      %v2770 = vpop.permute.xlu0 %2769
      %2771 = vrot.lane.b32.xlu0 %v2705, 64
      %v2772 = vpop.permute.xlu0 %2771
      %2773 = vrot.lane.b32.xlu0 %v2707, 64
      %v2774 = vpop.permute.xlu0 %2773
      %2775 = vrot.lane.b32.xlu0 %v2710, 64
      %v2776 = vpop.permute.xlu0 %2775
      %2777 = vrot.lane.b32.xlu0 %v2712, 64
      %v2778 = vpop.permute.xlu0 %2777
      %2779 = vrot.lane.b32.xlu0 %v2715, 64
      %v2780 = vpop.permute.xlu0 %2779
      %2781 = vrot.lane.b32.xlu0 %v2717, 64
      %v2782 = vpop.permute.xlu0 %2781
      %2783 = vrot.lane.b32.xlu0 %v2720, 64
      %v2784 = vpop.permute.xlu0 %2783
      %2785 = vrot.lane.b32.xlu0 %v2722, 64
      %v2786 = vpop.permute.xlu0 %2785
      %vm2819 = vcmask 589312
      %2820 = vst.msk [vmem:[#allocation2] sm:$0xff] %vm2819, %v2724
      %2821 = vst.msk [vmem:[#allocation2 + $0x8] sm:$0xff] %vm2819, %v2726
      %2822 = vst.msk [vmem:[#allocation2 + $0x10] sm:$0xff] %vm2819, %v2728
      %2823 = vst.msk [vmem:[#allocation2 + $0x18] sm:$0xff] %vm2819, %v2730
      %2824 = vst.msk [vmem:[#allocation2 + $0x20] sm:$0xff] %vm2819, %v2732
      %2825 = vst.msk [vmem:[#allocation2 + $0x28] sm:$0xff] %vm2819, %v2734
      %2826 = vst.msk [vmem:[#allocation2 + $0x30] sm:$0xff] %vm2819, %v2736
      %2827 = vst.msk [vmem:[#allocation2 + $0x38] sm:$0xff] %vm2819, %v2738
      %2828 = vst.msk [vmem:[#allocation2 + $0x40] sm:$0xff] %vm2819, %v2740
      %2829 = vst.msk [vmem:[#allocation2 + $0x48] sm:$0xff] %vm2819, %v2742
      %2830 = vst.msk [vmem:[#allocation2 + $0x50] sm:$0xff] %vm2819, %v2744
      %2831 = vst.msk [vmem:[#allocation2 + $0x58] sm:$0xff] %vm2819, %v2746
      %2832 = vst.msk [vmem:[#allocation2 + $0x60] sm:$0xff] %vm2819, %v2748
      %2833 = vst.msk [vmem:[#allocation2 + $0x68] sm:$0xff] %vm2819, %v2750
      %2834 = vst.msk [vmem:[#allocation2 + $0x70] sm:$0xff] %vm2819, %v2752
      %2835 = vst.msk [vmem:[#allocation2 + $0x78] sm:$0xff] %vm2819, %v2754
      %2836 = vst.msk [vmem:[#allocation2 + $0x80] sm:$0xff] %vm2819, %v2756
      %2837 = vst.msk [vmem:[#allocation2 + $0x88] sm:$0xff] %vm2819, %v2758
      %2838 = vst.msk [vmem:[#allocation2 + $0x90] sm:$0xff] %vm2819, %v2760
      %2839 = vst.msk [vmem:[#allocation2 + $0x98] sm:$0xff] %vm2819, %v2762
      %2840 = vst.msk [vmem:[#allocation2 + $0xa0] sm:$0xff] %vm2819, %v2764
      %2841 = vst.msk [vmem:[#allocation2 + $0xa8] sm:$0xff] %vm2819, %v2766
      %2842 = vst.msk [vmem:[#allocation2 + $0xb0] sm:$0xff] %vm2819, %v2768
      %2843 = vst.msk [vmem:[#allocation2 + $0xb8] sm:$0xff] %vm2819, %v2770
      %2844 = vst.msk [vmem:[#allocation2 + $0xc0] sm:$0xff] %vm2819, %v2772
      %2845 = vst.msk [vmem:[#allocation2 + $0xc8] sm:$0xff] %vm2819, %v2774
      %2846 = vst.msk [vmem:[#allocation2 + $0xd0] sm:$0xff] %vm2819, %v2776
      %2847 = vst.msk [vmem:[#allocation2 + $0xd8] sm:$0xff] %vm2819, %v2778
      %2848 = vst.msk [vmem:[#allocation2 + $0xe0] sm:$0xff] %vm2819, %v2780
      %2849 = vst.msk [vmem:[#allocation2 + $0xe8] sm:$0xff] %vm2819, %v2782
      %2850 = vst.msk [vmem:[#allocation2 + $0xf0] sm:$0xff] %vm2819, %v2784
      %2851 = vst.msk [vmem:[#allocation2 + $0xf8] sm:$0xff] %vm2819, %v2786
      %v2852 = vld [vmem:[#allocation2] sm:$0xff]
      %v2853 = vld [vmem:[#allocation2 + $0x8] sm:$0xff]
      %v2854 = vld [vmem:[#allocation2 + $0x10] sm:$0xff]
      %v2855 = vld [vmem:[#allocation2 + $0x18] sm:$0xff]
      %v2856 = vld [vmem:[#allocation2 + $0x20] sm:$0xff]
      %v2857 = vld [vmem:[#allocation2 + $0x28] sm:$0xff]
      %v2858 = vld [vmem:[#allocation2 + $0x30] sm:$0xff]
      %v2859 = vld [vmem:[#allocation2 + $0x38] sm:$0xff]
      %v2860 = vld [vmem:[#allocation2 + $0x40] sm:$0xff]
      %v2861 = vld [vmem:[#allocation2 + $0x48] sm:$0xff]
      %v2862 = vld [vmem:[#allocation2 + $0x50] sm:$0xff]
      %v2863 = vld [vmem:[#allocation2 + $0x58] sm:$0xff]
      %v2864 = vld [vmem:[#allocation2 + $0x60] sm:$0xff]
      %v2865 = vld [vmem:[#allocation2 + $0x68] sm:$0xff]
      %v2866 = vld [vmem:[#allocation2 + $0x70] sm:$0xff]
      %v2867 = vld [vmem:[#allocation2 + $0x78] sm:$0xff]
      %v2868 = vld [vmem:[#allocation2 + $0x80] sm:$0xff]
      %v2869 = vld [vmem:[#allocation2 + $0x88] sm:$0xff]
      %v2870 = vld [vmem:[#allocation2 + $0x90] sm:$0xff]
      %v2871 = vld [vmem:[#allocation2 + $0x98] sm:$0xff]
      %v2872 = vld [vmem:[#allocation2 + $0xa0] sm:$0xff]
      %v2873 = vld [vmem:[#allocation2 + $0xa8] sm:$0xff]
      %v2874 = vld [vmem:[#allocation2 + $0xb0] sm:$0xff]
      %v2875 = vld [vmem:[#allocation2 + $0xb8] sm:$0xff]
      %v2876 = vld [vmem:[#allocation2 + $0xc0] sm:$0xff]
      %v2877 = vld [vmem:[#allocation2 + $0xc8] sm:$0xff]
      %v2878 = vld [vmem:[#allocation2 + $0xd0] sm:$0xff]
      %v2879 = vld [vmem:[#allocation2 + $0xd8] sm:$0xff]
      %v2880 = vld [vmem:[#allocation2 + $0xe0] sm:$0xff]
      %v2881 = vld [vmem:[#allocation2 + $0xe8] sm:$0xff]
      %v2882 = vld [vmem:[#allocation2 + $0xf0] sm:$0xff]
      %v2883 = vld [vmem:[#allocation2 + $0xf8] sm:$0xff]
      %v2884 = vpack.c.bf16 %v2853, %v2852
      %v2885 = vpack.c.bf16 %v2855, %v2854
      %v2886 = vpack.c.bf16 %v2857, %v2856
      %v2887 = vpack.c.bf16 %v2859, %v2858
      %v2888 = vpack.c.bf16 %v2861, %v2860
      %v2889 = vpack.c.bf16 %v2863, %v2862
      %v2890 = vpack.c.bf16 %v2865, %v2864
      %v2891 = vpack.c.bf16 %v2867, %v2866
      %v2892 = vpack.c.bf16 %v2869, %v2868
      %v2893 = vpack.c.bf16 %v2871, %v2870
      %v2894 = vpack.c.bf16 %v2873, %v2872
      %v2895 = vpack.c.bf16 %v2875, %v2874
      %v2896 = vpack.c.bf16 %v2877, %v2876
      %v2897 = vpack.c.bf16 %v2879, %v2878
      %v2898 = vpack.c.bf16 %v2881, %v2880
      %v2899 = vpack.c.bf16 %v2883, %v2882
      %v2900 = vld [vmem:[%s1] sm:$0xf]
      %v2901 = vld [vmem:[%s1 + $0x4] sm:$0xf]
      %v2902 = vld [vmem:[%s1 + $0x8] sm:$0xf]
      %v2903 = vld [vmem:[%s1 + $0xc] sm:$0xf]
      %v2904 = vld [vmem:[%s1 + $0x10] sm:$0xf]
      %v2905 = vld [vmem:[%s1 + $0x14] sm:$0xf]
      %v2906 = vld [vmem:[%s1 + $0x18] sm:$0xf]
      %v2907 = vld [vmem:[%s1 + $0x1c] sm:$0xf]
      %v2908 = vld [vmem:[%s1 + $0x20] sm:$0xf]
      %v2918 = vunpack.c.l.b16 %v2900
      %v2919 = vunpack.c.l.b16 %v2901
      %v2920 = vunpack.c.l.b16 %v2902
      %v2921 = vunpack.c.l.b16 %v2903
      %v2922 = vunpack.c.l.b16 %v2904
      %v2923 = vunpack.c.l.b16 %v2905
      %v2924 = vunpack.c.l.b16 %v2906
      %v2925 = vunpack.c.l.b16 %v2907
      %v2926 = vunpack.c.l.b16 %v2908
      %v2927 = vpack.c.b16 %v2919, %v2918
      %v2928 = vpack.c.b16 %v2921, %v2920
      %v2929 = vpack.c.b16 %v2923, %v2922
      %v2930 = vpack.c.b16 %v2925, %v2924
      %v2931 = vpack.c.b16 %v2926, %v2926
      %vm2936 = vcmask 588800
      %v2938 = vsel %vm2936, %v2884, 0
      %v2941 = vsel %vm2936, %v2885, 0
      %v2944 = vsel %vm2936, %v2886, 0
      %v2947 = vsel %vm2936, %v2887, 0
      %v2950 = vsel %vm2936, %v2888, 0
      %v2953 = vsel %vm2936, %v2889, 0
      %v2956 = vsel %vm2936, %v2890, 0
      %v2959 = vsel %vm2936, %v2891, 0
      %v2962 = vsel %vm2936, %v2892, 0
      %v2965 = vsel %vm2936, %v2893, 0
      %v2968 = vsel %vm2936, %v2894, 0
      %v2971 = vsel %vm2936, %v2895, 0
      %v2974 = vsel %vm2936, %v2896, 0
      %v2977 = vsel %vm2936, %v2897, 0
      %v2980 = vsel %vm2936, %v2898, 0
      %v2983 = vsel %vm2936, %v2899, 0
      %vm2985 = vcmask 1043456
      %v2987 = vsel %vm2985, %v2931, 0
      %2989 = vmatprep.subr.bf16.mxu0 0
      %2990 = vmatpush1.bf16.msra.mxu0 0
      %2991 = vmatprep.subr.bf16.mxu0 0
      %2992 = vmatpush1.bf16.msra.mxu0 0
      %2993 = vmatprep.subr.bf16.mxu0 0
      %2994 = vmatpush1.bf16.msra.mxu0 0
      %2995 = vmatprep.subr.bf16.mxu0 0
      %2996 = vmatpush1.bf16.msra.mxu0 %v2987
      %2997 = vmatprep.subr.bf16.mxu0 0
      %2998 = vmatpush1.bf16.msra.mxu0 %v2930
      %2999 = vmatprep.subr.bf16.mxu0 0
      %3000 = vmatpush1.bf16.msra.mxu0 %v2929
      %3001 = vmatprep.subr.bf16.mxu0 0
      %3002 = vmatpush1.bf16.msra.mxu0 %v2928
      %3003 = vmatprep.subr.bf16.mxu0 0
      %3004 = vmatpush1.bf16.msra.mxu0 %v2927
      %3005 = vmatprep.subr.bf16.mxu0 0
      %3006 = vmatpush2.bf16.msra.mxu0 0
      %3007 = vmatprep.subr.bf16.mxu0 0
      %3008 = vmatpush2.bf16.msra.mxu0 0
      %3009 = vmatprep.subr.bf16.mxu0 0
      %3010 = vmatpush2.bf16.msra.mxu0 0
      %3011 = vmatprep.subr.bf16.mxu0 0
      %3012 = vmatpush2.bf16.msra.mxu0 0
      %3013 = vmatprep.subr.bf16.mxu0 0
      %3014 = vmatpush2.bf16.msra.mxu0 0
      %3015 = vmatprep.subr.bf16.mxu0 0
      %3016 = vmatpush2.bf16.msra.mxu0 0
      %3017 = vmatprep.subr.bf16.mxu0 0
      %3018 = vmatpush2.bf16.msra.mxu0 0
      %3019 = vmatprep.subr.bf16.mxu0 0
      %3020 = vmatpush2.bf16.msra.mxu0 0
      %3021 = vmatprep.mubr.bf16.mxu0 0
      %3022 = vmatmul.mubr.bf16.gmra.mxu0 %v2938
      %v3023 = vpop.f32.mrf.mxu0
      %v3024 = vadd.f32 0.0, %v3023
      %v3025 = vpop.f32.mrf.mxu0
      %v3026 = vpop.f32.mrf.mxu0
      %v3027 = vadd.f32 0.0, %v3026
      %v3028 = vpop.f32.mrf.mxu0
      %3029 = vmatprep.mubr.bf16.mxu0 0
      %3030 = vmatmul.mubr.bf16.gmra.mxu0 %v2941
      %v3031 = vpop.f32.mrf.mxu0
      %v3032 = vadd.f32 0.0, %v3031
      %v3033 = vpop.f32.mrf.mxu0
      %v3034 = vpop.f32.mrf.mxu0
      %v3035 = vadd.f32 0.0, %v3034
      %v3036 = vpop.f32.mrf.mxu0
      %3037 = vmatprep.mubr.bf16.mxu0 0
      %3038 = vmatmul.mubr.bf16.gmra.mxu0 %v2944
      %v3039 = vpop.f32.mrf.mxu0
      %v3040 = vadd.f32 0.0, %v3039
      %v3041 = vpop.f32.mrf.mxu0
      %v3042 = vpop.f32.mrf.mxu0
      %v3043 = vadd.f32 0.0, %v3042
      %v3044 = vpop.f32.mrf.mxu0
      %3045 = vmatprep.mubr.bf16.mxu0 0
      %3046 = vmatmul.mubr.bf16.gmra.mxu0 %v2947
      %v3047 = vpop.f32.mrf.mxu0
      %v3048 = vadd.f32 0.0, %v3047
      %v3049 = vpop.f32.mrf.mxu0
      %v3050 = vpop.f32.mrf.mxu0
      %v3051 = vadd.f32 0.0, %v3050
      %v3052 = vpop.f32.mrf.mxu0
      %3053 = vmatprep.mubr.bf16.mxu0 0
      %3054 = vmatmul.mubr.bf16.gmra.mxu0 %v2950
      %v3055 = vpop.f32.mrf.mxu0
      %v3056 = vadd.f32 0.0, %v3055
      %v3057 = vpop.f32.mrf.mxu0
      %v3058 = vpop.f32.mrf.mxu0
      %v3059 = vadd.f32 0.0, %v3058
      %v3060 = vpop.f32.mrf.mxu0
      %3061 = vmatprep.mubr.bf16.mxu0 0
      %3062 = vmatmul.mubr.bf16.gmra.mxu0 %v2953
      %v3063 = vpop.f32.mrf.mxu0
      %v3064 = vadd.f32 0.0, %v3063
      %v3065 = vpop.f32.mrf.mxu0
      %v3066 = vpop.f32.mrf.mxu0
      %v3067 = vadd.f32 0.0, %v3066
      %v3068 = vpop.f32.mrf.mxu0
      %3069 = vmatprep.mubr.bf16.mxu0 0
      %3070 = vmatmul.mubr.bf16.gmra.mxu0 %v2956
      %v3071 = vpop.f32.mrf.mxu0
      %v3072 = vadd.f32 0.0, %v3071
      %v3073 = vpop.f32.mrf.mxu0
      %v3074 = vpop.f32.mrf.mxu0
      %v3075 = vadd.f32 0.0, %v3074
      %v3076 = vpop.f32.mrf.mxu0
      %3077 = vmatprep.mubr.bf16.mxu0 0
      %3078 = vmatmul.mubr.bf16.gmra.mxu0 %v2959
      %v3079 = vpop.f32.mrf.mxu0
      %v3080 = vadd.f32 0.0, %v3079
      %v3081 = vpop.f32.mrf.mxu0
      %v3082 = vpop.f32.mrf.mxu0
      %v3083 = vadd.f32 0.0, %v3082
      %v3084 = vpop.f32.mrf.mxu0
      %3085 = vmatprep.mubr.bf16.mxu0 0
      %3086 = vmatmul.mubr.bf16.gmra.mxu0 %v2962
      %v3087 = vpop.f32.mrf.mxu0
      %v3088 = vadd.f32 0.0, %v3087
      %v3089 = vpop.f32.mrf.mxu0
      %v3090 = vpop.f32.mrf.mxu0
      %v3091 = vadd.f32 0.0, %v3090
      %v3092 = vpop.f32.mrf.mxu0
      %3093 = vmatprep.mubr.bf16.mxu0 0
      %3094 = vmatmul.mubr.bf16.gmra.mxu0 %v2965
      %v3095 = vpop.f32.mrf.mxu0
      %v3096 = vadd.f32 0.0, %v3095
      %v3097 = vpop.f32.mrf.mxu0
      %v3098 = vpop.f32.mrf.mxu0
      %v3099 = vadd.f32 0.0, %v3098
      %v3100 = vpop.f32.mrf.mxu0
      %3101 = vmatprep.mubr.bf16.mxu0 0
      %3102 = vmatmul.mubr.bf16.gmra.mxu0 %v2968
      %v3103 = vpop.f32.mrf.mxu0
      %v3104 = vadd.f32 0.0, %v3103
      %v3105 = vpop.f32.mrf.mxu0
      %v3106 = vpop.f32.mrf.mxu0
      %v3107 = vadd.f32 0.0, %v3106
      %v3108 = vpop.f32.mrf.mxu0
      %3109 = vmatprep.mubr.bf16.mxu0 0
      %3110 = vmatmul.mubr.bf16.gmra.mxu0 %v2971
      %v3111 = vpop.f32.mrf.mxu0
      %v3112 = vadd.f32 0.0, %v3111
      %v3113 = vpop.f32.mrf.mxu0
      %v3114 = vpop.f32.mrf.mxu0
      %v3115 = vadd.f32 0.0, %v3114
      %v3116 = vpop.f32.mrf.mxu0
      %3117 = vmatprep.mubr.bf16.mxu0 0
      %3118 = vmatmul.mubr.bf16.gmra.mxu0 %v2974
      %v3119 = vpop.f32.mrf.mxu0
      %v3120 = vadd.f32 0.0, %v3119
      %v3121 = vpop.f32.mrf.mxu0
      %v3122 = vpop.f32.mrf.mxu0
      %v3123 = vadd.f32 0.0, %v3122
      %v3124 = vpop.f32.mrf.mxu0
      %3125 = vmatprep.mubr.bf16.mxu0 0
      %3126 = vmatmul.mubr.bf16.gmra.mxu0 %v2977
      %v3127 = vpop.f32.mrf.mxu0
      %v3128 = vadd.f32 0.0, %v3127
      %v3129 = vpop.f32.mrf.mxu0
      %v3130 = vpop.f32.mrf.mxu0
      %v3131 = vadd.f32 0.0, %v3130
      %v3132 = vpop.f32.mrf.mxu0
      %3133 = vmatprep.mubr.bf16.mxu0 0
      %3134 = vmatmul.mubr.bf16.gmra.mxu0 %v2980
      %v3135 = vpop.f32.mrf.mxu0
      %v3136 = vadd.f32 0.0, %v3135
      %v3137 = vpop.f32.mrf.mxu0
      %v3138 = vpop.f32.mrf.mxu0
      %v3139 = vadd.f32 0.0, %v3138
      %v3140 = vpop.f32.mrf.mxu0
      %3141 = vmatprep.mubr.bf16.mxu0 0
      %3142 = vmatmul.mubr.bf16.gmra.mxu0 %v2983
      %v3143 = vpop.f32.mrf.mxu0
      %v3144 = vadd.f32 0.0, %v3143
      %v3145 = vpop.f32.mrf.mxu0
      %v3146 = vpop.f32.mrf.mxu0
      %v3147 = vadd.f32 0.0, %v3146
      %v3148 = vpop.f32.mrf.mxu0
      %3149 = vdwg.mxu0
      %v3150 = vpack.c.bf16 %v3027, %v3024
      %v3151 = vpack.c.bf16 %v3035, %v3032
      %v3152 = vpack.c.bf16 %v3043, %v3040
      %v3153 = vpack.c.bf16 %v3051, %v3048
      %v3154 = vpack.c.bf16 %v3059, %v3056
      %v3155 = vpack.c.bf16 %v3067, %v3064
      %v3156 = vpack.c.bf16 %v3075, %v3072
      %v3157 = vpack.c.bf16 %v3083, %v3080
      %v3158 = vpack.c.bf16 %v3091, %v3088
      %v3159 = vpack.c.bf16 %v3099, %v3096
      %v3160 = vpack.c.bf16 %v3107, %v3104
      %v3161 = vpack.c.bf16 %v3115, %v3112
      %v3162 = vpack.c.bf16 %v3123, %v3120
      %v3163 = vpack.c.bf16 %v3131, %v3128
      %v3164 = vpack.c.bf16 %v3139, %v3136
      %v3165 = vpack.c.bf16 %v3147, %v3144
      %v3182 = vunpack.c.l.b16 %v3150
      %v3183 = vunpack.c.h.b16 %v3150
      %v3184 = vunpack.c.l.b16 %v3151
      %v3185 = vunpack.c.h.b16 %v3151
      %v3186 = vunpack.c.l.b16 %v3152
      %v3187 = vunpack.c.h.b16 %v3152
      %v3188 = vunpack.c.l.b16 %v3153
      %v3189 = vunpack.c.h.b16 %v3153
      %v3190 = vunpack.c.l.b16 %v3154
      %v3191 = vunpack.c.h.b16 %v3154
      %v3192 = vunpack.c.l.b16 %v3155
      %v3193 = vunpack.c.h.b16 %v3155
      %v3194 = vunpack.c.l.b16 %v3156
      %v3195 = vunpack.c.h.b16 %v3156
      %v3196 = vunpack.c.l.b16 %v3157
      %v3197 = vunpack.c.h.b16 %v3157
      %v3198 = vunpack.c.l.b16 %v3158
      %v3199 = vunpack.c.h.b16 %v3158
      %v3200 = vunpack.c.l.b16 %v3159
      %v3201 = vunpack.c.h.b16 %v3159
      %v3202 = vunpack.c.l.b16 %v3160
      %v3203 = vunpack.c.h.b16 %v3160
      %v3204 = vunpack.c.l.b16 %v3161
      %v3205 = vunpack.c.h.b16 %v3161
      %v3206 = vunpack.c.l.b16 %v3162
      %v3207 = vunpack.c.h.b16 %v3162
      %v3208 = vunpack.c.l.b16 %v3163
      %v3209 = vunpack.c.h.b16 %v3163
      %v3210 = vunpack.c.l.b16 %v3164
      %v3211 = vunpack.c.h.b16 %v3164
      %v3212 = vunpack.c.l.b16 %v3165
      %v3213 = vunpack.c.h.b16 %v3165
      %v3214 = vpack.c.b16 %v3182, %v3182
      %v3215 = vpack.c.b16 %v3183, %v3183
      %v3216 = vpack.c.b16 %v3184, %v3184
      %v3217 = vpack.c.b16 %v3185, %v3185
      %v3218 = vpack.c.b16 %v3186, %v3186
      %v3219 = vpack.c.b16 %v3187, %v3187
      %v3220 = vpack.c.b16 %v3188, %v3188
      %v3221 = vpack.c.b16 %v3189, %v3189
      %v3222 = vpack.c.b16 %v3190, %v3190
      %v3223 = vpack.c.b16 %v3191, %v3191
      %v3224 = vpack.c.b16 %v3192, %v3192
      %v3225 = vpack.c.b16 %v3193, %v3193
      %v3226 = vpack.c.b16 %v3194, %v3194
      %v3227 = vpack.c.b16 %v3195, %v3195
      %v3228 = vpack.c.b16 %v3196, %v3196
      %v3229 = vpack.c.b16 %v3197, %v3197
      %v3230 = vpack.c.b16 %v3198, %v3198
      %v3231 = vpack.c.b16 %v3199, %v3199
      %v3232 = vpack.c.b16 %v3200, %v3200
      %v3233 = vpack.c.b16 %v3201, %v3201
      %v3234 = vpack.c.b16 %v3202, %v3202
      %v3235 = vpack.c.b16 %v3203, %v3203
      %v3236 = vpack.c.b16 %v3204, %v3204
      %v3237 = vpack.c.b16 %v3205, %v3205
      %v3238 = vpack.c.b16 %v3206, %v3206
      %v3239 = vpack.c.b16 %v3207, %v3207
      %v3240 = vpack.c.b16 %v3208, %v3208
      %v3241 = vpack.c.b16 %v3209, %v3209
      %v3242 = vpack.c.b16 %v3210, %v3210
      %v3243 = vpack.c.b16 %v3211, %v3211
      %v3244 = vpack.c.b16 %v3212, %v3212
      %v3245 = vpack.c.b16 %v3213, %v3213
      %vm3278 = vcmask 60416
      %3279 = vst.msk [vmem:[%s177] sm:$0xf] %vm3278, %v3214
      %3280 = vst.msk [vmem:[%s177 + $0x4] sm:$0xf] %vm3278, %v3215
      %3281 = vst.msk [vmem:[%s177 + $0x8] sm:$0xf] %vm3278, %v3216
      %3282 = vst.msk [vmem:[%s177 + $0xc] sm:$0xf] %vm3278, %v3217
      %3283 = vst.msk [vmem:[%s177 + $0x10] sm:$0xf] %vm3278, %v3218
      %3284 = vst.msk [vmem:[%s177 + $0x14] sm:$0xf] %vm3278, %v3219
      %3285 = vst.msk [vmem:[%s177 + $0x18] sm:$0xf] %vm3278, %v3220
      %3286 = vst.msk [vmem:[%s177 + $0x1c] sm:$0xf] %vm3278, %v3221
      %3287 = vst.msk [vmem:[%s177 + $0x20] sm:$0xf] %vm3278, %v3222
      %3288 = vst.msk [vmem:[%s177 + $0x24] sm:$0xf] %vm3278, %v3223
      %3289 = vst.msk [vmem:[%s177 + $0x28] sm:$0xf] %vm3278, %v3224
      %3290 = vst.msk [vmem:[%s177 + $0x2c] sm:$0xf] %vm3278, %v3225
      %3291 = vst.msk [vmem:[%s177 + $0x30] sm:$0xf] %vm3278, %v3226
      %3292 = vst.msk [vmem:[%s177 + $0x34] sm:$0xf] %vm3278, %v3227
      %3293 = vst.msk [vmem:[%s177 + $0x38] sm:$0xf] %vm3278, %v3228
      %3294 = vst.msk [vmem:[%s177 + $0x3c] sm:$0xf] %vm3278, %v3229
      %3295 = vst.msk [vmem:[%s177 + $0x40] sm:$0xf] %vm3278, %v3230
      %3296 = vst.msk [vmem:[%s177 + $0x44] sm:$0xf] %vm3278, %v3231
      %3297 = vst.msk [vmem:[%s177 + $0x48] sm:$0xf] %vm3278, %v3232
      %3298 = vst.msk [vmem:[%s177 + $0x4c] sm:$0xf] %vm3278, %v3233
      %3299 = vst.msk [vmem:[%s177 + $0x50] sm:$0xf] %vm3278, %v3234
      %3300 = vst.msk [vmem:[%s177 + $0x54] sm:$0xf] %vm3278, %v3235
      %3301 = vst.msk [vmem:[%s177 + $0x58] sm:$0xf] %vm3278, %v3236
      %3302 = vst.msk [vmem:[%s177 + $0x5c] sm:$0xf] %vm3278, %v3237
      %3303 = vst.msk [vmem:[%s177 + $0x60] sm:$0xf] %vm3278, %v3238
      %3304 = vst.msk [vmem:[%s177 + $0x64] sm:$0xf] %vm3278, %v3239
      %3305 = vst.msk [vmem:[%s177 + $0x68] sm:$0xf] %vm3278, %v3240
      %3306 = vst.msk [vmem:[%s177 + $0x6c] sm:$0xf] %vm3278, %v3241
      %3307 = vst.msk [vmem:[%s177 + $0x70] sm:$0xf] %vm3278, %v3242
      %3308 = vst.msk [vmem:[%s177 + $0x74] sm:$0xf] %vm3278, %v3243
      %3309 = vst.msk [vmem:[%s177 + $0x78] sm:$0xf] %vm3278, %v3244
      %3310 = vst.msk [vmem:[%s177 + $0x7c] sm:$0xf] %vm3278, %v3245
      %v3311 = vsel %vm247, %v3024, 0.0
      %v3312 = vsel %vm247, %v3027, 0.0
      %v3313 = vadd.f32 %v3311, %v3312
      %v3314 = vsel %vm247, %v3032, 0.0
      %v3315 = vadd.f32 %v3313, %v3314
      %v3316 = vsel %vm247, %v3035, 0.0
      %v3317 = vadd.f32 %v3315, %v3316
      %v3318 = vsel %vm247, %v3040, 0.0
      %v3319 = vadd.f32 %v3317, %v3318
      %v3320 = vsel %vm247, %v3043, 0.0
      %v3321 = vadd.f32 %v3319, %v3320
      %v3322 = vsel %vm247, %v3048, 0.0
      %v3323 = vadd.f32 %v3321, %v3322
      %v3324 = vsel %vm247, %v3051, 0.0
      %v3325 = vadd.f32 %v3323, %v3324
      %v3326 = vsel %vm247, %v3056, 0.0
      %v3327 = vadd.f32 %v3325, %v3326
      %v3328 = vsel %vm247, %v3059, 0.0
      %v3329 = vadd.f32 %v3327, %v3328
      %v3330 = vsel %vm247, %v3064, 0.0
      %v3331 = vadd.f32 %v3329, %v3330
      %v3332 = vsel %vm247, %v3067, 0.0
      %v3333 = vadd.f32 %v3331, %v3332
      %v3334 = vsel %vm247, %v3072, 0.0
      %v3335 = vadd.f32 %v3333, %v3334
      %v3336 = vsel %vm247, %v3075, 0.0
      %v3337 = vadd.f32 %v3335, %v3336
      %v3338 = vsel %vm247, %v3080, 0.0
      %v3339 = vadd.f32 %v3337, %v3338
      %v3340 = vsel %vm247, %v3083, 0.0
      %v3341 = vadd.f32 %v3339, %v3340
      %v3342 = vsel %vm247, %v3088, 0.0
      %v3343 = vadd.f32 %v3341, %v3342
      %v3344 = vsel %vm247, %v3091, 0.0
      %v3345 = vadd.f32 %v3343, %v3344
      %v3346 = vsel %vm247, %v3096, 0.0
      %v3347 = vadd.f32 %v3345, %v3346
      %v3348 = vsel %vm247, %v3099, 0.0
      %v3349 = vadd.f32 %v3347, %v3348
      %v3350 = vsel %vm247, %v3104, 0.0
      %v3351 = vadd.f32 %v3349, %v3350
      %v3352 = vsel %vm247, %v3107, 0.0
      %v3353 = vadd.f32 %v3351, %v3352
      %v3354 = vsel %vm247, %v3112, 0.0
      %v3355 = vadd.f32 %v3353, %v3354
      %v3356 = vsel %vm247, %v3115, 0.0
      %v3357 = vadd.f32 %v3355, %v3356
      %v3358 = vsel %vm247, %v3120, 0.0
      %v3359 = vadd.f32 %v3357, %v3358
      %v3360 = vsel %vm247, %v3123, 0.0
      %v3361 = vadd.f32 %v3359, %v3360
      %v3362 = vsel %vm247, %v3128, 0.0
      %v3363 = vadd.f32 %v3361, %v3362
      %v3364 = vsel %vm247, %v3131, 0.0
      %v3365 = vadd.f32 %v3363, %v3364
      %v3366 = vsel %vm247, %v3136, 0.0
      %v3367 = vadd.f32 %v3365, %v3366
      %v3368 = vsel %vm247, %v3139, 0.0
      %v3369 = vadd.f32 %v3367, %v3368
      %v3370 = vsel %vm247, %v3144, 0.0
      %v3371 = vadd.f32 %v3369, %v3370
      %v3372 = vsel %vm247, %v3147, 0.0
      %v3373 = vadd.f32 %v3371, %v3372
      %v3374 = vrot.slane %v3373, 4
      %v3375 = vadd.f32 %v3373, %v3374
      %v3376 = vrot.slane %v3375, 2
      %v3377 = vadd.f32 %v3375, %v3376
      %v3378 = vrot.slane %v3377, 1
      %v3379 = vadd.f32 %v3377, %v3378
      %vm3380 = vcmask 57344
      %3381 = vst.msk [vmem:[%s181] sm:$0x1] %vm3380, %v3379
      %v3382 = vmul.f32 %v3024, %v3024
      %v3383 = vmul.f32 %v3027, %v3027
      %v3384 = vmul.f32 %v3032, %v3032
      %v3385 = vmul.f32 %v3035, %v3035
      %v3386 = vmul.f32 %v3040, %v3040
      %v3387 = vmul.f32 %v3043, %v3043
      %v3388 = vmul.f32 %v3048, %v3048
      %v3389 = vmul.f32 %v3051, %v3051
      %v3390 = vmul.f32 %v3056, %v3056
      %v3391 = vmul.f32 %v3059, %v3059
      %v3392 = vmul.f32 %v3064, %v3064
      %v3393 = vmul.f32 %v3067, %v3067
      %v3394 = vmul.f32 %v3072, %v3072
      %v3395 = vmul.f32 %v3075, %v3075
      %v3396 = vmul.f32 %v3080, %v3080
      %v3397 = vmul.f32 %v3083, %v3083
      %v3398 = vmul.f32 %v3088, %v3088
      %v3399 = vmul.f32 %v3091, %v3091
      %v3400 = vmul.f32 %v3096, %v3096
      %v3401 = vmul.f32 %v3099, %v3099
      %v3402 = vmul.f32 %v3104, %v3104
      %v3403 = vmul.f32 %v3107, %v3107
      %v3404 = vmul.f32 %v3112, %v3112
      %v3405 = vmul.f32 %v3115, %v3115
      %v3406 = vmul.f32 %v3120, %v3120
      %v3407 = vmul.f32 %v3123, %v3123
      %v3408 = vmul.f32 %v3128, %v3128
      %v3409 = vmul.f32 %v3131, %v3131
      %v3410 = vmul.f32 %v3136, %v3136
      %v3411 = vmul.f32 %v3139, %v3139
      %v3412 = vmul.f32 %v3144, %v3144
      %v3413 = vmul.f32 %v3147, %v3147
      %v3414 = vsel %vm247, %v3382, 0.0
      %v3415 = vsel %vm247, %v3383, 0.0
      %v3416 = vadd.f32 %v3414, %v3415
      %v3417 = vsel %vm247, %v3384, 0.0
      %v3418 = vadd.f32 %v3416, %v3417
      %v3419 = vsel %vm247, %v3385, 0.0
      %v3420 = vadd.f32 %v3418, %v3419
      %v3421 = vsel %vm247, %v3386, 0.0
      %v3422 = vadd.f32 %v3420, %v3421
      %v3423 = vsel %vm247, %v3387, 0.0
      %v3424 = vadd.f32 %v3422, %v3423
      %v3425 = vsel %vm247, %v3388, 0.0
      %v3426 = vadd.f32 %v3424, %v3425
      %v3427 = vsel %vm247, %v3389, 0.0
      %v3428 = vadd.f32 %v3426, %v3427
      %v3429 = vsel %vm247, %v3390, 0.0
      %v3430 = vadd.f32 %v3428, %v3429
      %v3431 = vsel %vm247, %v3391, 0.0
      %v3432 = vadd.f32 %v3430, %v3431
      %v3433 = vsel %vm247, %v3392, 0.0
      %v3434 = vadd.f32 %v3432, %v3433
      %v3435 = vsel %vm247, %v3393, 0.0
      %v3436 = vadd.f32 %v3434, %v3435
      %v3437 = vsel %vm247, %v3394, 0.0
      %v3438 = vadd.f32 %v3436, %v3437
      %v3439 = vsel %vm247, %v3395, 0.0
      %v3440 = vadd.f32 %v3438, %v3439
      %v3441 = vsel %vm247, %v3396, 0.0
      %v3442 = vadd.f32 %v3440, %v3441
      %v3443 = vsel %vm247, %v3397, 0.0
      %v3444 = vadd.f32 %v3442, %v3443
      %v3445 = vsel %vm247, %v3398, 0.0
      %v3446 = vadd.f32 %v3444, %v3445
      %v3447 = vsel %vm247, %v3399, 0.0
      %v3448 = vadd.f32 %v3446, %v3447
      %v3449 = vsel %vm247, %v3400, 0.0
      %v3450 = vadd.f32 %v3448, %v3449
      %v3451 = vsel %vm247, %v3401, 0.0
      %v3452 = vadd.f32 %v3450, %v3451
      %v3453 = vsel %vm247, %v3402, 0.0
      %v3454 = vadd.f32 %v3452, %v3453
      %v3455 = vsel %vm247, %v3403, 0.0
      %v3456 = vadd.f32 %v3454, %v3455
      %v3457 = vsel %vm247, %v3404, 0.0
      %v3458 = vadd.f32 %v3456, %v3457
      %v3459 = vsel %vm247, %v3405, 0.0
      %v3460 = vadd.f32 %v3458, %v3459
      %v3461 = vsel %vm247, %v3406, 0.0
      %v3462 = vadd.f32 %v3460, %v3461
      %v3463 = vsel %vm247, %v3407, 0.0
      %v3464 = vadd.f32 %v3462, %v3463
      %v3465 = vsel %vm247, %v3408, 0.0
      %v3466 = vadd.f32 %v3464, %v3465
      %v3467 = vsel %vm247, %v3409, 0.0
      %v3468 = vadd.f32 %v3466, %v3467
      %v3469 = vsel %vm247, %v3410, 0.0
      %v3470 = vadd.f32 %v3468, %v3469
      %v3471 = vsel %vm247, %v3411, 0.0
      %v3472 = vadd.f32 %v3470, %v3471
      %v3473 = vsel %vm247, %v3412, 0.0
      %v3474 = vadd.f32 %v3472, %v3473
      %v3475 = vsel %vm247, %v3413, 0.0
      %v3476 = vadd.f32 %v3474, %v3475
      %v3477 = vrot.slane %v3476, 4
      %v3478 = vadd.f32 %v3476, %v3477
      %v3479 = vrot.slane %v3478, 2
      %v3480 = vadd.f32 %v3478, %v3479
      %v3481 = vrot.slane %v3480, 1
      %v3482 = vadd.f32 %v3480, %v3481
      %3483 = vst.msk [vmem:[%s181 + $0x1] sm:$0x1] %vm3380, %v3482
      %p3484 = scmp.lt.s32.totalorder %s15, 1
      %s3485 = scalar_select %p3484, %s15, 1
      %s3486 = smul.addr %s3485, 32
      %s3487 = smul.addr %s3486, 4
      %s3488 = scalar_lea.vmem %s2, %s3487
      %p3489 = scmp.lt.s32.totalorder %s15, 1
      %s3490 = scalar_select %p3489, %s15, 1
      %s3491 = smul.addr %s3490, 2
      %s3492 = scalar_lea.vmem %s3, %s3491
      // Predicated region
      $region29: #{basic_block.3} parent=27 // pred_check
        %p3493 = pneg %p80
      $region30: #{basic_block.3} parent=27 // pred_check_branch
        %3495 = sbr.rel (%p3493) target = $region32
      $region31: #{basic_block.3} parent=27 // pred_region
        _
      $region32: #{basic_block.3} parent=27 // pred_fallthru
        _
      // Predicated region
      $region33: #{basic_block.3} parent=27 // pred_check
        %p3496 = pneg %p106
      $region34: #{basic_block.3} parent=27 // pred_check_branch
        %3498 = sbr.rel (%p3496) target = $region36
      $region35: #{basic_block.3} parent=27 // pred_region
        _
      $region36: #{basic_block.3} parent=27 // pred_fallthru
        _
    $region28: #{basic_block.3} parent=5 // pred_fallthru
      _
    %p3499 = scmp.le.s32.totalorder 2, %s10
    // Predicated region
    $region37: #{basic_block.3} parent=5 // pred_check
      %p3500 = pneg %p3499
    $region38: #{basic_block.3} parent=5 // pred_check_branch
      %3502 = sbr.rel (%p3500) target = $region40
    $region39: #{basic_block.3} parent=5 // pred_region
      %s3503 = ssub.s32 %s10, 2
      // Predicated region
      $region41: #{basic_block.3} parent=39 // pred_check
        %p3504 = pneg %p86
      $region42: #{basic_block.3} parent=39 // pred_check_branch
        %3506 = sbr.rel (%p3504) target = $region44
      $region43: #{basic_block.3} parent=39 // pred_region
        %p3507 = scmp.lt.s32.totalorder %s16, 1
        %s3508 = scalar_select %p3507, %s16, 1
        %s3509 = smul.addr %s3508, 32
        %s3510 = smul.addr %s3509, 4
        %s3511 = scalar_lea.vmem %s2, %s3510
      $region44: #{basic_block.3} parent=39 // pred_fallthru
        _
      // Predicated region
      $region45: #{basic_block.3} parent=39 // pred_check
        %p3512 = pneg %p112
      $region46: #{basic_block.3} parent=39 // pred_check_branch
        %3514 = sbr.rel (%p3512) target = $region48
      $region47: #{basic_block.3} parent=39 // pred_region
        %p3515 = scmp.lt.s32.totalorder %s16, 1
        %s3516 = scalar_select %p3515, %s16, 1
        %s3517 = smul.addr %s3516, 2
        %s3518 = scalar_lea.vmem %s3, %s3517
      $region48: #{basic_block.3} parent=39 // pred_fallthru
        _
    $region40: #{basic_block.3} parent=5 // pred_fallthru
      _
  $region6: #{basic_block.3} parent=0 // loop_footer
    %s14 = sadd.s32 1, %s10
  $region7: #{basic_block.3} parent=0 // loop_footer_branch
    %9 = sbr.rel target = $region3
  $region8: #{basic_block.3} parent=0 // loop_exit
    _

</llo_original>
